<compile_context>
chip_gen: v7x
topology: tpu7x:2x2x1
jax: 0.10.0
libtpu: 0.0.40
codegen_flags: <defaults>
</compile_context>

<pallas_src>
import math
import functools

import numpy as np
import jax
import jax.numpy as jnp
from jax.experimental import pallas as pl
from jax.experimental.pallas import tpu as pltpu


# ----------------------------------------------------------------------------
# Fused kernel: 5 x (depthwise 3x3 + pointwise 1x1 + folded BN + swish) + upsample
# ----------------------------------------------------------------------------
def fused_correction_kernel(x_ref, dw_ref, pw_ref, pb_ref, up_ref, o_ref, xpad_ref,
                            *, H, W, n_blocks):
    # x_ref  : (1, H, W, C)        NHWC input (one batch element)
    # dw_ref : (nb, 9, C)  f32     depthwise weights, taps flattened (ky*3+kx)
    # pw_ref : (nb, C, C)  bf16    pointwise weights with BN scale folded in
    # pb_ref : (nb, 1, C)  f32     pointwise bias with BN scale/shift folded in
    # up_ref : (2H*2W, H*W) f32    full 2D bilinear interpolation matrix
    # o_ref  : (1, 2H*2W, C)       output (flattened upsampled spatial)
    # xpad_ref: VMEM (H+2, Wp, C) f32 halo-padded activation staging buffer
    C = x_ref.shape[-1]
    HW = H * W

    # Zero the staging buffer once per grid step (halo stays zero; the interior is
    # rewritten before every use).
    xpad_ref[...] = jnp.zeros_like(xpad_ref)
    xpad_ref[1:1 + H, 1:1 + W, :] = x_ref[0]

    y = None
    for b in range(n_blocks):  # static unroll; inter-block state lives in VMEM scratch
        # ---- depthwise 3x3 "same" (pad=1): 9 vectorized multiply-adds on (H,W,C) ----
        acc = xpad_ref[0:H, 0:W, :] * dw_ref[b, 0:1, :]
        for t in range(1, 9):
            ky, kx = divmod(t, 3)
            acc = acc + xpad_ref[ky:ky + H, kx:kx + W, :] * dw_ref[b, t:t + 1, :]

        # ---- pointwise 1x1 conv + folded BatchNorm: one MXU matmul ----
        # bf16 operands, f32 accumulation (numerically safe for a 256-deep reduction)
        y = jnp.dot(acc.reshape(HW, C).astype(pw_ref.dtype), pw_ref[b],
                    preferred_element_type=jnp.float32)
        y = y + pb_ref[b]
        # Swish
        y = y * jax.nn.sigmoid(y)

        if b + 1 < n_blocks:
            xpad_ref[1:1 + H, 1:1 + W, :] = y.reshape(H, W, C)

    # ---- bilinear 2x upsample (align_corners=False) as a single matmul ----
    out = jnp.dot(up_ref[...], y, preferred_element_type=jnp.float32)
    o_ref[0, :, :] = out.astype(o_ref.dtype)


# ----------------------------------------------------------------------------
# Host-side helpers
# ----------------------------------------------------------------------------
def _linear_upsample_matrix(out_size, in_size):
    # PyTorch nn.Upsample(mode='bilinear', align_corners=False) 1-D weights.
    m = np.zeros((out_size, in_size), np.float32)
    for o in range(out_size):
        src = max((o + 0.5) * in_size / out_size - 0.5, 0.0)
        i0 = int(math.floor(src))
        i1 = min(i0 + 1, in_size - 1)
        w1 = src - i0
        m[o, i0] += 1.0 - w1
        m[o, i1] += w1
    return m


def correction_module(x_nchw, params):
    # layout: accept NCHW (PyTorch), run the fused kernel in NHWC, return NCHW.
    N, C, H, W = x_nchw.shape
    x = jnp.transpose(x_nchw, (0, 2, 3, 1)).astype(jnp.float32)

    # Fold eval-mode BN (scale/shift) and bias into the pointwise conv on the host.
    dw_l, pw_l, pb_l = [], [], []
    for (dw, pw, pb, scale, shift) in params:
        dw_l.append(dw.reshape(9, C))                        # f32: VPU math stays f32
        pw_l.append((pw * scale).astype(jnp.bfloat16))       # (Cin,Cout)*(1,Cout)
        pb_l.append(pb * scale + shift)
    dw_stack = jnp.stack(dw_l)            # (nb, 9, C)  f32
    pw_stack = jnp.stack(pw_l)            # (nb, C, C)  bf16 (MXU operands)
    pb_stack = jnp.stack(pb_l)            # (nb, 1, C)  f32
    n_blocks = len(params)

    # Full 2-D bilinear upsample as one matrix: kron(row_interp, col_interp).
    up = jnp.asarray(np.kron(_linear_upsample_matrix(2 * H, H),
                             _linear_upsample_matrix(2 * W, W)))   # (4HW, HW) f32

    Wp = ((W + 2 + 7) // 8) * 8           # sublane-padded staging width

    out = pl.pallas_call(
        functools.partial(fused_correction_kernel, H=H, W=W, n_blocks=n_blocks),
        out_shape=jax.ShapeDtypeStruct((N, 4 * H * W, C), jnp.float32),
        grid_spec=pltpu.PrefetchScalarGridSpec(
            num_scalar_prefetch=0,
            grid=(N,),
            in_specs=[
                pl.BlockSpec((1, H, W, C), lambda n: (n, 0, 0, 0)),
                pl.BlockSpec((n_blocks, 9, C), lambda n: (0, 0, 0)),
                pl.BlockSpec((n_blocks, C, C), lambda n: (0, 0, 0)),
                pl.BlockSpec((n_blocks, 1, C), lambda n: (0, 0, 0)),
                pl.BlockSpec((4 * H * W, H * W), lambda n: (0, 0)),
            ],
            out_specs=pl.BlockSpec((1, 4 * H * W, C), lambda n: (n, 0, 0)),
            scratch_shapes=[pltpu.VMEM((H + 2, Wp, C), jnp.float32)],
        ),
        compiler_params=pltpu.CompilerParams(
            dimension_semantics=("parallel",)),
    )(x, dw_stack, pw_stack, pb_stack, up)

    out = out.reshape(N, 2 * H, 2 * W, C)
    return jnp.transpose(out, (0, 3, 1, 2))


# ----------------------------------------------------------------------------
# Parameters
# ----------------------------------------------------------------------------
def init_params(key, C=256, n_blocks=5):
    params = []
    eps = 1e-3  # BatchNorm2d(eps=0.001)
    for _ in range(n_blocks):
        key, k_dw, k_pw, k_pb, k_g, k_b = jax.random.split(key, 6)
        dw = jax.random.normal(k_dw, (3, 3, C), jnp.float32) * 0.1
        pw = jax.random.normal(k_pw, (C, C), jnp.float32) * (1.0 / math.sqrt(C))
        pb = jax.random.normal(k_pb, (1, C), jnp.float32) * 0.1
        gamma = 1.0 + 0.1 * jax.random.normal(k_g, (1, C), jnp.float32)
        beta = 0.1 * jax.random.normal(k_b, (1, C), jnp.float32)
        running_mean = jnp.zeros((1, C), jnp.float32)
        running_var = jnp.ones((1, C), jnp.float32)
        scale = gamma / jnp.sqrt(running_var + eps)
        shift = beta - running_mean * scale
        params.append((dw, pw, pb, scale, shift))
    return params


if __name__ == "__main__":
    key = jax.random.PRNGKey(0)
    key, pk, xk = jax.random.split(key, 3)

    C = 256          # fixed by CorrectionModule (SeparableConvBlock(256, 256))
    N, H, W = 2, 8, 8

    params = init_params(pk, C=C, n_blocks=5)
    x = jax.random.normal(xk, (N, C, H, W), jnp.float32)   # NCHW, like PyTorch

    out = jax.jit(correction_module)(x, params)
    out = jax.block_until_ready(out)

    assert out.shape == (N, C, 2 * H, 2 * W), out.shape
    assert bool(jnp.all(jnp.isfinite(out)))
    print("KERNEL_OK")
</pallas_src>

<mosaic_0001>
module attributes {stable_mosaic.version = 11 : i64} {
  func.func @fused_correction_kernel(%arg0: i32, %arg1: memref<1x8x8x256xf32, #tpu.memory_space<vmem>>, %arg2: memref<5x9x256xf32, #tpu.memory_space<vmem>>, %arg3: memref<5x256x256xbf16, #tpu.memory_space<vmem>>, %arg4: memref<5x1x256xf32, #tpu.memory_space<vmem>>, %arg5: memref<256x64xf32, #tpu.memory_space<vmem>>, %arg6: memref<1x256x256xf32, #tpu.memory_space<vmem>>, %arg7: memref<10x16x256xf32, #tpu.memory_space<vmem>>) attributes {dimension_semantics = [#tpu.dimension_semantics<parallel>], iteration_bounds = array<i64: 2>, scalar_prefetch = 0 : i64, scratch_operands = 1 : i64, tpu.core_type = #tpu.core_type<tc>, window_params = [{transform_indices = @transform_0, window_bounds = array<i64: 1, 8, 8, 256>}, {pipeline_mode = #tpu.pipeline_mode<synchronous>, transform_indices = @transform_1, window_bounds = array<i64: 5, 9, 256>}, {pipeline_mode = #tpu.pipeline_mode<synchronous>, transform_indices = @transform_2, window_bounds = array<i64: 5, 256, 256>}, {pipeline_mode = #tpu.pipeline_mode<synchronous>, transform_indices = @transform_3, window_bounds = array<i64: 5, 1, 256>}, {pipeline_mode = #tpu.pipeline_mode<synchronous>, transform_indices = @transform_4, window_bounds = array<i64: 256, 64>}, {transform_indices = @transform_5, window_bounds = array<i64: 1, 256, 256>}]} {
    %cst = arith.constant 0.000000e+00 : f32
    %0 = vector.broadcast %cst : f32 to vector<10x16x256xf32>
    %c0 = arith.constant 0 : index
    %c0_0 = arith.constant 0 : index
    %c0_1 = arith.constant 0 : index
    %1 = vector.load %arg7[%c0, %c0_0, %c0_1] : memref<10x16x256xf32, #tpu.memory_space<vmem>>, vector<10x16x256xf32>
    tpu.vector_store %arg7[%c0, %c0_0, %c0_1], %0 {strides = array<i32>} : memref<10x16x256xf32, #tpu.memory_space<vmem>>, vector<10x16x256xf32>,
    %c0_2 = arith.constant 0 : index
    %c0_3 = arith.constant 0 : index
    %c0_4 = arith.constant 0 : index
    %c0_5 = arith.constant 0 : index
    %2 = vector.load %arg1[%c0_2, %c0_3, %c0_4, %c0_5] : memref<1x8x8x256xf32, #tpu.memory_space<vmem>>, vector<1x8x8x256xf32>
    %3 = vector.shape_cast %2 : vector<1x8x8x256xf32> to vector<8x8x256xf32>
    %c1 = arith.constant 1 : index
    %c1_6 = arith.constant 1 : index
    %c0_7 = arith.constant 0 : index
    %4 = vector.load %arg7[%c1, %c1_6, %c0_7] : memref<10x16x256xf32, #tpu.memory_space<vmem>>, vector<8x8x256xf32>
    tpu.vector_store %arg7[%c1, %c1_6, %c0_7], %3 {strides = array<i32>} : memref<10x16x256xf32, #tpu.memory_space<vmem>>, vector<8x8x256xf32>,
    %c0_8 = arith.constant 0 : index
    %c0_9 = arith.constant 0 : index
    %c0_10 = arith.constant 0 : index
    %5 = vector.load %arg7[%c0_8, %c0_9, %c0_10] : memref<10x16x256xf32, #tpu.memory_space<vmem>>, vector<8x8x256xf32>
    %c0_11 = arith.constant 0 : index
    %c0_12 = arith.constant 0 : index
    %c0_13 = arith.constant 0 : index
    %6 = vector.load %arg2[%c0_11, %c0_12, %c0_13] : memref<5x9x256xf32, #tpu.memory_space<vmem>>, vector<1x1x256xf32>
    %7 = vector.shape_cast %6 : vector<1x1x256xf32> to vector<1x256xf32>
    %8 = vector.shape_cast %7 : vector<1x256xf32> to vector<1x1x256xf32>
    %9 = vector.broadcast %8 : vector<1x1x256xf32> to vector<8x8x256xf32>
    %10 = arith.mulf %5, %9 : vector<8x8x256xf32>
    %c0_14 = arith.constant 0 : index
    %c1_15 = arith.constant 1 : index
    %c0_16 = arith.constant 0 : index
    %11 = vector.load %arg7[%c0_14, %c1_15, %c0_16] : memref<10x16x256xf32, #tpu.memory_space<vmem>>, vector<8x8x256xf32>
    %c0_17 = arith.constant 0 : index
    %c1_18 = arith.constant 1 : index
    %c0_19 = arith.constant 0 : index
    %12 = vector.load %arg2[%c0_17, %c1_18, %c0_19] : memref<5x9x256xf32, #tpu.memory_space<vmem>>, vector<1x1x256xf32>
    %13 = vector.shape_cast %12 : vector<1x1x256xf32> to vector<1x256xf32>
    %14 = vector.shape_cast %13 : vector<1x256xf32> to vector<1x1x256xf32>
    %15 = vector.broadcast %14 : vector<1x1x256xf32> to vector<8x8x256xf32>
    %16 = arith.mulf %11, %15 : vector<8x8x256xf32>
    %17 = arith.addf %10, %16 : vector<8x8x256xf32>
    %c0_20 = arith.constant 0 : index
    %c2 = arith.constant 2 : index
    %c0_21 = arith.constant 0 : index
    %18 = vector.load %arg7[%c0_20, %c2, %c0_21] : memref<10x16x256xf32, #tpu.memory_space<vmem>>, vector<8x8x256xf32>
    %c0_22 = arith.constant 0 : index
    %c2_23 = arith.constant 2 : index
    %c0_24 = arith.constant 0 : index
    %19 = vector.load %arg2[%c0_22, %c2_23, %c0_24] : memref<5x9x256xf32, #tpu.memory_space<vmem>>, vector<1x1x256xf32>
    %20 = vector.shape_cast %19 : vector<1x1x256xf32> to vector<1x256xf32>
    %21 = vector.shape_cast %20 : vector<1x256xf32> to vector<1x1x256xf32>
    %22 = vector.broadcast %21 : vector<1x1x256xf32> to vector<8x8x256xf32>
    %23 = arith.mulf %18, %22 : vector<8x8x256xf32>
    %24 = arith.addf %17, %23 : vector<8x8x256xf32>
    %c1_25 = arith.constant 1 : index
    %c0_26 = arith.constant 0 : index
    %c0_27 = arith.constant 0 : index
    %25 = vector.load %arg7[%c1_25, %c0_26, %c0_27] : memref<10x16x256xf32, #tpu.memory_space<vmem>>, vector<8x8x256xf32>
    %c0_28 = arith.constant 0 : index
    %c3 = arith.constant 3 : index
    %c0_29 = arith.constant 0 : index
    %26 = vector.load %arg2[%c0_28, %c3, %c0_29] : memref<5x9x256xf32, #tpu.memory_space<vmem>>, vector<1x1x256xf32>
    %27 = vector.shape_cast %26 : vector<1x1x256xf32> to vector<1x256xf32>
    %28 = vector.shape_cast %27 : vector<1x256xf32> to vector<1x1x256xf32>
    %29 = vector.broadcast %28 : vector<1x1x256xf32> to vector<8x8x256xf32>
    %30 = arith.mulf %25, %29 : vector<8x8x256xf32>
    %31 = arith.addf %24, %30 : vector<8x8x256xf32>
    %c1_30 = arith.constant 1 : index
    %c1_31 = arith.constant 1 : index
    %c0_32 = arith.constant 0 : index
    %32 = vector.load %arg7[%c1_30, %c1_31, %c0_32] : memref<10x16x256xf32, #tpu.memory_space<vmem>>, vector<8x8x256xf32>
    %c0_33 = arith.constant 0 : index
    %c4 = arith.constant 4 : index
    %c0_34 = arith.constant 0 : index
    %33 = vector.load %arg2[%c0_33, %c4, %c0_34] : memref<5x9x256xf32, #tpu.memory_space<vmem>>, vector<1x1x256xf32>
    %34 = vector.shape_cast %33 : vector<1x1x256xf32> to vector<1x256xf32>
    %35 = vector.shape_cast %34 : vector<1x256xf32> to vector<1x1x256xf32>
    %36 = vector.broadcast %35 : vector<1x1x256xf32> to vector<8x8x256xf32>
    %37 = arith.mulf %32, %36 : vector<8x8x256xf32>
    %38 = arith.addf %31, %37 : vector<8x8x256xf32>
    %c1_35 = arith.constant 1 : index
    %c2_36 = arith.constant 2 : index
    %c0_37 = arith.constant 0 : index
    %39 = vector.load %arg7[%c1_35, %c2_36, %c0_37] : memref<10x16x256xf32, #tpu.memory_space<vmem>>, vector<8x8x256xf32>
    %c0_38 = arith.constant 0 : index
    %c5 = arith.constant 5 : index
    %c0_39 = arith.constant 0 : index
    %40 = vector.load %arg2[%c0_38, %c5, %c0_39] : memref<5x9x256xf32, #tpu.memory_space<vmem>>, vector<1x1x256xf32>
    %41 = vector.shape_cast %40 : vector<1x1x256xf32> to vector<1x256xf32>
    %42 = vector.shape_cast %41 : vector<1x256xf32> to vector<1x1x256xf32>
    %43 = vector.broadcast %42 : vector<1x1x256xf32> to vector<8x8x256xf32>
    %44 = arith.mulf %39, %43 : vector<8x8x256xf32>
    %45 = arith.addf %38, %44 : vector<8x8x256xf32>
    %c2_40 = arith.constant 2 : index
    %c0_41 = arith.constant 0 : index
    %c0_42 = arith.constant 0 : index
    %46 = vector.load %arg7[%c2_40, %c0_41, %c0_42] : memref<10x16x256xf32, #tpu.memory_space<vmem>>, vector<8x8x256xf32>
    %c0_43 = arith.constant 0 : index
    %c6 = arith.constant 6 : index
    %c0_44 = arith.constant 0 : index
    %47 = vector.load %arg2[%c0_43, %c6, %c0_44] : memref<5x9x256xf32, #tpu.memory_space<vmem>>, vector<1x1x256xf32>
    %48 = vector.shape_cast %47 : vector<1x1x256xf32> to vector<1x256xf32>
    %49 = vector.shape_cast %48 : vector<1x256xf32> to vector<1x1x256xf32>
    %50 = vector.broadcast %49 : vector<1x1x256xf32> to vector<8x8x256xf32>
    %51 = arith.mulf %46, %50 : vector<8x8x256xf32>
    %52 = arith.addf %45, %51 : vector<8x8x256xf32>
    %c2_45 = arith.constant 2 : index
    %c1_46 = arith.constant 1 : index
    %c0_47 = arith.constant 0 : index
    %53 = vector.load %arg7[%c2_45, %c1_46, %c0_47] : memref<10x16x256xf32, #tpu.memory_space<vmem>>, vector<8x8x256xf32>
    %c0_48 = arith.constant 0 : index
    %c7 = arith.constant 7 : index
    %c0_49 = arith.constant 0 : index
    %54 = vector.load %arg2[%c0_48, %c7, %c0_49] : memref<5x9x256xf32, #tpu.memory_space<vmem>>, vector<1x1x256xf32>
    %55 = vector.shape_cast %54 : vector<1x1x256xf32> to vector<1x256xf32>
    %56 = vector.shape_cast %55 : vector<1x256xf32> to vector<1x1x256xf32>
    %57 = vector.broadcast %56 : vector<1x1x256xf32> to vector<8x8x256xf32>
    %58 = arith.mulf %53, %57 : vector<8x8x256xf32>
    %59 = arith.addf %52, %58 : vector<8x8x256xf32>
    %c2_50 = arith.constant 2 : index
    %c2_51 = arith.constant 2 : index
    %c0_52 = arith.constant 0 : index
    %60 = vector.load %arg7[%c2_50, %c2_51, %c0_52] : memref<10x16x256xf32, #tpu.memory_space<vmem>>, vector<8x8x256xf32>
    %c0_53 = arith.constant 0 : index
    %c8 = arith.constant 8 : index
    %c0_54 = arith.constant 0 : index
    %61 = vector.load %arg2[%c0_53, %c8, %c0_54] : memref<5x9x256xf32, #tpu.memory_space<vmem>>, vector<1x1x256xf32>
    %62 = vector.shape_cast %61 : vector<1x1x256xf32> to vector<1x256xf32>
    %63 = vector.shape_cast %62 : vector<1x256xf32> to vector<1x1x256xf32>
    %64 = vector.broadcast %63 : vector<1x1x256xf32> to vector<8x8x256xf32>
    %65 = arith.mulf %60, %64 : vector<8x8x256xf32>
    %66 = arith.addf %59, %65 : vector<8x8x256xf32>
    %67 = vector.shape_cast %66 : vector<8x8x256xf32> to vector<64x256xf32>
    %68 = arith.truncf %67 : vector<64x256xf32> to vector<64x256xbf16>
    %c0_55 = arith.constant 0 : index
    %c0_56 = arith.constant 0 : index
    %c0_57 = arith.constant 0 : index
    %69 = vector.load %arg3[%c0_55, %c0_56, %c0_57] : memref<5x256x256xbf16, #tpu.memory_space<vmem>>, vector<1x256x256xbf16>
    %70 = vector.shape_cast %69 : vector<1x256x256xbf16> to vector<256x256xbf16>
    %cst_58 = arith.constant dense<0.000000e+00> : vector<64x256xf32>
    %71 = tpu.matmul %68, %70, %cst_58 {dimension_numbers = #tpu.dot_dimension_numbers<[1], [0], [0], [1], [0, 0, 1, 1], [], []>} : vector<64x256xbf16>, vector<256x256xbf16>, vector<64x256xf32> -> vector<64x256xf32>
    %c0_59 = arith.constant 0 : index
    %c0_60 = arith.constant 0 : index
    %c0_61 = arith.constant 0 : index
    %72 = vector.load %arg4[%c0_59, %c0_60, %c0_61] : memref<5x1x256xf32, #tpu.memory_space<vmem>>, vector<1x1x256xf32>
    %73 = vector.shape_cast %72 : vector<1x1x256xf32> to vector<1x256xf32>
    %74 = vector.broadcast %73 : vector<1x256xf32> to vector<64x256xf32>
    %75 = arith.addf %71, %74 : vector<64x256xf32>
    %76 = arith.negf %75 : vector<64x256xf32>
    %77 = math.exp %76 : vector<64x256xf32>
    %cst_62 = arith.constant 1.000000e+00 : f32
    %78 = vector.broadcast %cst_62 : f32 to vector<64x256xf32>
    %79 = arith.addf %78, %77 : vector<64x256xf32>
    %80 = arith.divf %78, %79 : vector<64x256xf32>
    %81 = arith.mulf %75, %80 : vector<64x256xf32>
    %82 = vector.shape_cast %81 : vector<64x256xf32> to vector<8x8x256xf32>
    %c1_63 = arith.constant 1 : index
    %c1_64 = arith.constant 1 : index
    %c0_65 = arith.constant 0 : index
    %83 = vector.load %arg7[%c1_63, %c1_64, %c0_65] : memref<10x16x256xf32, #tpu.memory_space<vmem>>, vector<8x8x256xf32>
    tpu.vector_store %arg7[%c1_63, %c1_64, %c0_65], %82 {strides = array<i32>} : memref<10x16x256xf32, #tpu.memory_space<vmem>>, vector<8x8x256xf32>,
    %c0_66 = arith.constant 0 : index
    %c0_67 = arith.constant 0 : index
    %c0_68 = arith.constant 0 : index
    %84 = vector.load %arg7[%c0_66, %c0_67, %c0_68] : memref<10x16x256xf32, #tpu.memory_space<vmem>>, vector<8x8x256xf32>
    %c1_69 = arith.constant 1 : index
    %c0_70 = arith.constant 0 : index
    %c0_71 = arith.constant 0 : index
    %85 = vector.load %arg2[%c1_69, %c0_70, %c0_71] : memref<5x9x256xf32, #tpu.memory_space<vmem>>, vector<1x1x256xf32>
    %86 = vector.shape_cast %85 : vector<1x1x256xf32> to vector<1x256xf32>
    %87 = vector.shape_cast %86 : vector<1x256xf32> to vector<1x1x256xf32>
    %88 = vector.broadcast %87 : vector<1x1x256xf32> to vector<8x8x256xf32>
    %89 = arith.mulf %84, %88 : vector<8x8x256xf32>
    %c0_72 = arith.constant 0 : index
    %c1_73 = arith.constant 1 : index
    %c0_74 = arith.constant 0 : index
    %90 = vector.load %arg7[%c0_72, %c1_73, %c0_74] : memref<10x16x256xf32, #tpu.memory_space<vmem>>, vector<8x8x256xf32>
    %c1_75 = arith.constant 1 : index
    %c1_76 = arith.constant 1 : index
    %c0_77 = arith.constant 0 : index
    %91 = vector.load %arg2[%c1_75, %c1_76, %c0_77] : memref<5x9x256xf32, #tpu.memory_space<vmem>>, vector<1x1x256xf32>
    %92 = vector.shape_cast %91 : vector<1x1x256xf32> to vector<1x256xf32>
    %93 = vector.shape_cast %92 : vector<1x256xf32> to vector<1x1x256xf32>
    %94 = vector.broadcast %93 : vector<1x1x256xf32> to vector<8x8x256xf32>
    %95 = arith.mulf %90, %94 : vector<8x8x256xf32>
    %96 = arith.addf %89, %95 : vector<8x8x256xf32>
    %c0_78 = arith.constant 0 : index
    %c2_79 = arith.constant 2 : index
    %c0_80 = arith.constant 0 : index
    %97 = vector.load %arg7[%c0_78, %c2_79, %c0_80] : memref<10x16x256xf32, #tpu.memory_space<vmem>>, vector<8x8x256xf32>
    %c1_81 = arith.constant 1 : index
    %c2_82 = arith.constant 2 : index
    %c0_83 = arith.constant 0 : index
    %98 = vector.load %arg2[%c1_81, %c2_82, %c0_83] : memref<5x9x256xf32, #tpu.memory_space<vmem>>, vector<1x1x256xf32>
    %99 = vector.shape_cast %98 : vector<1x1x256xf32> to vector<1x256xf32>
    %100 = vector.shape_cast %99 : vector<1x256xf32> to vector<1x1x256xf32>
    %101 = vector.broadcast %100 : vector<1x1x256xf32> to vector<8x8x256xf32>
    %102 = arith.mulf %97, %101 : vector<8x8x256xf32>
    %103 = arith.addf %96, %102 : vector<8x8x256xf32>
    %c1_84 = arith.constant 1 : index
    %c0_85 = arith.constant 0 : index
    %c0_86 = arith.constant 0 : index
    %104 = vector.load %arg7[%c1_84, %c0_85, %c0_86] : memref<10x16x256xf32, #tpu.memory_space<vmem>>, vector<8x8x256xf32>
    %c1_87 = arith.constant 1 : index
    %c3_88 = arith.constant 3 : index
    %c0_89 = arith.constant 0 : index
    %105 = vector.load %arg2[%c1_87, %c3_88, %c0_89] : memref<5x9x256xf32, #tpu.memory_space<vmem>>, vector<1x1x256xf32>
    %106 = vector.shape_cast %105 : vector<1x1x256xf32> to vector<1x256xf32>
    %107 = vector.shape_cast %106 : vector<1x256xf32> to vector<1x1x256xf32>
    %108 = vector.broadcast %107 : vector<1x1x256xf32> to vector<8x8x256xf32>
    %109 = arith.mulf %104, %108 : vector<8x8x256xf32>
    %110 = arith.addf %103, %109 : vector<8x8x256xf32>
    %c1_90 = arith.constant 1 : index
    %c1_91 = arith.constant 1 : index
    %c0_92 = arith.constant 0 : index
    %111 = vector.load %arg7[%c1_90, %c1_91, %c0_92] : memref<10x16x256xf32, #tpu.memory_space<vmem>>, vector<8x8x256xf32>
    %c1_93 = arith.constant 1 : index
    %c4_94 = arith.constant 4 : index
    %c0_95 = arith.constant 0 : index
    %112 = vector.load %arg2[%c1_93, %c4_94, %c0_95] : memref<5x9x256xf32, #tpu.memory_space<vmem>>, vector<1x1x256xf32>
    %113 = vector.shape_cast %112 : vector<1x1x256xf32> to vector<1x256xf32>
    %114 = vector.shape_cast %113 : vector<1x256xf32> to vector<1x1x256xf32>
    %115 = vector.broadcast %114 : vector<1x1x256xf32> to vector<8x8x256xf32>
    %116 = arith.mulf %111, %115 : vector<8x8x256xf32>
    %117 = arith.addf %110, %116 : vector<8x8x256xf32>
    %c1_96 = arith.constant 1 : index
    %c2_97 = arith.constant 2 : index
    %c0_98 = arith.constant 0 : index
    %118 = vector.load %arg7[%c1_96, %c2_97, %c0_98] : memref<10x16x256xf32, #tpu.memory_space<vmem>>, vector<8x8x256xf32>
    %c1_99 = arith.constant 1 : index
    %c5_100 = arith.constant 5 : index
    %c0_101 = arith.constant 0 : index
    %119 = vector.load %arg2[%c1_99, %c5_100, %c0_101] : memref<5x9x256xf32, #tpu.memory_space<vmem>>, vector<1x1x256xf32>
    %120 = vector.shape_cast %119 : vector<1x1x256xf32> to vector<1x256xf32>
    %121 = vector.shape_cast %120 : vector<1x256xf32> to vector<1x1x256xf32>
    %122 = vector.broadcast %121 : vector<1x1x256xf32> to vector<8x8x256xf32>
    %123 = arith.mulf %118, %122 : vector<8x8x256xf32>
    %124 = arith.addf %117, %123 : vector<8x8x256xf32>
    %c2_102 = arith.constant 2 : index
    %c0_103 = arith.constant 0 : index
    %c0_104 = arith.constant 0 : index
    %125 = vector.load %arg7[%c2_102, %c0_103, %c0_104] : memref<10x16x256xf32, #tpu.memory_space<vmem>>, vector<8x8x256xf32>
    %c1_105 = arith.constant 1 : index
    %c6_106 = arith.constant 6 : index
    %c0_107 = arith.constant 0 : index
    %126 = vector.load %arg2[%c1_105, %c6_106, %c0_107] : memref<5x9x256xf32, #tpu.memory_space<vmem>>, vector<1x1x256xf32>
    %127 = vector.shape_cast %126 : vector<1x1x256xf32> to vector<1x256xf32>
    %128 = vector.shape_cast %127 : vector<1x256xf32> to vector<1x1x256xf32>
    %129 = vector.broadcast %128 : vector<1x1x256xf32> to vector<8x8x256xf32>
    %130 = arith.mulf %125, %129 : vector<8x8x256xf32>
    %131 = arith.addf %124, %130 : vector<8x8x256xf32>
    %c2_108 = arith.constant 2 : index
    %c1_109 = arith.constant 1 : index
    %c0_110 = arith.constant 0 : index
    %132 = vector.load %arg7[%c2_108, %c1_109, %c0_110] : memref<10x16x256xf32, #tpu.memory_space<vmem>>, vector<8x8x256xf32>
    %c1_111 = arith.constant 1 : index
    %c7_112 = arith.constant 7 : index
    %c0_113 = arith.constant 0 : index
    %133 = vector.load %arg2[%c1_111, %c7_112, %c0_113] : memref<5x9x256xf32, #tpu.memory_space<vmem>>, vector<1x1x256xf32>
    %134 = vector.shape_cast %133 : vector<1x1x256xf32> to vector<1x256xf32>
    %135 = vector.shape_cast %134 : vector<1x256xf32> to vector<1x1x256xf32>
    %136 = vector.broadcast %135 : vector<1x1x256xf32> to vector<8x8x256xf32>
    %137 = arith.mulf %132, %136 : vector<8x8x256xf32>
    %138 = arith.addf %131, %137 : vector<8x8x256xf32>
    %c2_114 = arith.constant 2 : index
    %c2_115 = arith.constant 2 : index
    %c0_116 = arith.constant 0 : index
    %139 = vector.load %arg7[%c2_114, %c2_115, %c0_116] : memref<10x16x256xf32, #tpu.memory_space<vmem>>, vector<8x8x256xf32>
    %c1_117 = arith.constant 1 : index
    %c8_118 = arith.constant 8 : index
    %c0_119 = arith.constant 0 : index
    %140 = vector.load %arg2[%c1_117, %c8_118, %c0_119] : memref<5x9x256xf32, #tpu.memory_space<vmem>>, vector<1x1x256xf32>
    %141 = vector.shape_cast %140 : vector<1x1x256xf32> to vector<1x256xf32>
    %142 = vector.shape_cast %141 : vector<1x256xf32> to vector<1x1x256xf32>
    %143 = vector.broadcast %142 : vector<1x1x256xf32> to vector<8x8x256xf32>
    %144 = arith.mulf %139, %143 : vector<8x8x256xf32>
    %145 = arith.addf %138, %144 : vector<8x8x256xf32>
    %146 = vector.shape_cast %145 : vector<8x8x256xf32> to vector<64x256xf32>
    %147 = arith.truncf %146 : vector<64x256xf32> to vector<64x256xbf16>
    %c1_120 = arith.constant 1 : index
    %c0_121 = arith.constant 0 : index
    %c0_122 = arith.constant 0 : index
    %148 = vector.load %arg3[%c1_120, %c0_121, %c0_122] : memref<5x256x256xbf16, #tpu.memory_space<vmem>>, vector<1x256x256xbf16>
    %149 = vector.shape_cast %148 : vector<1x256x256xbf16> to vector<256x256xbf16>
    %cst_123 = arith.constant dense<0.000000e+00> : vector<64x256xf32>
    %150 = tpu.matmul %147, %149, %cst_123 {dimension_numbers = #tpu.dot_dimension_numbers<[1], [0], [0], [1], [0, 0, 1, 1], [], []>} : vector<64x256xbf16>, vector<256x256xbf16>, vector<64x256xf32> -> vector<64x256xf32>
    %c1_124 = arith.constant 1 : index
    %c0_125 = arith.constant 0 : index
    %c0_126 = arith.constant 0 : index
    %151 = vector.load %arg4[%c1_124, %c0_125, %c0_126] : memref<5x1x256xf32, #tpu.memory_space<vmem>>, vector<1x1x256xf32>
    %152 = vector.shape_cast %151 : vector<1x1x256xf32> to vector<1x256xf32>
    %153 = vector.broadcast %152 : vector<1x256xf32> to vector<64x256xf32>
    %154 = arith.addf %150, %153 : vector<64x256xf32>
    %155 = arith.negf %154 : vector<64x256xf32>
    %156 = math.exp %155 : vector<64x256xf32>
    %cst_127 = arith.constant 1.000000e+00 : f32
    %157 = vector.broadcast %cst_127 : f32 to vector<64x256xf32>
    %158 = arith.addf %157, %156 : vector<64x256xf32>
    %159 = arith.divf %157, %158 : vector<64x256xf32>
    %160 = arith.mulf %154, %159 : vector<64x256xf32>
    %161 = vector.shape_cast %160 : vector<64x256xf32> to vector<8x8x256xf32>
    %c1_128 = arith.constant 1 : index
    %c1_129 = arith.constant 1 : index
    %c0_130 = arith.constant 0 : index
    %162 = vector.load %arg7[%c1_128, %c1_129, %c0_130] : memref<10x16x256xf32, #tpu.memory_space<vmem>>, vector<8x8x256xf32>
    tpu.vector_store %arg7[%c1_128, %c1_129, %c0_130], %161 {strides = array<i32>} : memref<10x16x256xf32, #tpu.memory_space<vmem>>, vector<8x8x256xf32>,
    %c0_131 = arith.constant 0 : index
    %c0_132 = arith.constant 0 : index
    %c0_133 = arith.constant 0 : index
    %163 = vector.load %arg7[%c0_131, %c0_132, %c0_133] : memref<10x16x256xf32, #tpu.memory_space<vmem>>, vector<8x8x256xf32>
    %c2_134 = arith.constant 2 : index
    %c0_135 = arith.constant 0 : index
    %c0_136 = arith.constant 0 : index
    %164 = vector.load %arg2[%c2_134, %c0_135, %c0_136] : memref<5x9x256xf32, #tpu.memory_space<vmem>>, vector<1x1x256xf32>
    %165 = vector.shape_cast %164 : vector<1x1x256xf32> to vector<1x256xf32>
    %166 = vector.shape_cast %165 : vector<1x256xf32> to vector<1x1x256xf32>
    %167 = vector.broadcast %166 : vector<1x1x256xf32> to vector<8x8x256xf32>
    %168 = arith.mulf %163, %167 : vector<8x8x256xf32>
    %c0_137 = arith.constant 0 : index
    %c1_138 = arith.constant 1 : index
    %c0_139 = arith.constant 0 : index
    %169 = vector.load %arg7[%c0_137, %c1_138, %c0_139] : memref<10x16x256xf32, #tpu.memory_space<vmem>>, vector<8x8x256xf32>
    %c2_140 = arith.constant 2 : index
    %c1_141 = arith.constant 1 : index
    %c0_142 = arith.constant 0 : index
    %170 = vector.load %arg2[%c2_140, %c1_141, %c0_142] : memref<5x9x256xf32, #tpu.memory_space<vmem>>, vector<1x1x256xf32>
    %171 = vector.shape_cast %170 : vector<1x1x256xf32> to vector<1x256xf32>
    %172 = vector.shape_cast %171 : vector<1x256xf32> to vector<1x1x256xf32>
    %173 = vector.broadcast %172 : vector<1x1x256xf32> to vector<8x8x256xf32>
    %174 = arith.mulf %169, %173 : vector<8x8x256xf32>
    %175 = arith.addf %168, %174 : vector<8x8x256xf32>
    %c0_143 = arith.constant 0 : index
    %c2_144 = arith.constant 2 : index
    %c0_145 = arith.constant 0 : index
    %176 = vector.load %arg7[%c0_143, %c2_144, %c0_145] : memref<10x16x256xf32, #tpu.memory_space<vmem>>, vector<8x8x256xf32>
    %c2_146 = arith.constant 2 : index
    %c2_147 = arith.constant 2 : index
    %c0_148 = arith.constant 0 : index
    %177 = vector.load %arg2[%c2_146, %c2_147, %c0_148] : memref<5x9x256xf32, #tpu.memory_space<vmem>>, vector<1x1x256xf32>
    %178 = vector.shape_cast %177 : vector<1x1x256xf32> to vector<1x256xf32>
    %179 = vector.shape_cast %178 : vector<1x256xf32> to vector<1x1x256xf32>
    %180 = vector.broadcast %179 : vector<1x1x256xf32> to vector<8x8x256xf32>
    %181 = arith.mulf %176, %180 : vector<8x8x256xf32>
    %182 = arith.addf %175, %181 : vector<8x8x256xf32>
    %c1_149 = arith.constant 1 : index
    %c0_150 = arith.constant 0 : index
    %c0_151 = arith.constant 0 : index
    %183 = vector.load %arg7[%c1_149, %c0_150, %c0_151] : memref<10x16x256xf32, #tpu.memory_space<vmem>>, vector<8x8x256xf32>
    %c2_152 = arith.constant 2 : index
    %c3_153 = arith.constant 3 : index
    %c0_154 = arith.constant 0 : index
    %184 = vector.load %arg2[%c2_152, %c3_153, %c0_154] : memref<5x9x256xf32, #tpu.memory_space<vmem>>, vector<1x1x256xf32>
    %185 = vector.shape_cast %184 : vector<1x1x256xf32> to vector<1x256xf32>
    %186 = vector.shape_cast %185 : vector<1x256xf32> to vector<1x1x256xf32>
    %187 = vector.broadcast %186 : vector<1x1x256xf32> to vector<8x8x256xf32>
    %188 = arith.mulf %183, %187 : vector<8x8x256xf32>
    %189 = arith.addf %182, %188 : vector<8x8x256xf32>
    %c1_155 = arith.constant 1 : index
    %c1_156 = arith.constant 1 : index
    %c0_157 = arith.constant 0 : index
    %190 = vector.load %arg7[%c1_155, %c1_156, %c0_157] : memref<10x16x256xf32, #tpu.memory_space<vmem>>, vector<8x8x256xf32>
    %c2_158 = arith.constant 2 : index
    %c4_159 = arith.constant 4 : index
    %c0_160 = arith.constant 0 : index
    %191 = vector.load %arg2[%c2_158, %c4_159, %c0_160] : memref<5x9x256xf32, #tpu.memory_space<vmem>>, vector<1x1x256xf32>
    %192 = vector.shape_cast %191 : vector<1x1x256xf32> to vector<1x256xf32>
    %193 = vector.shape_cast %192 : vector<1x256xf32> to vector<1x1x256xf32>
    %194 = vector.broadcast %193 : vector<1x1x256xf32> to vector<8x8x256xf32>
    %195 = arith.mulf %190, %194 : vector<8x8x256xf32>
    %196 = arith.addf %189, %195 : vector<8x8x256xf32>
    %c1_161 = arith.constant 1 : index
    %c2_162 = arith.constant 2 : index
    %c0_163 = arith.constant 0 : index
    %197 = vector.load %arg7[%c1_161, %c2_162, %c0_163] : memref<10x16x256xf32, #tpu.memory_space<vmem>>, vector<8x8x256xf32>
    %c2_164 = arith.constant 2 : index
    %c5_165 = arith.constant 5 : index
    %c0_166 = arith.constant 0 : index
    %198 = vector.load %arg2[%c2_164, %c5_165, %c0_166] : memref<5x9x256xf32, #tpu.memory_space<vmem>>, vector<1x1x256xf32>
    %199 = vector.shape_cast %198 : vector<1x1x256xf32> to vector<1x256xf32>
    %200 = vector.shape_cast %199 : vector<1x256xf32> to vector<1x1x256xf32>
    %201 = vector.broadcast %200 : vector<1x1x256xf32> to vector<8x8x256xf32>
    %202 = arith.mulf %197, %201 : vector<8x8x256xf32>
    %203 = arith.addf %196, %202 : vector<8x8x256xf32>
    %c2_167 = arith.constant 2 : index
    %c0_168 = arith.constant 0 : index
    %c0_169 = arith.constant 0 : index
    %204 = vector.load %arg7[%c2_167, %c0_168, %c0_169] : memref<10x16x256xf32, #tpu.memory_space<vmem>>, vector<8x8x256xf32>
    %c2_170 = arith.constant 2 : index
    %c6_171 = arith.constant 6 : index
    %c0_172 = arith.constant 0 : index
    %205 = vector.load %arg2[%c2_170, %c6_171, %c0_172] : memref<5x9x256xf32, #tpu.memory_space<vmem>>, vector<1x1x256xf32>
    %206 = vector.shape_cast %205 : vector<1x1x256xf32> to vector<1x256xf32>
    %207 = vector.shape_cast %206 : vector<1x256xf32> to vector<1x1x256xf32>
    %208 = vector.broadcast %207 : vector<1x1x256xf32> to vector<8x8x256xf32>
    %209 = arith.mulf %204, %208 : vector<8x8x256xf32>
    %210 = arith.addf %203, %209 : vector<8x8x256xf32>
    %c2_173 = arith.constant 2 : index
    %c1_174 = arith.constant 1 : index
    %c0_175 = arith.constant 0 : index
    %211 = vector.load %arg7[%c2_173, %c1_174, %c0_175] : memref<10x16x256xf32, #tpu.memory_space<vmem>>, vector<8x8x256xf32>
    %c2_176 = arith.constant 2 : index
    %c7_177 = arith.constant 7 : index
    %c0_178 = arith.constant 0 : index
    %212 = vector.load %arg2[%c2_176, %c7_177, %c0_178] : memref<5x9x256xf32, #tpu.memory_space<vmem>>, vector<1x1x256xf32>
    %213 = vector.shape_cast %212 : vector<1x1x256xf32> to vector<1x256xf32>
    %214 = vector.shape_cast %213 : vector<1x256xf32> to vector<1x1x256xf32>
    %215 = vector.broadcast %214 : vector<1x1x256xf32> to vector<8x8x256xf32>
    %216 = arith.mulf %211, %215 : vector<8x8x256xf32>
    %217 = arith.addf %210, %216 : vector<8x8x256xf32>
    %c2_179 = arith.constant 2 : index
    %c2_180 = arith.constant 2 : index
    %c0_181 = arith.constant 0 : index
    %218 = vector.load %arg7[%c2_179, %c2_180, %c0_181] : memref<10x16x256xf32, #tpu.memory_space<vmem>>, vector<8x8x256xf32>
    %c2_182 = arith.constant 2 : index
    %c8_183 = arith.constant 8 : index
    %c0_184 = arith.constant 0 : index
    %219 = vector.load %arg2[%c2_182, %c8_183, %c0_184] : memref<5x9x256xf32, #tpu.memory_space<vmem>>, vector<1x1x256xf32>
    %220 = vector.shape_cast %219 : vector<1x1x256xf32> to vector<1x256xf32>
    %221 = vector.shape_cast %220 : vector<1x256xf32> to vector<1x1x256xf32>
    %222 = vector.broadcast %221 : vector<1x1x256xf32> to vector<8x8x256xf32>
    %223 = arith.mulf %218, %222 : vector<8x8x256xf32>
    %224 = arith.addf %217, %223 : vector<8x8x256xf32>
    %225 = vector.shape_cast %224 : vector<8x8x256xf32> to vector<64x256xf32>
    %226 = arith.truncf %225 : vector<64x256xf32> to vector<64x256xbf16>
    %c2_185 = arith.constant 2 : index
    %c0_186 = arith.constant 0 : index
    %c0_187 = arith.constant 0 : index
    %227 = vector.load %arg3[%c2_185, %c0_186, %c0_187] : memref<5x256x256xbf16, #tpu.memory_space<vmem>>, vector<1x256x256xbf16>
    %228 = vector.shape_cast %227 : vector<1x256x256xbf16> to vector<256x256xbf16>
    %cst_188 = arith.constant dense<0.000000e+00> : vector<64x256xf32>
    %229 = tpu.matmul %226, %228, %cst_188 {dimension_numbers = #tpu.dot_dimension_numbers<[1], [0], [0], [1], [0, 0, 1, 1], [], []>} : vector<64x256xbf16>, vector<256x256xbf16>, vector<64x256xf32> -> vector<64x256xf32>
    %c2_189 = arith.constant 2 : index
    %c0_190 = arith.constant 0 : index
    %c0_191 = arith.constant 0 : index
    %230 = vector.load %arg4[%c2_189, %c0_190, %c0_191] : memref<5x1x256xf32, #tpu.memory_space<vmem>>, vector<1x1x256xf32>
    %231 = vector.shape_cast %230 : vector<1x1x256xf32> to vector<1x256xf32>
    %232 = vector.broadcast %231 : vector<1x256xf32> to vector<64x256xf32>
    %233 = arith.addf %229, %232 : vector<64x256xf32>
    %234 = arith.negf %233 : vector<64x256xf32>
    %235 = math.exp %234 : vector<64x256xf32>
    %cst_192 = arith.constant 1.000000e+00 : f32
    %236 = vector.broadcast %cst_192 : f32 to vector<64x256xf32>
    %237 = arith.addf %236, %235 : vector<64x256xf32>
    %238 = arith.divf %236, %237 : vector<64x256xf32>
    %239 = arith.mulf %233, %238 : vector<64x256xf32>
    %240 = vector.shape_cast %239 : vector<64x256xf32> to vector<8x8x256xf32>
    %c1_193 = arith.constant 1 : index
    %c1_194 = arith.constant 1 : index
    %c0_195 = arith.constant 0 : index
    %241 = vector.load %arg7[%c1_193, %c1_194, %c0_195] : memref<10x16x256xf32, #tpu.memory_space<vmem>>, vector<8x8x256xf32>
    tpu.vector_store %arg7[%c1_193, %c1_194, %c0_195], %240 {strides = array<i32>} : memref<10x16x256xf32, #tpu.memory_space<vmem>>, vector<8x8x256xf32>,
    %c0_196 = arith.constant 0 : index
    %c0_197 = arith.constant 0 : index
    %c0_198 = arith.constant 0 : index
    %242 = vector.load %arg7[%c0_196, %c0_197, %c0_198] : memref<10x16x256xf32, #tpu.memory_space<vmem>>, vector<8x8x256xf32>
    %c3_199 = arith.constant 3 : index
    %c0_200 = arith.constant 0 : index
    %c0_201 = arith.constant 0 : index
    %243 = vector.load %arg2[%c3_199, %c0_200, %c0_201] : memref<5x9x256xf32, #tpu.memory_space<vmem>>, vector<1x1x256xf32>
    %244 = vector.shape_cast %243 : vector<1x1x256xf32> to vector<1x256xf32>
    %245 = vector.shape_cast %244 : vector<1x256xf32> to vector<1x1x256xf32>
    %246 = vector.broadcast %245 : vector<1x1x256xf32> to vector<8x8x256xf32>
    %247 = arith.mulf %242, %246 : vector<8x8x256xf32>
    %c0_202 = arith.constant 0 : index
    %c1_203 = arith.constant 1 : index
    %c0_204 = arith.constant 0 : index
    %248 = vector.load %arg7[%c0_202, %c1_203, %c0_204] : memref<10x16x256xf32, #tpu.memory_space<vmem>>, vector<8x8x256xf32>
    %c3_205 = arith.constant 3 : index
    %c1_206 = arith.constant 1 : index
    %c0_207 = arith.constant 0 : index
    %249 = vector.load %arg2[%c3_205, %c1_206, %c0_207] : memref<5x9x256xf32, #tpu.memory_space<vmem>>, vector<1x1x256xf32>
    %250 = vector.shape_cast %249 : vector<1x1x256xf32> to vector<1x256xf32>
    %251 = vector.shape_cast %250 : vector<1x256xf32> to vector<1x1x256xf32>
    %252 = vector.broadcast %251 : vector<1x1x256xf32> to vector<8x8x256xf32>
    %253 = arith.mulf %248, %252 : vector<8x8x256xf32>
    %254 = arith.addf %247, %253 : vector<8x8x256xf32>
    %c0_208 = arith.constant 0 : index
    %c2_209 = arith.constant 2 : index
    %c0_210 = arith.constant 0 : index
    %255 = vector.load %arg7[%c0_208, %c2_209, %c0_210] : memref<10x16x256xf32, #tpu.memory_space<vmem>>, vector<8x8x256xf32>
    %c3_211 = arith.constant 3 : index
    %c2_212 = arith.constant 2 : index
    %c0_213 = arith.constant 0 : index
    %256 = vector.load %arg2[%c3_211, %c2_212, %c0_213] : memref<5x9x256xf32, #tpu.memory_space<vmem>>, vector<1x1x256xf32>
    %257 = vector.shape_cast %256 : vector<1x1x256xf32> to vector<1x256xf32>
    %258 = vector.shape_cast %257 : vector<1x256xf32> to vector<1x1x256xf32>
    %259 = vector.broadcast %258 : vector<1x1x256xf32> to vector<8x8x256xf32>
    %260 = arith.mulf %255, %259 : vector<8x8x256xf32>
    %261 = arith.addf %254, %260 : vector<8x8x256xf32>
    %c1_214 = arith.constant 1 : index
    %c0_215 = arith.constant 0 : index
    %c0_216 = arith.constant 0 : index
    %262 = vector.load %arg7[%c1_214, %c0_215, %c0_216] : memref<10x16x256xf32, #tpu.memory_space<vmem>>, vector<8x8x256xf32>
    %c3_217 = arith.constant 3 : index
    %c3_218 = arith.constant 3 : index
    %c0_219 = arith.constant 0 : index
    %263 = vector.load %arg2[%c3_217, %c3_218, %c0_219] : memref<5x9x256xf32, #tpu.memory_space<vmem>>, vector<1x1x256xf32>
    %264 = vector.shape_cast %263 : vector<1x1x256xf32> to vector<1x256xf32>
    %265 = vector.shape_cast %264 : vector<1x256xf32> to vector<1x1x256xf32>
    %266 = vector.broadcast %265 : vector<1x1x256xf32> to vector<8x8x256xf32>
    %267 = arith.mulf %262, %266 : vector<8x8x256xf32>
    %268 = arith.addf %261, %267 : vector<8x8x256xf32>
    %c1_220 = arith.constant 1 : index
    %c1_221 = arith.constant 1 : index
    %c0_222 = arith.constant 0 : index
    %269 = vector.load %arg7[%c1_220, %c1_221, %c0_222] : memref<10x16x256xf32, #tpu.memory_space<vmem>>, vector<8x8x256xf32>
    %c3_223 = arith.constant 3 : index
    %c4_224 = arith.constant 4 : index
    %c0_225 = arith.constant 0 : index
    %270 = vector.load %arg2[%c3_223, %c4_224, %c0_225] : memref<5x9x256xf32, #tpu.memory_space<vmem>>, vector<1x1x256xf32>
    %271 = vector.shape_cast %270 : vector<1x1x256xf32> to vector<1x256xf32>
    %272 = vector.shape_cast %271 : vector<1x256xf32> to vector<1x1x256xf32>
    %273 = vector.broadcast %272 : vector<1x1x256xf32> to vector<8x8x256xf32>
    %274 = arith.mulf %269, %273 : vector<8x8x256xf32>
    %275 = arith.addf %268, %274 : vector<8x8x256xf32>
    %c1_226 = arith.constant 1 : index
    %c2_227 = arith.constant 2 : index
    %c0_228 = arith.constant 0 : index
    %276 = vector.load %arg7[%c1_226, %c2_227, %c0_228] : memref<10x16x256xf32, #tpu.memory_space<vmem>>, vector<8x8x256xf32>
    %c3_229 = arith.constant 3 : index
    %c5_230 = arith.constant 5 : index
    %c0_231 = arith.constant 0 : index
    %277 = vector.load %arg2[%c3_229, %c5_230, %c0_231] : memref<5x9x256xf32, #tpu.memory_space<vmem>>, vector<1x1x256xf32>
    %278 = vector.shape_cast %277 : vector<1x1x256xf32> to vector<1x256xf32>
    %279 = vector.shape_cast %278 : vector<1x256xf32> to vector<1x1x256xf32>
    %280 = vector.broadcast %279 : vector<1x1x256xf32> to vector<8x8x256xf32>
    %281 = arith.mulf %276, %280 : vector<8x8x256xf32>
    %282 = arith.addf %275, %281 : vector<8x8x256xf32>
    %c2_232 = arith.constant 2 : index
    %c0_233 = arith.constant 0 : index
    %c0_234 = arith.constant 0 : index
    %283 = vector.load %arg7[%c2_232, %c0_233, %c0_234] : memref<10x16x256xf32, #tpu.memory_space<vmem>>, vector<8x8x256xf32>
    %c3_235 = arith.constant 3 : index
    %c6_236 = arith.constant 6 : index
    %c0_237 = arith.constant 0 : index
    %284 = vector.load %arg2[%c3_235, %c6_236, %c0_237] : memref<5x9x256xf32, #tpu.memory_space<vmem>>, vector<1x1x256xf32>
    %285 = vector.shape_cast %284 : vector<1x1x256xf32> to vector<1x256xf32>
    %286 = vector.shape_cast %285 : vector<1x256xf32> to vector<1x1x256xf32>
    %287 = vector.broadcast %286 : vector<1x1x256xf32> to vector<8x8x256xf32>
    %288 = arith.mulf %283, %287 : vector<8x8x256xf32>
    %289 = arith.addf %282, %288 : vector<8x8x256xf32>
    %c2_238 = arith.constant 2 : index
    %c1_239 = arith.constant 1 : index
    %c0_240 = arith.constant 0 : index
    %290 = vector.load %arg7[%c2_238, %c1_239, %c0_240] : memref<10x16x256xf32, #tpu.memory_space<vmem>>, vector<8x8x256xf32>
    %c3_241 = arith.constant 3 : index
    %c7_242 = arith.constant 7 : index
    %c0_243 = arith.constant 0 : index
    %291 = vector.load %arg2[%c3_241, %c7_242, %c0_243] : memref<5x9x256xf32, #tpu.memory_space<vmem>>, vector<1x1x256xf32>
    %292 = vector.shape_cast %291 : vector<1x1x256xf32> to vector<1x256xf32>
    %293 = vector.shape_cast %292 : vector<1x256xf32> to vector<1x1x256xf32>
    %294 = vector.broadcast %293 : vector<1x1x256xf32> to vector<8x8x256xf32>
    %295 = arith.mulf %290, %294 : vector<8x8x256xf32>
    %296 = arith.addf %289, %295 : vector<8x8x256xf32>
    %c2_244 = arith.constant 2 : index
    %c2_245 = arith.constant 2 : index
    %c0_246 = arith.constant 0 : index
    %297 = vector.load %arg7[%c2_244, %c2_245, %c0_246] : memref<10x16x256xf32, #tpu.memory_space<vmem>>, vector<8x8x256xf32>
    %c3_247 = arith.constant 3 : index
    %c8_248 = arith.constant 8 : index
    %c0_249 = arith.constant 0 : index
    %298 = vector.load %arg2[%c3_247, %c8_248, %c0_249] : memref<5x9x256xf32, #tpu.memory_space<vmem>>, vector<1x1x256xf32>
    %299 = vector.shape_cast %298 : vector<1x1x256xf32> to vector<1x256xf32>
    %300 = vector.shape_cast %299 : vector<1x256xf32> to vector<1x1x256xf32>
    %301 = vector.broadcast %300 : vector<1x1x256xf32> to vector<8x8x256xf32>
    %302 = arith.mulf %297, %301 : vector<8x8x256xf32>
    %303 = arith.addf %296, %302 : vector<8x8x256xf32>
    %304 = vector.shape_cast %303 : vector<8x8x256xf32> to vector<64x256xf32>
    %305 = arith.truncf %304 : vector<64x256xf32> to vector<64x256xbf16>
    %c3_250 = arith.constant 3 : index
    %c0_251 = arith.constant 0 : index
    %c0_252 = arith.constant 0 : index
    %306 = vector.load %arg3[%c3_250, %c0_251, %c0_252] : memref<5x256x256xbf16, #tpu.memory_space<vmem>>, vector<1x256x256xbf16>
    %307 = vector.shape_cast %306 : vector<1x256x256xbf16> to vector<256x256xbf16>
    %cst_253 = arith.constant dense<0.000000e+00> : vector<64x256xf32>
    %308 = tpu.matmul %305, %307, %cst_253 {dimension_numbers = #tpu.dot_dimension_numbers<[1], [0], [0], [1], [0, 0, 1, 1], [], []>} : vector<64x256xbf16>, vector<256x256xbf16>, vector<64x256xf32> -> vector<64x256xf32>
    %c3_254 = arith.constant 3 : index
    %c0_255 = arith.constant 0 : index
    %c0_256 = arith.constant 0 : index
    %309 = vector.load %arg4[%c3_254, %c0_255, %c0_256] : memref<5x1x256xf32, #tpu.memory_space<vmem>>, vector<1x1x256xf32>
    %310 = vector.shape_cast %309 : vector<1x1x256xf32> to vector<1x256xf32>
    %311 = vector.broadcast %310 : vector<1x256xf32> to vector<64x256xf32>
    %312 = arith.addf %308, %311 : vector<64x256xf32>
    %313 = arith.negf %312 : vector<64x256xf32>
    %314 = math.exp %313 : vector<64x256xf32>
    %cst_257 = arith.constant 1.000000e+00 : f32
    %315 = vector.broadcast %cst_257 : f32 to vector<64x256xf32>
    %316 = arith.addf %315, %314 : vector<64x256xf32>
    %317 = arith.divf %315, %316 : vector<64x256xf32>
    %318 = arith.mulf %312, %317 : vector<64x256xf32>
    %319 = vector.shape_cast %318 : vector<64x256xf32> to vector<8x8x256xf32>
    %c1_258 = arith.constant 1 : index
    %c1_259 = arith.constant 1 : index
    %c0_260 = arith.constant 0 : index
    %320 = vector.load %arg7[%c1_258, %c1_259, %c0_260] : memref<10x16x256xf32, #tpu.memory_space<vmem>>, vector<8x8x256xf32>
    tpu.vector_store %arg7[%c1_258, %c1_259, %c0_260], %319 {strides = array<i32>} : memref<10x16x256xf32, #tpu.memory_space<vmem>>, vector<8x8x256xf32>,
    %c0_261 = arith.constant 0 : index
    %c0_262 = arith.constant 0 : index
    %c0_263 = arith.constant 0 : index
    %321 = vector.load %arg7[%c0_261, %c0_262, %c0_263] : memref<10x16x256xf32, #tpu.memory_space<vmem>>, vector<8x8x256xf32>
    %c4_264 = arith.constant 4 : index
    %c0_265 = arith.constant 0 : index
    %c0_266 = arith.constant 0 : index
    %322 = vector.load %arg2[%c4_264, %c0_265, %c0_266] : memref<5x9x256xf32, #tpu.memory_space<vmem>>, vector<1x1x256xf32>
    %323 = vector.shape_cast %322 : vector<1x1x256xf32> to vector<1x256xf32>
    %324 = vector.shape_cast %323 : vector<1x256xf32> to vector<1x1x256xf32>
    %325 = vector.broadcast %324 : vector<1x1x256xf32> to vector<8x8x256xf32>
    %326 = arith.mulf %321, %325 : vector<8x8x256xf32>
    %c0_267 = arith.constant 0 : index
    %c1_268 = arith.constant 1 : index
    %c0_269 = arith.constant 0 : index
    %327 = vector.load %arg7[%c0_267, %c1_268, %c0_269] : memref<10x16x256xf32, #tpu.memory_space<vmem>>, vector<8x8x256xf32>
    %c4_270 = arith.constant 4 : index
    %c1_271 = arith.constant 1 : index
    %c0_272 = arith.constant 0 : index
    %328 = vector.load %arg2[%c4_270, %c1_271, %c0_272] : memref<5x9x256xf32, #tpu.memory_space<vmem>>, vector<1x1x256xf32>
    %329 = vector.shape_cast %328 : vector<1x1x256xf32> to vector<1x256xf32>
    %330 = vector.shape_cast %329 : vector<1x256xf32> to vector<1x1x256xf32>
    %331 = vector.broadcast %330 : vector<1x1x256xf32> to vector<8x8x256xf32>
    %332 = arith.mulf %327, %331 : vector<8x8x256xf32>
    %333 = arith.addf %326, %332 : vector<8x8x256xf32>
    %c0_273 = arith.constant 0 : index
    %c2_274 = arith.constant 2 : index
    %c0_275 = arith.constant 0 : index
    %334 = vector.load %arg7[%c0_273, %c2_274, %c0_275] : memref<10x16x256xf32, #tpu.memory_space<vmem>>, vector<8x8x256xf32>
    %c4_276 = arith.constant 4 : index
    %c2_277 = arith.constant 2 : index
    %c0_278 = arith.constant 0 : index
    %335 = vector.load %arg2[%c4_276, %c2_277, %c0_278] : memref<5x9x256xf32, #tpu.memory_space<vmem>>, vector<1x1x256xf32>
    %336 = vector.shape_cast %335 : vector<1x1x256xf32> to vector<1x256xf32>
    %337 = vector.shape_cast %336 : vector<1x256xf32> to vector<1x1x256xf32>
    %338 = vector.broadcast %337 : vector<1x1x256xf32> to vector<8x8x256xf32>
    %339 = arith.mulf %334, %338 : vector<8x8x256xf32>
    %340 = arith.addf %333, %339 : vector<8x8x256xf32>
    %c1_279 = arith.constant 1 : index
    %c0_280 = arith.constant 0 : index
    %c0_281 = arith.constant 0 : index
    %341 = vector.load %arg7[%c1_279, %c0_280, %c0_281] : memref<10x16x256xf32, #tpu.memory_space<vmem>>, vector<8x8x256xf32>
    %c4_282 = arith.constant 4 : index
    %c3_283 = arith.constant 3 : index
    %c0_284 = arith.constant 0 : index
    %342 = vector.load %arg2[%c4_282, %c3_283, %c0_284] : memref<5x9x256xf32, #tpu.memory_space<vmem>>, vector<1x1x256xf32>
    %343 = vector.shape_cast %342 : vector<1x1x256xf32> to vector<1x256xf32>
    %344 = vector.shape_cast %343 : vector<1x256xf32> to vector<1x1x256xf32>
    %345 = vector.broadcast %344 : vector<1x1x256xf32> to vector<8x8x256xf32>
    %346 = arith.mulf %341, %345 : vector<8x8x256xf32>
    %347 = arith.addf %340, %346 : vector<8x8x256xf32>
    %c1_285 = arith.constant 1 : index
    %c1_286 = arith.constant 1 : index
    %c0_287 = arith.constant 0 : index
    %348 = vector.load %arg7[%c1_285, %c1_286, %c0_287] : memref<10x16x256xf32, #tpu.memory_space<vmem>>, vector<8x8x256xf32>
    %c4_288 = arith.constant 4 : index
    %c4_289 = arith.constant 4 : index
    %c0_290 = arith.constant 0 : index
    %349 = vector.load %arg2[%c4_288, %c4_289, %c0_290] : memref<5x9x256xf32, #tpu.memory_space<vmem>>, vector<1x1x256xf32>
    %350 = vector.shape_cast %349 : vector<1x1x256xf32> to vector<1x256xf32>
    %351 = vector.shape_cast %350 : vector<1x256xf32> to vector<1x1x256xf32>
    %352 = vector.broadcast %351 : vector<1x1x256xf32> to vector<8x8x256xf32>
    %353 = arith.mulf %348, %352 : vector<8x8x256xf32>
    %354 = arith.addf %347, %353 : vector<8x8x256xf32>
    %c1_291 = arith.constant 1 : index
    %c2_292 = arith.constant 2 : index
    %c0_293 = arith.constant 0 : index
    %355 = vector.load %arg7[%c1_291, %c2_292, %c0_293] : memref<10x16x256xf32, #tpu.memory_space<vmem>>, vector<8x8x256xf32>
    %c4_294 = arith.constant 4 : index
    %c5_295 = arith.constant 5 : index
    %c0_296 = arith.constant 0 : index
    %356 = vector.load %arg2[%c4_294, %c5_295, %c0_296] : memref<5x9x256xf32, #tpu.memory_space<vmem>>, vector<1x1x256xf32>
    %357 = vector.shape_cast %356 : vector<1x1x256xf32> to vector<1x256xf32>
    %358 = vector.shape_cast %357 : vector<1x256xf32> to vector<1x1x256xf32>
    %359 = vector.broadcast %358 : vector<1x1x256xf32> to vector<8x8x256xf32>
    %360 = arith.mulf %355, %359 : vector<8x8x256xf32>
    %361 = arith.addf %354, %360 : vector<8x8x256xf32>
    %c2_297 = arith.constant 2 : index
    %c0_298 = arith.constant 0 : index
    %c0_299 = arith.constant 0 : index
    %362 = vector.load %arg7[%c2_297, %c0_298, %c0_299] : memref<10x16x256xf32, #tpu.memory_space<vmem>>, vector<8x8x256xf32>
    %c4_300 = arith.constant 4 : index
    %c6_301 = arith.constant 6 : index
    %c0_302 = arith.constant 0 : index
    %363 = vector.load %arg2[%c4_300, %c6_301, %c0_302] : memref<5x9x256xf32, #tpu.memory_space<vmem>>, vector<1x1x256xf32>
    %364 = vector.shape_cast %363 : vector<1x1x256xf32> to vector<1x256xf32>
    %365 = vector.shape_cast %364 : vector<1x256xf32> to vector<1x1x256xf32>
    %366 = vector.broadcast %365 : vector<1x1x256xf32> to vector<8x8x256xf32>
    %367 = arith.mulf %362, %366 : vector<8x8x256xf32>
    %368 = arith.addf %361, %367 : vector<8x8x256xf32>
    %c2_303 = arith.constant 2 : index
    %c1_304 = arith.constant 1 : index
    %c0_305 = arith.constant 0 : index
    %369 = vector.load %arg7[%c2_303, %c1_304, %c0_305] : memref<10x16x256xf32, #tpu.memory_space<vmem>>, vector<8x8x256xf32>
    %c4_306 = arith.constant 4 : index
    %c7_307 = arith.constant 7 : index
    %c0_308 = arith.constant 0 : index
    %370 = vector.load %arg2[%c4_306, %c7_307, %c0_308] : memref<5x9x256xf32, #tpu.memory_space<vmem>>, vector<1x1x256xf32>
    %371 = vector.shape_cast %370 : vector<1x1x256xf32> to vector<1x256xf32>
    %372 = vector.shape_cast %371 : vector<1x256xf32> to vector<1x1x256xf32>
    %373 = vector.broadcast %372 : vector<1x1x256xf32> to vector<8x8x256xf32>
    %374 = arith.mulf %369, %373 : vector<8x8x256xf32>
    %375 = arith.addf %368, %374 : vector<8x8x256xf32>
    %c2_309 = arith.constant 2 : index
    %c2_310 = arith.constant 2 : index
    %c0_311 = arith.constant 0 : index
    %376 = vector.load %arg7[%c2_309, %c2_310, %c0_311] : memref<10x16x256xf32, #tpu.memory_space<vmem>>, vector<8x8x256xf32>
    %c4_312 = arith.constant 4 : index
    %c8_313 = arith.constant 8 : index
    %c0_314 = arith.constant 0 : index
    %377 = vector.load %arg2[%c4_312, %c8_313, %c0_314] : memref<5x9x256xf32, #tpu.memory_space<vmem>>, vector<1x1x256xf32>
    %378 = vector.shape_cast %377 : vector<1x1x256xf32> to vector<1x256xf32>
    %379 = vector.shape_cast %378 : vector<1x256xf32> to vector<1x1x256xf32>
    %380 = vector.broadcast %379 : vector<1x1x256xf32> to vector<8x8x256xf32>
    %381 = arith.mulf %376, %380 : vector<8x8x256xf32>
    %382 = arith.addf %375, %381 : vector<8x8x256xf32>
    %383 = vector.shape_cast %382 : vector<8x8x256xf32> to vector<64x256xf32>
    %384 = arith.truncf %383 : vector<64x256xf32> to vector<64x256xbf16>
    %c4_315 = arith.constant 4 : index
    %c0_316 = arith.constant 0 : index
    %c0_317 = arith.constant 0 : index
    %385 = vector.load %arg3[%c4_315, %c0_316, %c0_317] : memref<5x256x256xbf16, #tpu.memory_space<vmem>>, vector<1x256x256xbf16>
    %386 = vector.shape_cast %385 : vector<1x256x256xbf16> to vector<256x256xbf16>
    %cst_318 = arith.constant dense<0.000000e+00> : vector<64x256xf32>
    %387 = tpu.matmul %384, %386, %cst_318 {dimension_numbers = #tpu.dot_dimension_numbers<[1], [0], [0], [1], [0, 0, 1, 1], [], []>} : vector<64x256xbf16>, vector<256x256xbf16>, vector<64x256xf32> -> vector<64x256xf32>
    %c4_319 = arith.constant 4 : index
    %c0_320 = arith.constant 0 : index
    %c0_321 = arith.constant 0 : index
    %388 = vector.load %arg4[%c4_319, %c0_320, %c0_321] : memref<5x1x256xf32, #tpu.memory_space<vmem>>, vector<1x1x256xf32>
    %389 = vector.shape_cast %388 : vector<1x1x256xf32> to vector<1x256xf32>
    %390 = vector.broadcast %389 : vector<1x256xf32> to vector<64x256xf32>
    %391 = arith.addf %387, %390 : vector<64x256xf32>
    %392 = arith.negf %391 : vector<64x256xf32>
    %393 = math.exp %392 : vector<64x256xf32>
    %cst_322 = arith.constant 1.000000e+00 : f32
    %394 = vector.broadcast %cst_322 : f32 to vector<64x256xf32>
    %395 = arith.addf %394, %393 : vector<64x256xf32>
    %396 = arith.divf %394, %395 : vector<64x256xf32>
    %397 = arith.mulf %391, %396 : vector<64x256xf32>
    %c0_323 = arith.constant 0 : index
    %c0_324 = arith.constant 0 : index
    %398 = vector.load %arg5[%c0_323, %c0_324] : memref<256x64xf32, #tpu.memory_space<vmem>>, vector<256x64xf32>
    %cst_325 = arith.constant dense<0.000000e+00> : vector<256x256xf32>
    %399 = tpu.matmul %398, %397, %cst_325 {dimension_numbers = #tpu.dot_dimension_numbers<[1], [0], [0], [1], [0, 0, 1, 1], [], []>} : vector<256x64xf32>, vector<64x256xf32>, vector<256x256xf32> -> vector<256x256xf32>
    %c0_326 = arith.constant 0 : index
    %c0_327 = arith.constant 0 : index
    %c0_328 = arith.constant 0 : index
    %400 = vector.load %arg6[%c0_326, %c0_327, %c0_328] : memref<1x256x256xf32, #tpu.memory_space<vmem>>, vector<1x256x256xf32>
    %401 = vector.shape_cast %400 : vector<1x256x256xf32> to vector<256x256xf32>
    %402 = vector.shape_cast %399 : vector<256x256xf32> to vector<1x256x256xf32>
    tpu.vector_store %arg6[%c0_326, %c0_327, %c0_328], %402 {strides = array<i32>} : memref<1x256x256xf32, #tpu.memory_space<vmem>>, vector<1x256x256xf32>,
    return
  }
  func.func @transform_0(%arg0: i32) -> (i32, i32, i32, i32) {
    %c0_i32 = arith.constant 0 : i32
    %c0_i32_0 = arith.constant 0 : i32
    %c0_i32_1 = arith.constant 0 : i32
    %c0_i32_2 = arith.constant 0 : i32
    return %arg0, %c0_i32, %c0_i32_0, %c0_i32_1 : i32, i32, i32, i32
  }
  func.func @transform_1(%arg0: i32) -> (i32, i32, i32) {
    %c0_i32 = arith.constant 0 : i32
    %c0_i32_0 = arith.constant 0 : i32
    %c0_i32_1 = arith.constant 0 : i32
    %c0_i32_2 = arith.constant 0 : i32
    return %c0_i32, %c0_i32_0, %c0_i32_1 : i32, i32, i32
  }
  func.func @transform_2(%arg0: i32) -> (i32, i32, i32) {
    %c0_i32 = arith.constant 0 : i32
    %c0_i32_0 = arith.constant 0 : i32
    %c0_i32_1 = arith.constant 0 : i32
    %c0_i32_2 = arith.constant 0 : i32
    return %c0_i32, %c0_i32_0, %c0_i32_1 : i32, i32, i32
  }
  func.func @transform_3(%arg0: i32) -> (i32, i32, i32) {
    %c0_i32 = arith.constant 0 : i32
    %c0_i32_0 = arith.constant 0 : i32
    %c0_i32_1 = arith.constant 0 : i32
    %c0_i32_2 = arith.constant 0 : i32
    return %c0_i32, %c0_i32_0, %c0_i32_1 : i32, i32, i32
  }
  func.func @transform_4(%arg0: i32) -> (i32, i32) {
    %c0_i32 = arith.constant 0 : i32
    %c0_i32_0 = arith.constant 0 : i32
    %c0_i32_1 = arith.constant 0 : i32
    return %c0_i32, %c0_i32_0 : i32, i32
  }
  func.func @transform_5(%arg0: i32) -> (i32, i32, i32) {
    %c0_i32 = arith.constant 0 : i32
    %c0_i32_0 = arith.constant 0 : i32
    %c0_i32_1 = arith.constant 0 : i32
    return %arg0, %c0_i32, %c0_i32_0 : i32, i32, i32
  }
}

</mosaic_0001>

<llo_original>
// kernel: correction_module.1
$region0: #{correction_module.1}
  #allocation0 [shape = 'u32[]', space=smem, size = 0x4, offset = 0x4, fixed_abs, tag = 'smem constant byte address 0x4 - core index']
  #allocation1 [shape = 'u32[144,128]{1,0:T(1,128)}', space=vmem, size = 0x12000, scoped, tag = 'internal scratch']
  #allocation2 [shape = 'f32[10,16,256]{2,1,0:T(8,128)}', space=vmem, size = 0x28000, scoped, tag = 'scratch operand']
  %s0 = inlined_call_operand.vmem [shape: f32[2,8,8,256], index: 0, kind: input, shape index: {}]
  %s1 = inlined_call_operand.vmem [shape: f32[5,9,256], index: 1, kind: input, shape index: {}]
  %s2 = inlined_call_operand.vmem [shape: bf16[5,256,256], index: 2, kind: input, shape index: {}]
  %s3 = inlined_call_operand.vmem [shape: f32[5,1,256], index: 3, kind: input, shape index: {}]
  %s4 = inlined_call_operand.vmem [shape: f32[256,64], index: 4, kind: input, shape index: {}]
  %s5 = inlined_call_operand.hbm [shape: f32[2,256,256], index: 5, kind: output, shape index: {}]
  %s6 = sld [smem:[#allocation0]]
  $region53: #{correction_module.1} parent=0
    _
  %s8 = ssub.s32 1, %s6
  %s9 = scalar_select 0, %s8, %s6
  $region1: #{correction_module.1} parent=0
    #allocation3 [shape = 'u8[524288]{0}', space=vmem, size = 0x80000, scoped, tag = 'output window, operand 0']
    #allocation4 [shape = 's32[2]{0}', space=sflag, size = 0x8, scoped, tag = 'scoped memory for correction_module.1']
    %10 = vsyncpa [#allocation4], 0
    %s11 = scalar_lea.sflag [#allocation4], 1
    %12 = vsyncpa %s11, 0
    loop: start=0, step=1, limit=4
    $region2: #{correction_module.1} parent=1 // loop_pre_header
      _
    $region3: #{correction_module.1} parent=1 // loop_header
      %s14 = sphi 0, %s18
      %p15 = scmp.ge.s32.totalorder %s14, 4
      %s24 = sphi 0, %s26
      %s27 = sphi 0, %s24
      %s28 = sphi 0, %s27
      %s44 = sphi 0, %s28
      %s48 = sphi 0, %s48
      %s50 = sphi 0, %s48
      %s51 = sphi 0, %s50
      %s65 = sphi 0, %s51
      %s69 = sphi 0, %s69
      %s71 = sphi 0, %s69
      %s72 = sphi 0, %s71
      %s86 = sphi 0, %s72
      %s90 = sphi 0, %s90
      %s92 = sphi 0, %s90
      %s93 = sphi 0, %s92
      %s107 = sphi 0, %s93
      %s111 = sphi 0, %s111
      %s113 = sphi 0, %s111
      %s114 = sphi 0, %s113
      %s128 = sphi 0, %s114
      %s134 = sphi 0, %s136
      %s137 = sphi 0, %s134
      %s138 = sphi 0, %s137
      %s154 = sphi 0, %s138
    $region4: #{correction_module.1} parent=1 // loop_header_branch
      %17 = sbr.rel (%p15) target = $region8
    $region5: #{correction_module.1} parent=1 // loop_body
      %s19 = ssub.s32 %s14, 1
      %s20 = ssub.s32 %s14, 2
      %s21 = sadd.s32 %s14, 1
      %s22 = ssub.s32 %s14, %s21
      %p23 = scmp.eq.s32.totalorder %s22, 0
      %s25 = sadd.s32 %s24, 1
      %s26 = scalar_select %p23, %s24, %s25
      %p29 = pneg %p23
      %p30 = scmp.eq.s32.totalorder %s14, 1
      %p31 = por %p29, %p30
      %p32 = scmp.ne.s32.totalorder %s24, %s27
      %p33 = scmp.eq.s32.totalorder %s14, 0
      %p34 = por %p32, %p33
      %p35 = scmp.ne.s32.totalorder %s24, %s27
      %p36 = scmp.eq.s32.totalorder %s19, 1
      %p37 = por %p35, %p36
      %p38 = scmp.ne.s32.totalorder %s27, %s28
      %p39 = scmp.eq.s32.totalorder %s19, 0
      %p40 = por %p38, %p39
      %p41 = scmp.ne.s32.totalorder %s27, %s28
      %p42 = scmp.eq.s32.totalorder %s20, 1
      %p43 = por %p41, %p42
      %p45 = scmp.ne.s32.totalorder %s28, %s44
      %p46 = scmp.eq.s32.totalorder %s20, 0
      %p47 = por %p45, %p46
      %s49 = sadd.s32 %s48, 1
      %p52 = scmp.eq.s32.totalorder %s14, 1
      %p53 = scmp.ne.s32.totalorder %s48, %s50
      %p54 = scmp.eq.s32.totalorder %s14, 0
      %p55 = por %p53, %p54
      %p56 = scmp.ne.s32.totalorder %s48, %s50
      %p57 = scmp.eq.s32.totalorder %s19, 1
      %p58 = por %p56, %p57
      %p59 = scmp.ne.s32.totalorder %s50, %s51
      %p60 = scmp.eq.s32.totalorder %s19, 0
      %p61 = por %p59, %p60
      %p62 = scmp.ne.s32.totalorder %s50, %s51
      %p63 = scmp.eq.s32.totalorder %s20, 1
      %p64 = por %p62, %p63
      %p66 = scmp.ne.s32.totalorder %s51, %s65
      %p67 = scmp.eq.s32.totalorder %s20, 0
      %p68 = por %p66, %p67
      %s70 = sadd.s32 %s69, 1
      %p73 = scmp.eq.s32.totalorder %s14, 1
      %p74 = scmp.ne.s32.totalorder %s69, %s71
      %p75 = scmp.eq.s32.totalorder %s14, 0
      %p76 = por %p74, %p75
      %p77 = scmp.ne.s32.totalorder %s69, %s71
      %p78 = scmp.eq.s32.totalorder %s19, 1
      %p79 = por %p77, %p78
      %p80 = scmp.ne.s32.totalorder %s71, %s72
      %p81 = scmp.eq.s32.totalorder %s19, 0
      %p82 = por %p80, %p81
      %p83 = scmp.ne.s32.totalorder %s71, %s72
      %p84 = scmp.eq.s32.totalorder %s20, 1
      %p85 = por %p83, %p84
      %p87 = scmp.ne.s32.totalorder %s72, %s86
      %p88 = scmp.eq.s32.totalorder %s20, 0
      %p89 = por %p87, %p88
      %s91 = sadd.s32 %s90, 1
      %p94 = scmp.eq.s32.totalorder %s14, 1
      %p95 = scmp.ne.s32.totalorder %s90, %s92
      %p96 = scmp.eq.s32.totalorder %s14, 0
      %p97 = por %p95, %p96
      %p98 = scmp.ne.s32.totalorder %s90, %s92
      %p99 = scmp.eq.s32.totalorder %s19, 1
      %p100 = por %p98, %p99
      %p101 = scmp.ne.s32.totalorder %s92, %s93
      %p102 = scmp.eq.s32.totalorder %s19, 0
      %p103 = por %p101, %p102
      %p104 = scmp.ne.s32.totalorder %s92, %s93
      %p105 = scmp.eq.s32.totalorder %s20, 1
      %p106 = por %p104, %p105
      %p108 = scmp.ne.s32.totalorder %s93, %s107
      %p109 = scmp.eq.s32.totalorder %s20, 0
      %p110 = por %p108, %p109
      %s112 = sadd.s32 %s111, 1
      %p115 = scmp.eq.s32.totalorder %s14, 1
      %p116 = scmp.ne.s32.totalorder %s111, %s113
      %p117 = scmp.eq.s32.totalorder %s14, 0
      %p118 = por %p116, %p117
      %p119 = scmp.ne.s32.totalorder %s111, %s113
      %p120 = scmp.eq.s32.totalorder %s19, 1
      %p121 = por %p119, %p120
      %p122 = scmp.ne.s32.totalorder %s113, %s114
      %p123 = scmp.eq.s32.totalorder %s19, 0
      %p124 = por %p122, %p123
      %p125 = scmp.ne.s32.totalorder %s113, %s114
      %p126 = scmp.eq.s32.totalorder %s20, 1
      %p127 = por %p125, %p126
      %p129 = scmp.ne.s32.totalorder %s114, %s128
      %p130 = scmp.eq.s32.totalorder %s20, 0
      %p131 = por %p129, %p130
      %s132 = ssub.s32 %s14, %s21
      %p133 = scmp.eq.s32.totalorder %s132, 0
      %s135 = sadd.s32 %s134, 1
      %s136 = scalar_select %p133, %s134, %s135
      %p139 = pneg %p133
      %p140 = scmp.eq.s32.totalorder %s14, 1
      %p141 = por %p139, %p140
      %p142 = scmp.ne.s32.totalorder %s134, %s137
      %p143 = scmp.eq.s32.totalorder %s14, 0
      %p144 = por %p142, %p143
      %p145 = scmp.ne.s32.totalorder %s134, %s137
      %p146 = scmp.eq.s32.totalorder %s19, 1
      %p147 = por %p145, %p146
      %p148 = scmp.ne.s32.totalorder %s137, %s138
      %p149 = scmp.eq.s32.totalorder %s19, 0
      %p150 = por %p148, %p149
      %p151 = scmp.ne.s32.totalorder %s137, %s138
      %p152 = scmp.eq.s32.totalorder %s20, 1
      %p153 = por %p151, %p152
      %p155 = scmp.ne.s32.totalorder %s138, %s154
      %p156 = scmp.eq.s32.totalorder %s20, 0
      %p157 = por %p155, %p156
      %p158 = scmp.le.s32.totalorder 1, %s14
      %p159 = scmp.lt.s32.totalorder %s14, 3
      %p160 = pnand %p158, %p159
      %p161 = pneg %p160
      // Predicated region
      $region9: #{correction_module.1} parent=5 // pred_check
        _
      $region10: #{correction_module.1} parent=5 // pred_check_branch
        %163 = sbr.rel (%p160) target = $region12
      $region11: #{correction_module.1} parent=5 // pred_region
        %s164 = ssub.s32 %s14, 1
        // Predicated region
        $region13: #{correction_module.1} parent=11 // pred_check
          %p165 = pneg %p61
        $region14: #{correction_module.1} parent=11 // pred_check_branch
          %167 = sbr.rel (%p165) target = $region16
        $region15: #{correction_module.1} parent=11 // pred_region
          _
        $region16: #{correction_module.1} parent=11 // pred_fallthru
          _
        // Predicated region
        $region17: #{correction_module.1} parent=11 // pred_check
          %p168 = pneg %p82
        $region18: #{correction_module.1} parent=11 // pred_check_branch
          %170 = sbr.rel (%p168) target = $region20
        $region19: #{correction_module.1} parent=11 // pred_region
          _
        $region20: #{correction_module.1} parent=11 // pred_fallthru
          _
        // Predicated region
        $region21: #{correction_module.1} parent=11 // pred_check
          %p171 = pneg %p103
        $region22: #{correction_module.1} parent=11 // pred_check_branch
          %173 = sbr.rel (%p171) target = $region24
        $region23: #{correction_module.1} parent=11 // pred_region
          _
        $region24: #{correction_module.1} parent=11 // pred_fallthru
          _
        // Predicated region
        $region25: #{correction_module.1} parent=11 // pred_check
          %p174 = pneg %p124
        $region26: #{correction_module.1} parent=11 // pred_check_branch
          %176 = sbr.rel (%p174) target = $region28
        $region27: #{correction_module.1} parent=11 // pred_region
          _
        $region28: #{correction_module.1} parent=11 // pred_fallthru
          _
      $region12: #{correction_module.1} parent=5 // pred_fallthru
        _
      %p177 = scmp.lt.s32.totalorder %s14, 2
      // Predicated region
      $region29: #{correction_module.1} parent=5 // pred_check
        %p178 = pneg %p177
      $region30: #{correction_module.1} parent=5 // pred_check_branch
        %180 = sbr.rel (%p178) target = $region32
      $region31: #{correction_module.1} parent=5 // pred_region
        // Predicated region
        $region33: #{correction_module.1} parent=31 // pred_check
          %p181 = pneg %p34
        $region34: #{correction_module.1} parent=31 // pred_check_branch
          %183 = sbr.rel (%p181) target = $region36
        $region35: #{correction_module.1} parent=31 // pred_region
          %p184 = scmp.lt.s32.totalorder %s14, 1
          %s185 = scalar_select %p184, %s14, 1
          %s186 = smul.addr %s185, 16
          %s187 = smul.addr %s186, 8
          %s188 = scalar_lea.vmem %s0, %s187
        $region36: #{correction_module.1} parent=31 // pred_fallthru
          _
      $region32: #{correction_module.1} parent=5 // pred_fallthru
        _
      %p189 = scmp.le.s32.totalorder 1, %s14
      %p190 = scmp.lt.s32.totalorder %s14, 3
      %p191 = pnand %p189, %p190
      %p192 = pneg %p191
      // Predicated region
      $region37: #{correction_module.1} parent=5 // pred_check
        _
      $region38: #{correction_module.1} parent=5 // pred_check_branch
        %194 = sbr.rel (%p191) target = $region40
      $region39: #{correction_module.1} parent=5 // pred_region
        %s195 = ssub.s32 %s14, 1
        %p196 = scmp.lt.s32.totalorder %s19, 1
        %s197 = scalar_select %p196, %s19, 1
        %s198 = smul.addr %s197, 16
        %s199 = smul.addr %s198, 8
        %s200 = scalar_lea.vmem %s0, %s199
        %p201 = pneg %p40
        %p202 = pneg %p37
        %p203 = pneg %p61
        %p204 = pneg %p58
        %p205 = pneg %p82
        %p206 = pneg %p79
        %p207 = pneg %p103
        %p208 = pneg %p100
        %p209 = pneg %p124
        %p210 = pneg %p121
        %p211 = pneg %p150
        %p212 = pneg %p147
        %s213 = sand.u32 %s137, 1
        %s214 = scalar_lea.sflag [#allocation4], %s213
        %s215 = sand.u32 %s137, 1
        %s216 = smul.addr %s215, 512
        %s217 = scalar_lea.vmem [#allocation3], %s216
        %p218 = scmp.lt.s32.totalorder %s19, 1
        %s219 = scalar_select %p218, %s19, 1
        %s220 = smul.addr %s219, 16
        %s221 = smul.addr %s220, 8
        %s222 = scalar_lea.vmem %s0, %s221
        %223 = vst [vmem:[#allocation2] sm:$0xff] 0.0
        %224 = vst [vmem:[#allocation2 + $0x8] sm:$0xff] 0.0
        %225 = vst [vmem:[#allocation2 + $0x10] sm:$0xff] 0.0
        %226 = vst [vmem:[#allocation2 + $0x18] sm:$0xff] 0.0
        %227 = vst [vmem:[#allocation2 + $0x20] sm:$0xff] 0.0
        %228 = vst [vmem:[#allocation2 + $0x28] sm:$0xff] 0.0
        %229 = vst [vmem:[#allocation2 + $0x30] sm:$0xff] 0.0
        %230 = vst [vmem:[#allocation2 + $0x38] sm:$0xff] 0.0
        %231 = vst [vmem:[#allocation2 + $0x40] sm:$0xff] 0.0
        %232 = vst [vmem:[#allocation2 + $0x48] sm:$0xff] 0.0
        %233 = vst [vmem:[#allocation2 + $0x50] sm:$0xff] 0.0
        %234 = vst [vmem:[#allocation2 + $0x58] sm:$0xff] 0.0
        %235 = vst [vmem:[#allocation2 + $0x60] sm:$0xff] 0.0
        %236 = vst [vmem:[#allocation2 + $0x68] sm:$0xff] 0.0
        %237 = vst [vmem:[#allocation2 + $0x70] sm:$0xff] 0.0
        %238 = vst [vmem:[#allocation2 + $0x78] sm:$0xff] 0.0
        %239 = vst [vmem:[#allocation2 + $0x80] sm:$0xff] 0.0
        %240 = vst [vmem:[#allocation2 + $0x88] sm:$0xff] 0.0
        %241 = vst [vmem:[#allocation2 + $0x90] sm:$0xff] 0.0
        %242 = vst [vmem:[#allocation2 + $0x98] sm:$0xff] 0.0
        %243 = vst [vmem:[#allocation2 + $0xa0] sm:$0xff] 0.0
        %244 = vst [vmem:[#allocation2 + $0xa8] sm:$0xff] 0.0
        %245 = vst [vmem:[#allocation2 + $0xb0] sm:$0xff] 0.0
        %246 = vst [vmem:[#allocation2 + $0xb8] sm:$0xff] 0.0
        %247 = vst [vmem:[#allocation2 + $0xc0] sm:$0xff] 0.0
        %248 = vst [vmem:[#allocation2 + $0xc8] sm:$0xff] 0.0
        %249 = vst [vmem:[#allocation2 + $0xd0] sm:$0xff] 0.0
        %250 = vst [vmem:[#allocation2 + $0xd8] sm:$0xff] 0.0
        %251 = vst [vmem:[#allocation2 + $0xe0] sm:$0xff] 0.0
        %252 = vst [vmem:[#allocation2 + $0xe8] sm:$0xff] 0.0
        %253 = vst [vmem:[#allocation2 + $0xf0] sm:$0xff] 0.0
        %254 = vst [vmem:[#allocation2 + $0xf8] sm:$0xff] 0.0
        %255 = vst [vmem:[#allocation2 + $0x100] sm:$0xff] 0.0
        %256 = vst [vmem:[#allocation2 + $0x108] sm:$0xff] 0.0
        %257 = vst [vmem:[#allocation2 + $0x110] sm:$0xff] 0.0
        %258 = vst [vmem:[#allocation2 + $0x118] sm:$0xff] 0.0
        %259 = vst [vmem:[#allocation2 + $0x120] sm:$0xff] 0.0
        %260 = vst [vmem:[#allocation2 + $0x128] sm:$0xff] 0.0
        %261 = vst [vmem:[#allocation2 + $0x130] sm:$0xff] 0.0
        %262 = vst [vmem:[#allocation2 + $0x138] sm:$0xff] 0.0
        %v263 = vld [vmem:[%s222] sm:$0xff]
        %v264 = vld [vmem:[%s222 + $0x8] sm:$0xff]
        %v265 = vld [vmem:[%s222 + $0x10] sm:$0xff]
        %v266 = vld [vmem:[%s222 + $0x18] sm:$0xff]
        %v267 = vld [vmem:[%s222 + $0x20] sm:$0xff]
        %v268 = vld [vmem:[%s222 + $0x28] sm:$0xff]
        %v269 = vld [vmem:[%s222 + $0x30] sm:$0xff]
        %v270 = vld [vmem:[%s222 + $0x38] sm:$0xff]
        %v271 = vld [vmem:[%s222 + $0x40] sm:$0xff]
        %v272 = vld [vmem:[%s222 + $0x48] sm:$0xff]
        %v273 = vld [vmem:[%s222 + $0x50] sm:$0xff]
        %v274 = vld [vmem:[%s222 + $0x58] sm:$0xff]
        %v275 = vld [vmem:[%s222 + $0x60] sm:$0xff]
        %v276 = vld [vmem:[%s222 + $0x68] sm:$0xff]
        %v277 = vld [vmem:[%s222 + $0x70] sm:$0xff]
        %v278 = vld [vmem:[%s222 + $0x78] sm:$0xff]
        %v295 = vrot.slane %v263, 7
        %v296 = vrot.slane %v264, 7
        %v297 = vrot.slane %v265, 7
        %v298 = vrot.slane %v266, 7
        %v299 = vrot.slane %v267, 7
        %v300 = vrot.slane %v268, 7
        %v301 = vrot.slane %v269, 7
        %v302 = vrot.slane %v270, 7
        %v303 = vrot.slane %v271, 7
        %v304 = vrot.slane %v272, 7
        %v305 = vrot.slane %v273, 7
        %v306 = vrot.slane %v274, 7
        %v307 = vrot.slane %v275, 7
        %v308 = vrot.slane %v276, 7
        %v309 = vrot.slane %v277, 7
        %v310 = vrot.slane %v278, 7
        %s327 = scalar_lea.vmem [#allocation2], 32
        %328 = vst [vmem:[%s327] sm:$0xfe] %v295
        %329 = vst [vmem:[%s327 + $0x8] sm:$0xfe] %v296
        %330 = vst [vmem:[%s327 + $0x10] sm:$0x1] %v295
        %331 = vst [vmem:[%s327 + $0x18] sm:$0x1] %v296
        %332 = vst [vmem:[%s327 + $0x20] sm:$0xfe] %v297
        %333 = vst [vmem:[%s327 + $0x28] sm:$0xfe] %v298
        %334 = vst [vmem:[%s327 + $0x30] sm:$0x1] %v297
        %335 = vst [vmem:[%s327 + $0x38] sm:$0x1] %v298
        %336 = vst [vmem:[%s327 + $0x40] sm:$0xfe] %v299
        %337 = vst [vmem:[%s327 + $0x48] sm:$0xfe] %v300
        %338 = vst [vmem:[%s327 + $0x50] sm:$0x1] %v299
        %339 = vst [vmem:[%s327 + $0x58] sm:$0x1] %v300
        %340 = vst [vmem:[%s327 + $0x60] sm:$0xfe] %v301
        %341 = vst [vmem:[%s327 + $0x68] sm:$0xfe] %v302
        %342 = vst [vmem:[%s327 + $0x70] sm:$0x1] %v301
        %343 = vst [vmem:[%s327 + $0x78] sm:$0x1] %v302
        %344 = vst [vmem:[%s327 + $0x80] sm:$0xfe] %v303
        %345 = vst [vmem:[%s327 + $0x88] sm:$0xfe] %v304
        %346 = vst [vmem:[%s327 + $0x90] sm:$0x1] %v303
        %347 = vst [vmem:[%s327 + $0x98] sm:$0x1] %v304
        %348 = vst [vmem:[%s327 + $0xa0] sm:$0xfe] %v305
        %349 = vst [vmem:[%s327 + $0xa8] sm:$0xfe] %v306
        %350 = vst [vmem:[%s327 + $0xb0] sm:$0x1] %v305
        %351 = vst [vmem:[%s327 + $0xb8] sm:$0x1] %v306
        %352 = vst [vmem:[%s327 + $0xc0] sm:$0xfe] %v307
        %353 = vst [vmem:[%s327 + $0xc8] sm:$0xfe] %v308
        %354 = vst [vmem:[%s327 + $0xd0] sm:$0x1] %v307
        %355 = vst [vmem:[%s327 + $0xd8] sm:$0x1] %v308
        %356 = vst [vmem:[%s327 + $0xe0] sm:$0xfe] %v309
        %357 = vst [vmem:[%s327 + $0xe8] sm:$0xfe] %v310
        %358 = vst [vmem:[%s327 + $0xf0] sm:$0x1] %v309
        %359 = vst [vmem:[%s327 + $0xf8] sm:$0x1] %v310
        %v360 = vld [vmem:[#allocation2] sm:$0xff]
        %v361 = vld [vmem:[#allocation2 + $0x8] sm:$0xff]
        %v362 = vld [vmem:[#allocation2 + $0x20] sm:$0xff]
        %v363 = vld [vmem:[#allocation2 + $0x28] sm:$0xff]
        %v364 = vld [vmem:[#allocation2 + $0x40] sm:$0xff]
        %v365 = vld [vmem:[#allocation2 + $0x48] sm:$0xff]
        %v366 = vld [vmem:[#allocation2 + $0x60] sm:$0xff]
        %v367 = vld [vmem:[#allocation2 + $0x68] sm:$0xff]
        %v368 = vld [vmem:[#allocation2 + $0x80] sm:$0xff]
        %v369 = vld [vmem:[#allocation2 + $0x88] sm:$0xff]
        %v370 = vld [vmem:[#allocation2 + $0xa0] sm:$0xff]
        %v371 = vld [vmem:[#allocation2 + $0xa8] sm:$0xff]
        %v372 = vld [vmem:[#allocation2 + $0xc0] sm:$0xff]
        %v373 = vld [vmem:[#allocation2 + $0xc8] sm:$0xff]
        %v374 = vld [vmem:[#allocation2 + $0xe0] sm:$0xff]
        %v375 = vld [vmem:[#allocation2 + $0xe8] sm:$0xff]
        %v376 = vld [vmem:[%s1] ss:$8 sm:$0x3]
        %v378 = vlaneseq
        %v379 = vshrl.u32 %v378, 7
        %v380 = vsub.s32 0, %v379
        %v381 = vrot.slane %v376, %v380
        %v382 = vlaneseq
        %v383 = vshrl.u32 %v382, 7
        %v384 = vsub.s32 1, %v383
        %v385 = vrot.slane %v376, %v384
        %v388 = vmul.f32 %v360, %v381
        %v389 = vmul.f32 %v361, %v385
        %v390 = vmul.f32 %v362, %v381
        %v391 = vmul.f32 %v363, %v385
        %v392 = vmul.f32 %v364, %v381
        %v393 = vmul.f32 %v365, %v385
        %v394 = vmul.f32 %v366, %v381
        %v395 = vmul.f32 %v367, %v385
        %v396 = vmul.f32 %v368, %v381
        %v397 = vmul.f32 %v369, %v385
        %v398 = vmul.f32 %v370, %v381
        %v399 = vmul.f32 %v371, %v385
        %v400 = vmul.f32 %v372, %v381
        %v401 = vmul.f32 %v373, %v385
        %v402 = vmul.f32 %v374, %v381
        %v403 = vmul.f32 %v375, %v385
        %v404 = vld [vmem:[#allocation2] sm:$0xfe]
        %v405 = vld [vmem:[#allocation2 + $0x8] sm:$0xfe]
        %v406 = vld [vmem:[#allocation2 + $0x10] sm:$0x1]
        %v407 = vld [vmem:[#allocation2 + $0x18] sm:$0x1]
        %v408 = vld [vmem:[#allocation2 + $0x20] sm:$0xfe]
        %v409 = vld [vmem:[#allocation2 + $0x28] sm:$0xfe]
        %v410 = vld [vmem:[#allocation2 + $0x30] sm:$0x1]
        %v411 = vld [vmem:[#allocation2 + $0x38] sm:$0x1]
        %v412 = vld [vmem:[#allocation2 + $0x40] sm:$0xfe]
        %v413 = vld [vmem:[#allocation2 + $0x48] sm:$0xfe]
        %v414 = vld [vmem:[#allocation2 + $0x50] sm:$0x1]
        %v415 = vld [vmem:[#allocation2 + $0x58] sm:$0x1]
        %v416 = vld [vmem:[#allocation2 + $0x60] sm:$0xfe]
        %v417 = vld [vmem:[#allocation2 + $0x68] sm:$0xfe]
        %v418 = vld [vmem:[#allocation2 + $0x70] sm:$0x1]
        %v419 = vld [vmem:[#allocation2 + $0x78] sm:$0x1]
        %v420 = vld [vmem:[#allocation2 + $0x80] sm:$0xfe]
        %v421 = vld [vmem:[#allocation2 + $0x88] sm:$0xfe]
        %v422 = vld [vmem:[#allocation2 + $0x90] sm:$0x1]
        %v423 = vld [vmem:[#allocation2 + $0x98] sm:$0x1]
        %v424 = vld [vmem:[#allocation2 + $0xa0] sm:$0xfe]
        %v425 = vld [vmem:[#allocation2 + $0xa8] sm:$0xfe]
        %v426 = vld [vmem:[#allocation2 + $0xb0] sm:$0x1]
        %v427 = vld [vmem:[#allocation2 + $0xb8] sm:$0x1]
        %v428 = vld [vmem:[#allocation2 + $0xc0] sm:$0xfe]
        %v429 = vld [vmem:[#allocation2 + $0xc8] sm:$0xfe]
        %v430 = vld [vmem:[#allocation2 + $0xd0] sm:$0x1]
        %v431 = vld [vmem:[#allocation2 + $0xd8] sm:$0x1]
        %v432 = vld [vmem:[#allocation2 + $0xe0] sm:$0xfe]
        %v433 = vld [vmem:[#allocation2 + $0xe8] sm:$0xfe]
        %v434 = vld [vmem:[#allocation2 + $0xf0] sm:$0x1]
        %v435 = vld [vmem:[#allocation2 + $0xf8] sm:$0x1]
        %s436 = scalar_lea.vmem %s1, 1
        %v437 = vld [vmem:[%s436] ss:$8 sm:$0x3]
        %v439 = vlaneseq
        %v440 = vshrl.u32 %v439, 7
        %v441 = vsub.s32 0, %v440
        %v442 = vrot.slane %v437, %v441
        %v443 = vlaneseq
        %v444 = vshrl.u32 %v443, 7
        %v445 = vsub.s32 1, %v444
        %v446 = vrot.slane %v437, %v445
        %v449 = vmul.f32 %v404, %v442
        %v450 = vmul.f32 %v405, %v446
        %v451 = vmul.f32 %v406, %v442
        %v452 = vmul.f32 %v407, %v446
        %v453 = vmul.f32 %v408, %v442
        %v454 = vmul.f32 %v409, %v446
        %v455 = vmul.f32 %v410, %v442
        %v456 = vmul.f32 %v411, %v446
        %v457 = vmul.f32 %v412, %v442
        %v458 = vmul.f32 %v413, %v446
        %v459 = vmul.f32 %v414, %v442
        %v460 = vmul.f32 %v415, %v446
        %v461 = vmul.f32 %v416, %v442
        %v462 = vmul.f32 %v417, %v446
        %v463 = vmul.f32 %v418, %v442
        %v464 = vmul.f32 %v419, %v446
        %v465 = vmul.f32 %v420, %v442
        %v466 = vmul.f32 %v421, %v446
        %v467 = vmul.f32 %v422, %v442
        %v468 = vmul.f32 %v423, %v446
        %v469 = vmul.f32 %v424, %v442
        %v470 = vmul.f32 %v425, %v446
        %v471 = vmul.f32 %v426, %v442
        %v472 = vmul.f32 %v427, %v446
        %v473 = vmul.f32 %v428, %v442
        %v474 = vmul.f32 %v429, %v446
        %v475 = vmul.f32 %v430, %v442
        %v476 = vmul.f32 %v431, %v446
        %v477 = vmul.f32 %v432, %v442
        %v478 = vmul.f32 %v433, %v446
        %v479 = vmul.f32 %v434, %v442
        %v480 = vmul.f32 %v435, %v446
        %vm513 = vcmask 1046528
        %v514 = vrot.slane %v449, 1
        %v515 = vrot.slane %v451, 1
        %v516 = vsel %vm513, %v514, %v515
        %v517 = vrot.slane %v450, 1
        %v518 = vrot.slane %v452, 1
        %v519 = vsel %vm513, %v517, %v518
        %v520 = vrot.slane %v453, 1
        %v521 = vrot.slane %v455, 1
        %v522 = vsel %vm513, %v520, %v521
        %v523 = vrot.slane %v454, 1
        %v524 = vrot.slane %v456, 1
        %v525 = vsel %vm513, %v523, %v524
        %v526 = vrot.slane %v457, 1
        %v527 = vrot.slane %v459, 1
        %v528 = vsel %vm513, %v526, %v527
        %v529 = vrot.slane %v458, 1
        %v530 = vrot.slane %v460, 1
        %v531 = vsel %vm513, %v529, %v530
        %v532 = vrot.slane %v461, 1
        %v533 = vrot.slane %v463, 1
        %v534 = vsel %vm513, %v532, %v533
        %v535 = vrot.slane %v462, 1
        %v536 = vrot.slane %v464, 1
        %v537 = vsel %vm513, %v535, %v536
        %v538 = vrot.slane %v465, 1
        %v539 = vrot.slane %v467, 1
        %v540 = vsel %vm513, %v538, %v539
        %v541 = vrot.slane %v466, 1
        %v542 = vrot.slane %v468, 1
        %v543 = vsel %vm513, %v541, %v542
        %v544 = vrot.slane %v469, 1
        %v545 = vrot.slane %v471, 1
        %v546 = vsel %vm513, %v544, %v545
        %v547 = vrot.slane %v470, 1
        %v548 = vrot.slane %v472, 1
        %v549 = vsel %vm513, %v547, %v548
        %v550 = vrot.slane %v473, 1
        %v551 = vrot.slane %v475, 1
        %v552 = vsel %vm513, %v550, %v551
        %v553 = vrot.slane %v474, 1
        %v554 = vrot.slane %v476, 1
        %v555 = vsel %vm513, %v553, %v554
        %v556 = vrot.slane %v477, 1
        %v557 = vrot.slane %v479, 1
        %v558 = vsel %vm513, %v556, %v557
        %v559 = vrot.slane %v478, 1
        %v560 = vrot.slane %v480, 1
        %v561 = vsel %vm513, %v559, %v560
        %v578 = vadd.f32 %v388, %v516
        %v579 = vadd.f32 %v389, %v519
        %v580 = vadd.f32 %v390, %v522
        %v581 = vadd.f32 %v391, %v525
        %v582 = vadd.f32 %v392, %v528
        %v583 = vadd.f32 %v393, %v531
        %v584 = vadd.f32 %v394, %v534
        %v585 = vadd.f32 %v395, %v537
        %v586 = vadd.f32 %v396, %v540
        %v587 = vadd.f32 %v397, %v543
        %v588 = vadd.f32 %v398, %v546
        %v589 = vadd.f32 %v399, %v549
        %v590 = vadd.f32 %v400, %v552
        %v591 = vadd.f32 %v401, %v555
        %v592 = vadd.f32 %v402, %v558
        %v593 = vadd.f32 %v403, %v561
        %v594 = vld [vmem:[#allocation2] sm:$0xfc]
        %v595 = vld [vmem:[#allocation2 + $0x8] sm:$0xfc]
        %v596 = vld [vmem:[#allocation2 + $0x10] sm:$0x3]
        %v597 = vld [vmem:[#allocation2 + $0x18] sm:$0x3]
        %v598 = vld [vmem:[#allocation2 + $0x20] sm:$0xfc]
        %v599 = vld [vmem:[#allocation2 + $0x28] sm:$0xfc]
        %v600 = vld [vmem:[#allocation2 + $0x30] sm:$0x3]
        %v601 = vld [vmem:[#allocation2 + $0x38] sm:$0x3]
        %v602 = vld [vmem:[#allocation2 + $0x40] sm:$0xfc]
        %v603 = vld [vmem:[#allocation2 + $0x48] sm:$0xfc]
        %v604 = vld [vmem:[#allocation2 + $0x50] sm:$0x3]
        %v605 = vld [vmem:[#allocation2 + $0x58] sm:$0x3]
        %v606 = vld [vmem:[#allocation2 + $0x60] sm:$0xfc]
        %v607 = vld [vmem:[#allocation2 + $0x68] sm:$0xfc]
        %v608 = vld [vmem:[#allocation2 + $0x70] sm:$0x3]
        %v609 = vld [vmem:[#allocation2 + $0x78] sm:$0x3]
        %v610 = vld [vmem:[#allocation2 + $0x80] sm:$0xfc]
        %v611 = vld [vmem:[#allocation2 + $0x88] sm:$0xfc]
        %v612 = vld [vmem:[#allocation2 + $0x90] sm:$0x3]
        %v613 = vld [vmem:[#allocation2 + $0x98] sm:$0x3]
        %v614 = vld [vmem:[#allocation2 + $0xa0] sm:$0xfc]
        %v615 = vld [vmem:[#allocation2 + $0xa8] sm:$0xfc]
        %v616 = vld [vmem:[#allocation2 + $0xb0] sm:$0x3]
        %v617 = vld [vmem:[#allocation2 + $0xb8] sm:$0x3]
        %v618 = vld [vmem:[#allocation2 + $0xc0] sm:$0xfc]
        %v619 = vld [vmem:[#allocation2 + $0xc8] sm:$0xfc]
        %v620 = vld [vmem:[#allocation2 + $0xd0] sm:$0x3]
        %v621 = vld [vmem:[#allocation2 + $0xd8] sm:$0x3]
        %v622 = vld [vmem:[#allocation2 + $0xe0] sm:$0xfc]
        %v623 = vld [vmem:[#allocation2 + $0xe8] sm:$0xfc]
        %v624 = vld [vmem:[#allocation2 + $0xf0] sm:$0x3]
        %v625 = vld [vmem:[#allocation2 + $0xf8] sm:$0x3]
        %s626 = scalar_lea.vmem %s1, 2
        %v627 = vld [vmem:[%s626] ss:$8 sm:$0x3]
        %v629 = vlaneseq
        %v630 = vshrl.u32 %v629, 7
        %v631 = vsub.s32 0, %v630
        %v632 = vrot.slane %v627, %v631
        %v633 = vlaneseq
        %v634 = vshrl.u32 %v633, 7
        %v635 = vsub.s32 1, %v634
        %v636 = vrot.slane %v627, %v635
        %v639 = vmul.f32 %v594, %v632
        %v640 = vmul.f32 %v595, %v636
        %v641 = vmul.f32 %v596, %v632
        %v642 = vmul.f32 %v597, %v636
        %v643 = vmul.f32 %v598, %v632
        %v644 = vmul.f32 %v599, %v636
        %v645 = vmul.f32 %v600, %v632
        %v646 = vmul.f32 %v601, %v636
        %v647 = vmul.f32 %v602, %v632
        %v648 = vmul.f32 %v603, %v636
        %v649 = vmul.f32 %v604, %v632
        %v650 = vmul.f32 %v605, %v636
        %v651 = vmul.f32 %v606, %v632
        %v652 = vmul.f32 %v607, %v636
        %v653 = vmul.f32 %v608, %v632
        %v654 = vmul.f32 %v609, %v636
        %v655 = vmul.f32 %v610, %v632
        %v656 = vmul.f32 %v611, %v636
        %v657 = vmul.f32 %v612, %v632
        %v658 = vmul.f32 %v613, %v636
        %v659 = vmul.f32 %v614, %v632
        %v660 = vmul.f32 %v615, %v636
        %v661 = vmul.f32 %v616, %v632
        %v662 = vmul.f32 %v617, %v636
        %v663 = vmul.f32 %v618, %v632
        %v664 = vmul.f32 %v619, %v636
        %v665 = vmul.f32 %v620, %v632
        %v666 = vmul.f32 %v621, %v636
        %v667 = vmul.f32 %v622, %v632
        %v668 = vmul.f32 %v623, %v636
        %v669 = vmul.f32 %v624, %v632
        %v670 = vmul.f32 %v625, %v636
        %vm703 = vcmask 1045504
        %v704 = vrot.slane %v639, 2
        %v705 = vrot.slane %v641, 2
        %v706 = vsel %vm703, %v704, %v705
        %v707 = vrot.slane %v640, 2
        %v708 = vrot.slane %v642, 2
        %v709 = vsel %vm703, %v707, %v708
        %v710 = vrot.slane %v643, 2
        %v711 = vrot.slane %v645, 2
        %v712 = vsel %vm703, %v710, %v711
        %v713 = vrot.slane %v644, 2
        %v714 = vrot.slane %v646, 2
        %v715 = vsel %vm703, %v713, %v714
        %v716 = vrot.slane %v647, 2
        %v717 = vrot.slane %v649, 2
        %v718 = vsel %vm703, %v716, %v717
        %v719 = vrot.slane %v648, 2
        %v720 = vrot.slane %v650, 2
        %v721 = vsel %vm703, %v719, %v720
        %v722 = vrot.slane %v651, 2
        %v723 = vrot.slane %v653, 2
        %v724 = vsel %vm703, %v722, %v723
        %v725 = vrot.slane %v652, 2
        %v726 = vrot.slane %v654, 2
        %v727 = vsel %vm703, %v725, %v726
        %v728 = vrot.slane %v655, 2
        %v729 = vrot.slane %v657, 2
        %v730 = vsel %vm703, %v728, %v729
        %v731 = vrot.slane %v656, 2
        %v732 = vrot.slane %v658, 2
        %v733 = vsel %vm703, %v731, %v732
        %v734 = vrot.slane %v659, 2
        %v735 = vrot.slane %v661, 2
        %v736 = vsel %vm703, %v734, %v735
        %v737 = vrot.slane %v660, 2
        %v738 = vrot.slane %v662, 2
        %v739 = vsel %vm703, %v737, %v738
        %v740 = vrot.slane %v663, 2
        %v741 = vrot.slane %v665, 2
        %v742 = vsel %vm703, %v740, %v741
        %v743 = vrot.slane %v664, 2
        %v744 = vrot.slane %v666, 2
        %v745 = vsel %vm703, %v743, %v744
        %v746 = vrot.slane %v667, 2
        %v747 = vrot.slane %v669, 2
        %v748 = vsel %vm703, %v746, %v747
        %v749 = vrot.slane %v668, 2
        %v750 = vrot.slane %v670, 2
        %v751 = vsel %vm703, %v749, %v750
        %v768 = vadd.f32 %v578, %v706
        %v769 = vadd.f32 %v579, %v709
        %v770 = vadd.f32 %v580, %v712
        %v771 = vadd.f32 %v581, %v715
        %v772 = vadd.f32 %v582, %v718
        %v773 = vadd.f32 %v583, %v721
        %v774 = vadd.f32 %v584, %v724
        %v775 = vadd.f32 %v585, %v727
        %v776 = vadd.f32 %v586, %v730
        %v777 = vadd.f32 %v587, %v733
        %v778 = vadd.f32 %v588, %v736
        %v779 = vadd.f32 %v589, %v739
        %v780 = vadd.f32 %v590, %v742
        %v781 = vadd.f32 %v591, %v745
        %v782 = vadd.f32 %v592, %v748
        %v783 = vadd.f32 %v593, %v751
        %v784 = vld [vmem:[%s327] sm:$0xff]
        %v785 = vld [vmem:[%s327 + $0x8] sm:$0xff]
        %v786 = vld [vmem:[%s327 + $0x20] sm:$0xff]
        %v787 = vld [vmem:[%s327 + $0x28] sm:$0xff]
        %v788 = vld [vmem:[%s327 + $0x40] sm:$0xff]
        %v789 = vld [vmem:[%s327 + $0x48] sm:$0xff]
        %v790 = vld [vmem:[%s327 + $0x60] sm:$0xff]
        %v791 = vld [vmem:[%s327 + $0x68] sm:$0xff]
        %v792 = vld [vmem:[%s327 + $0x80] sm:$0xff]
        %v793 = vld [vmem:[%s327 + $0x88] sm:$0xff]
        %v794 = vld [vmem:[%s327 + $0xa0] sm:$0xff]
        %v795 = vld [vmem:[%s327 + $0xa8] sm:$0xff]
        %v796 = vld [vmem:[%s327 + $0xc0] sm:$0xff]
        %v797 = vld [vmem:[%s327 + $0xc8] sm:$0xff]
        %v798 = vld [vmem:[%s327 + $0xe0] sm:$0xff]
        %v799 = vld [vmem:[%s327 + $0xe8] sm:$0xff]
        %s800 = scalar_lea.vmem %s1, 3
        %v801 = vld [vmem:[%s800] ss:$8 sm:$0x3]
        %v803 = vlaneseq
        %v804 = vshrl.u32 %v803, 7
        %v805 = vsub.s32 0, %v804
        %v806 = vrot.slane %v801, %v805
        %v807 = vlaneseq
        %v808 = vshrl.u32 %v807, 7
        %v809 = vsub.s32 1, %v808
        %v810 = vrot.slane %v801, %v809
        %v813 = vmul.f32 %v784, %v806
        %v814 = vmul.f32 %v785, %v810
        %v815 = vmul.f32 %v786, %v806
        %v816 = vmul.f32 %v787, %v810
        %v817 = vmul.f32 %v788, %v806
        %v818 = vmul.f32 %v789, %v810
        %v819 = vmul.f32 %v790, %v806
        %v820 = vmul.f32 %v791, %v810
        %v821 = vmul.f32 %v792, %v806
        %v822 = vmul.f32 %v793, %v810
        %v823 = vmul.f32 %v794, %v806
        %v824 = vmul.f32 %v795, %v810
        %v825 = vmul.f32 %v796, %v806
        %v826 = vmul.f32 %v797, %v810
        %v827 = vmul.f32 %v798, %v806
        %v828 = vmul.f32 %v799, %v810
        %v829 = vadd.f32 %v768, %v813
        %v830 = vadd.f32 %v769, %v814
        %v831 = vadd.f32 %v770, %v815
        %v832 = vadd.f32 %v771, %v816
        %v833 = vadd.f32 %v772, %v817
        %v834 = vadd.f32 %v773, %v818
        %v835 = vadd.f32 %v774, %v819
        %v836 = vadd.f32 %v775, %v820
        %v837 = vadd.f32 %v776, %v821
        %v838 = vadd.f32 %v777, %v822
        %v839 = vadd.f32 %v778, %v823
        %v840 = vadd.f32 %v779, %v824
        %v841 = vadd.f32 %v780, %v825
        %v842 = vadd.f32 %v781, %v826
        %v843 = vadd.f32 %v782, %v827
        %v844 = vadd.f32 %v783, %v828
        %v845 = vld [vmem:[%s327] sm:$0xfe]
        %v846 = vld [vmem:[%s327 + $0x8] sm:$0xfe]
        %v847 = vld [vmem:[%s327 + $0x10] sm:$0x1]
        %v848 = vld [vmem:[%s327 + $0x18] sm:$0x1]
        %v849 = vld [vmem:[%s327 + $0x20] sm:$0xfe]
        %v850 = vld [vmem:[%s327 + $0x28] sm:$0xfe]
        %v851 = vld [vmem:[%s327 + $0x30] sm:$0x1]
        %v852 = vld [vmem:[%s327 + $0x38] sm:$0x1]
        %v853 = vld [vmem:[%s327 + $0x40] sm:$0xfe]
        %v854 = vld [vmem:[%s327 + $0x48] sm:$0xfe]
        %v855 = vld [vmem:[%s327 + $0x50] sm:$0x1]
        %v856 = vld [vmem:[%s327 + $0x58] sm:$0x1]
        %v857 = vld [vmem:[%s327 + $0x60] sm:$0xfe]
        %v858 = vld [vmem:[%s327 + $0x68] sm:$0xfe]
        %v859 = vld [vmem:[%s327 + $0x70] sm:$0x1]
        %v860 = vld [vmem:[%s327 + $0x78] sm:$0x1]
        %v861 = vld [vmem:[%s327 + $0x80] sm:$0xfe]
        %v862 = vld [vmem:[%s327 + $0x88] sm:$0xfe]
        %v863 = vld [vmem:[%s327 + $0x90] sm:$0x1]
        %v864 = vld [vmem:[%s327 + $0x98] sm:$0x1]
        %v865 = vld [vmem:[%s327 + $0xa0] sm:$0xfe]
        %v866 = vld [vmem:[%s327 + $0xa8] sm:$0xfe]
        %v867 = vld [vmem:[%s327 + $0xb0] sm:$0x1]
        %v868 = vld [vmem:[%s327 + $0xb8] sm:$0x1]
        %v869 = vld [vmem:[%s327 + $0xc0] sm:$0xfe]
        %v870 = vld [vmem:[%s327 + $0xc8] sm:$0xfe]
        %v871 = vld [vmem:[%s327 + $0xd0] sm:$0x1]
        %v872 = vld [vmem:[%s327 + $0xd8] sm:$0x1]
        %v873 = vld [vmem:[%s327 + $0xe0] sm:$0xfe]
        %v874 = vld [vmem:[%s327 + $0xe8] sm:$0xfe]
        %v875 = vld [vmem:[%s327 + $0xf0] sm:$0x1]
        %v876 = vld [vmem:[%s327 + $0xf8] sm:$0x1]
        %s877 = scalar_lea.vmem %s1, 4
        %v878 = vld [vmem:[%s877] ss:$8 sm:$0x3]
        %v880 = vlaneseq
        %v881 = vshrl.u32 %v880, 7
        %v882 = vsub.s32 0, %v881
        %v883 = vrot.slane %v878, %v882
        %v884 = vlaneseq
        %v885 = vshrl.u32 %v884, 7
        %v886 = vsub.s32 1, %v885
        %v887 = vrot.slane %v878, %v886
        %v890 = vmul.f32 %v845, %v883
        %v891 = vmul.f32 %v846, %v887
        %v892 = vmul.f32 %v847, %v883
        %v893 = vmul.f32 %v848, %v887
        %v894 = vmul.f32 %v849, %v883
        %v895 = vmul.f32 %v850, %v887
        %v896 = vmul.f32 %v851, %v883
        %v897 = vmul.f32 %v852, %v887
        %v898 = vmul.f32 %v853, %v883
        %v899 = vmul.f32 %v854, %v887
        %v900 = vmul.f32 %v855, %v883
        %v901 = vmul.f32 %v856, %v887
        %v902 = vmul.f32 %v857, %v883
        %v903 = vmul.f32 %v858, %v887
        %v904 = vmul.f32 %v859, %v883
        %v905 = vmul.f32 %v860, %v887
        %v906 = vmul.f32 %v861, %v883
        %v907 = vmul.f32 %v862, %v887
        %v908 = vmul.f32 %v863, %v883
        %v909 = vmul.f32 %v864, %v887
        %v910 = vmul.f32 %v865, %v883
        %v911 = vmul.f32 %v866, %v887
        %v912 = vmul.f32 %v867, %v883
        %v913 = vmul.f32 %v868, %v887
        %v914 = vmul.f32 %v869, %v883
        %v915 = vmul.f32 %v870, %v887
        %v916 = vmul.f32 %v871, %v883
        %v917 = vmul.f32 %v872, %v887
        %v918 = vmul.f32 %v873, %v883
        %v919 = vmul.f32 %v874, %v887
        %v920 = vmul.f32 %v875, %v883
        %v921 = vmul.f32 %v876, %v887
        %v954 = vrot.slane %v890, 1
        %v955 = vrot.slane %v892, 1
        %v956 = vsel %vm513, %v954, %v955
        %v957 = vrot.slane %v891, 1
        %v958 = vrot.slane %v893, 1
        %v959 = vsel %vm513, %v957, %v958
        %v960 = vrot.slane %v894, 1
        %v961 = vrot.slane %v896, 1
        %v962 = vsel %vm513, %v960, %v961
        %v963 = vrot.slane %v895, 1
        %v964 = vrot.slane %v897, 1
        %v965 = vsel %vm513, %v963, %v964
        %v966 = vrot.slane %v898, 1
        %v967 = vrot.slane %v900, 1
        %v968 = vsel %vm513, %v966, %v967
        %v969 = vrot.slane %v899, 1
        %v970 = vrot.slane %v901, 1
        %v971 = vsel %vm513, %v969, %v970
        %v972 = vrot.slane %v902, 1
        %v973 = vrot.slane %v904, 1
        %v974 = vsel %vm513, %v972, %v973
        %v975 = vrot.slane %v903, 1
        %v976 = vrot.slane %v905, 1
        %v977 = vsel %vm513, %v975, %v976
        %v978 = vrot.slane %v906, 1
        %v979 = vrot.slane %v908, 1
        %v980 = vsel %vm513, %v978, %v979
        %v981 = vrot.slane %v907, 1
        %v982 = vrot.slane %v909, 1
        %v983 = vsel %vm513, %v981, %v982
        %v984 = vrot.slane %v910, 1
        %v985 = vrot.slane %v912, 1
        %v986 = vsel %vm513, %v984, %v985
        %v987 = vrot.slane %v911, 1
        %v988 = vrot.slane %v913, 1
        %v989 = vsel %vm513, %v987, %v988
        %v990 = vrot.slane %v914, 1
        %v991 = vrot.slane %v916, 1
        %v992 = vsel %vm513, %v990, %v991
        %v993 = vrot.slane %v915, 1
        %v994 = vrot.slane %v917, 1
        %v995 = vsel %vm513, %v993, %v994
        %v996 = vrot.slane %v918, 1
        %v997 = vrot.slane %v920, 1
        %v998 = vsel %vm513, %v996, %v997
        %v999 = vrot.slane %v919, 1
        %v1000 = vrot.slane %v921, 1
        %v1001 = vsel %vm513, %v999, %v1000
        %v1018 = vadd.f32 %v829, %v956
        %v1019 = vadd.f32 %v830, %v959
        %v1020 = vadd.f32 %v831, %v962
        %v1021 = vadd.f32 %v832, %v965
        %v1022 = vadd.f32 %v833, %v968
        %v1023 = vadd.f32 %v834, %v971
        %v1024 = vadd.f32 %v835, %v974
        %v1025 = vadd.f32 %v836, %v977
        %v1026 = vadd.f32 %v837, %v980
        %v1027 = vadd.f32 %v838, %v983
        %v1028 = vadd.f32 %v839, %v986
        %v1029 = vadd.f32 %v840, %v989
        %v1030 = vadd.f32 %v841, %v992
        %v1031 = vadd.f32 %v842, %v995
        %v1032 = vadd.f32 %v843, %v998
        %v1033 = vadd.f32 %v844, %v1001
        %v1034 = vld [vmem:[%s327] sm:$0xfc]
        %v1035 = vld [vmem:[%s327 + $0x8] sm:$0xfc]
        %v1036 = vld [vmem:[%s327 + $0x10] sm:$0x3]
        %v1037 = vld [vmem:[%s327 + $0x18] sm:$0x3]
        %v1038 = vld [vmem:[%s327 + $0x20] sm:$0xfc]
        %v1039 = vld [vmem:[%s327 + $0x28] sm:$0xfc]
        %v1040 = vld [vmem:[%s327 + $0x30] sm:$0x3]
        %v1041 = vld [vmem:[%s327 + $0x38] sm:$0x3]
        %v1042 = vld [vmem:[%s327 + $0x40] sm:$0xfc]
        %v1043 = vld [vmem:[%s327 + $0x48] sm:$0xfc]
        %v1044 = vld [vmem:[%s327 + $0x50] sm:$0x3]
        %v1045 = vld [vmem:[%s327 + $0x58] sm:$0x3]
        %v1046 = vld [vmem:[%s327 + $0x60] sm:$0xfc]
        %v1047 = vld [vmem:[%s327 + $0x68] sm:$0xfc]
        %v1048 = vld [vmem:[%s327 + $0x70] sm:$0x3]
        %v1049 = vld [vmem:[%s327 + $0x78] sm:$0x3]
        %v1050 = vld [vmem:[%s327 + $0x80] sm:$0xfc]
        %v1051 = vld [vmem:[%s327 + $0x88] sm:$0xfc]
        %v1052 = vld [vmem:[%s327 + $0x90] sm:$0x3]
        %v1053 = vld [vmem:[%s327 + $0x98] sm:$0x3]
        %v1054 = vld [vmem:[%s327 + $0xa0] sm:$0xfc]
        %v1055 = vld [vmem:[%s327 + $0xa8] sm:$0xfc]
        %v1056 = vld [vmem:[%s327 + $0xb0] sm:$0x3]
        %v1057 = vld [vmem:[%s327 + $0xb8] sm:$0x3]
        %v1058 = vld [vmem:[%s327 + $0xc0] sm:$0xfc]
        %v1059 = vld [vmem:[%s327 + $0xc8] sm:$0xfc]
        %v1060 = vld [vmem:[%s327 + $0xd0] sm:$0x3]
        %v1061 = vld [vmem:[%s327 + $0xd8] sm:$0x3]
        %v1062 = vld [vmem:[%s327 + $0xe0] sm:$0xfc]
        %v1063 = vld [vmem:[%s327 + $0xe8] sm:$0xfc]
        %v1064 = vld [vmem:[%s327 + $0xf0] sm:$0x3]
        %v1065 = vld [vmem:[%s327 + $0xf8] sm:$0x3]
        %s1066 = scalar_lea.vmem %s1, 5
        %v1067 = vld [vmem:[%s1066] ss:$8 sm:$0x3]
        %v1069 = vlaneseq
        %v1070 = vshrl.u32 %v1069, 7
        %v1071 = vsub.s32 0, %v1070
        %v1072 = vrot.slane %v1067, %v1071
        %v1073 = vlaneseq
        %v1074 = vshrl.u32 %v1073, 7
        %v1075 = vsub.s32 1, %v1074
        %v1076 = vrot.slane %v1067, %v1075
        %v1079 = vmul.f32 %v1034, %v1072
        %v1080 = vmul.f32 %v1035, %v1076
        %v1081 = vmul.f32 %v1036, %v1072
        %v1082 = vmul.f32 %v1037, %v1076
        %v1083 = vmul.f32 %v1038, %v1072
        %v1084 = vmul.f32 %v1039, %v1076
        %v1085 = vmul.f32 %v1040, %v1072
        %v1086 = vmul.f32 %v1041, %v1076
        %v1087 = vmul.f32 %v1042, %v1072
        %v1088 = vmul.f32 %v1043, %v1076
        %v1089 = vmul.f32 %v1044, %v1072
        %v1090 = vmul.f32 %v1045, %v1076
        %v1091 = vmul.f32 %v1046, %v1072
        %v1092 = vmul.f32 %v1047, %v1076
        %v1093 = vmul.f32 %v1048, %v1072
        %v1094 = vmul.f32 %v1049, %v1076
        %v1095 = vmul.f32 %v1050, %v1072
        %v1096 = vmul.f32 %v1051, %v1076
        %v1097 = vmul.f32 %v1052, %v1072
        %v1098 = vmul.f32 %v1053, %v1076
        %v1099 = vmul.f32 %v1054, %v1072
        %v1100 = vmul.f32 %v1055, %v1076
        %v1101 = vmul.f32 %v1056, %v1072
        %v1102 = vmul.f32 %v1057, %v1076
        %v1103 = vmul.f32 %v1058, %v1072
        %v1104 = vmul.f32 %v1059, %v1076
        %v1105 = vmul.f32 %v1060, %v1072
        %v1106 = vmul.f32 %v1061, %v1076
        %v1107 = vmul.f32 %v1062, %v1072
        %v1108 = vmul.f32 %v1063, %v1076
        %v1109 = vmul.f32 %v1064, %v1072
        %v1110 = vmul.f32 %v1065, %v1076
        %v1143 = vrot.slane %v1079, 2
        %v1144 = vrot.slane %v1081, 2
        %v1145 = vsel %vm703, %v1143, %v1144
        %v1146 = vrot.slane %v1080, 2
        %v1147 = vrot.slane %v1082, 2
        %v1148 = vsel %vm703, %v1146, %v1147
        %v1149 = vrot.slane %v1083, 2
        %v1150 = vrot.slane %v1085, 2
        %v1151 = vsel %vm703, %v1149, %v1150
        %v1152 = vrot.slane %v1084, 2
        %v1153 = vrot.slane %v1086, 2
        %v1154 = vsel %vm703, %v1152, %v1153
        %v1155 = vrot.slane %v1087, 2
        %v1156 = vrot.slane %v1089, 2
        %v1157 = vsel %vm703, %v1155, %v1156
        %v1158 = vrot.slane %v1088, 2
        %v1159 = vrot.slane %v1090, 2
        %v1160 = vsel %vm703, %v1158, %v1159
        %v1161 = vrot.slane %v1091, 2
        %v1162 = vrot.slane %v1093, 2
        %v1163 = vsel %vm703, %v1161, %v1162
        %v1164 = vrot.slane %v1092, 2
        %v1165 = vrot.slane %v1094, 2
        %v1166 = vsel %vm703, %v1164, %v1165
        %v1167 = vrot.slane %v1095, 2
        %v1168 = vrot.slane %v1097, 2
        %v1169 = vsel %vm703, %v1167, %v1168
        %v1170 = vrot.slane %v1096, 2
        %v1171 = vrot.slane %v1098, 2
        %v1172 = vsel %vm703, %v1170, %v1171
        %v1173 = vrot.slane %v1099, 2
        %v1174 = vrot.slane %v1101, 2
        %v1175 = vsel %vm703, %v1173, %v1174
        %v1176 = vrot.slane %v1100, 2
        %v1177 = vrot.slane %v1102, 2
        %v1178 = vsel %vm703, %v1176, %v1177
        %v1179 = vrot.slane %v1103, 2
        %v1180 = vrot.slane %v1105, 2
        %v1181 = vsel %vm703, %v1179, %v1180
        %v1182 = vrot.slane %v1104, 2
        %v1183 = vrot.slane %v1106, 2
        %v1184 = vsel %vm703, %v1182, %v1183
        %v1185 = vrot.slane %v1107, 2
        %v1186 = vrot.slane %v1109, 2
        %v1187 = vsel %vm703, %v1185, %v1186
        %v1188 = vrot.slane %v1108, 2
        %v1189 = vrot.slane %v1110, 2
        %v1190 = vsel %vm703, %v1188, %v1189
        %v1207 = vadd.f32 %v1018, %v1145
        %v1208 = vadd.f32 %v1019, %v1148
        %v1209 = vadd.f32 %v1020, %v1151
        %v1210 = vadd.f32 %v1021, %v1154
        %v1211 = vadd.f32 %v1022, %v1157
        %v1212 = vadd.f32 %v1023, %v1160
        %v1213 = vadd.f32 %v1024, %v1163
        %v1214 = vadd.f32 %v1025, %v1166
        %v1215 = vadd.f32 %v1026, %v1169
        %v1216 = vadd.f32 %v1027, %v1172
        %v1217 = vadd.f32 %v1028, %v1175
        %v1218 = vadd.f32 %v1029, %v1178
        %v1219 = vadd.f32 %v1030, %v1181
        %v1220 = vadd.f32 %v1031, %v1184
        %v1221 = vadd.f32 %v1032, %v1187
        %v1222 = vadd.f32 %v1033, %v1190
        %s1223 = scalar_lea.vmem [#allocation2], 64
        %v1224 = vld [vmem:[%s1223] sm:$0xff]
        %v1225 = vld [vmem:[%s1223 + $0x8] sm:$0xff]
        %v1226 = vld [vmem:[%s1223 + $0x20] sm:$0xff]
        %v1227 = vld [vmem:[%s1223 + $0x28] sm:$0xff]
        %v1228 = vld [vmem:[%s1223 + $0x40] sm:$0xff]
        %v1229 = vld [vmem:[%s1223 + $0x48] sm:$0xff]
        %v1230 = vld [vmem:[%s1223 + $0x60] sm:$0xff]
        %v1231 = vld [vmem:[%s1223 + $0x68] sm:$0xff]
        %v1232 = vld [vmem:[%s1223 + $0x80] sm:$0xff]
        %v1233 = vld [vmem:[%s1223 + $0x88] sm:$0xff]
        %v1234 = vld [vmem:[%s1223 + $0xa0] sm:$0xff]
        %v1235 = vld [vmem:[%s1223 + $0xa8] sm:$0xff]
        %v1236 = vld [vmem:[%s1223 + $0xc0] sm:$0xff]
        %v1237 = vld [vmem:[%s1223 + $0xc8] sm:$0xff]
        %v1238 = vld [vmem:[%s1223 + $0xe0] sm:$0xff]
        %v1239 = vld [vmem:[%s1223 + $0xe8] sm:$0xff]
        %s1240 = scalar_lea.vmem %s1, 6
        %v1241 = vld [vmem:[%s1240] ss:$8 sm:$0x3]
        %v1243 = vlaneseq
        %v1244 = vshrl.u32 %v1243, 7
        %v1245 = vsub.s32 0, %v1244
        %v1246 = vrot.slane %v1241, %v1245
        %v1247 = vlaneseq
        %v1248 = vshrl.u32 %v1247, 7
        %v1249 = vsub.s32 1, %v1248
        %v1250 = vrot.slane %v1241, %v1249
        %v1253 = vmul.f32 %v1224, %v1246
        %v1254 = vmul.f32 %v1225, %v1250
        %v1255 = vmul.f32 %v1226, %v1246
        %v1256 = vmul.f32 %v1227, %v1250
        %v1257 = vmul.f32 %v1228, %v1246
        %v1258 = vmul.f32 %v1229, %v1250
        %v1259 = vmul.f32 %v1230, %v1246
        %v1260 = vmul.f32 %v1231, %v1250
        %v1261 = vmul.f32 %v1232, %v1246
        %v1262 = vmul.f32 %v1233, %v1250
        %v1263 = vmul.f32 %v1234, %v1246
        %v1264 = vmul.f32 %v1235, %v1250
        %v1265 = vmul.f32 %v1236, %v1246
        %v1266 = vmul.f32 %v1237, %v1250
        %v1267 = vmul.f32 %v1238, %v1246
        %v1268 = vmul.f32 %v1239, %v1250
        %v1269 = vadd.f32 %v1207, %v1253
        %v1270 = vadd.f32 %v1208, %v1254
        %v1271 = vadd.f32 %v1209, %v1255
        %v1272 = vadd.f32 %v1210, %v1256
        %v1273 = vadd.f32 %v1211, %v1257
        %v1274 = vadd.f32 %v1212, %v1258
        %v1275 = vadd.f32 %v1213, %v1259
        %v1276 = vadd.f32 %v1214, %v1260
        %v1277 = vadd.f32 %v1215, %v1261
        %v1278 = vadd.f32 %v1216, %v1262
        %v1279 = vadd.f32 %v1217, %v1263
        %v1280 = vadd.f32 %v1218, %v1264
        %v1281 = vadd.f32 %v1219, %v1265
        %v1282 = vadd.f32 %v1220, %v1266
        %v1283 = vadd.f32 %v1221, %v1267
        %v1284 = vadd.f32 %v1222, %v1268
        %v1285 = vld [vmem:[%s1223] sm:$0xfe]
        %v1286 = vld [vmem:[%s1223 + $0x8] sm:$0xfe]
        %v1287 = vld [vmem:[%s1223 + $0x10] sm:$0x1]
        %v1288 = vld [vmem:[%s1223 + $0x18] sm:$0x1]
        %v1289 = vld [vmem:[%s1223 + $0x20] sm:$0xfe]
        %v1290 = vld [vmem:[%s1223 + $0x28] sm:$0xfe]
        %v1291 = vld [vmem:[%s1223 + $0x30] sm:$0x1]
        %v1292 = vld [vmem:[%s1223 + $0x38] sm:$0x1]
        %v1293 = vld [vmem:[%s1223 + $0x40] sm:$0xfe]
        %v1294 = vld [vmem:[%s1223 + $0x48] sm:$0xfe]
        %v1295 = vld [vmem:[%s1223 + $0x50] sm:$0x1]
        %v1296 = vld [vmem:[%s1223 + $0x58] sm:$0x1]
        %v1297 = vld [vmem:[%s1223 + $0x60] sm:$0xfe]
        %v1298 = vld [vmem:[%s1223 + $0x68] sm:$0xfe]
        %v1299 = vld [vmem:[%s1223 + $0x70] sm:$0x1]
        %v1300 = vld [vmem:[%s1223 + $0x78] sm:$0x1]
        %v1301 = vld [vmem:[%s1223 + $0x80] sm:$0xfe]
        %v1302 = vld [vmem:[%s1223 + $0x88] sm:$0xfe]
        %v1303 = vld [vmem:[%s1223 + $0x90] sm:$0x1]
        %v1304 = vld [vmem:[%s1223 + $0x98] sm:$0x1]
        %v1305 = vld [vmem:[%s1223 + $0xa0] sm:$0xfe]
        %v1306 = vld [vmem:[%s1223 + $0xa8] sm:$0xfe]
        %v1307 = vld [vmem:[%s1223 + $0xb0] sm:$0x1]
        %v1308 = vld [vmem:[%s1223 + $0xb8] sm:$0x1]
        %v1309 = vld [vmem:[%s1223 + $0xc0] sm:$0xfe]
        %v1310 = vld [vmem:[%s1223 + $0xc8] sm:$0xfe]
        %v1311 = vld [vmem:[%s1223 + $0xd0] sm:$0x1]
        %v1312 = vld [vmem:[%s1223 + $0xd8] sm:$0x1]
        %v1313 = vld [vmem:[%s1223 + $0xe0] sm:$0xfe]
        %v1314 = vld [vmem:[%s1223 + $0xe8] sm:$0xfe]
        %v1315 = vld [vmem:[%s1223 + $0xf0] sm:$0x1]
        %v1316 = vld [vmem:[%s1223 + $0xf8] sm:$0x1]
        %s1317 = scalar_lea.vmem %s1, 7
        %v1318 = vld [vmem:[%s1317] ss:$8 sm:$0x3]
        %v1320 = vlaneseq
        %v1321 = vshrl.u32 %v1320, 7
        %v1322 = vsub.s32 0, %v1321
        %v1323 = vrot.slane %v1318, %v1322
        %v1324 = vlaneseq
        %v1325 = vshrl.u32 %v1324, 7
        %v1326 = vsub.s32 1, %v1325
        %v1327 = vrot.slane %v1318, %v1326
        %v1330 = vmul.f32 %v1285, %v1323
        %v1331 = vmul.f32 %v1286, %v1327
        %v1332 = vmul.f32 %v1287, %v1323
        %v1333 = vmul.f32 %v1288, %v1327
        %v1334 = vmul.f32 %v1289, %v1323
        %v1335 = vmul.f32 %v1290, %v1327
        %v1336 = vmul.f32 %v1291, %v1323
        %v1337 = vmul.f32 %v1292, %v1327
        %v1338 = vmul.f32 %v1293, %v1323
        %v1339 = vmul.f32 %v1294, %v1327
        %v1340 = vmul.f32 %v1295, %v1323
        %v1341 = vmul.f32 %v1296, %v1327
        %v1342 = vmul.f32 %v1297, %v1323
        %v1343 = vmul.f32 %v1298, %v1327
        %v1344 = vmul.f32 %v1299, %v1323
        %v1345 = vmul.f32 %v1300, %v1327
        %v1346 = vmul.f32 %v1301, %v1323
        %v1347 = vmul.f32 %v1302, %v1327
        %v1348 = vmul.f32 %v1303, %v1323
        %v1349 = vmul.f32 %v1304, %v1327
        %v1350 = vmul.f32 %v1305, %v1323
        %v1351 = vmul.f32 %v1306, %v1327
        %v1352 = vmul.f32 %v1307, %v1323
        %v1353 = vmul.f32 %v1308, %v1327
        %v1354 = vmul.f32 %v1309, %v1323
        %v1355 = vmul.f32 %v1310, %v1327
        %v1356 = vmul.f32 %v1311, %v1323
        %v1357 = vmul.f32 %v1312, %v1327
        %v1358 = vmul.f32 %v1313, %v1323
        %v1359 = vmul.f32 %v1314, %v1327
        %v1360 = vmul.f32 %v1315, %v1323
        %v1361 = vmul.f32 %v1316, %v1327
        %v1394 = vrot.slane %v1330, 1
        %v1395 = vrot.slane %v1332, 1
        %v1396 = vsel %vm513, %v1394, %v1395
        %v1397 = vrot.slane %v1331, 1
        %v1398 = vrot.slane %v1333, 1
        %v1399 = vsel %vm513, %v1397, %v1398
        %v1400 = vrot.slane %v1334, 1
        %v1401 = vrot.slane %v1336, 1
        %v1402 = vsel %vm513, %v1400, %v1401
        %v1403 = vrot.slane %v1335, 1
        %v1404 = vrot.slane %v1337, 1
        %v1405 = vsel %vm513, %v1403, %v1404
        %v1406 = vrot.slane %v1338, 1
        %v1407 = vrot.slane %v1340, 1
        %v1408 = vsel %vm513, %v1406, %v1407
        %v1409 = vrot.slane %v1339, 1
        %v1410 = vrot.slane %v1341, 1
        %v1411 = vsel %vm513, %v1409, %v1410
        %v1412 = vrot.slane %v1342, 1
        %v1413 = vrot.slane %v1344, 1
        %v1414 = vsel %vm513, %v1412, %v1413
        %v1415 = vrot.slane %v1343, 1
        %v1416 = vrot.slane %v1345, 1
        %v1417 = vsel %vm513, %v1415, %v1416
        %v1418 = vrot.slane %v1346, 1
        %v1419 = vrot.slane %v1348, 1
        %v1420 = vsel %vm513, %v1418, %v1419
        %v1421 = vrot.slane %v1347, 1
        %v1422 = vrot.slane %v1349, 1
        %v1423 = vsel %vm513, %v1421, %v1422
        %v1424 = vrot.slane %v1350, 1
        %v1425 = vrot.slane %v1352, 1
        %v1426 = vsel %vm513, %v1424, %v1425
        %v1427 = vrot.slane %v1351, 1
        %v1428 = vrot.slane %v1353, 1
        %v1429 = vsel %vm513, %v1427, %v1428
        %v1430 = vrot.slane %v1354, 1
        %v1431 = vrot.slane %v1356, 1
        %v1432 = vsel %vm513, %v1430, %v1431
        %v1433 = vrot.slane %v1355, 1
        %v1434 = vrot.slane %v1357, 1
        %v1435 = vsel %vm513, %v1433, %v1434
        %v1436 = vrot.slane %v1358, 1
        %v1437 = vrot.slane %v1360, 1
        %v1438 = vsel %vm513, %v1436, %v1437
        %v1439 = vrot.slane %v1359, 1
        %v1440 = vrot.slane %v1361, 1
        %v1441 = vsel %vm513, %v1439, %v1440
        %v1458 = vadd.f32 %v1269, %v1396
        %v1459 = vadd.f32 %v1270, %v1399
        %v1460 = vadd.f32 %v1271, %v1402
        %v1461 = vadd.f32 %v1272, %v1405
        %v1462 = vadd.f32 %v1273, %v1408
        %v1463 = vadd.f32 %v1274, %v1411
        %v1464 = vadd.f32 %v1275, %v1414
        %v1465 = vadd.f32 %v1276, %v1417
        %v1466 = vadd.f32 %v1277, %v1420
        %v1467 = vadd.f32 %v1278, %v1423
        %v1468 = vadd.f32 %v1279, %v1426
        %v1469 = vadd.f32 %v1280, %v1429
        %v1470 = vadd.f32 %v1281, %v1432
        %v1471 = vadd.f32 %v1282, %v1435
        %v1472 = vadd.f32 %v1283, %v1438
        %v1473 = vadd.f32 %v1284, %v1441
        %v1474 = vld [vmem:[%s1223] sm:$0xfc]
        %v1475 = vld [vmem:[%s1223 + $0x8] sm:$0xfc]
        %v1476 = vld [vmem:[%s1223 + $0x10] sm:$0x3]
        %v1477 = vld [vmem:[%s1223 + $0x18] sm:$0x3]
        %v1478 = vld [vmem:[%s1223 + $0x20] sm:$0xfc]
        %v1479 = vld [vmem:[%s1223 + $0x28] sm:$0xfc]
        %v1480 = vld [vmem:[%s1223 + $0x30] sm:$0x3]
        %v1481 = vld [vmem:[%s1223 + $0x38] sm:$0x3]
        %v1482 = vld [vmem:[%s1223 + $0x40] sm:$0xfc]
        %v1483 = vld [vmem:[%s1223 + $0x48] sm:$0xfc]
        %v1484 = vld [vmem:[%s1223 + $0x50] sm:$0x3]
        %v1485 = vld [vmem:[%s1223 + $0x58] sm:$0x3]
        %v1486 = vld [vmem:[%s1223 + $0x60] sm:$0xfc]
        %v1487 = vld [vmem:[%s1223 + $0x68] sm:$0xfc]
        %v1488 = vld [vmem:[%s1223 + $0x70] sm:$0x3]
        %v1489 = vld [vmem:[%s1223 + $0x78] sm:$0x3]
        %v1490 = vld [vmem:[%s1223 + $0x80] sm:$0xfc]
        %v1491 = vld [vmem:[%s1223 + $0x88] sm:$0xfc]
        %v1492 = vld [vmem:[%s1223 + $0x90] sm:$0x3]
        %v1493 = vld [vmem:[%s1223 + $0x98] sm:$0x3]
        %v1494 = vld [vmem:[%s1223 + $0xa0] sm:$0xfc]
        %v1495 = vld [vmem:[%s1223 + $0xa8] sm:$0xfc]
        %v1496 = vld [vmem:[%s1223 + $0xb0] sm:$0x3]
        %v1497 = vld [vmem:[%s1223 + $0xb8] sm:$0x3]
        %v1498 = vld [vmem:[%s1223 + $0xc0] sm:$0xfc]
        %v1499 = vld [vmem:[%s1223 + $0xc8] sm:$0xfc]
        %v1500 = vld [vmem:[%s1223 + $0xd0] sm:$0x3]
        %v1501 = vld [vmem:[%s1223 + $0xd8] sm:$0x3]
        %v1502 = vld [vmem:[%s1223 + $0xe0] sm:$0xfc]
        %v1503 = vld [vmem:[%s1223 + $0xe8] sm:$0xfc]
        %v1504 = vld [vmem:[%s1223 + $0xf0] sm:$0x3]
        %v1505 = vld [vmem:[%s1223 + $0xf8] sm:$0x3]
        %s1506 = scalar_lea.vmem %s1, 16
        %v1507 = vld [vmem:[%s1506] ss:$8 sm:$0x3]
        %v1509 = vlaneseq
        %v1510 = vshrl.u32 %v1509, 7
        %v1511 = vsub.s32 0, %v1510
        %v1512 = vrot.slane %v1507, %v1511
        %v1513 = vlaneseq
        %v1514 = vshrl.u32 %v1513, 7
        %v1515 = vsub.s32 1, %v1514
        %v1516 = vrot.slane %v1507, %v1515
        %v1519 = vmul.f32 %v1474, %v1512
        %v1520 = vmul.f32 %v1475, %v1516
        %v1521 = vmul.f32 %v1476, %v1512
        %v1522 = vmul.f32 %v1477, %v1516
        %v1523 = vmul.f32 %v1478, %v1512
        %v1524 = vmul.f32 %v1479, %v1516
        %v1525 = vmul.f32 %v1480, %v1512
        %v1526 = vmul.f32 %v1481, %v1516
        %v1527 = vmul.f32 %v1482, %v1512
        %v1528 = vmul.f32 %v1483, %v1516
        %v1529 = vmul.f32 %v1484, %v1512
        %v1530 = vmul.f32 %v1485, %v1516
        %v1531 = vmul.f32 %v1486, %v1512
        %v1532 = vmul.f32 %v1487, %v1516
        %v1533 = vmul.f32 %v1488, %v1512
        %v1534 = vmul.f32 %v1489, %v1516
        %v1535 = vmul.f32 %v1490, %v1512
        %v1536 = vmul.f32 %v1491, %v1516
        %v1537 = vmul.f32 %v1492, %v1512
        %v1538 = vmul.f32 %v1493, %v1516
        %v1539 = vmul.f32 %v1494, %v1512
        %v1540 = vmul.f32 %v1495, %v1516
        %v1541 = vmul.f32 %v1496, %v1512
        %v1542 = vmul.f32 %v1497, %v1516
        %v1543 = vmul.f32 %v1498, %v1512
        %v1544 = vmul.f32 %v1499, %v1516
        %v1545 = vmul.f32 %v1500, %v1512
        %v1546 = vmul.f32 %v1501, %v1516
        %v1547 = vmul.f32 %v1502, %v1512
        %v1548 = vmul.f32 %v1503, %v1516
        %v1549 = vmul.f32 %v1504, %v1512
        %v1550 = vmul.f32 %v1505, %v1516
        %v1583 = vrot.slane %v1519, 2
        %v1584 = vrot.slane %v1521, 2
        %v1585 = vsel %vm703, %v1583, %v1584
        %v1586 = vrot.slane %v1520, 2
        %v1587 = vrot.slane %v1522, 2
        %v1588 = vsel %vm703, %v1586, %v1587
        %v1589 = vrot.slane %v1523, 2
        %v1590 = vrot.slane %v1525, 2
        %v1591 = vsel %vm703, %v1589, %v1590
        %v1592 = vrot.slane %v1524, 2
        %v1593 = vrot.slane %v1526, 2
        %v1594 = vsel %vm703, %v1592, %v1593
        %v1595 = vrot.slane %v1527, 2
        %v1596 = vrot.slane %v1529, 2
        %v1597 = vsel %vm703, %v1595, %v1596
        %v1598 = vrot.slane %v1528, 2
        %v1599 = vrot.slane %v1530, 2
        %v1600 = vsel %vm703, %v1598, %v1599
        %v1601 = vrot.slane %v1531, 2
        %v1602 = vrot.slane %v1533, 2
        %v1603 = vsel %vm703, %v1601, %v1602
        %v1604 = vrot.slane %v1532, 2
        %v1605 = vrot.slane %v1534, 2
        %v1606 = vsel %vm703, %v1604, %v1605
        %v1607 = vrot.slane %v1535, 2
        %v1608 = vrot.slane %v1537, 2
        %v1609 = vsel %vm703, %v1607, %v1608
        %v1610 = vrot.slane %v1536, 2
        %v1611 = vrot.slane %v1538, 2
        %v1612 = vsel %vm703, %v1610, %v1611
        %v1613 = vrot.slane %v1539, 2
        %v1614 = vrot.slane %v1541, 2
        %v1615 = vsel %vm703, %v1613, %v1614
        %v1616 = vrot.slane %v1540, 2
        %v1617 = vrot.slane %v1542, 2
        %v1618 = vsel %vm703, %v1616, %v1617
        %v1619 = vrot.slane %v1543, 2
        %v1620 = vrot.slane %v1545, 2
        %v1621 = vsel %vm703, %v1619, %v1620
        %v1622 = vrot.slane %v1544, 2
        %v1623 = vrot.slane %v1546, 2
        %v1624 = vsel %vm703, %v1622, %v1623
        %v1625 = vrot.slane %v1547, 2
        %v1626 = vrot.slane %v1549, 2
        %v1627 = vsel %vm703, %v1625, %v1626
        %v1628 = vrot.slane %v1548, 2
        %v1629 = vrot.slane %v1550, 2
        %v1630 = vsel %vm703, %v1628, %v1629
        %v1647 = vadd.f32 %v1458, %v1585
        %v1648 = vadd.f32 %v1459, %v1588
        %v1649 = vadd.f32 %v1460, %v1591
        %v1650 = vadd.f32 %v1461, %v1594
        %v1651 = vadd.f32 %v1462, %v1597
        %v1652 = vadd.f32 %v1463, %v1600
        %v1653 = vadd.f32 %v1464, %v1603
        %v1654 = vadd.f32 %v1465, %v1606
        %v1655 = vadd.f32 %v1466, %v1609
        %v1656 = vadd.f32 %v1467, %v1612
        %v1657 = vadd.f32 %v1468, %v1615
        %v1658 = vadd.f32 %v1469, %v1618
        %v1659 = vadd.f32 %v1470, %v1621
        %v1660 = vadd.f32 %v1471, %v1624
        %v1661 = vadd.f32 %v1472, %v1627
        %v1662 = vadd.f32 %v1473, %v1630
        %v1663 = vpack.c.bf16 %v1649, %v1647
        %v1664 = vpack.c.bf16 %v1650, %v1648
        %v1665 = vpack.c.bf16 %v1653, %v1651
        %v1666 = vpack.c.bf16 %v1654, %v1652
        %v1667 = vpack.c.bf16 %v1657, %v1655
        %v1668 = vpack.c.bf16 %v1658, %v1656
        %v1669 = vpack.c.bf16 %v1661, %v1659
        %v1670 = vpack.c.bf16 %v1662, %v1660
        %v1671 = vld [vmem:[%s2] sm:$0xff]
        %v1672 = vld [vmem:[%s2 + $0x8] sm:$0xff]
        %v1673 = vld [vmem:[%s2 + $0x10] sm:$0xff]
        %v1674 = vld [vmem:[%s2 + $0x18] sm:$0xff]
        %v1675 = vld [vmem:[%s2 + $0x20] sm:$0xff]
        %v1676 = vld [vmem:[%s2 + $0x28] sm:$0xff]
        %v1677 = vld [vmem:[%s2 + $0x30] sm:$0xff]
        %v1678 = vld [vmem:[%s2 + $0x38] sm:$0xff]
        %v1679 = vld [vmem:[%s2 + $0x40] sm:$0xff]
        %v1680 = vld [vmem:[%s2 + $0x48] sm:$0xff]
        %v1681 = vld [vmem:[%s2 + $0x50] sm:$0xff]
        %v1682 = vld [vmem:[%s2 + $0x58] sm:$0xff]
        %v1683 = vld [vmem:[%s2 + $0x60] sm:$0xff]
        %v1684 = vld [vmem:[%s2 + $0x68] sm:$0xff]
        %v1685 = vld [vmem:[%s2 + $0x70] sm:$0xff]
        %v1686 = vld [vmem:[%s2 + $0x78] sm:$0xff]
        %v1687 = vld [vmem:[%s2 + $0x80] sm:$0xff]
        %v1688 = vld [vmem:[%s2 + $0x88] sm:$0xff]
        %v1689 = vld [vmem:[%s2 + $0x90] sm:$0xff]
        %v1690 = vld [vmem:[%s2 + $0x98] sm:$0xff]
        %v1691 = vld [vmem:[%s2 + $0xa0] sm:$0xff]
        %v1692 = vld [vmem:[%s2 + $0xa8] sm:$0xff]
        %v1693 = vld [vmem:[%s2 + $0xb0] sm:$0xff]
        %v1694 = vld [vmem:[%s2 + $0xb8] sm:$0xff]
        %v1695 = vld [vmem:[%s2 + $0xc0] sm:$0xff]
        %v1696 = vld [vmem:[%s2 + $0xc8] sm:$0xff]
        %v1697 = vld [vmem:[%s2 + $0xd0] sm:$0xff]
        %v1698 = vld [vmem:[%s2 + $0xd8] sm:$0xff]
        %v1699 = vld [vmem:[%s2 + $0xe0] sm:$0xff]
        %v1700 = vld [vmem:[%s2 + $0xe8] sm:$0xff]
        %v1701 = vld [vmem:[%s2 + $0xf0] sm:$0xff]
        %v1702 = vld [vmem:[%s2 + $0xf8] sm:$0xff]
        %v1703 = vld [vmem:[%s3] sm:$0x3]
        %v1705 = vlaneseq
        %v1706 = vshrl.u32 %v1705, 7
        %v1707 = vsub.s32 0, %v1706
        %v1708 = vrot.slane %v1703, %v1707
        %v1709 = vlaneseq
        %v1710 = vshrl.u32 %v1709, 7
        %v1711 = vsub.s32 1, %v1710
        %v1712 = vrot.slane %v1703, %v1711
        %v1747 = vunpack.c.l.b16 %v1671
        %v1748 = vunpack.c.h.b16 %v1671
        %v1749 = vunpack.c.l.b16 %v1672
        %v1750 = vunpack.c.h.b16 %v1672
        %v1751 = vunpack.c.l.b16 %v1673
        %v1752 = vunpack.c.h.b16 %v1673
        %v1753 = vunpack.c.l.b16 %v1674
        %v1754 = vunpack.c.h.b16 %v1674
        %v1755 = vunpack.c.l.b16 %v1675
        %v1756 = vunpack.c.h.b16 %v1675
        %v1757 = vunpack.c.l.b16 %v1676
        %v1758 = vunpack.c.h.b16 %v1676
        %v1759 = vunpack.c.l.b16 %v1677
        %v1760 = vunpack.c.h.b16 %v1677
        %v1761 = vunpack.c.l.b16 %v1678
        %v1762 = vunpack.c.h.b16 %v1678
        %v1763 = vunpack.c.l.b16 %v1679
        %v1764 = vunpack.c.h.b16 %v1679
        %v1765 = vunpack.c.l.b16 %v1680
        %v1766 = vunpack.c.h.b16 %v1680
        %v1767 = vunpack.c.l.b16 %v1681
        %v1768 = vunpack.c.h.b16 %v1681
        %v1769 = vunpack.c.l.b16 %v1682
        %v1770 = vunpack.c.h.b16 %v1682
        %v1771 = vunpack.c.l.b16 %v1683
        %v1772 = vunpack.c.h.b16 %v1683
        %v1773 = vunpack.c.l.b16 %v1684
        %v1774 = vunpack.c.h.b16 %v1684
        %v1775 = vunpack.c.l.b16 %v1685
        %v1776 = vunpack.c.h.b16 %v1685
        %v1777 = vunpack.c.l.b16 %v1686
        %v1778 = vunpack.c.h.b16 %v1686
        %v1779 = vunpack.c.l.b16 %v1687
        %v1780 = vunpack.c.h.b16 %v1687
        %v1781 = vunpack.c.l.b16 %v1688
        %v1782 = vunpack.c.h.b16 %v1688
        %v1783 = vunpack.c.l.b16 %v1689
        %v1784 = vunpack.c.h.b16 %v1689
        %v1785 = vunpack.c.l.b16 %v1690
        %v1786 = vunpack.c.h.b16 %v1690
        %v1787 = vunpack.c.l.b16 %v1691
        %v1788 = vunpack.c.h.b16 %v1691
        %v1789 = vunpack.c.l.b16 %v1692
        %v1790 = vunpack.c.h.b16 %v1692
        %v1791 = vunpack.c.l.b16 %v1693
        %v1792 = vunpack.c.h.b16 %v1693
        %v1793 = vunpack.c.l.b16 %v1694
        %v1794 = vunpack.c.h.b16 %v1694
        %v1795 = vunpack.c.l.b16 %v1695
        %v1796 = vunpack.c.h.b16 %v1695
        %v1797 = vunpack.c.l.b16 %v1696
        %v1798 = vunpack.c.h.b16 %v1696
        %v1799 = vunpack.c.l.b16 %v1697
        %v1800 = vunpack.c.h.b16 %v1697
        %v1801 = vunpack.c.l.b16 %v1698
        %v1802 = vunpack.c.h.b16 %v1698
        %v1803 = vunpack.c.l.b16 %v1699
        %v1804 = vunpack.c.h.b16 %v1699
        %v1805 = vunpack.c.l.b16 %v1700
        %v1806 = vunpack.c.h.b16 %v1700
        %v1807 = vunpack.c.l.b16 %v1701
        %v1808 = vunpack.c.h.b16 %v1701
        %v1809 = vunpack.c.l.b16 %v1702
        %v1810 = vunpack.c.h.b16 %v1702
        %v1811 = vpack.c.b16 %v1749, %v1747
        %v1812 = vpack.c.b16 %v1750, %v1748
        %v1813 = vpack.c.b16 %v1753, %v1751
        %v1814 = vpack.c.b16 %v1754, %v1752
        %v1815 = vpack.c.b16 %v1757, %v1755
        %v1816 = vpack.c.b16 %v1758, %v1756
        %v1817 = vpack.c.b16 %v1761, %v1759
        %v1818 = vpack.c.b16 %v1762, %v1760
        %v1819 = vpack.c.b16 %v1765, %v1763
        %v1820 = vpack.c.b16 %v1766, %v1764
        %v1821 = vpack.c.b16 %v1769, %v1767
        %v1822 = vpack.c.b16 %v1770, %v1768
        %v1823 = vpack.c.b16 %v1773, %v1771
        %v1824 = vpack.c.b16 %v1774, %v1772
        %v1825 = vpack.c.b16 %v1777, %v1775
        %v1826 = vpack.c.b16 %v1778, %v1776
        %v1827 = vpack.c.b16 %v1781, %v1779
        %v1828 = vpack.c.b16 %v1782, %v1780
        %v1829 = vpack.c.b16 %v1785, %v1783
        %v1830 = vpack.c.b16 %v1786, %v1784
        %v1831 = vpack.c.b16 %v1789, %v1787
        %v1832 = vpack.c.b16 %v1790, %v1788
        %v1833 = vpack.c.b16 %v1793, %v1791
        %v1834 = vpack.c.b16 %v1794, %v1792
        %v1835 = vpack.c.b16 %v1797, %v1795
        %v1836 = vpack.c.b16 %v1798, %v1796
        %v1837 = vpack.c.b16 %v1801, %v1799
        %v1838 = vpack.c.b16 %v1802, %v1800
        %v1839 = vpack.c.b16 %v1805, %v1803
        %v1840 = vpack.c.b16 %v1806, %v1804
        %v1841 = vpack.c.b16 %v1809, %v1807
        %v1842 = vpack.c.b16 %v1810, %v1808
        %1875 = vmatprep.subr.bf16.mxu0 %v1812
        %1876 = vmatpush1.bf16.msra.mxu0 %v1811
        %1877 = vmatprep.subr.bf16.mxu0 %v1814
        %1878 = vmatpush1.bf16.msra.mxu0 %v1813
        %1879 = vmatprep.subr.bf16.mxu0 %v1816
        %1880 = vmatpush1.bf16.msra.mxu0 %v1815
        %1881 = vmatprep.subr.bf16.mxu0 %v1818
        %1882 = vmatpush1.bf16.msra.mxu0 %v1817
        %1883 = vmatprep.subr.bf16.mxu0 %v1820
        %1884 = vmatpush1.bf16.msra.mxu0 %v1819
        %1885 = vmatprep.subr.bf16.mxu0 %v1822
        %1886 = vmatpush1.bf16.msra.mxu0 %v1821
        %1887 = vmatprep.subr.bf16.mxu0 %v1824
        %1888 = vmatpush1.bf16.msra.mxu0 %v1823
        %1889 = vmatprep.subr.bf16.mxu0 %v1826
        %1890 = vmatpush1.bf16.msra.mxu0 %v1825
        %1891 = vmatprep.subr.bf16.mxu0 %v1828
        %1892 = vmatpush1.bf16.msra.mxu0 %v1827
        %1893 = vmatprep.subr.bf16.mxu0 %v1830
        %1894 = vmatpush1.bf16.msra.mxu0 %v1829
        %1895 = vmatprep.subr.bf16.mxu0 %v1832
        %1896 = vmatpush1.bf16.msra.mxu0 %v1831
        %1897 = vmatprep.subr.bf16.mxu0 %v1834
        %1898 = vmatpush1.bf16.msra.mxu0 %v1833
        %1899 = vmatprep.subr.bf16.mxu0 %v1836
        %1900 = vmatpush1.bf16.msra.mxu0 %v1835
        %1901 = vmatprep.subr.bf16.mxu0 %v1838
        %1902 = vmatpush1.bf16.msra.mxu0 %v1837
        %1903 = vmatprep.subr.bf16.mxu0 %v1840
        %1904 = vmatpush1.bf16.msra.mxu0 %v1839
        %1905 = vmatprep.subr.bf16.mxu0 %v1842
        %1906 = vmatpush1.bf16.msra.mxu0 %v1841
        %1907 = vmatprep.mubr.bf16.mxu0 %v1664
        %1908 = vmatmul.mubr.bf16.gmra.mrb[0].mxu0 %v1663
        %v1909 = vpop.f32.mrb[0].mxu0
        %v1910 = vadd.f32 %v1708, %v1909
        %v1911 = vpop.f32.mrb[0].mxu0
        %v1912 = vadd.f32 %v1712, %v1911
        %v1913 = vpop.f32.mrb[0].mxu0
        %v1914 = vadd.f32 %v1708, %v1913
        %v1915 = vpop.f32.mrb[0].mxu0
        %v1916 = vadd.f32 %v1712, %v1915
        %1917 = vmatprep.mubr.bf16.mxu0 %v1666
        %1918 = vmatmul.mubr.bf16.gmra.mrb[0].mxu0 %v1665
        %v1919 = vpop.f32.mrb[0].mxu0
        %v1920 = vadd.f32 %v1708, %v1919
        %v1921 = vpop.f32.mrb[0].mxu0
        %v1922 = vadd.f32 %v1712, %v1921
        %v1923 = vpop.f32.mrb[0].mxu0
        %v1924 = vadd.f32 %v1708, %v1923
        %v1925 = vpop.f32.mrb[0].mxu0
        %v1926 = vadd.f32 %v1712, %v1925
        %1927 = vmatprep.mubr.bf16.mxu0 %v1668
        %1928 = vmatmul.mubr.bf16.gmra.mrb[0].mxu0 %v1667
        %v1929 = vpop.f32.mrb[0].mxu0
        %v1930 = vadd.f32 %v1708, %v1929
        %v1931 = vpop.f32.mrb[0].mxu0
        %v1932 = vadd.f32 %v1712, %v1931
        %v1933 = vpop.f32.mrb[0].mxu0
        %v1934 = vadd.f32 %v1708, %v1933
        %v1935 = vpop.f32.mrb[0].mxu0
        %v1936 = vadd.f32 %v1712, %v1935
        %1937 = vmatprep.mubr.bf16.mxu0 %v1670
        %1938 = vmatmul.mubr.bf16.gmra.mrb[0].mxu0 %v1669
        %v1939 = vpop.f32.mrb[0].mxu0
        %v1940 = vadd.f32 %v1708, %v1939
        %v1941 = vpop.f32.mrb[0].mxu0
        %v1942 = vadd.f32 %v1712, %v1941
        %v1943 = vpop.f32.mrb[0].mxu0
        %v1944 = vadd.f32 %v1708, %v1943
        %v1945 = vpop.f32.mrb[0].mxu0
        %v1946 = vadd.f32 %v1712, %v1945
        %1947 = vdwg.mxu0
        %v1948 = vxor.u32 %v1910, 2147483648
        %v1949 = vxor.u32 %v1912, 2147483648
        %v1950 = vxor.u32 %v1914, 2147483648
        %v1951 = vxor.u32 %v1916, 2147483648
        %v1952 = vxor.u32 %v1920, 2147483648
        %v1953 = vxor.u32 %v1922, 2147483648
        %v1954 = vxor.u32 %v1924, 2147483648
        %v1955 = vxor.u32 %v1926, 2147483648
        %v1956 = vxor.u32 %v1930, 2147483648
        %v1957 = vxor.u32 %v1932, 2147483648
        %v1958 = vxor.u32 %v1934, 2147483648
        %v1959 = vxor.u32 %v1936, 2147483648
        %v1960 = vxor.u32 %v1940, 2147483648
        %v1961 = vxor.u32 %v1942, 2147483648
        %v1962 = vxor.u32 %v1944, 2147483648
        %v1963 = vxor.u32 %v1946, 2147483648
        %v1964 = vmul.f32 %v1948, 1.442695
        %v1965 = vpow.pop %v1964
        %v1966 = vmul.f32 %v1949, 1.442695
        %v1967 = vpow.pop %v1966
        %v1968 = vmul.f32 %v1950, 1.442695
        %v1969 = vpow.pop %v1968
        %v1970 = vmul.f32 %v1951, 1.442695
        %v1971 = vpow.pop %v1970
        %v1972 = vmul.f32 %v1952, 1.442695
        %v1973 = vpow.pop %v1972
        %v1974 = vmul.f32 %v1953, 1.442695
        %v1975 = vpow.pop %v1974
        %v1976 = vmul.f32 %v1954, 1.442695
        %v1977 = vpow.pop %v1976
        %v1978 = vmul.f32 %v1955, 1.442695
        %v1979 = vpow.pop %v1978
        %v1980 = vmul.f32 %v1956, 1.442695
        %v1981 = vpow.pop %v1980
        %v1982 = vmul.f32 %v1957, 1.442695
        %v1983 = vpow.pop %v1982
        %v1984 = vmul.f32 %v1958, 1.442695
        %v1985 = vpow.pop %v1984
        %v1986 = vmul.f32 %v1959, 1.442695
        %v1987 = vpow.pop %v1986
        %v1988 = vmul.f32 %v1960, 1.442695
        %v1989 = vpow.pop %v1988
        %v1990 = vmul.f32 %v1961, 1.442695
        %v1991 = vpow.pop %v1990
        %v1992 = vmul.f32 %v1962, 1.442695
        %v1993 = vpow.pop %v1992
        %v1994 = vmul.f32 %v1963, 1.442695
        %v1995 = vpow.pop %v1994
        %v1996 = vadd.f32 %v1965, 1.0
        %v1997 = vadd.f32 %v1967, 1.0
        %v1998 = vadd.f32 %v1969, 1.0
        %v1999 = vadd.f32 %v1971, 1.0
        %v2000 = vadd.f32 %v1973, 1.0
        %v2001 = vadd.f32 %v1975, 1.0
        %v2002 = vadd.f32 %v1977, 1.0
        %v2003 = vadd.f32 %v1979, 1.0
        %v2004 = vadd.f32 %v1981, 1.0
        %v2005 = vadd.f32 %v1983, 1.0
        %v2006 = vadd.f32 %v1985, 1.0
        %v2007 = vadd.f32 %v1987, 1.0
        %v2008 = vadd.f32 %v1989, 1.0
        %v2009 = vadd.f32 %v1991, 1.0
        %v2010 = vadd.f32 %v1993, 1.0
        %v2011 = vadd.f32 %v1995, 1.0
        %v2012 = vrcp.pop %v1996
        %v2013 = vmul.f32 1.0, %v2012
        %v2014 = vrcp.pop %v1997
        %v2015 = vmul.f32 1.0, %v2014
        %v2016 = vrcp.pop %v1998
        %v2017 = vmul.f32 1.0, %v2016
        %v2018 = vrcp.pop %v1999
        %v2019 = vmul.f32 1.0, %v2018
        %v2020 = vrcp.pop %v2000
        %v2021 = vmul.f32 1.0, %v2020
        %v2022 = vrcp.pop %v2001
        %v2023 = vmul.f32 1.0, %v2022
        %v2024 = vrcp.pop %v2002
        %v2025 = vmul.f32 1.0, %v2024
        %v2026 = vrcp.pop %v2003
        %v2027 = vmul.f32 1.0, %v2026
        %v2028 = vrcp.pop %v2004
        %v2029 = vmul.f32 1.0, %v2028
        %v2030 = vrcp.pop %v2005
        %v2031 = vmul.f32 1.0, %v2030
        %v2032 = vrcp.pop %v2006
        %v2033 = vmul.f32 1.0, %v2032
        %v2034 = vrcp.pop %v2007
        %v2035 = vmul.f32 1.0, %v2034
        %v2036 = vrcp.pop %v2008
        %v2037 = vmul.f32 1.0, %v2036
        %v2038 = vrcp.pop %v2009
        %v2039 = vmul.f32 1.0, %v2038
        %v2040 = vrcp.pop %v2010
        %v2041 = vmul.f32 1.0, %v2040
        %v2042 = vrcp.pop %v2011
        %v2043 = vmul.f32 1.0, %v2042
        %v2044 = vmul.f32 %v1910, %v2013
        %v2045 = vmul.f32 %v1912, %v2015
        %v2046 = vmul.f32 %v1914, %v2017
        %v2047 = vmul.f32 %v1916, %v2019
        %v2048 = vmul.f32 %v1920, %v2021
        %v2049 = vmul.f32 %v1922, %v2023
        %v2050 = vmul.f32 %v1924, %v2025
        %v2051 = vmul.f32 %v1926, %v2027
        %v2052 = vmul.f32 %v1930, %v2029
        %v2053 = vmul.f32 %v1932, %v2031
        %v2054 = vmul.f32 %v1934, %v2033
        %v2055 = vmul.f32 %v1936, %v2035
        %v2056 = vmul.f32 %v1940, %v2037
        %v2057 = vmul.f32 %v1942, %v2039
        %v2058 = vmul.f32 %v1944, %v2041
        %v2059 = vmul.f32 %v1946, %v2043
        %v2076 = vrot.slane %v2044, 7
        %v2077 = vrot.slane %v2045, 7
        %v2078 = vrot.slane %v2046, 7
        %v2079 = vrot.slane %v2047, 7
        %v2080 = vrot.slane %v2048, 7
        %v2081 = vrot.slane %v2049, 7
        %v2082 = vrot.slane %v2050, 7
        %v2083 = vrot.slane %v2051, 7
        %v2084 = vrot.slane %v2052, 7
        %v2085 = vrot.slane %v2053, 7
        %v2086 = vrot.slane %v2054, 7
        %v2087 = vrot.slane %v2055, 7
        %v2088 = vrot.slane %v2056, 7
        %v2089 = vrot.slane %v2057, 7
        %v2090 = vrot.slane %v2058, 7
        %v2091 = vrot.slane %v2059, 7
        %2108 = vst [vmem:[%s327] sm:$0xfe] %v2076
        %2109 = vst [vmem:[%s327 + $0x8] sm:$0xfe] %v2077
        %2110 = vst [vmem:[%s327 + $0x10] sm:$0x1] %v2076
        %2111 = vst [vmem:[%s327 + $0x18] sm:$0x1] %v2077
        %2112 = vst [vmem:[%s327 + $0x20] sm:$0xfe] %v2078
        %2113 = vst [vmem:[%s327 + $0x28] sm:$0xfe] %v2079
        %2114 = vst [vmem:[%s327 + $0x30] sm:$0x1] %v2078
        %2115 = vst [vmem:[%s327 + $0x38] sm:$0x1] %v2079
        %2116 = vst [vmem:[%s327 + $0x40] sm:$0xfe] %v2080
        %2117 = vst [vmem:[%s327 + $0x48] sm:$0xfe] %v2081
        %2118 = vst [vmem:[%s327 + $0x50] sm:$0x1] %v2080
        %2119 = vst [vmem:[%s327 + $0x58] sm:$0x1] %v2081
        %2120 = vst [vmem:[%s327 + $0x60] sm:$0xfe] %v2082
        %2121 = vst [vmem:[%s327 + $0x68] sm:$0xfe] %v2083
        %2122 = vst [vmem:[%s327 + $0x70] sm:$0x1] %v2082
        %2123 = vst [vmem:[%s327 + $0x78] sm:$0x1] %v2083
        %2124 = vst [vmem:[%s327 + $0x80] sm:$0xfe] %v2084
        %2125 = vst [vmem:[%s327 + $0x88] sm:$0xfe] %v2085
        %2126 = vst [vmem:[%s327 + $0x90] sm:$0x1] %v2084
        %2127 = vst [vmem:[%s327 + $0x98] sm:$0x1] %v2085
        %2128 = vst [vmem:[%s327 + $0xa0] sm:$0xfe] %v2086
        %2129 = vst [vmem:[%s327 + $0xa8] sm:$0xfe] %v2087
        %2130 = vst [vmem:[%s327 + $0xb0] sm:$0x1] %v2086
        %2131 = vst [vmem:[%s327 + $0xb8] sm:$0x1] %v2087
        %2132 = vst [vmem:[%s327 + $0xc0] sm:$0xfe] %v2088
        %2133 = vst [vmem:[%s327 + $0xc8] sm:$0xfe] %v2089
        %2134 = vst [vmem:[%s327 + $0xd0] sm:$0x1] %v2088
        %2135 = vst [vmem:[%s327 + $0xd8] sm:$0x1] %v2089
        %2136 = vst [vmem:[%s327 + $0xe0] sm:$0xfe] %v2090
        %2137 = vst [vmem:[%s327 + $0xe8] sm:$0xfe] %v2091
        %2138 = vst [vmem:[%s327 + $0xf0] sm:$0x1] %v2090
        %2139 = vst [vmem:[%s327 + $0xf8] sm:$0x1] %v2091
        %v2140 = vld [vmem:[#allocation2] sm:$0xff]
        %v2141 = vld [vmem:[#allocation2 + $0x8] sm:$0xff]
        %v2142 = vld [vmem:[#allocation2 + $0x20] sm:$0xff]
        %v2143 = vld [vmem:[#allocation2 + $0x28] sm:$0xff]
        %v2144 = vld [vmem:[#allocation2 + $0x40] sm:$0xff]
        %v2145 = vld [vmem:[#allocation2 + $0x48] sm:$0xff]
        %v2146 = vld [vmem:[#allocation2 + $0x60] sm:$0xff]
        %v2147 = vld [vmem:[#allocation2 + $0x68] sm:$0xff]
        %v2148 = vld [vmem:[#allocation2 + $0x80] sm:$0xff]
        %v2149 = vld [vmem:[#allocation2 + $0x88] sm:$0xff]
        %v2150 = vld [vmem:[#allocation2 + $0xa0] sm:$0xff]
        %v2151 = vld [vmem:[#allocation2 + $0xa8] sm:$0xff]
        %v2152 = vld [vmem:[#allocation2 + $0xc0] sm:$0xff]
        %v2153 = vld [vmem:[#allocation2 + $0xc8] sm:$0xff]
        %v2154 = vld [vmem:[#allocation2 + $0xe0] sm:$0xff]
        %v2155 = vld [vmem:[#allocation2 + $0xe8] sm:$0xff]
        %s2156 = scalar_lea.vmem %s1, 32
        %v2157 = vld [vmem:[%s2156] ss:$8 sm:$0x3]
        %v2159 = vlaneseq
        %v2160 = vshrl.u32 %v2159, 7
        %v2161 = vsub.s32 0, %v2160
        %v2162 = vrot.slane %v2157, %v2161
        %v2163 = vlaneseq
        %v2164 = vshrl.u32 %v2163, 7
        %v2165 = vsub.s32 1, %v2164
        %v2166 = vrot.slane %v2157, %v2165
        %v2169 = vmul.f32 %v2140, %v2162
        %v2170 = vmul.f32 %v2141, %v2166
        %v2171 = vmul.f32 %v2142, %v2162
        %v2172 = vmul.f32 %v2143, %v2166
        %v2173 = vmul.f32 %v2144, %v2162
        %v2174 = vmul.f32 %v2145, %v2166
        %v2175 = vmul.f32 %v2146, %v2162
        %v2176 = vmul.f32 %v2147, %v2166
        %v2177 = vmul.f32 %v2148, %v2162
        %v2178 = vmul.f32 %v2149, %v2166
        %v2179 = vmul.f32 %v2150, %v2162
        %v2180 = vmul.f32 %v2151, %v2166
        %v2181 = vmul.f32 %v2152, %v2162
        %v2182 = vmul.f32 %v2153, %v2166
        %v2183 = vmul.f32 %v2154, %v2162
        %v2184 = vmul.f32 %v2155, %v2166
        %v2185 = vld [vmem:[#allocation2] sm:$0xfe]
        %v2186 = vld [vmem:[#allocation2 + $0x8] sm:$0xfe]
        %v2187 = vld [vmem:[#allocation2 + $0x10] sm:$0x1]
        %v2188 = vld [vmem:[#allocation2 + $0x18] sm:$0x1]
        %v2189 = vld [vmem:[#allocation2 + $0x20] sm:$0xfe]
        %v2190 = vld [vmem:[#allocation2 + $0x28] sm:$0xfe]
        %v2191 = vld [vmem:[#allocation2 + $0x30] sm:$0x1]
        %v2192 = vld [vmem:[#allocation2 + $0x38] sm:$0x1]
        %v2193 = vld [vmem:[#allocation2 + $0x40] sm:$0xfe]
        %v2194 = vld [vmem:[#allocation2 + $0x48] sm:$0xfe]
        %v2195 = vld [vmem:[#allocation2 + $0x50] sm:$0x1]
        %v2196 = vld [vmem:[#allocation2 + $0x58] sm:$0x1]
        %v2197 = vld [vmem:[#allocation2 + $0x60] sm:$0xfe]
        %v2198 = vld [vmem:[#allocation2 + $0x68] sm:$0xfe]
        %v2199 = vld [vmem:[#allocation2 + $0x70] sm:$0x1]
        %v2200 = vld [vmem:[#allocation2 + $0x78] sm:$0x1]
        %v2201 = vld [vmem:[#allocation2 + $0x80] sm:$0xfe]
        %v2202 = vld [vmem:[#allocation2 + $0x88] sm:$0xfe]
        %v2203 = vld [vmem:[#allocation2 + $0x90] sm:$0x1]
        %v2204 = vld [vmem:[#allocation2 + $0x98] sm:$0x1]
        %v2205 = vld [vmem:[#allocation2 + $0xa0] sm:$0xfe]
        %v2206 = vld [vmem:[#allocation2 + $0xa8] sm:$0xfe]
        %v2207 = vld [vmem:[#allocation2 + $0xb0] sm:$0x1]
        %v2208 = vld [vmem:[#allocation2 + $0xb8] sm:$0x1]
        %v2209 = vld [vmem:[#allocation2 + $0xc0] sm:$0xfe]
        %v2210 = vld [vmem:[#allocation2 + $0xc8] sm:$0xfe]
        %v2211 = vld [vmem:[#allocation2 + $0xd0] sm:$0x1]
        %v2212 = vld [vmem:[#allocation2 + $0xd8] sm:$0x1]
        %v2213 = vld [vmem:[#allocation2 + $0xe0] sm:$0xfe]
        %v2214 = vld [vmem:[#allocation2 + $0xe8] sm:$0xfe]
        %v2215 = vld [vmem:[#allocation2 + $0xf0] sm:$0x1]
        %v2216 = vld [vmem:[#allocation2 + $0xf8] sm:$0x1]
        %s2217 = scalar_lea.vmem %s2156, 1
        %v2218 = vld [vmem:[%s2217] ss:$8 sm:$0x3]
        %v2220 = vlaneseq
        %v2221 = vshrl.u32 %v2220, 7
        %v2222 = vsub.s32 0, %v2221
        %v2223 = vrot.slane %v2218, %v2222
        %v2224 = vlaneseq
        %v2225 = vshrl.u32 %v2224, 7
        %v2226 = vsub.s32 1, %v2225
        %v2227 = vrot.slane %v2218, %v2226
        %v2230 = vmul.f32 %v2185, %v2223
        %v2231 = vmul.f32 %v2186, %v2227
        %v2232 = vmul.f32 %v2187, %v2223
        %v2233 = vmul.f32 %v2188, %v2227
        %v2234 = vmul.f32 %v2189, %v2223
        %v2235 = vmul.f32 %v2190, %v2227
        %v2236 = vmul.f32 %v2191, %v2223
        %v2237 = vmul.f32 %v2192, %v2227
        %v2238 = vmul.f32 %v2193, %v2223
        %v2239 = vmul.f32 %v2194, %v2227
        %v2240 = vmul.f32 %v2195, %v2223
        %v2241 = vmul.f32 %v2196, %v2227
        %v2242 = vmul.f32 %v2197, %v2223
        %v2243 = vmul.f32 %v2198, %v2227
        %v2244 = vmul.f32 %v2199, %v2223
        %v2245 = vmul.f32 %v2200, %v2227
        %v2246 = vmul.f32 %v2201, %v2223
        %v2247 = vmul.f32 %v2202, %v2227
        %v2248 = vmul.f32 %v2203, %v2223
        %v2249 = vmul.f32 %v2204, %v2227
        %v2250 = vmul.f32 %v2205, %v2223
        %v2251 = vmul.f32 %v2206, %v2227
        %v2252 = vmul.f32 %v2207, %v2223
        %v2253 = vmul.f32 %v2208, %v2227
        %v2254 = vmul.f32 %v2209, %v2223
        %v2255 = vmul.f32 %v2210, %v2227
        %v2256 = vmul.f32 %v2211, %v2223
        %v2257 = vmul.f32 %v2212, %v2227
        %v2258 = vmul.f32 %v2213, %v2223
        %v2259 = vmul.f32 %v2214, %v2227
        %v2260 = vmul.f32 %v2215, %v2223
        %v2261 = vmul.f32 %v2216, %v2227
        %v2294 = vrot.slane %v2230, 1
        %v2295 = vrot.slane %v2232, 1
        %v2296 = vsel %vm513, %v2294, %v2295
        %v2297 = vrot.slane %v2231, 1
        %v2298 = vrot.slane %v2233, 1
        %v2299 = vsel %vm513, %v2297, %v2298
        %v2300 = vrot.slane %v2234, 1
        %v2301 = vrot.slane %v2236, 1
        %v2302 = vsel %vm513, %v2300, %v2301
        %v2303 = vrot.slane %v2235, 1
        %v2304 = vrot.slane %v2237, 1
        %v2305 = vsel %vm513, %v2303, %v2304
        %v2306 = vrot.slane %v2238, 1
        %v2307 = vrot.slane %v2240, 1
        %v2308 = vsel %vm513, %v2306, %v2307
        %v2309 = vrot.slane %v2239, 1
        %v2310 = vrot.slane %v2241, 1
        %v2311 = vsel %vm513, %v2309, %v2310
        %v2312 = vrot.slane %v2242, 1
        %v2313 = vrot.slane %v2244, 1
        %v2314 = vsel %vm513, %v2312, %v2313
        %v2315 = vrot.slane %v2243, 1
        %v2316 = vrot.slane %v2245, 1
        %v2317 = vsel %vm513, %v2315, %v2316
        %v2318 = vrot.slane %v2246, 1
        %v2319 = vrot.slane %v2248, 1
        %v2320 = vsel %vm513, %v2318, %v2319
        %v2321 = vrot.slane %v2247, 1
        %v2322 = vrot.slane %v2249, 1
        %v2323 = vsel %vm513, %v2321, %v2322
        %v2324 = vrot.slane %v2250, 1
        %v2325 = vrot.slane %v2252, 1
        %v2326 = vsel %vm513, %v2324, %v2325
        %v2327 = vrot.slane %v2251, 1
        %v2328 = vrot.slane %v2253, 1
        %v2329 = vsel %vm513, %v2327, %v2328
        %v2330 = vrot.slane %v2254, 1
        %v2331 = vrot.slane %v2256, 1
        %v2332 = vsel %vm513, %v2330, %v2331
        %v2333 = vrot.slane %v2255, 1
        %v2334 = vrot.slane %v2257, 1
        %v2335 = vsel %vm513, %v2333, %v2334
        %v2336 = vrot.slane %v2258, 1
        %v2337 = vrot.slane %v2260, 1
        %v2338 = vsel %vm513, %v2336, %v2337
        %v2339 = vrot.slane %v2259, 1
        %v2340 = vrot.slane %v2261, 1
        %v2341 = vsel %vm513, %v2339, %v2340
        %v2358 = vadd.f32 %v2169, %v2296
        %v2359 = vadd.f32 %v2170, %v2299
        %v2360 = vadd.f32 %v2171, %v2302
        %v2361 = vadd.f32 %v2172, %v2305
        %v2362 = vadd.f32 %v2173, %v2308
        %v2363 = vadd.f32 %v2174, %v2311
        %v2364 = vadd.f32 %v2175, %v2314
        %v2365 = vadd.f32 %v2176, %v2317
        %v2366 = vadd.f32 %v2177, %v2320
        %v2367 = vadd.f32 %v2178, %v2323
        %v2368 = vadd.f32 %v2179, %v2326
        %v2369 = vadd.f32 %v2180, %v2329
        %v2370 = vadd.f32 %v2181, %v2332
        %v2371 = vadd.f32 %v2182, %v2335
        %v2372 = vadd.f32 %v2183, %v2338
        %v2373 = vadd.f32 %v2184, %v2341
        %v2374 = vld [vmem:[#allocation2] sm:$0xfc]
        %v2375 = vld [vmem:[#allocation2 + $0x8] sm:$0xfc]
        %v2376 = vld [vmem:[#allocation2 + $0x10] sm:$0x3]
        %v2377 = vld [vmem:[#allocation2 + $0x18] sm:$0x3]
        %v2378 = vld [vmem:[#allocation2 + $0x20] sm:$0xfc]
        %v2379 = vld [vmem:[#allocation2 + $0x28] sm:$0xfc]
        %v2380 = vld [vmem:[#allocation2 + $0x30] sm:$0x3]
        %v2381 = vld [vmem:[#allocation2 + $0x38] sm:$0x3]
        %v2382 = vld [vmem:[#allocation2 + $0x40] sm:$0xfc]
        %v2383 = vld [vmem:[#allocation2 + $0x48] sm:$0xfc]
        %v2384 = vld [vmem:[#allocation2 + $0x50] sm:$0x3]
        %v2385 = vld [vmem:[#allocation2 + $0x58] sm:$0x3]
        %v2386 = vld [vmem:[#allocation2 + $0x60] sm:$0xfc]
        %v2387 = vld [vmem:[#allocation2 + $0x68] sm:$0xfc]
        %v2388 = vld [vmem:[#allocation2 + $0x70] sm:$0x3]
        %v2389 = vld [vmem:[#allocation2 + $0x78] sm:$0x3]
        %v2390 = vld [vmem:[#allocation2 + $0x80] sm:$0xfc]
        %v2391 = vld [vmem:[#allocation2 + $0x88] sm:$0xfc]
        %v2392 = vld [vmem:[#allocation2 + $0x90] sm:$0x3]
        %v2393 = vld [vmem:[#allocation2 + $0x98] sm:$0x3]
        %v2394 = vld [vmem:[#allocation2 + $0xa0] sm:$0xfc]
        %v2395 = vld [vmem:[#allocation2 + $0xa8] sm:$0xfc]
        %v2396 = vld [vmem:[#allocation2 + $0xb0] sm:$0x3]
        %v2397 = vld [vmem:[#allocation2 + $0xb8] sm:$0x3]
        %v2398 = vld [vmem:[#allocation2 + $0xc0] sm:$0xfc]
        %v2399 = vld [vmem:[#allocation2 + $0xc8] sm:$0xfc]
        %v2400 = vld [vmem:[#allocation2 + $0xd0] sm:$0x3]
        %v2401 = vld [vmem:[#allocation2 + $0xd8] sm:$0x3]
        %v2402 = vld [vmem:[#allocation2 + $0xe0] sm:$0xfc]
        %v2403 = vld [vmem:[#allocation2 + $0xe8] sm:$0xfc]
        %v2404 = vld [vmem:[#allocation2 + $0xf0] sm:$0x3]
        %v2405 = vld [vmem:[#allocation2 + $0xf8] sm:$0x3]
        %s2406 = scalar_lea.vmem %s2156, 2
        %v2407 = vld [vmem:[%s2406] ss:$8 sm:$0x3]
        %v2409 = vlaneseq
        %v2410 = vshrl.u32 %v2409, 7
        %v2411 = vsub.s32 0, %v2410
        %v2412 = vrot.slane %v2407, %v2411
        %v2413 = vlaneseq
        %v2414 = vshrl.u32 %v2413, 7
        %v2415 = vsub.s32 1, %v2414
        %v2416 = vrot.slane %v2407, %v2415
        %v2419 = vmul.f32 %v2374, %v2412
        %v2420 = vmul.f32 %v2375, %v2416
        %v2421 = vmul.f32 %v2376, %v2412
        %v2422 = vmul.f32 %v2377, %v2416
        %v2423 = vmul.f32 %v2378, %v2412
        %v2424 = vmul.f32 %v2379, %v2416
        %v2425 = vmul.f32 %v2380, %v2412
        %v2426 = vmul.f32 %v2381, %v2416
        %v2427 = vmul.f32 %v2382, %v2412
        %v2428 = vmul.f32 %v2383, %v2416
        %v2429 = vmul.f32 %v2384, %v2412
        %v2430 = vmul.f32 %v2385, %v2416
        %v2431 = vmul.f32 %v2386, %v2412
        %v2432 = vmul.f32 %v2387, %v2416
        %v2433 = vmul.f32 %v2388, %v2412
        %v2434 = vmul.f32 %v2389, %v2416
        %v2435 = vmul.f32 %v2390, %v2412
        %v2436 = vmul.f32 %v2391, %v2416
        %v2437 = vmul.f32 %v2392, %v2412
        %v2438 = vmul.f32 %v2393, %v2416
        %v2439 = vmul.f32 %v2394, %v2412
        %v2440 = vmul.f32 %v2395, %v2416
        %v2441 = vmul.f32 %v2396, %v2412
        %v2442 = vmul.f32 %v2397, %v2416
        %v2443 = vmul.f32 %v2398, %v2412
        %v2444 = vmul.f32 %v2399, %v2416
        %v2445 = vmul.f32 %v2400, %v2412
        %v2446 = vmul.f32 %v2401, %v2416
        %v2447 = vmul.f32 %v2402, %v2412
        %v2448 = vmul.f32 %v2403, %v2416
        %v2449 = vmul.f32 %v2404, %v2412
        %v2450 = vmul.f32 %v2405, %v2416
        %v2483 = vrot.slane %v2419, 2
        %v2484 = vrot.slane %v2421, 2
        %v2485 = vsel %vm703, %v2483, %v2484
        %v2486 = vrot.slane %v2420, 2
        %v2487 = vrot.slane %v2422, 2
        %v2488 = vsel %vm703, %v2486, %v2487
        %v2489 = vrot.slane %v2423, 2
        %v2490 = vrot.slane %v2425, 2
        %v2491 = vsel %vm703, %v2489, %v2490
        %v2492 = vrot.slane %v2424, 2
        %v2493 = vrot.slane %v2426, 2
        %v2494 = vsel %vm703, %v2492, %v2493
        %v2495 = vrot.slane %v2427, 2
        %v2496 = vrot.slane %v2429, 2
        %v2497 = vsel %vm703, %v2495, %v2496
        %v2498 = vrot.slane %v2428, 2
        %v2499 = vrot.slane %v2430, 2
        %v2500 = vsel %vm703, %v2498, %v2499
        %v2501 = vrot.slane %v2431, 2
        %v2502 = vrot.slane %v2433, 2
        %v2503 = vsel %vm703, %v2501, %v2502
        %v2504 = vrot.slane %v2432, 2
        %v2505 = vrot.slane %v2434, 2
        %v2506 = vsel %vm703, %v2504, %v2505
        %v2507 = vrot.slane %v2435, 2
        %v2508 = vrot.slane %v2437, 2
        %v2509 = vsel %vm703, %v2507, %v2508
        %v2510 = vrot.slane %v2436, 2
        %v2511 = vrot.slane %v2438, 2
        %v2512 = vsel %vm703, %v2510, %v2511
        %v2513 = vrot.slane %v2439, 2
        %v2514 = vrot.slane %v2441, 2
        %v2515 = vsel %vm703, %v2513, %v2514
        %v2516 = vrot.slane %v2440, 2
        %v2517 = vrot.slane %v2442, 2
        %v2518 = vsel %vm703, %v2516, %v2517
        %v2519 = vrot.slane %v2443, 2
        %v2520 = vrot.slane %v2445, 2
        %v2521 = vsel %vm703, %v2519, %v2520
        %v2522 = vrot.slane %v2444, 2
        %v2523 = vrot.slane %v2446, 2
        %v2524 = vsel %vm703, %v2522, %v2523
        %v2525 = vrot.slane %v2447, 2
        %v2526 = vrot.slane %v2449, 2
        %v2527 = vsel %vm703, %v2525, %v2526
        %v2528 = vrot.slane %v2448, 2
        %v2529 = vrot.slane %v2450, 2
        %v2530 = vsel %vm703, %v2528, %v2529
        %v2547 = vadd.f32 %v2358, %v2485
        %v2548 = vadd.f32 %v2359, %v2488
        %v2549 = vadd.f32 %v2360, %v2491
        %v2550 = vadd.f32 %v2361, %v2494
        %v2551 = vadd.f32 %v2362, %v2497
        %v2552 = vadd.f32 %v2363, %v2500
        %v2553 = vadd.f32 %v2364, %v2503
        %v2554 = vadd.f32 %v2365, %v2506
        %v2555 = vadd.f32 %v2366, %v2509
        %v2556 = vadd.f32 %v2367, %v2512
        %v2557 = vadd.f32 %v2368, %v2515
        %v2558 = vadd.f32 %v2369, %v2518
        %v2559 = vadd.f32 %v2370, %v2521
        %v2560 = vadd.f32 %v2371, %v2524
        %v2561 = vadd.f32 %v2372, %v2527
        %v2562 = vadd.f32 %v2373, %v2530
        %v2563 = vld [vmem:[%s327] sm:$0xff]
        %v2564 = vld [vmem:[%s327 + $0x8] sm:$0xff]
        %v2565 = vld [vmem:[%s327 + $0x20] sm:$0xff]
        %v2566 = vld [vmem:[%s327 + $0x28] sm:$0xff]
        %v2567 = vld [vmem:[%s327 + $0x40] sm:$0xff]
        %v2568 = vld [vmem:[%s327 + $0x48] sm:$0xff]
        %v2569 = vld [vmem:[%s327 + $0x60] sm:$0xff]
        %v2570 = vld [vmem:[%s327 + $0x68] sm:$0xff]
        %v2571 = vld [vmem:[%s327 + $0x80] sm:$0xff]
        %v2572 = vld [vmem:[%s327 + $0x88] sm:$0xff]
        %v2573 = vld [vmem:[%s327 + $0xa0] sm:$0xff]
        %v2574 = vld [vmem:[%s327 + $0xa8] sm:$0xff]
        %v2575 = vld [vmem:[%s327 + $0xc0] sm:$0xff]
        %v2576 = vld [vmem:[%s327 + $0xc8] sm:$0xff]
        %v2577 = vld [vmem:[%s327 + $0xe0] sm:$0xff]
        %v2578 = vld [vmem:[%s327 + $0xe8] sm:$0xff]
        %s2579 = scalar_lea.vmem %s2156, 3
        %v2580 = vld [vmem:[%s2579] ss:$8 sm:$0x3]
        %v2582 = vlaneseq
        %v2583 = vshrl.u32 %v2582, 7
        %v2584 = vsub.s32 0, %v2583
        %v2585 = vrot.slane %v2580, %v2584
        %v2586 = vlaneseq
        %v2587 = vshrl.u32 %v2586, 7
        %v2588 = vsub.s32 1, %v2587
        %v2589 = vrot.slane %v2580, %v2588
        %v2592 = vmul.f32 %v2563, %v2585
        %v2593 = vmul.f32 %v2564, %v2589
        %v2594 = vmul.f32 %v2565, %v2585
        %v2595 = vmul.f32 %v2566, %v2589
        %v2596 = vmul.f32 %v2567, %v2585
        %v2597 = vmul.f32 %v2568, %v2589
        %v2598 = vmul.f32 %v2569, %v2585
        %v2599 = vmul.f32 %v2570, %v2589
        %v2600 = vmul.f32 %v2571, %v2585
        %v2601 = vmul.f32 %v2572, %v2589
        %v2602 = vmul.f32 %v2573, %v2585
        %v2603 = vmul.f32 %v2574, %v2589
        %v2604 = vmul.f32 %v2575, %v2585
        %v2605 = vmul.f32 %v2576, %v2589
        %v2606 = vmul.f32 %v2577, %v2585
        %v2607 = vmul.f32 %v2578, %v2589
        %v2608 = vadd.f32 %v2547, %v2592
        %v2609 = vadd.f32 %v2548, %v2593
        %v2610 = vadd.f32 %v2549, %v2594
        %v2611 = vadd.f32 %v2550, %v2595
        %v2612 = vadd.f32 %v2551, %v2596
        %v2613 = vadd.f32 %v2552, %v2597
        %v2614 = vadd.f32 %v2553, %v2598
        %v2615 = vadd.f32 %v2554, %v2599
        %v2616 = vadd.f32 %v2555, %v2600
        %v2617 = vadd.f32 %v2556, %v2601
        %v2618 = vadd.f32 %v2557, %v2602
        %v2619 = vadd.f32 %v2558, %v2603
        %v2620 = vadd.f32 %v2559, %v2604
        %v2621 = vadd.f32 %v2560, %v2605
        %v2622 = vadd.f32 %v2561, %v2606
        %v2623 = vadd.f32 %v2562, %v2607
        %v2624 = vld [vmem:[%s327] sm:$0xfe]
        %v2625 = vld [vmem:[%s327 + $0x8] sm:$0xfe]
        %v2626 = vld [vmem:[%s327 + $0x10] sm:$0x1]
        %v2627 = vld [vmem:[%s327 + $0x18] sm:$0x1]
        %v2628 = vld [vmem:[%s327 + $0x20] sm:$0xfe]
        %v2629 = vld [vmem:[%s327 + $0x28] sm:$0xfe]
        %v2630 = vld [vmem:[%s327 + $0x30] sm:$0x1]
        %v2631 = vld [vmem:[%s327 + $0x38] sm:$0x1]
        %v2632 = vld [vmem:[%s327 + $0x40] sm:$0xfe]
        %v2633 = vld [vmem:[%s327 + $0x48] sm:$0xfe]
        %v2634 = vld [vmem:[%s327 + $0x50] sm:$0x1]
        %v2635 = vld [vmem:[%s327 + $0x58] sm:$0x1]
        %v2636 = vld [vmem:[%s327 + $0x60] sm:$0xfe]
        %v2637 = vld [vmem:[%s327 + $0x68] sm:$0xfe]
        %v2638 = vld [vmem:[%s327 + $0x70] sm:$0x1]
        %v2639 = vld [vmem:[%s327 + $0x78] sm:$0x1]
        %v2640 = vld [vmem:[%s327 + $0x80] sm:$0xfe]
        %v2641 = vld [vmem:[%s327 + $0x88] sm:$0xfe]
        %v2642 = vld [vmem:[%s327 + $0x90] sm:$0x1]
        %v2643 = vld [vmem:[%s327 + $0x98] sm:$0x1]
        %v2644 = vld [vmem:[%s327 + $0xa0] sm:$0xfe]
        %v2645 = vld [vmem:[%s327 + $0xa8] sm:$0xfe]
        %v2646 = vld [vmem:[%s327 + $0xb0] sm:$0x1]
        %v2647 = vld [vmem:[%s327 + $0xb8] sm:$0x1]
        %v2648 = vld [vmem:[%s327 + $0xc0] sm:$0xfe]
        %v2649 = vld [vmem:[%s327 + $0xc8] sm:$0xfe]
        %v2650 = vld [vmem:[%s327 + $0xd0] sm:$0x1]
        %v2651 = vld [vmem:[%s327 + $0xd8] sm:$0x1]
        %v2652 = vld [vmem:[%s327 + $0xe0] sm:$0xfe]
        %v2653 = vld [vmem:[%s327 + $0xe8] sm:$0xfe]
        %v2654 = vld [vmem:[%s327 + $0xf0] sm:$0x1]
        %v2655 = vld [vmem:[%s327 + $0xf8] sm:$0x1]
        %s2656 = scalar_lea.vmem %s2156, 4
        %v2657 = vld [vmem:[%s2656] ss:$8 sm:$0x3]
        %v2659 = vlaneseq
        %v2660 = vshrl.u32 %v2659, 7
        %v2661 = vsub.s32 0, %v2660
        %v2662 = vrot.slane %v2657, %v2661
        %v2663 = vlaneseq
        %v2664 = vshrl.u32 %v2663, 7
        %v2665 = vsub.s32 1, %v2664
        %v2666 = vrot.slane %v2657, %v2665
        %v2669 = vmul.f32 %v2624, %v2662
        %v2670 = vmul.f32 %v2625, %v2666
        %v2671 = vmul.f32 %v2626, %v2662
        %v2672 = vmul.f32 %v2627, %v2666
        %v2673 = vmul.f32 %v2628, %v2662
        %v2674 = vmul.f32 %v2629, %v2666
        %v2675 = vmul.f32 %v2630, %v2662
        %v2676 = vmul.f32 %v2631, %v2666
        %v2677 = vmul.f32 %v2632, %v2662
        %v2678 = vmul.f32 %v2633, %v2666
        %v2679 = vmul.f32 %v2634, %v2662
        %v2680 = vmul.f32 %v2635, %v2666
        %v2681 = vmul.f32 %v2636, %v2662
        %v2682 = vmul.f32 %v2637, %v2666
        %v2683 = vmul.f32 %v2638, %v2662
        %v2684 = vmul.f32 %v2639, %v2666
        %v2685 = vmul.f32 %v2640, %v2662
        %v2686 = vmul.f32 %v2641, %v2666
        %v2687 = vmul.f32 %v2642, %v2662
        %v2688 = vmul.f32 %v2643, %v2666
        %v2689 = vmul.f32 %v2644, %v2662
        %v2690 = vmul.f32 %v2645, %v2666
        %v2691 = vmul.f32 %v2646, %v2662
        %v2692 = vmul.f32 %v2647, %v2666
        %v2693 = vmul.f32 %v2648, %v2662
        %v2694 = vmul.f32 %v2649, %v2666
        %v2695 = vmul.f32 %v2650, %v2662
        %v2696 = vmul.f32 %v2651, %v2666
        %v2697 = vmul.f32 %v2652, %v2662
        %v2698 = vmul.f32 %v2653, %v2666
        %v2699 = vmul.f32 %v2654, %v2662
        %v2700 = vmul.f32 %v2655, %v2666
        %v2733 = vrot.slane %v2669, 1
        %v2734 = vrot.slane %v2671, 1
        %v2735 = vsel %vm513, %v2733, %v2734
        %v2736 = vrot.slane %v2670, 1
        %v2737 = vrot.slane %v2672, 1
        %v2738 = vsel %vm513, %v2736, %v2737
        %v2739 = vrot.slane %v2673, 1
        %v2740 = vrot.slane %v2675, 1
        %v2741 = vsel %vm513, %v2739, %v2740
        %v2742 = vrot.slane %v2674, 1
        %v2743 = vrot.slane %v2676, 1
        %v2744 = vsel %vm513, %v2742, %v2743
        %v2745 = vrot.slane %v2677, 1
        %v2746 = vrot.slane %v2679, 1
        %v2747 = vsel %vm513, %v2745, %v2746
        %v2748 = vrot.slane %v2678, 1
        %v2749 = vrot.slane %v2680, 1
        %v2750 = vsel %vm513, %v2748, %v2749
        %v2751 = vrot.slane %v2681, 1
        %v2752 = vrot.slane %v2683, 1
        %v2753 = vsel %vm513, %v2751, %v2752
        %v2754 = vrot.slane %v2682, 1
        %v2755 = vrot.slane %v2684, 1
        %v2756 = vsel %vm513, %v2754, %v2755
        %v2757 = vrot.slane %v2685, 1
        %v2758 = vrot.slane %v2687, 1
        %v2759 = vsel %vm513, %v2757, %v2758
        %v2760 = vrot.slane %v2686, 1
        %v2761 = vrot.slane %v2688, 1
        %v2762 = vsel %vm513, %v2760, %v2761
        %v2763 = vrot.slane %v2689, 1
        %v2764 = vrot.slane %v2691, 1
        %v2765 = vsel %vm513, %v2763, %v2764
        %v2766 = vrot.slane %v2690, 1
        %v2767 = vrot.slane %v2692, 1
        %v2768 = vsel %vm513, %v2766, %v2767
        %v2769 = vrot.slane %v2693, 1
        %v2770 = vrot.slane %v2695, 1
        %v2771 = vsel %vm513, %v2769, %v2770
        %v2772 = vrot.slane %v2694, 1
        %v2773 = vrot.slane %v2696, 1
        %v2774 = vsel %vm513, %v2772, %v2773
        %v2775 = vrot.slane %v2697, 1
        %v2776 = vrot.slane %v2699, 1
        %v2777 = vsel %vm513, %v2775, %v2776
        %v2778 = vrot.slane %v2698, 1
        %v2779 = vrot.slane %v2700, 1
        %v2780 = vsel %vm513, %v2778, %v2779
        %v2797 = vadd.f32 %v2608, %v2735
        %v2798 = vadd.f32 %v2609, %v2738
        %v2799 = vadd.f32 %v2610, %v2741
        %v2800 = vadd.f32 %v2611, %v2744
        %v2801 = vadd.f32 %v2612, %v2747
        %v2802 = vadd.f32 %v2613, %v2750
        %v2803 = vadd.f32 %v2614, %v2753
        %v2804 = vadd.f32 %v2615, %v2756
        %v2805 = vadd.f32 %v2616, %v2759
        %v2806 = vadd.f32 %v2617, %v2762
        %v2807 = vadd.f32 %v2618, %v2765
        %v2808 = vadd.f32 %v2619, %v2768
        %v2809 = vadd.f32 %v2620, %v2771
        %v2810 = vadd.f32 %v2621, %v2774
        %v2811 = vadd.f32 %v2622, %v2777
        %v2812 = vadd.f32 %v2623, %v2780
        %v2813 = vld [vmem:[%s327] sm:$0xfc]
        %v2814 = vld [vmem:[%s327 + $0x8] sm:$0xfc]
        %v2815 = vld [vmem:[%s327 + $0x10] sm:$0x3]
        %v2816 = vld [vmem:[%s327 + $0x18] sm:$0x3]
        %v2817 = vld [vmem:[%s327 + $0x20] sm:$0xfc]
        %v2818 = vld [vmem:[%s327 + $0x28] sm:$0xfc]
        %v2819 = vld [vmem:[%s327 + $0x30] sm:$0x3]
        %v2820 = vld [vmem:[%s327 + $0x38] sm:$0x3]
        %v2821 = vld [vmem:[%s327 + $0x40] sm:$0xfc]
        %v2822 = vld [vmem:[%s327 + $0x48] sm:$0xfc]
        %v2823 = vld [vmem:[%s327 + $0x50] sm:$0x3]
        %v2824 = vld [vmem:[%s327 + $0x58] sm:$0x3]
        %v2825 = vld [vmem:[%s327 + $0x60] sm:$0xfc]
        %v2826 = vld [vmem:[%s327 + $0x68] sm:$0xfc]
        %v2827 = vld [vmem:[%s327 + $0x70] sm:$0x3]
        %v2828 = vld [vmem:[%s327 + $0x78] sm:$0x3]
        %v2829 = vld [vmem:[%s327 + $0x80] sm:$0xfc]
        %v2830 = vld [vmem:[%s327 + $0x88] sm:$0xfc]
        %v2831 = vld [vmem:[%s327 + $0x90] sm:$0x3]
        %v2832 = vld [vmem:[%s327 + $0x98] sm:$0x3]
        %v2833 = vld [vmem:[%s327 + $0xa0] sm:$0xfc]
        %v2834 = vld [vmem:[%s327 + $0xa8] sm:$0xfc]
        %v2835 = vld [vmem:[%s327 + $0xb0] sm:$0x3]
        %v2836 = vld [vmem:[%s327 + $0xb8] sm:$0x3]
        %v2837 = vld [vmem:[%s327 + $0xc0] sm:$0xfc]
        %v2838 = vld [vmem:[%s327 + $0xc8] sm:$0xfc]
        %v2839 = vld [vmem:[%s327 + $0xd0] sm:$0x3]
        %v2840 = vld [vmem:[%s327 + $0xd8] sm:$0x3]
        %v2841 = vld [vmem:[%s327 + $0xe0] sm:$0xfc]
        %v2842 = vld [vmem:[%s327 + $0xe8] sm:$0xfc]
        %v2843 = vld [vmem:[%s327 + $0xf0] sm:$0x3]
        %v2844 = vld [vmem:[%s327 + $0xf8] sm:$0x3]
        %s2845 = scalar_lea.vmem %s2156, 5
        %v2846 = vld [vmem:[%s2845] ss:$8 sm:$0x3]
        %v2848 = vlaneseq
        %v2849 = vshrl.u32 %v2848, 7
        %v2850 = vsub.s32 0, %v2849
        %v2851 = vrot.slane %v2846, %v2850
        %v2852 = vlaneseq
        %v2853 = vshrl.u32 %v2852, 7
        %v2854 = vsub.s32 1, %v2853
        %v2855 = vrot.slane %v2846, %v2854
        %v2858 = vmul.f32 %v2813, %v2851
        %v2859 = vmul.f32 %v2814, %v2855
        %v2860 = vmul.f32 %v2815, %v2851
        %v2861 = vmul.f32 %v2816, %v2855
        %v2862 = vmul.f32 %v2817, %v2851
        %v2863 = vmul.f32 %v2818, %v2855
        %v2864 = vmul.f32 %v2819, %v2851
        %v2865 = vmul.f32 %v2820, %v2855
        %v2866 = vmul.f32 %v2821, %v2851
        %v2867 = vmul.f32 %v2822, %v2855
        %v2868 = vmul.f32 %v2823, %v2851
        %v2869 = vmul.f32 %v2824, %v2855
        %v2870 = vmul.f32 %v2825, %v2851
        %v2871 = vmul.f32 %v2826, %v2855
        %v2872 = vmul.f32 %v2827, %v2851
        %v2873 = vmul.f32 %v2828, %v2855
        %v2874 = vmul.f32 %v2829, %v2851
        %v2875 = vmul.f32 %v2830, %v2855
        %v2876 = vmul.f32 %v2831, %v2851
        %v2877 = vmul.f32 %v2832, %v2855
        %v2878 = vmul.f32 %v2833, %v2851
        %v2879 = vmul.f32 %v2834, %v2855
        %v2880 = vmul.f32 %v2835, %v2851
        %v2881 = vmul.f32 %v2836, %v2855
        %v2882 = vmul.f32 %v2837, %v2851
        %v2883 = vmul.f32 %v2838, %v2855
        %v2884 = vmul.f32 %v2839, %v2851
        %v2885 = vmul.f32 %v2840, %v2855
        %v2886 = vmul.f32 %v2841, %v2851
        %v2887 = vmul.f32 %v2842, %v2855
        %v2888 = vmul.f32 %v2843, %v2851
        %v2889 = vmul.f32 %v2844, %v2855
        %v2922 = vrot.slane %v2858, 2
        %v2923 = vrot.slane %v2860, 2
        %v2924 = vsel %vm703, %v2922, %v2923
        %v2925 = vrot.slane %v2859, 2
        %v2926 = vrot.slane %v2861, 2
        %v2927 = vsel %vm703, %v2925, %v2926
        %v2928 = vrot.slane %v2862, 2
        %v2929 = vrot.slane %v2864, 2
        %v2930 = vsel %vm703, %v2928, %v2929
        %v2931 = vrot.slane %v2863, 2
        %v2932 = vrot.slane %v2865, 2
        %v2933 = vsel %vm703, %v2931, %v2932
        %v2934 = vrot.slane %v2866, 2
        %v2935 = vrot.slane %v2868, 2
        %v2936 = vsel %vm703, %v2934, %v2935
        %v2937 = vrot.slane %v2867, 2
        %v2938 = vrot.slane %v2869, 2
        %v2939 = vsel %vm703, %v2937, %v2938
        %v2940 = vrot.slane %v2870, 2
        %v2941 = vrot.slane %v2872, 2
        %v2942 = vsel %vm703, %v2940, %v2941
        %v2943 = vrot.slane %v2871, 2
        %v2944 = vrot.slane %v2873, 2
        %v2945 = vsel %vm703, %v2943, %v2944
        %v2946 = vrot.slane %v2874, 2
        %v2947 = vrot.slane %v2876, 2
        %v2948 = vsel %vm703, %v2946, %v2947
        %v2949 = vrot.slane %v2875, 2
        %v2950 = vrot.slane %v2877, 2
        %v2951 = vsel %vm703, %v2949, %v2950
        %v2952 = vrot.slane %v2878, 2
        %v2953 = vrot.slane %v2880, 2
        %v2954 = vsel %vm703, %v2952, %v2953
        %v2955 = vrot.slane %v2879, 2
        %v2956 = vrot.slane %v2881, 2
        %v2957 = vsel %vm703, %v2955, %v2956
        %v2958 = vrot.slane %v2882, 2
        %v2959 = vrot.slane %v2884, 2
        %v2960 = vsel %vm703, %v2958, %v2959
        %v2961 = vrot.slane %v2883, 2
        %v2962 = vrot.slane %v2885, 2
        %v2963 = vsel %vm703, %v2961, %v2962
        %v2964 = vrot.slane %v2886, 2
        %v2965 = vrot.slane %v2888, 2
        %v2966 = vsel %vm703, %v2964, %v2965
        %v2967 = vrot.slane %v2887, 2
        %v2968 = vrot.slane %v2889, 2
        %v2969 = vsel %vm703, %v2967, %v2968
        %v2986 = vadd.f32 %v2797, %v2924
        %v2987 = vadd.f32 %v2798, %v2927
        %v2988 = vadd.f32 %v2799, %v2930
        %v2989 = vadd.f32 %v2800, %v2933
        %v2990 = vadd.f32 %v2801, %v2936
        %v2991 = vadd.f32 %v2802, %v2939
        %v2992 = vadd.f32 %v2803, %v2942
        %v2993 = vadd.f32 %v2804, %v2945
        %v2994 = vadd.f32 %v2805, %v2948
        %v2995 = vadd.f32 %v2806, %v2951
        %v2996 = vadd.f32 %v2807, %v2954
        %v2997 = vadd.f32 %v2808, %v2957
        %v2998 = vadd.f32 %v2809, %v2960
        %v2999 = vadd.f32 %v2810, %v2963
        %v3000 = vadd.f32 %v2811, %v2966
        %v3001 = vadd.f32 %v2812, %v2969
        %v3002 = vld [vmem:[%s1223] sm:$0xff]
        %v3003 = vld [vmem:[%s1223 + $0x8] sm:$0xff]
        %v3004 = vld [vmem:[%s1223 + $0x20] sm:$0xff]
        %v3005 = vld [vmem:[%s1223 + $0x28] sm:$0xff]
        %v3006 = vld [vmem:[%s1223 + $0x40] sm:$0xff]
        %v3007 = vld [vmem:[%s1223 + $0x48] sm:$0xff]
        %v3008 = vld [vmem:[%s1223 + $0x60] sm:$0xff]
        %v3009 = vld [vmem:[%s1223 + $0x68] sm:$0xff]
        %v3010 = vld [vmem:[%s1223 + $0x80] sm:$0xff]
        %v3011 = vld [vmem:[%s1223 + $0x88] sm:$0xff]
        %v3012 = vld [vmem:[%s1223 + $0xa0] sm:$0xff]
        %v3013 = vld [vmem:[%s1223 + $0xa8] sm:$0xff]
        %v3014 = vld [vmem:[%s1223 + $0xc0] sm:$0xff]
        %v3015 = vld [vmem:[%s1223 + $0xc8] sm:$0xff]
        %v3016 = vld [vmem:[%s1223 + $0xe0] sm:$0xff]
        %v3017 = vld [vmem:[%s1223 + $0xe8] sm:$0xff]
        %s3018 = scalar_lea.vmem %s2156, 6
        %v3019 = vld [vmem:[%s3018] ss:$8 sm:$0x3]
        %v3021 = vlaneseq
        %v3022 = vshrl.u32 %v3021, 7
        %v3023 = vsub.s32 0, %v3022
        %v3024 = vrot.slane %v3019, %v3023
        %v3025 = vlaneseq
        %v3026 = vshrl.u32 %v3025, 7
        %v3027 = vsub.s32 1, %v3026
        %v3028 = vrot.slane %v3019, %v3027
        %v3031 = vmul.f32 %v3002, %v3024
        %v3032 = vmul.f32 %v3003, %v3028
        %v3033 = vmul.f32 %v3004, %v3024
        %v3034 = vmul.f32 %v3005, %v3028
        %v3035 = vmul.f32 %v3006, %v3024
        %v3036 = vmul.f32 %v3007, %v3028
        %v3037 = vmul.f32 %v3008, %v3024
        %v3038 = vmul.f32 %v3009, %v3028
        %v3039 = vmul.f32 %v3010, %v3024
        %v3040 = vmul.f32 %v3011, %v3028
        %v3041 = vmul.f32 %v3012, %v3024
        %v3042 = vmul.f32 %v3013, %v3028
        %v3043 = vmul.f32 %v3014, %v3024
        %v3044 = vmul.f32 %v3015, %v3028
        %v3045 = vmul.f32 %v3016, %v3024
        %v3046 = vmul.f32 %v3017, %v3028
        %v3047 = vadd.f32 %v2986, %v3031
        %v3048 = vadd.f32 %v2987, %v3032
        %v3049 = vadd.f32 %v2988, %v3033
        %v3050 = vadd.f32 %v2989, %v3034
        %v3051 = vadd.f32 %v2990, %v3035
        %v3052 = vadd.f32 %v2991, %v3036
        %v3053 = vadd.f32 %v2992, %v3037
        %v3054 = vadd.f32 %v2993, %v3038
        %v3055 = vadd.f32 %v2994, %v3039
        %v3056 = vadd.f32 %v2995, %v3040
        %v3057 = vadd.f32 %v2996, %v3041
        %v3058 = vadd.f32 %v2997, %v3042
        %v3059 = vadd.f32 %v2998, %v3043
        %v3060 = vadd.f32 %v2999, %v3044
        %v3061 = vadd.f32 %v3000, %v3045
        %v3062 = vadd.f32 %v3001, %v3046
        %v3063 = vld [vmem:[%s1223] sm:$0xfe]
        %v3064 = vld [vmem:[%s1223 + $0x8] sm:$0xfe]
        %v3065 = vld [vmem:[%s1223 + $0x10] sm:$0x1]
        %v3066 = vld [vmem:[%s1223 + $0x18] sm:$0x1]
        %v3067 = vld [vmem:[%s1223 + $0x20] sm:$0xfe]
        %v3068 = vld [vmem:[%s1223 + $0x28] sm:$0xfe]
        %v3069 = vld [vmem:[%s1223 + $0x30] sm:$0x1]
        %v3070 = vld [vmem:[%s1223 + $0x38] sm:$0x1]
        %v3071 = vld [vmem:[%s1223 + $0x40] sm:$0xfe]
        %v3072 = vld [vmem:[%s1223 + $0x48] sm:$0xfe]
        %v3073 = vld [vmem:[%s1223 + $0x50] sm:$0x1]
        %v3074 = vld [vmem:[%s1223 + $0x58] sm:$0x1]
        %v3075 = vld [vmem:[%s1223 + $0x60] sm:$0xfe]
        %v3076 = vld [vmem:[%s1223 + $0x68] sm:$0xfe]
        %v3077 = vld [vmem:[%s1223 + $0x70] sm:$0x1]
        %v3078 = vld [vmem:[%s1223 + $0x78] sm:$0x1]
        %v3079 = vld [vmem:[%s1223 + $0x80] sm:$0xfe]
        %v3080 = vld [vmem:[%s1223 + $0x88] sm:$0xfe]
        %v3081 = vld [vmem:[%s1223 + $0x90] sm:$0x1]
        %v3082 = vld [vmem:[%s1223 + $0x98] sm:$0x1]
        %v3083 = vld [vmem:[%s1223 + $0xa0] sm:$0xfe]
        %v3084 = vld [vmem:[%s1223 + $0xa8] sm:$0xfe]
        %v3085 = vld [vmem:[%s1223 + $0xb0] sm:$0x1]
        %v3086 = vld [vmem:[%s1223 + $0xb8] sm:$0x1]
        %v3087 = vld [vmem:[%s1223 + $0xc0] sm:$0xfe]
        %v3088 = vld [vmem:[%s1223 + $0xc8] sm:$0xfe]
        %v3089 = vld [vmem:[%s1223 + $0xd0] sm:$0x1]
        %v3090 = vld [vmem:[%s1223 + $0xd8] sm:$0x1]
        %v3091 = vld [vmem:[%s1223 + $0xe0] sm:$0xfe]
        %v3092 = vld [vmem:[%s1223 + $0xe8] sm:$0xfe]
        %v3093 = vld [vmem:[%s1223 + $0xf0] sm:$0x1]
        %v3094 = vld [vmem:[%s1223 + $0xf8] sm:$0x1]
        %s3095 = scalar_lea.vmem %s2156, 7
        %v3096 = vld [vmem:[%s3095] ss:$8 sm:$0x3]
        %v3098 = vlaneseq
        %v3099 = vshrl.u32 %v3098, 7
        %v3100 = vsub.s32 0, %v3099
        %v3101 = vrot.slane %v3096, %v3100
        %v3102 = vlaneseq
        %v3103 = vshrl.u32 %v3102, 7
        %v3104 = vsub.s32 1, %v3103
        %v3105 = vrot.slane %v3096, %v3104
        %v3108 = vmul.f32 %v3063, %v3101
        %v3109 = vmul.f32 %v3064, %v3105
        %v3110 = vmul.f32 %v3065, %v3101
        %v3111 = vmul.f32 %v3066, %v3105
        %v3112 = vmul.f32 %v3067, %v3101
        %v3113 = vmul.f32 %v3068, %v3105
        %v3114 = vmul.f32 %v3069, %v3101
        %v3115 = vmul.f32 %v3070, %v3105
        %v3116 = vmul.f32 %v3071, %v3101
        %v3117 = vmul.f32 %v3072, %v3105
        %v3118 = vmul.f32 %v3073, %v3101
        %v3119 = vmul.f32 %v3074, %v3105
        %v3120 = vmul.f32 %v3075, %v3101
        %v3121 = vmul.f32 %v3076, %v3105
        %v3122 = vmul.f32 %v3077, %v3101
        %v3123 = vmul.f32 %v3078, %v3105
        %v3124 = vmul.f32 %v3079, %v3101
        %v3125 = vmul.f32 %v3080, %v3105
        %v3126 = vmul.f32 %v3081, %v3101
        %v3127 = vmul.f32 %v3082, %v3105
        %v3128 = vmul.f32 %v3083, %v3101
        %v3129 = vmul.f32 %v3084, %v3105
        %v3130 = vmul.f32 %v3085, %v3101
        %v3131 = vmul.f32 %v3086, %v3105
        %v3132 = vmul.f32 %v3087, %v3101
        %v3133 = vmul.f32 %v3088, %v3105
        %v3134 = vmul.f32 %v3089, %v3101
        %v3135 = vmul.f32 %v3090, %v3105
        %v3136 = vmul.f32 %v3091, %v3101
        %v3137 = vmul.f32 %v3092, %v3105
        %v3138 = vmul.f32 %v3093, %v3101
        %v3139 = vmul.f32 %v3094, %v3105
        %v3172 = vrot.slane %v3108, 1
        %v3173 = vrot.slane %v3110, 1
        %v3174 = vsel %vm513, %v3172, %v3173
        %v3175 = vrot.slane %v3109, 1
        %v3176 = vrot.slane %v3111, 1
        %v3177 = vsel %vm513, %v3175, %v3176
        %v3178 = vrot.slane %v3112, 1
        %v3179 = vrot.slane %v3114, 1
        %v3180 = vsel %vm513, %v3178, %v3179
        %v3181 = vrot.slane %v3113, 1
        %v3182 = vrot.slane %v3115, 1
        %v3183 = vsel %vm513, %v3181, %v3182
        %v3184 = vrot.slane %v3116, 1
        %v3185 = vrot.slane %v3118, 1
        %v3186 = vsel %vm513, %v3184, %v3185
        %v3187 = vrot.slane %v3117, 1
        %v3188 = vrot.slane %v3119, 1
        %v3189 = vsel %vm513, %v3187, %v3188
        %v3190 = vrot.slane %v3120, 1
        %v3191 = vrot.slane %v3122, 1
        %v3192 = vsel %vm513, %v3190, %v3191
        %v3193 = vrot.slane %v3121, 1
        %v3194 = vrot.slane %v3123, 1
        %v3195 = vsel %vm513, %v3193, %v3194
        %v3196 = vrot.slane %v3124, 1
        %v3197 = vrot.slane %v3126, 1
        %v3198 = vsel %vm513, %v3196, %v3197
        %v3199 = vrot.slane %v3125, 1
        %v3200 = vrot.slane %v3127, 1
        %v3201 = vsel %vm513, %v3199, %v3200
        %v3202 = vrot.slane %v3128, 1
        %v3203 = vrot.slane %v3130, 1
        %v3204 = vsel %vm513, %v3202, %v3203
        %v3205 = vrot.slane %v3129, 1
        %v3206 = vrot.slane %v3131, 1
        %v3207 = vsel %vm513, %v3205, %v3206
        %v3208 = vrot.slane %v3132, 1
        %v3209 = vrot.slane %v3134, 1
        %v3210 = vsel %vm513, %v3208, %v3209
        %v3211 = vrot.slane %v3133, 1
        %v3212 = vrot.slane %v3135, 1
        %v3213 = vsel %vm513, %v3211, %v3212
        %v3214 = vrot.slane %v3136, 1
        %v3215 = vrot.slane %v3138, 1
        %v3216 = vsel %vm513, %v3214, %v3215
        %v3217 = vrot.slane %v3137, 1
        %v3218 = vrot.slane %v3139, 1
        %v3219 = vsel %vm513, %v3217, %v3218
        %v3236 = vadd.f32 %v3047, %v3174
        %v3237 = vadd.f32 %v3048, %v3177
        %v3238 = vadd.f32 %v3049, %v3180
        %v3239 = vadd.f32 %v3050, %v3183
        %v3240 = vadd.f32 %v3051, %v3186
        %v3241 = vadd.f32 %v3052, %v3189
        %v3242 = vadd.f32 %v3053, %v3192
        %v3243 = vadd.f32 %v3054, %v3195
        %v3244 = vadd.f32 %v3055, %v3198
        %v3245 = vadd.f32 %v3056, %v3201
        %v3246 = vadd.f32 %v3057, %v3204
        %v3247 = vadd.f32 %v3058, %v3207
        %v3248 = vadd.f32 %v3059, %v3210
        %v3249 = vadd.f32 %v3060, %v3213
        %v3250 = vadd.f32 %v3061, %v3216
        %v3251 = vadd.f32 %v3062, %v3219
        %v3252 = vld [vmem:[%s1223] sm:$0xfc]
        %v3253 = vld [vmem:[%s1223 + $0x8] sm:$0xfc]
        %v3254 = vld [vmem:[%s1223 + $0x10] sm:$0x3]
        %v3255 = vld [vmem:[%s1223 + $0x18] sm:$0x3]
        %v3256 = vld [vmem:[%s1223 + $0x20] sm:$0xfc]
        %v3257 = vld [vmem:[%s1223 + $0x28] sm:$0xfc]
        %v3258 = vld [vmem:[%s1223 + $0x30] sm:$0x3]
        %v3259 = vld [vmem:[%s1223 + $0x38] sm:$0x3]
        %v3260 = vld [vmem:[%s1223 + $0x40] sm:$0xfc]
        %v3261 = vld [vmem:[%s1223 + $0x48] sm:$0xfc]
        %v3262 = vld [vmem:[%s1223 + $0x50] sm:$0x3]
        %v3263 = vld [vmem:[%s1223 + $0x58] sm:$0x3]
        %v3264 = vld [vmem:[%s1223 + $0x60] sm:$0xfc]
        %v3265 = vld [vmem:[%s1223 + $0x68] sm:$0xfc]
        %v3266 = vld [vmem:[%s1223 + $0x70] sm:$0x3]
        %v3267 = vld [vmem:[%s1223 + $0x78] sm:$0x3]
        %v3268 = vld [vmem:[%s1223 + $0x80] sm:$0xfc]
        %v3269 = vld [vmem:[%s1223 + $0x88] sm:$0xfc]
        %v3270 = vld [vmem:[%s1223 + $0x90] sm:$0x3]
        %v3271 = vld [vmem:[%s1223 + $0x98] sm:$0x3]
        %v3272 = vld [vmem:[%s1223 + $0xa0] sm:$0xfc]
        %v3273 = vld [vmem:[%s1223 + $0xa8] sm:$0xfc]
        %v3274 = vld [vmem:[%s1223 + $0xb0] sm:$0x3]
        %v3275 = vld [vmem:[%s1223 + $0xb8] sm:$0x3]
        %v3276 = vld [vmem:[%s1223 + $0xc0] sm:$0xfc]
        %v3277 = vld [vmem:[%s1223 + $0xc8] sm:$0xfc]
        %v3278 = vld [vmem:[%s1223 + $0xd0] sm:$0x3]
        %v3279 = vld [vmem:[%s1223 + $0xd8] sm:$0x3]
        %v3280 = vld [vmem:[%s1223 + $0xe0] sm:$0xfc]
        %v3281 = vld [vmem:[%s1223 + $0xe8] sm:$0xfc]
        %v3282 = vld [vmem:[%s1223 + $0xf0] sm:$0x3]
        %v3283 = vld [vmem:[%s1223 + $0xf8] sm:$0x3]
        %s3284 = scalar_lea.vmem %s2156, 16
        %v3285 = vld [vmem:[%s3284] ss:$8 sm:$0x3]
        %v3287 = vlaneseq
        %v3288 = vshrl.u32 %v3287, 7
        %v3289 = vsub.s32 0, %v3288
        %v3290 = vrot.slane %v3285, %v3289
        %v3291 = vlaneseq
        %v3292 = vshrl.u32 %v3291, 7
        %v3293 = vsub.s32 1, %v3292
        %v3294 = vrot.slane %v3285, %v3293
        %v3297 = vmul.f32 %v3252, %v3290
        %v3298 = vmul.f32 %v3253, %v3294
        %v3299 = vmul.f32 %v3254, %v3290
        %v3300 = vmul.f32 %v3255, %v3294
        %v3301 = vmul.f32 %v3256, %v3290
        %v3302 = vmul.f32 %v3257, %v3294
        %v3303 = vmul.f32 %v3258, %v3290
        %v3304 = vmul.f32 %v3259, %v3294
        %v3305 = vmul.f32 %v3260, %v3290
        %v3306 = vmul.f32 %v3261, %v3294
        %v3307 = vmul.f32 %v3262, %v3290
        %v3308 = vmul.f32 %v3263, %v3294
        %v3309 = vmul.f32 %v3264, %v3290
        %v3310 = vmul.f32 %v3265, %v3294
        %v3311 = vmul.f32 %v3266, %v3290
        %v3312 = vmul.f32 %v3267, %v3294
        %v3313 = vmul.f32 %v3268, %v3290
        %v3314 = vmul.f32 %v3269, %v3294
        %v3315 = vmul.f32 %v3270, %v3290
        %v3316 = vmul.f32 %v3271, %v3294
        %v3317 = vmul.f32 %v3272, %v3290
        %v3318 = vmul.f32 %v3273, %v3294
        %v3319 = vmul.f32 %v3274, %v3290
        %v3320 = vmul.f32 %v3275, %v3294
        %v3321 = vmul.f32 %v3276, %v3290
        %v3322 = vmul.f32 %v3277, %v3294
        %v3323 = vmul.f32 %v3278, %v3290
        %v3324 = vmul.f32 %v3279, %v3294
        %v3325 = vmul.f32 %v3280, %v3290
        %v3326 = vmul.f32 %v3281, %v3294
        %v3327 = vmul.f32 %v3282, %v3290
        %v3328 = vmul.f32 %v3283, %v3294
        %v3361 = vrot.slane %v3297, 2
        %v3362 = vrot.slane %v3299, 2
        %v3363 = vsel %vm703, %v3361, %v3362
        %v3364 = vrot.slane %v3298, 2
        %v3365 = vrot.slane %v3300, 2
        %v3366 = vsel %vm703, %v3364, %v3365
        %v3367 = vrot.slane %v3301, 2
        %v3368 = vrot.slane %v3303, 2
        %v3369 = vsel %vm703, %v3367, %v3368
        %v3370 = vrot.slane %v3302, 2
        %v3371 = vrot.slane %v3304, 2
        %v3372 = vsel %vm703, %v3370, %v3371
        %v3373 = vrot.slane %v3305, 2
        %v3374 = vrot.slane %v3307, 2
        %v3375 = vsel %vm703, %v3373, %v3374
        %v3376 = vrot.slane %v3306, 2
        %v3377 = vrot.slane %v3308, 2
        %v3378 = vsel %vm703, %v3376, %v3377
        %v3379 = vrot.slane %v3309, 2
        %v3380 = vrot.slane %v3311, 2
        %v3381 = vsel %vm703, %v3379, %v3380
        %v3382 = vrot.slane %v3310, 2
        %v3383 = vrot.slane %v3312, 2
        %v3384 = vsel %vm703, %v3382, %v3383
        %v3385 = vrot.slane %v3313, 2
        %v3386 = vrot.slane %v3315, 2
        %v3387 = vsel %vm703, %v3385, %v3386
        %v3388 = vrot.slane %v3314, 2
        %v3389 = vrot.slane %v3316, 2
        %v3390 = vsel %vm703, %v3388, %v3389
        %v3391 = vrot.slane %v3317, 2
        %v3392 = vrot.slane %v3319, 2
        %v3393 = vsel %vm703, %v3391, %v3392
        %v3394 = vrot.slane %v3318, 2
        %v3395 = vrot.slane %v3320, 2
        %v3396 = vsel %vm703, %v3394, %v3395
        %v3397 = vrot.slane %v3321, 2
        %v3398 = vrot.slane %v3323, 2
        %v3399 = vsel %vm703, %v3397, %v3398
        %v3400 = vrot.slane %v3322, 2
        %v3401 = vrot.slane %v3324, 2
        %v3402 = vsel %vm703, %v3400, %v3401
        %v3403 = vrot.slane %v3325, 2
        %v3404 = vrot.slane %v3327, 2
        %v3405 = vsel %vm703, %v3403, %v3404
        %v3406 = vrot.slane %v3326, 2
        %v3407 = vrot.slane %v3328, 2
        %v3408 = vsel %vm703, %v3406, %v3407
        %v3425 = vadd.f32 %v3236, %v3363
        %v3426 = vadd.f32 %v3237, %v3366
        %v3427 = vadd.f32 %v3238, %v3369
        %v3428 = vadd.f32 %v3239, %v3372
        %v3429 = vadd.f32 %v3240, %v3375
        %v3430 = vadd.f32 %v3241, %v3378
        %v3431 = vadd.f32 %v3242, %v3381
        %v3432 = vadd.f32 %v3243, %v3384
        %v3433 = vadd.f32 %v3244, %v3387
        %v3434 = vadd.f32 %v3245, %v3390
        %v3435 = vadd.f32 %v3246, %v3393
        %v3436 = vadd.f32 %v3247, %v3396
        %v3437 = vadd.f32 %v3248, %v3399
        %v3438 = vadd.f32 %v3249, %v3402
        %v3439 = vadd.f32 %v3250, %v3405
        %v3440 = vadd.f32 %v3251, %v3408
        %v3441 = vpack.c.bf16 %v3427, %v3425
        %v3442 = vpack.c.bf16 %v3428, %v3426
        %v3443 = vpack.c.bf16 %v3431, %v3429
        %v3444 = vpack.c.bf16 %v3432, %v3430
        %v3445 = vpack.c.bf16 %v3435, %v3433
        %v3446 = vpack.c.bf16 %v3436, %v3434
        %v3447 = vpack.c.bf16 %v3439, %v3437
        %v3448 = vpack.c.bf16 %v3440, %v3438
        %s3449 = scalar_lea.vmem %s2, 256
        %v3450 = vld [vmem:[%s3449] sm:$0xff]
        %v3451 = vld [vmem:[%s3449 + $0x8] sm:$0xff]
        %v3452 = vld [vmem:[%s3449 + $0x10] sm:$0xff]
        %v3453 = vld [vmem:[%s3449 + $0x18] sm:$0xff]
        %v3454 = vld [vmem:[%s3449 + $0x20] sm:$0xff]
        %v3455 = vld [vmem:[%s3449 + $0x28] sm:$0xff]
        %v3456 = vld [vmem:[%s3449 + $0x30] sm:$0xff]
        %v3457 = vld [vmem:[%s3449 + $0x38] sm:$0xff]
        %v3458 = vld [vmem:[%s3449 + $0x40] sm:$0xff]
        %v3459 = vld [vmem:[%s3449 + $0x48] sm:$0xff]
        %v3460 = vld [vmem:[%s3449 + $0x50] sm:$0xff]
        %v3461 = vld [vmem:[%s3449 + $0x58] sm:$0xff]
        %v3462 = vld [vmem:[%s3449 + $0x60] sm:$0xff]
        %v3463 = vld [vmem:[%s3449 + $0x68] sm:$0xff]
        %v3464 = vld [vmem:[%s3449 + $0x70] sm:$0xff]
        %v3465 = vld [vmem:[%s3449 + $0x78] sm:$0xff]
        %v3466 = vld [vmem:[%s3449 + $0x80] sm:$0xff]
        %v3467 = vld [vmem:[%s3449 + $0x88] sm:$0xff]
        %v3468 = vld [vmem:[%s3449 + $0x90] sm:$0xff]
        %v3469 = vld [vmem:[%s3449 + $0x98] sm:$0xff]
        %v3470 = vld [vmem:[%s3449 + $0xa0] sm:$0xff]
        %v3471 = vld [vmem:[%s3449 + $0xa8] sm:$0xff]
        %v3472 = vld [vmem:[%s3449 + $0xb0] sm:$0xff]
        %v3473 = vld [vmem:[%s3449 + $0xb8] sm:$0xff]
        %v3474 = vld [vmem:[%s3449 + $0xc0] sm:$0xff]
        %v3475 = vld [vmem:[%s3449 + $0xc8] sm:$0xff]
        %v3476 = vld [vmem:[%s3449 + $0xd0] sm:$0xff]
        %v3477 = vld [vmem:[%s3449 + $0xd8] sm:$0xff]
        %v3478 = vld [vmem:[%s3449 + $0xe0] sm:$0xff]
        %v3479 = vld [vmem:[%s3449 + $0xe8] sm:$0xff]
        %v3480 = vld [vmem:[%s3449 + $0xf0] sm:$0xff]
        %v3481 = vld [vmem:[%s3449 + $0xf8] sm:$0xff]
        %s3482 = scalar_lea.vmem %s3, 2
        %v3483 = vld [vmem:[%s3482] sm:$0x3]
        %v3485 = vlaneseq
        %v3486 = vshrl.u32 %v3485, 7
        %v3487 = vsub.s32 0, %v3486
        %v3488 = vrot.slane %v3483, %v3487
        %v3489 = vlaneseq
        %v3490 = vshrl.u32 %v3489, 7
        %v3491 = vsub.s32 1, %v3490
        %v3492 = vrot.slane %v3483, %v3491
        %v3527 = vunpack.c.l.b16 %v3450
        %v3528 = vunpack.c.h.b16 %v3450
        %v3529 = vunpack.c.l.b16 %v3451
        %v3530 = vunpack.c.h.b16 %v3451
        %v3531 = vunpack.c.l.b16 %v3452
        %v3532 = vunpack.c.h.b16 %v3452
        %v3533 = vunpack.c.l.b16 %v3453
        %v3534 = vunpack.c.h.b16 %v3453
        %v3535 = vunpack.c.l.b16 %v3454
        %v3536 = vunpack.c.h.b16 %v3454
        %v3537 = vunpack.c.l.b16 %v3455
        %v3538 = vunpack.c.h.b16 %v3455
        %v3539 = vunpack.c.l.b16 %v3456
        %v3540 = vunpack.c.h.b16 %v3456
        %v3541 = vunpack.c.l.b16 %v3457
        %v3542 = vunpack.c.h.b16 %v3457
        %v3543 = vunpack.c.l.b16 %v3458
        %v3544 = vunpack.c.h.b16 %v3458
        %v3545 = vunpack.c.l.b16 %v3459
        %v3546 = vunpack.c.h.b16 %v3459
        %v3547 = vunpack.c.l.b16 %v3460
        %v3548 = vunpack.c.h.b16 %v3460
        %v3549 = vunpack.c.l.b16 %v3461
        %v3550 = vunpack.c.h.b16 %v3461
        %v3551 = vunpack.c.l.b16 %v3462
        %v3552 = vunpack.c.h.b16 %v3462
        %v3553 = vunpack.c.l.b16 %v3463
        %v3554 = vunpack.c.h.b16 %v3463
        %v3555 = vunpack.c.l.b16 %v3464
        %v3556 = vunpack.c.h.b16 %v3464
        %v3557 = vunpack.c.l.b16 %v3465
        %v3558 = vunpack.c.h.b16 %v3465
        %v3559 = vunpack.c.l.b16 %v3466
        %v3560 = vunpack.c.h.b16 %v3466
        %v3561 = vunpack.c.l.b16 %v3467
        %v3562 = vunpack.c.h.b16 %v3467
        %v3563 = vunpack.c.l.b16 %v3468
        %v3564 = vunpack.c.h.b16 %v3468
        %v3565 = vunpack.c.l.b16 %v3469
        %v3566 = vunpack.c.h.b16 %v3469
        %v3567 = vunpack.c.l.b16 %v3470
        %v3568 = vunpack.c.h.b16 %v3470
        %v3569 = vunpack.c.l.b16 %v3471
        %v3570 = vunpack.c.h.b16 %v3471
        %v3571 = vunpack.c.l.b16 %v3472
        %v3572 = vunpack.c.h.b16 %v3472
        %v3573 = vunpack.c.l.b16 %v3473
        %v3574 = vunpack.c.h.b16 %v3473
        %v3575 = vunpack.c.l.b16 %v3474
        %v3576 = vunpack.c.h.b16 %v3474
        %v3577 = vunpack.c.l.b16 %v3475
        %v3578 = vunpack.c.h.b16 %v3475
        %v3579 = vunpack.c.l.b16 %v3476
        %v3580 = vunpack.c.h.b16 %v3476
        %v3581 = vunpack.c.l.b16 %v3477
        %v3582 = vunpack.c.h.b16 %v3477
        %v3583 = vunpack.c.l.b16 %v3478
        %v3584 = vunpack.c.h.b16 %v3478
        %v3585 = vunpack.c.l.b16 %v3479
        %v3586 = vunpack.c.h.b16 %v3479
        %v3587 = vunpack.c.l.b16 %v3480
        %v3588 = vunpack.c.h.b16 %v3480
        %v3589 = vunpack.c.l.b16 %v3481
        %v3590 = vunpack.c.h.b16 %v3481
        %v3591 = vpack.c.b16 %v3529, %v3527
        %v3592 = vpack.c.b16 %v3530, %v3528
        %v3593 = vpack.c.b16 %v3533, %v3531
        %v3594 = vpack.c.b16 %v3534, %v3532
        %v3595 = vpack.c.b16 %v3537, %v3535
        %v3596 = vpack.c.b16 %v3538, %v3536
        %v3597 = vpack.c.b16 %v3541, %v3539
        %v3598 = vpack.c.b16 %v3542, %v3540
        %v3599 = vpack.c.b16 %v3545, %v3543
        %v3600 = vpack.c.b16 %v3546, %v3544
        %v3601 = vpack.c.b16 %v3549, %v3547
        %v3602 = vpack.c.b16 %v3550, %v3548
        %v3603 = vpack.c.b16 %v3553, %v3551
        %v3604 = vpack.c.b16 %v3554, %v3552
        %v3605 = vpack.c.b16 %v3557, %v3555
        %v3606 = vpack.c.b16 %v3558, %v3556
        %v3607 = vpack.c.b16 %v3561, %v3559
        %v3608 = vpack.c.b16 %v3562, %v3560
        %v3609 = vpack.c.b16 %v3565, %v3563
        %v3610 = vpack.c.b16 %v3566, %v3564
        %v3611 = vpack.c.b16 %v3569, %v3567
        %v3612 = vpack.c.b16 %v3570, %v3568
        %v3613 = vpack.c.b16 %v3573, %v3571
        %v3614 = vpack.c.b16 %v3574, %v3572
        %v3615 = vpack.c.b16 %v3577, %v3575
        %v3616 = vpack.c.b16 %v3578, %v3576
        %v3617 = vpack.c.b16 %v3581, %v3579
        %v3618 = vpack.c.b16 %v3582, %v3580
        %v3619 = vpack.c.b16 %v3585, %v3583
        %v3620 = vpack.c.b16 %v3586, %v3584
        %v3621 = vpack.c.b16 %v3589, %v3587
        %v3622 = vpack.c.b16 %v3590, %v3588
        %3655 = vmatprep.subr.bf16.mxu0 %v3592
        %3656 = vmatpush1.bf16.msra.mxu0 %v3591
        %3657 = vmatprep.subr.bf16.mxu0 %v3594
        %3658 = vmatpush1.bf16.msra.mxu0 %v3593
        %3659 = vmatprep.subr.bf16.mxu0 %v3596
        %3660 = vmatpush1.bf16.msra.mxu0 %v3595
        %3661 = vmatprep.subr.bf16.mxu0 %v3598
        %3662 = vmatpush1.bf16.msra.mxu0 %v3597
        %3663 = vmatprep.subr.bf16.mxu0 %v3600
        %3664 = vmatpush1.bf16.msra.mxu0 %v3599
        %3665 = vmatprep.subr.bf16.mxu0 %v3602
        %3666 = vmatpush1.bf16.msra.mxu0 %v3601
        %3667 = vmatprep.subr.bf16.mxu0 %v3604
        %3668 = vmatpush1.bf16.msra.mxu0 %v3603
        %3669 = vmatprep.subr.bf16.mxu0 %v3606
        %3670 = vmatpush1.bf16.msra.mxu0 %v3605
        %3671 = vmatprep.subr.bf16.mxu0 %v3608
        %3672 = vmatpush1.bf16.msra.mxu0 %v3607
        %3673 = vmatprep.subr.bf16.mxu0 %v3610
        %3674 = vmatpush1.bf16.msra.mxu0 %v3609
        %3675 = vmatprep.subr.bf16.mxu0 %v3612
        %3676 = vmatpush1.bf16.msra.mxu0 %v3611
        %3677 = vmatprep.subr.bf16.mxu0 %v3614
        %3678 = vmatpush1.bf16.msra.mxu0 %v3613
        %3679 = vmatprep.subr.bf16.mxu0 %v3616
        %3680 = vmatpush1.bf16.msra.mxu0 %v3615
        %3681 = vmatprep.subr.bf16.mxu0 %v3618
        %3682 = vmatpush1.bf16.msra.mxu0 %v3617
        %3683 = vmatprep.subr.bf16.mxu0 %v3620
        %3684 = vmatpush1.bf16.msra.mxu0 %v3619
        %3685 = vmatprep.subr.bf16.mxu0 %v3622
        %3686 = vmatpush1.bf16.msra.mxu0 %v3621
        %3687 = vmatprep.mubr.bf16.mxu0 %v3442
        %3688 = vmatmul.mubr.bf16.gmra.mrb[0].mxu0 %v3441
        %v3689 = vpop.f32.mrb[0].mxu0
        %v3690 = vadd.f32 %v3488, %v3689
        %v3691 = vpop.f32.mrb[0].mxu0
        %v3692 = vadd.f32 %v3492, %v3691
        %v3693 = vpop.f32.mrb[0].mxu0
        %v3694 = vadd.f32 %v3488, %v3693
        %v3695 = vpop.f32.mrb[0].mxu0
        %v3696 = vadd.f32 %v3492, %v3695
        %3697 = vmatprep.mubr.bf16.mxu0 %v3444
        %3698 = vmatmul.mubr.bf16.gmra.mrb[0].mxu0 %v3443
        %v3699 = vpop.f32.mrb[0].mxu0
        %v3700 = vadd.f32 %v3488, %v3699
        %v3701 = vpop.f32.mrb[0].mxu0
        %v3702 = vadd.f32 %v3492, %v3701
        %v3703 = vpop.f32.mrb[0].mxu0
        %v3704 = vadd.f32 %v3488, %v3703
        %v3705 = vpop.f32.mrb[0].mxu0
        %v3706 = vadd.f32 %v3492, %v3705
        %3707 = vmatprep.mubr.bf16.mxu0 %v3446
        %3708 = vmatmul.mubr.bf16.gmra.mrb[0].mxu0 %v3445
        %v3709 = vpop.f32.mrb[0].mxu0
        %v3710 = vadd.f32 %v3488, %v3709
        %v3711 = vpop.f32.mrb[0].mxu0
        %v3712 = vadd.f32 %v3492, %v3711
        %v3713 = vpop.f32.mrb[0].mxu0
        %v3714 = vadd.f32 %v3488, %v3713
        %v3715 = vpop.f32.mrb[0].mxu0
        %v3716 = vadd.f32 %v3492, %v3715
        %3717 = vmatprep.mubr.bf16.mxu0 %v3448
        %3718 = vmatmul.mubr.bf16.gmra.mrb[0].mxu0 %v3447
        %v3719 = vpop.f32.mrb[0].mxu0
        %v3720 = vadd.f32 %v3488, %v3719
        %v3721 = vpop.f32.mrb[0].mxu0
        %v3722 = vadd.f32 %v3492, %v3721
        %v3723 = vpop.f32.mrb[0].mxu0
        %v3724 = vadd.f32 %v3488, %v3723
        %v3725 = vpop.f32.mrb[0].mxu0
        %v3726 = vadd.f32 %v3492, %v3725
        %3727 = vdwg.mxu0
        %v3728 = vxor.u32 %v3690, 2147483648
        %v3729 = vxor.u32 %v3692, 2147483648
        %v3730 = vxor.u32 %v3694, 2147483648
        %v3731 = vxor.u32 %v3696, 2147483648
        %v3732 = vxor.u32 %v3700, 2147483648
        %v3733 = vxor.u32 %v3702, 2147483648
        %v3734 = vxor.u32 %v3704, 2147483648
        %v3735 = vxor.u32 %v3706, 2147483648
        %v3736 = vxor.u32 %v3710, 2147483648
        %v3737 = vxor.u32 %v3712, 2147483648
        %v3738 = vxor.u32 %v3714, 2147483648
        %v3739 = vxor.u32 %v3716, 2147483648
        %v3740 = vxor.u32 %v3720, 2147483648
        %v3741 = vxor.u32 %v3722, 2147483648
        %v3742 = vxor.u32 %v3724, 2147483648
        %v3743 = vxor.u32 %v3726, 2147483648
        %v3744 = vmul.f32 %v3728, 1.442695
        %v3745 = vpow.pop %v3744
        %v3746 = vmul.f32 %v3729, 1.442695
        %v3747 = vpow.pop %v3746
        %v3748 = vmul.f32 %v3730, 1.442695
        %v3749 = vpow.pop %v3748
        %v3750 = vmul.f32 %v3731, 1.442695
        %v3751 = vpow.pop %v3750
        %v3752 = vmul.f32 %v3732, 1.442695
        %v3753 = vpow.pop %v3752
        %v3754 = vmul.f32 %v3733, 1.442695
        %v3755 = vpow.pop %v3754
        %v3756 = vmul.f32 %v3734, 1.442695
        %v3757 = vpow.pop %v3756
        %v3758 = vmul.f32 %v3735, 1.442695
        %v3759 = vpow.pop %v3758
        %v3760 = vmul.f32 %v3736, 1.442695
        %v3761 = vpow.pop %v3760
        %v3762 = vmul.f32 %v3737, 1.442695
        %v3763 = vpow.pop %v3762
        %v3764 = vmul.f32 %v3738, 1.442695
        %v3765 = vpow.pop %v3764
        %v3766 = vmul.f32 %v3739, 1.442695
        %v3767 = vpow.pop %v3766
        %v3768 = vmul.f32 %v3740, 1.442695
        %v3769 = vpow.pop %v3768
        %v3770 = vmul.f32 %v3741, 1.442695
        %v3771 = vpow.pop %v3770
        %v3772 = vmul.f32 %v3742, 1.442695
        %v3773 = vpow.pop %v3772
        %v3774 = vmul.f32 %v3743, 1.442695
        %v3775 = vpow.pop %v3774
        %v3776 = vadd.f32 %v3745, 1.0
        %v3777 = vadd.f32 %v3747, 1.0
        %v3778 = vadd.f32 %v3749, 1.0
        %v3779 = vadd.f32 %v3751, 1.0
        %v3780 = vadd.f32 %v3753, 1.0
        %v3781 = vadd.f32 %v3755, 1.0
        %v3782 = vadd.f32 %v3757, 1.0
        %v3783 = vadd.f32 %v3759, 1.0
        %v3784 = vadd.f32 %v3761, 1.0
        %v3785 = vadd.f32 %v3763, 1.0
        %v3786 = vadd.f32 %v3765, 1.0
        %v3787 = vadd.f32 %v3767, 1.0
        %v3788 = vadd.f32 %v3769, 1.0
        %v3789 = vadd.f32 %v3771, 1.0
        %v3790 = vadd.f32 %v3773, 1.0
        %v3791 = vadd.f32 %v3775, 1.0
        %v3792 = vrcp.pop %v3776
        %v3793 = vmul.f32 1.0, %v3792
        %v3794 = vrcp.pop %v3777
        %v3795 = vmul.f32 1.0, %v3794
        %v3796 = vrcp.pop %v3778
        %v3797 = vmul.f32 1.0, %v3796
        %v3798 = vrcp.pop %v3779
        %v3799 = vmul.f32 1.0, %v3798
        %v3800 = vrcp.pop %v3780
        %v3801 = vmul.f32 1.0, %v3800
        %v3802 = vrcp.pop %v3781
        %v3803 = vmul.f32 1.0, %v3802
        %v3804 = vrcp.pop %v3782
        %v3805 = vmul.f32 1.0, %v3804
        %v3806 = vrcp.pop %v3783
        %v3807 = vmul.f32 1.0, %v3806
        %v3808 = vrcp.pop %v3784
        %v3809 = vmul.f32 1.0, %v3808
        %v3810 = vrcp.pop %v3785
        %v3811 = vmul.f32 1.0, %v3810
        %v3812 = vrcp.pop %v3786
        %v3813 = vmul.f32 1.0, %v3812
        %v3814 = vrcp.pop %v3787
        %v3815 = vmul.f32 1.0, %v3814
        %v3816 = vrcp.pop %v3788
        %v3817 = vmul.f32 1.0, %v3816
        %v3818 = vrcp.pop %v3789
        %v3819 = vmul.f32 1.0, %v3818
        %v3820 = vrcp.pop %v3790
        %v3821 = vmul.f32 1.0, %v3820
        %v3822 = vrcp.pop %v3791
        %v3823 = vmul.f32 1.0, %v3822
        %v3824 = vmul.f32 %v3690, %v3793
        %v3825 = vmul.f32 %v3692, %v3795
        %v3826 = vmul.f32 %v3694, %v3797
        %v3827 = vmul.f32 %v3696, %v3799
        %v3828 = vmul.f32 %v3700, %v3801
        %v3829 = vmul.f32 %v3702, %v3803
        %v3830 = vmul.f32 %v3704, %v3805
        %v3831 = vmul.f32 %v3706, %v3807
        %v3832 = vmul.f32 %v3710, %v3809
        %v3833 = vmul.f32 %v3712, %v3811
        %v3834 = vmul.f32 %v3714, %v3813
        %v3835 = vmul.f32 %v3716, %v3815
        %v3836 = vmul.f32 %v3720, %v3817
        %v3837 = vmul.f32 %v3722, %v3819
        %v3838 = vmul.f32 %v3724, %v3821
        %v3839 = vmul.f32 %v3726, %v3823
        %v3856 = vrot.slane %v3824, 7
        %v3857 = vrot.slane %v3825, 7
        %v3858 = vrot.slane %v3826, 7
        %v3859 = vrot.slane %v3827, 7
        %v3860 = vrot.slane %v3828, 7
        %v3861 = vrot.slane %v3829, 7
        %v3862 = vrot.slane %v3830, 7
        %v3863 = vrot.slane %v3831, 7
        %v3864 = vrot.slane %v3832, 7
        %v3865 = vrot.slane %v3833, 7
        %v3866 = vrot.slane %v3834, 7
        %v3867 = vrot.slane %v3835, 7
        %v3868 = vrot.slane %v3836, 7
        %v3869 = vrot.slane %v3837, 7
        %v3870 = vrot.slane %v3838, 7
        %v3871 = vrot.slane %v3839, 7
        %3888 = vst [vmem:[%s327] sm:$0xfe] %v3856
        %3889 = vst [vmem:[%s327 + $0x8] sm:$0xfe] %v3857
        %3890 = vst [vmem:[%s327 + $0x10] sm:$0x1] %v3856
        %3891 = vst [vmem:[%s327 + $0x18] sm:$0x1] %v3857
        %3892 = vst [vmem:[%s327 + $0x20] sm:$0xfe] %v3858
        %3893 = vst [vmem:[%s327 + $0x28] sm:$0xfe] %v3859
        %3894 = vst [vmem:[%s327 + $0x30] sm:$0x1] %v3858
        %3895 = vst [vmem:[%s327 + $0x38] sm:$0x1] %v3859
        %3896 = vst [vmem:[%s327 + $0x40] sm:$0xfe] %v3860
        %3897 = vst [vmem:[%s327 + $0x48] sm:$0xfe] %v3861
        %3898 = vst [vmem:[%s327 + $0x50] sm:$0x1] %v3860
        %3899 = vst [vmem:[%s327 + $0x58] sm:$0x1] %v3861
        %3900 = vst [vmem:[%s327 + $0x60] sm:$0xfe] %v3862
        %3901 = vst [vmem:[%s327 + $0x68] sm:$0xfe] %v3863
        %3902 = vst [vmem:[%s327 + $0x70] sm:$0x1] %v3862
        %3903 = vst [vmem:[%s327 + $0x78] sm:$0x1] %v3863
        %3904 = vst [vmem:[%s327 + $0x80] sm:$0xfe] %v3864
        %3905 = vst [vmem:[%s327 + $0x88] sm:$0xfe] %v3865
        %3906 = vst [vmem:[%s327 + $0x90] sm:$0x1] %v3864
        %3907 = vst [vmem:[%s327 + $0x98] sm:$0x1] %v3865
        %3908 = vst [vmem:[%s327 + $0xa0] sm:$0xfe] %v3866
        %3909 = vst [vmem:[%s327 + $0xa8] sm:$0xfe] %v3867
        %3910 = vst [vmem:[%s327 + $0xb0] sm:$0x1] %v3866
        %3911 = vst [vmem:[%s327 + $0xb8] sm:$0x1] %v3867
        %3912 = vst [vmem:[%s327 + $0xc0] sm:$0xfe] %v3868
        %3913 = vst [vmem:[%s327 + $0xc8] sm:$0xfe] %v3869
        %3914 = vst [vmem:[%s327 + $0xd0] sm:$0x1] %v3868
        %3915 = vst [vmem:[%s327 + $0xd8] sm:$0x1] %v3869
        %3916 = vst [vmem:[%s327 + $0xe0] sm:$0xfe] %v3870
        %3917 = vst [vmem:[%s327 + $0xe8] sm:$0xfe] %v3871
        %3918 = vst [vmem:[%s327 + $0xf0] sm:$0x1] %v3870
        %3919 = vst [vmem:[%s327 + $0xf8] sm:$0x1] %v3871
        %v3920 = vld [vmem:[#allocation2] sm:$0xff]
        %v3921 = vld [vmem:[#allocation2 + $0x8] sm:$0xff]
        %v3922 = vld [vmem:[#allocation2 + $0x20] sm:$0xff]
        %v3923 = vld [vmem:[#allocation2 + $0x28] sm:$0xff]
        %v3924 = vld [vmem:[#allocation2 + $0x40] sm:$0xff]
        %v3925 = vld [vmem:[#allocation2 + $0x48] sm:$0xff]
        %v3926 = vld [vmem:[#allocation2 + $0x60] sm:$0xff]
        %v3927 = vld [vmem:[#allocation2 + $0x68] sm:$0xff]
        %v3928 = vld [vmem:[#allocation2 + $0x80] sm:$0xff]
        %v3929 = vld [vmem:[#allocation2 + $0x88] sm:$0xff]
        %v3930 = vld [vmem:[#allocation2 + $0xa0] sm:$0xff]
        %v3931 = vld [vmem:[#allocation2 + $0xa8] sm:$0xff]
        %v3932 = vld [vmem:[#allocation2 + $0xc0] sm:$0xff]
        %v3933 = vld [vmem:[#allocation2 + $0xc8] sm:$0xff]
        %v3934 = vld [vmem:[#allocation2 + $0xe0] sm:$0xff]
        %v3935 = vld [vmem:[#allocation2 + $0xe8] sm:$0xff]
        %s3936 = scalar_lea.vmem %s1, 64
        %v3937 = vld [vmem:[%s3936] ss:$8 sm:$0x3]
        %v3939 = vlaneseq
        %v3940 = vshrl.u32 %v3939, 7
        %v3941 = vsub.s32 0, %v3940
        %v3942 = vrot.slane %v3937, %v3941
        %v3943 = vlaneseq
        %v3944 = vshrl.u32 %v3943, 7
        %v3945 = vsub.s32 1, %v3944
        %v3946 = vrot.slane %v3937, %v3945
        %v3949 = vmul.f32 %v3920, %v3942
        %v3950 = vmul.f32 %v3921, %v3946
        %v3951 = vmul.f32 %v3922, %v3942
        %v3952 = vmul.f32 %v3923, %v3946
        %v3953 = vmul.f32 %v3924, %v3942
        %v3954 = vmul.f32 %v3925, %v3946
        %v3955 = vmul.f32 %v3926, %v3942
        %v3956 = vmul.f32 %v3927, %v3946
        %v3957 = vmul.f32 %v3928, %v3942
        %v3958 = vmul.f32 %v3929, %v3946
        %v3959 = vmul.f32 %v3930, %v3942
        %v3960 = vmul.f32 %v3931, %v3946
        %v3961 = vmul.f32 %v3932, %v3942
        %v3962 = vmul.f32 %v3933, %v3946
        %v3963 = vmul.f32 %v3934, %v3942
        %v3964 = vmul.f32 %v3935, %v3946
        %v3965 = vld [vmem:[#allocation2] sm:$0xfe]
        %v3966 = vld [vmem:[#allocation2 + $0x8] sm:$0xfe]
        %v3967 = vld [vmem:[#allocation2 + $0x10] sm:$0x1]
        %v3968 = vld [vmem:[#allocation2 + $0x18] sm:$0x1]
        %v3969 = vld [vmem:[#allocation2 + $0x20] sm:$0xfe]
        %v3970 = vld [vmem:[#allocation2 + $0x28] sm:$0xfe]
        %v3971 = vld [vmem:[#allocation2 + $0x30] sm:$0x1]
        %v3972 = vld [vmem:[#allocation2 + $0x38] sm:$0x1]
        %v3973 = vld [vmem:[#allocation2 + $0x40] sm:$0xfe]
        %v3974 = vld [vmem:[#allocation2 + $0x48] sm:$0xfe]
        %v3975 = vld [vmem:[#allocation2 + $0x50] sm:$0x1]
        %v3976 = vld [vmem:[#allocation2 + $0x58] sm:$0x1]
        %v3977 = vld [vmem:[#allocation2 + $0x60] sm:$0xfe]
        %v3978 = vld [vmem:[#allocation2 + $0x68] sm:$0xfe]
        %v3979 = vld [vmem:[#allocation2 + $0x70] sm:$0x1]
        %v3980 = vld [vmem:[#allocation2 + $0x78] sm:$0x1]
        %v3981 = vld [vmem:[#allocation2 + $0x80] sm:$0xfe]
        %v3982 = vld [vmem:[#allocation2 + $0x88] sm:$0xfe]
        %v3983 = vld [vmem:[#allocation2 + $0x90] sm:$0x1]
        %v3984 = vld [vmem:[#allocation2 + $0x98] sm:$0x1]
        %v3985 = vld [vmem:[#allocation2 + $0xa0] sm:$0xfe]
        %v3986 = vld [vmem:[#allocation2 + $0xa8] sm:$0xfe]
        %v3987 = vld [vmem:[#allocation2 + $0xb0] sm:$0x1]
        %v3988 = vld [vmem:[#allocation2 + $0xb8] sm:$0x1]
        %v3989 = vld [vmem:[#allocation2 + $0xc0] sm:$0xfe]
        %v3990 = vld [vmem:[#allocation2 + $0xc8] sm:$0xfe]
        %v3991 = vld [vmem:[#allocation2 + $0xd0] sm:$0x1]
        %v3992 = vld [vmem:[#allocation2 + $0xd8] sm:$0x1]
        %v3993 = vld [vmem:[#allocation2 + $0xe0] sm:$0xfe]
        %v3994 = vld [vmem:[#allocation2 + $0xe8] sm:$0xfe]
        %v3995 = vld [vmem:[#allocation2 + $0xf0] sm:$0x1]
        %v3996 = vld [vmem:[#allocation2 + $0xf8] sm:$0x1]
        %s3997 = scalar_lea.vmem %s3936, 1
        %v3998 = vld [vmem:[%s3997] ss:$8 sm:$0x3]
        %v4000 = vlaneseq
        %v4001 = vshrl.u32 %v4000, 7
        %v4002 = vsub.s32 0, %v4001
        %v4003 = vrot.slane %v3998, %v4002
        %v4004 = vlaneseq
        %v4005 = vshrl.u32 %v4004, 7
        %v4006 = vsub.s32 1, %v4005
        %v4007 = vrot.slane %v3998, %v4006
        %v4010 = vmul.f32 %v3965, %v4003
        %v4011 = vmul.f32 %v3966, %v4007
        %v4012 = vmul.f32 %v3967, %v4003
        %v4013 = vmul.f32 %v3968, %v4007
        %v4014 = vmul.f32 %v3969, %v4003
        %v4015 = vmul.f32 %v3970, %v4007
        %v4016 = vmul.f32 %v3971, %v4003
        %v4017 = vmul.f32 %v3972, %v4007
        %v4018 = vmul.f32 %v3973, %v4003
        %v4019 = vmul.f32 %v3974, %v4007
        %v4020 = vmul.f32 %v3975, %v4003
        %v4021 = vmul.f32 %v3976, %v4007
        %v4022 = vmul.f32 %v3977, %v4003
        %v4023 = vmul.f32 %v3978, %v4007
        %v4024 = vmul.f32 %v3979, %v4003
        %v4025 = vmul.f32 %v3980, %v4007
        %v4026 = vmul.f32 %v3981, %v4003
        %v4027 = vmul.f32 %v3982, %v4007
        %v4028 = vmul.f32 %v3983, %v4003
        %v4029 = vmul.f32 %v3984, %v4007
        %v4030 = vmul.f32 %v3985, %v4003
        %v4031 = vmul.f32 %v3986, %v4007
        %v4032 = vmul.f32 %v3987, %v4003
        %v4033 = vmul.f32 %v3988, %v4007
        %v4034 = vmul.f32 %v3989, %v4003
        %v4035 = vmul.f32 %v3990, %v4007
        %v4036 = vmul.f32 %v3991, %v4003
        %v4037 = vmul.f32 %v3992, %v4007
        %v4038 = vmul.f32 %v3993, %v4003
        %v4039 = vmul.f32 %v3994, %v4007
        %v4040 = vmul.f32 %v3995, %v4003
        %v4041 = vmul.f32 %v3996, %v4007
        %v4074 = vrot.slane %v4010, 1
        %v4075 = vrot.slane %v4012, 1
        %v4076 = vsel %vm513, %v4074, %v4075
        %v4077 = vrot.slane %v4011, 1
        %v4078 = vrot.slane %v4013, 1
        %v4079 = vsel %vm513, %v4077, %v4078
        %v4080 = vrot.slane %v4014, 1
        %v4081 = vrot.slane %v4016, 1
        %v4082 = vsel %vm513, %v4080, %v4081
        %v4083 = vrot.slane %v4015, 1
        %v4084 = vrot.slane %v4017, 1
        %v4085 = vsel %vm513, %v4083, %v4084
        %v4086 = vrot.slane %v4018, 1
        %v4087 = vrot.slane %v4020, 1
        %v4088 = vsel %vm513, %v4086, %v4087
        %v4089 = vrot.slane %v4019, 1
        %v4090 = vrot.slane %v4021, 1
        %v4091 = vsel %vm513, %v4089, %v4090
        %v4092 = vrot.slane %v4022, 1
        %v4093 = vrot.slane %v4024, 1
        %v4094 = vsel %vm513, %v4092, %v4093
        %v4095 = vrot.slane %v4023, 1
        %v4096 = vrot.slane %v4025, 1
        %v4097 = vsel %vm513, %v4095, %v4096
        %v4098 = vrot.slane %v4026, 1
        %v4099 = vrot.slane %v4028, 1
        %v4100 = vsel %vm513, %v4098, %v4099
        %v4101 = vrot.slane %v4027, 1
        %v4102 = vrot.slane %v4029, 1
        %v4103 = vsel %vm513, %v4101, %v4102
        %v4104 = vrot.slane %v4030, 1
        %v4105 = vrot.slane %v4032, 1
        %v4106 = vsel %vm513, %v4104, %v4105
        %v4107 = vrot.slane %v4031, 1
        %v4108 = vrot.slane %v4033, 1
        %v4109 = vsel %vm513, %v4107, %v4108
        %v4110 = vrot.slane %v4034, 1
        %v4111 = vrot.slane %v4036, 1
        %v4112 = vsel %vm513, %v4110, %v4111
        %v4113 = vrot.slane %v4035, 1
        %v4114 = vrot.slane %v4037, 1
        %v4115 = vsel %vm513, %v4113, %v4114
        %v4116 = vrot.slane %v4038, 1
        %v4117 = vrot.slane %v4040, 1
        %v4118 = vsel %vm513, %v4116, %v4117
        %v4119 = vrot.slane %v4039, 1
        %v4120 = vrot.slane %v4041, 1
        %v4121 = vsel %vm513, %v4119, %v4120
        %v4138 = vadd.f32 %v3949, %v4076
        %v4139 = vadd.f32 %v3950, %v4079
        %v4140 = vadd.f32 %v3951, %v4082
        %v4141 = vadd.f32 %v3952, %v4085
        %v4142 = vadd.f32 %v3953, %v4088
        %v4143 = vadd.f32 %v3954, %v4091
        %v4144 = vadd.f32 %v3955, %v4094
        %v4145 = vadd.f32 %v3956, %v4097
        %v4146 = vadd.f32 %v3957, %v4100
        %v4147 = vadd.f32 %v3958, %v4103
        %v4148 = vadd.f32 %v3959, %v4106
        %v4149 = vadd.f32 %v3960, %v4109
        %v4150 = vadd.f32 %v3961, %v4112
        %v4151 = vadd.f32 %v3962, %v4115
        %v4152 = vadd.f32 %v3963, %v4118
        %v4153 = vadd.f32 %v3964, %v4121
        %v4154 = vld [vmem:[#allocation2] sm:$0xfc]
        %v4155 = vld [vmem:[#allocation2 + $0x8] sm:$0xfc]
        %v4156 = vld [vmem:[#allocation2 + $0x10] sm:$0x3]
        %v4157 = vld [vmem:[#allocation2 + $0x18] sm:$0x3]
        %v4158 = vld [vmem:[#allocation2 + $0x20] sm:$0xfc]
        %v4159 = vld [vmem:[#allocation2 + $0x28] sm:$0xfc]
        %v4160 = vld [vmem:[#allocation2 + $0x30] sm:$0x3]
        %v4161 = vld [vmem:[#allocation2 + $0x38] sm:$0x3]
        %v4162 = vld [vmem:[#allocation2 + $0x40] sm:$0xfc]
        %v4163 = vld [vmem:[#allocation2 + $0x48] sm:$0xfc]
        %v4164 = vld [vmem:[#allocation2 + $0x50] sm:$0x3]
        %v4165 = vld [vmem:[#allocation2 + $0x58] sm:$0x3]
        %v4166 = vld [vmem:[#allocation2 + $0x60] sm:$0xfc]
        %v4167 = vld [vmem:[#allocation2 + $0x68] sm:$0xfc]
        %v4168 = vld [vmem:[#allocation2 + $0x70] sm:$0x3]
        %v4169 = vld [vmem:[#allocation2 + $0x78] sm:$0x3]
        %v4170 = vld [vmem:[#allocation2 + $0x80] sm:$0xfc]
        %v4171 = vld [vmem:[#allocation2 + $0x88] sm:$0xfc]
        %v4172 = vld [vmem:[#allocation2 + $0x90] sm:$0x3]
        %v4173 = vld [vmem:[#allocation2 + $0x98] sm:$0x3]
        %v4174 = vld [vmem:[#allocation2 + $0xa0] sm:$0xfc]
        %v4175 = vld [vmem:[#allocation2 + $0xa8] sm:$0xfc]
        %v4176 = vld [vmem:[#allocation2 + $0xb0] sm:$0x3]
        %v4177 = vld [vmem:[#allocation2 + $0xb8] sm:$0x3]
        %v4178 = vld [vmem:[#allocation2 + $0xc0] sm:$0xfc]
        %v4179 = vld [vmem:[#allocation2 + $0xc8] sm:$0xfc]
        %v4180 = vld [vmem:[#allocation2 + $0xd0] sm:$0x3]
        %v4181 = vld [vmem:[#allocation2 + $0xd8] sm:$0x3]
        %v4182 = vld [vmem:[#allocation2 + $0xe0] sm:$0xfc]
        %v4183 = vld [vmem:[#allocation2 + $0xe8] sm:$0xfc]
        %v4184 = vld [vmem:[#allocation2 + $0xf0] sm:$0x3]
        %v4185 = vld [vmem:[#allocation2 + $0xf8] sm:$0x3]
        %s4186 = scalar_lea.vmem %s3936, 2
        %v4187 = vld [vmem:[%s4186] ss:$8 sm:$0x3]
        %v4189 = vlaneseq
        %v4190 = vshrl.u32 %v4189, 7
        %v4191 = vsub.s32 0, %v4190
        %v4192 = vrot.slane %v4187, %v4191
        %v4193 = vlaneseq
        %v4194 = vshrl.u32 %v4193, 7
        %v4195 = vsub.s32 1, %v4194
        %v4196 = vrot.slane %v4187, %v4195
        %v4199 = vmul.f32 %v4154, %v4192
        %v4200 = vmul.f32 %v4155, %v4196
        %v4201 = vmul.f32 %v4156, %v4192
        %v4202 = vmul.f32 %v4157, %v4196
        %v4203 = vmul.f32 %v4158, %v4192
        %v4204 = vmul.f32 %v4159, %v4196
        %v4205 = vmul.f32 %v4160, %v4192
        %v4206 = vmul.f32 %v4161, %v4196
        %v4207 = vmul.f32 %v4162, %v4192
        %v4208 = vmul.f32 %v4163, %v4196
        %v4209 = vmul.f32 %v4164, %v4192
        %v4210 = vmul.f32 %v4165, %v4196
        %v4211 = vmul.f32 %v4166, %v4192
        %v4212 = vmul.f32 %v4167, %v4196
        %v4213 = vmul.f32 %v4168, %v4192
        %v4214 = vmul.f32 %v4169, %v4196
        %v4215 = vmul.f32 %v4170, %v4192
        %v4216 = vmul.f32 %v4171, %v4196
        %v4217 = vmul.f32 %v4172, %v4192
        %v4218 = vmul.f32 %v4173, %v4196
        %v4219 = vmul.f32 %v4174, %v4192
        %v4220 = vmul.f32 %v4175, %v4196
        %v4221 = vmul.f32 %v4176, %v4192
        %v4222 = vmul.f32 %v4177, %v4196
        %v4223 = vmul.f32 %v4178, %v4192
        %v4224 = vmul.f32 %v4179, %v4196
        %v4225 = vmul.f32 %v4180, %v4192
        %v4226 = vmul.f32 %v4181, %v4196
        %v4227 = vmul.f32 %v4182, %v4192
        %v4228 = vmul.f32 %v4183, %v4196
        %v4229 = vmul.f32 %v4184, %v4192
        %v4230 = vmul.f32 %v4185, %v4196
        %v4263 = vrot.slane %v4199, 2
        %v4264 = vrot.slane %v4201, 2
        %v4265 = vsel %vm703, %v4263, %v4264
        %v4266 = vrot.slane %v4200, 2
        %v4267 = vrot.slane %v4202, 2
        %v4268 = vsel %vm703, %v4266, %v4267
        %v4269 = vrot.slane %v4203, 2
        %v4270 = vrot.slane %v4205, 2
        %v4271 = vsel %vm703, %v4269, %v4270
        %v4272 = vrot.slane %v4204, 2
        %v4273 = vrot.slane %v4206, 2
        %v4274 = vsel %vm703, %v4272, %v4273
        %v4275 = vrot.slane %v4207, 2
        %v4276 = vrot.slane %v4209, 2
        %v4277 = vsel %vm703, %v4275, %v4276
        %v4278 = vrot.slane %v4208, 2
        %v4279 = vrot.slane %v4210, 2
        %v4280 = vsel %vm703, %v4278, %v4279
        %v4281 = vrot.slane %v4211, 2
        %v4282 = vrot.slane %v4213, 2
        %v4283 = vsel %vm703, %v4281, %v4282
        %v4284 = vrot.slane %v4212, 2
        %v4285 = vrot.slane %v4214, 2
        %v4286 = vsel %vm703, %v4284, %v4285
        %v4287 = vrot.slane %v4215, 2
        %v4288 = vrot.slane %v4217, 2
        %v4289 = vsel %vm703, %v4287, %v4288
        %v4290 = vrot.slane %v4216, 2
        %v4291 = vrot.slane %v4218, 2
        %v4292 = vsel %vm703, %v4290, %v4291
        %v4293 = vrot.slane %v4219, 2
        %v4294 = vrot.slane %v4221, 2
        %v4295 = vsel %vm703, %v4293, %v4294
        %v4296 = vrot.slane %v4220, 2
        %v4297 = vrot.slane %v4222, 2
        %v4298 = vsel %vm703, %v4296, %v4297
        %v4299 = vrot.slane %v4223, 2
        %v4300 = vrot.slane %v4225, 2
        %v4301 = vsel %vm703, %v4299, %v4300
        %v4302 = vrot.slane %v4224, 2
        %v4303 = vrot.slane %v4226, 2
        %v4304 = vsel %vm703, %v4302, %v4303
        %v4305 = vrot.slane %v4227, 2
        %v4306 = vrot.slane %v4229, 2
        %v4307 = vsel %vm703, %v4305, %v4306
        %v4308 = vrot.slane %v4228, 2
        %v4309 = vrot.slane %v4230, 2
        %v4310 = vsel %vm703, %v4308, %v4309
        %v4327 = vadd.f32 %v4138, %v4265
        %v4328 = vadd.f32 %v4139, %v4268
        %v4329 = vadd.f32 %v4140, %v4271
        %v4330 = vadd.f32 %v4141, %v4274
        %v4331 = vadd.f32 %v4142, %v4277
        %v4332 = vadd.f32 %v4143, %v4280
        %v4333 = vadd.f32 %v4144, %v4283
        %v4334 = vadd.f32 %v4145, %v4286
        %v4335 = vadd.f32 %v4146, %v4289
        %v4336 = vadd.f32 %v4147, %v4292
        %v4337 = vadd.f32 %v4148, %v4295
        %v4338 = vadd.f32 %v4149, %v4298
        %v4339 = vadd.f32 %v4150, %v4301
        %v4340 = vadd.f32 %v4151, %v4304
        %v4341 = vadd.f32 %v4152, %v4307
        %v4342 = vadd.f32 %v4153, %v4310
        %v4343 = vld [vmem:[%s327] sm:$0xff]
        %v4344 = vld [vmem:[%s327 + $0x8] sm:$0xff]
        %v4345 = vld [vmem:[%s327 + $0x20] sm:$0xff]
        %v4346 = vld [vmem:[%s327 + $0x28] sm:$0xff]
        %v4347 = vld [vmem:[%s327 + $0x40] sm:$0xff]
        %v4348 = vld [vmem:[%s327 + $0x48] sm:$0xff]
        %v4349 = vld [vmem:[%s327 + $0x60] sm:$0xff]
        %v4350 = vld [vmem:[%s327 + $0x68] sm:$0xff]
        %v4351 = vld [vmem:[%s327 + $0x80] sm:$0xff]
        %v4352 = vld [vmem:[%s327 + $0x88] sm:$0xff]
        %v4353 = vld [vmem:[%s327 + $0xa0] sm:$0xff]
        %v4354 = vld [vmem:[%s327 + $0xa8] sm:$0xff]
        %v4355 = vld [vmem:[%s327 + $0xc0] sm:$0xff]
        %v4356 = vld [vmem:[%s327 + $0xc8] sm:$0xff]
        %v4357 = vld [vmem:[%s327 + $0xe0] sm:$0xff]
        %v4358 = vld [vmem:[%s327 + $0xe8] sm:$0xff]
        %s4359 = scalar_lea.vmem %s3936, 3
        %v4360 = vld [vmem:[%s4359] ss:$8 sm:$0x3]
        %v4362 = vlaneseq
        %v4363 = vshrl.u32 %v4362, 7
        %v4364 = vsub.s32 0, %v4363
        %v4365 = vrot.slane %v4360, %v4364
        %v4366 = vlaneseq
        %v4367 = vshrl.u32 %v4366, 7
        %v4368 = vsub.s32 1, %v4367
        %v4369 = vrot.slane %v4360, %v4368
        %v4372 = vmul.f32 %v4343, %v4365
        %v4373 = vmul.f32 %v4344, %v4369
        %v4374 = vmul.f32 %v4345, %v4365
        %v4375 = vmul.f32 %v4346, %v4369
        %v4376 = vmul.f32 %v4347, %v4365
        %v4377 = vmul.f32 %v4348, %v4369
        %v4378 = vmul.f32 %v4349, %v4365
        %v4379 = vmul.f32 %v4350, %v4369
        %v4380 = vmul.f32 %v4351, %v4365
        %v4381 = vmul.f32 %v4352, %v4369
        %v4382 = vmul.f32 %v4353, %v4365
        %v4383 = vmul.f32 %v4354, %v4369
        %v4384 = vmul.f32 %v4355, %v4365
        %v4385 = vmul.f32 %v4356, %v4369
        %v4386 = vmul.f32 %v4357, %v4365
        %v4387 = vmul.f32 %v4358, %v4369
        %v4388 = vadd.f32 %v4327, %v4372
        %v4389 = vadd.f32 %v4328, %v4373
        %v4390 = vadd.f32 %v4329, %v4374
        %v4391 = vadd.f32 %v4330, %v4375
        %v4392 = vadd.f32 %v4331, %v4376
        %v4393 = vadd.f32 %v4332, %v4377
        %v4394 = vadd.f32 %v4333, %v4378
        %v4395 = vadd.f32 %v4334, %v4379
        %v4396 = vadd.f32 %v4335, %v4380
        %v4397 = vadd.f32 %v4336, %v4381
        %v4398 = vadd.f32 %v4337, %v4382
        %v4399 = vadd.f32 %v4338, %v4383
        %v4400 = vadd.f32 %v4339, %v4384
        %v4401 = vadd.f32 %v4340, %v4385
        %v4402 = vadd.f32 %v4341, %v4386
        %v4403 = vadd.f32 %v4342, %v4387
        %v4404 = vld [vmem:[%s327] sm:$0xfe]
        %v4405 = vld [vmem:[%s327 + $0x8] sm:$0xfe]
        %v4406 = vld [vmem:[%s327 + $0x10] sm:$0x1]
        %v4407 = vld [vmem:[%s327 + $0x18] sm:$0x1]
        %v4408 = vld [vmem:[%s327 + $0x20] sm:$0xfe]
        %v4409 = vld [vmem:[%s327 + $0x28] sm:$0xfe]
        %v4410 = vld [vmem:[%s327 + $0x30] sm:$0x1]
        %v4411 = vld [vmem:[%s327 + $0x38] sm:$0x1]
        %v4412 = vld [vmem:[%s327 + $0x40] sm:$0xfe]
        %v4413 = vld [vmem:[%s327 + $0x48] sm:$0xfe]
        %v4414 = vld [vmem:[%s327 + $0x50] sm:$0x1]
        %v4415 = vld [vmem:[%s327 + $0x58] sm:$0x1]
        %v4416 = vld [vmem:[%s327 + $0x60] sm:$0xfe]
        %v4417 = vld [vmem:[%s327 + $0x68] sm:$0xfe]
        %v4418 = vld [vmem:[%s327 + $0x70] sm:$0x1]
        %v4419 = vld [vmem:[%s327 + $0x78] sm:$0x1]
        %v4420 = vld [vmem:[%s327 + $0x80] sm:$0xfe]
        %v4421 = vld [vmem:[%s327 + $0x88] sm:$0xfe]
        %v4422 = vld [vmem:[%s327 + $0x90] sm:$0x1]
        %v4423 = vld [vmem:[%s327 + $0x98] sm:$0x1]
        %v4424 = vld [vmem:[%s327 + $0xa0] sm:$0xfe]
        %v4425 = vld [vmem:[%s327 + $0xa8] sm:$0xfe]
        %v4426 = vld [vmem:[%s327 + $0xb0] sm:$0x1]
        %v4427 = vld [vmem:[%s327 + $0xb8] sm:$0x1]
        %v4428 = vld [vmem:[%s327 + $0xc0] sm:$0xfe]
        %v4429 = vld [vmem:[%s327 + $0xc8] sm:$0xfe]
        %v4430 = vld [vmem:[%s327 + $0xd0] sm:$0x1]
        %v4431 = vld [vmem:[%s327 + $0xd8] sm:$0x1]
        %v4432 = vld [vmem:[%s327 + $0xe0] sm:$0xfe]
        %v4433 = vld [vmem:[%s327 + $0xe8] sm:$0xfe]
        %v4434 = vld [vmem:[%s327 + $0xf0] sm:$0x1]
        %v4435 = vld [vmem:[%s327 + $0xf8] sm:$0x1]
        %s4436 = scalar_lea.vmem %s3936, 4
        %v4437 = vld [vmem:[%s4436] ss:$8 sm:$0x3]
        %v4439 = vlaneseq
        %v4440 = vshrl.u32 %v4439, 7
        %v4441 = vsub.s32 0, %v4440
        %v4442 = vrot.slane %v4437, %v4441
        %v4443 = vlaneseq
        %v4444 = vshrl.u32 %v4443, 7
        %v4445 = vsub.s32 1, %v4444
        %v4446 = vrot.slane %v4437, %v4445
        %v4449 = vmul.f32 %v4404, %v4442
        %v4450 = vmul.f32 %v4405, %v4446
        %v4451 = vmul.f32 %v4406, %v4442
        %v4452 = vmul.f32 %v4407, %v4446
        %v4453 = vmul.f32 %v4408, %v4442
        %v4454 = vmul.f32 %v4409, %v4446
        %v4455 = vmul.f32 %v4410, %v4442
        %v4456 = vmul.f32 %v4411, %v4446
        %v4457 = vmul.f32 %v4412, %v4442
        %v4458 = vmul.f32 %v4413, %v4446
        %v4459 = vmul.f32 %v4414, %v4442
        %v4460 = vmul.f32 %v4415, %v4446
        %v4461 = vmul.f32 %v4416, %v4442
        %v4462 = vmul.f32 %v4417, %v4446
        %v4463 = vmul.f32 %v4418, %v4442
        %v4464 = vmul.f32 %v4419, %v4446
        %v4465 = vmul.f32 %v4420, %v4442
        %v4466 = vmul.f32 %v4421, %v4446
        %v4467 = vmul.f32 %v4422, %v4442
        %v4468 = vmul.f32 %v4423, %v4446
        %v4469 = vmul.f32 %v4424, %v4442
        %v4470 = vmul.f32 %v4425, %v4446
        %v4471 = vmul.f32 %v4426, %v4442
        %v4472 = vmul.f32 %v4427, %v4446
        %v4473 = vmul.f32 %v4428, %v4442
        %v4474 = vmul.f32 %v4429, %v4446
        %v4475 = vmul.f32 %v4430, %v4442
        %v4476 = vmul.f32 %v4431, %v4446
        %v4477 = vmul.f32 %v4432, %v4442
        %v4478 = vmul.f32 %v4433, %v4446
        %v4479 = vmul.f32 %v4434, %v4442
        %v4480 = vmul.f32 %v4435, %v4446
        %v4513 = vrot.slane %v4449, 1
        %v4514 = vrot.slane %v4451, 1
        %v4515 = vsel %vm513, %v4513, %v4514
        %v4516 = vrot.slane %v4450, 1
        %v4517 = vrot.slane %v4452, 1
        %v4518 = vsel %vm513, %v4516, %v4517
        %v4519 = vrot.slane %v4453, 1
        %v4520 = vrot.slane %v4455, 1
        %v4521 = vsel %vm513, %v4519, %v4520
        %v4522 = vrot.slane %v4454, 1
        %v4523 = vrot.slane %v4456, 1
        %v4524 = vsel %vm513, %v4522, %v4523
        %v4525 = vrot.slane %v4457, 1
        %v4526 = vrot.slane %v4459, 1
        %v4527 = vsel %vm513, %v4525, %v4526
        %v4528 = vrot.slane %v4458, 1
        %v4529 = vrot.slane %v4460, 1
        %v4530 = vsel %vm513, %v4528, %v4529
        %v4531 = vrot.slane %v4461, 1
        %v4532 = vrot.slane %v4463, 1
        %v4533 = vsel %vm513, %v4531, %v4532
        %v4534 = vrot.slane %v4462, 1
        %v4535 = vrot.slane %v4464, 1
        %v4536 = vsel %vm513, %v4534, %v4535
        %v4537 = vrot.slane %v4465, 1
        %v4538 = vrot.slane %v4467, 1
        %v4539 = vsel %vm513, %v4537, %v4538
        %v4540 = vrot.slane %v4466, 1
        %v4541 = vrot.slane %v4468, 1
        %v4542 = vsel %vm513, %v4540, %v4541
        %v4543 = vrot.slane %v4469, 1
        %v4544 = vrot.slane %v4471, 1
        %v4545 = vsel %vm513, %v4543, %v4544
        %v4546 = vrot.slane %v4470, 1
        %v4547 = vrot.slane %v4472, 1
        %v4548 = vsel %vm513, %v4546, %v4547
        %v4549 = vrot.slane %v4473, 1
        %v4550 = vrot.slane %v4475, 1
        %v4551 = vsel %vm513, %v4549, %v4550
        %v4552 = vrot.slane %v4474, 1
        %v4553 = vrot.slane %v4476, 1
        %v4554 = vsel %vm513, %v4552, %v4553
        %v4555 = vrot.slane %v4477, 1
        %v4556 = vrot.slane %v4479, 1
        %v4557 = vsel %vm513, %v4555, %v4556
        %v4558 = vrot.slane %v4478, 1
        %v4559 = vrot.slane %v4480, 1
        %v4560 = vsel %vm513, %v4558, %v4559
        %v4577 = vadd.f32 %v4388, %v4515
        %v4578 = vadd.f32 %v4389, %v4518
        %v4579 = vadd.f32 %v4390, %v4521
        %v4580 = vadd.f32 %v4391, %v4524
        %v4581 = vadd.f32 %v4392, %v4527
        %v4582 = vadd.f32 %v4393, %v4530
        %v4583 = vadd.f32 %v4394, %v4533
        %v4584 = vadd.f32 %v4395, %v4536
        %v4585 = vadd.f32 %v4396, %v4539
        %v4586 = vadd.f32 %v4397, %v4542
        %v4587 = vadd.f32 %v4398, %v4545
        %v4588 = vadd.f32 %v4399, %v4548
        %v4589 = vadd.f32 %v4400, %v4551
        %v4590 = vadd.f32 %v4401, %v4554
        %v4591 = vadd.f32 %v4402, %v4557
        %v4592 = vadd.f32 %v4403, %v4560
        %v4593 = vld [vmem:[%s327] sm:$0xfc]
        %v4594 = vld [vmem:[%s327 + $0x8] sm:$0xfc]
        %v4595 = vld [vmem:[%s327 + $0x10] sm:$0x3]
        %v4596 = vld [vmem:[%s327 + $0x18] sm:$0x3]
        %v4597 = vld [vmem:[%s327 + $0x20] sm:$0xfc]
        %v4598 = vld [vmem:[%s327 + $0x28] sm:$0xfc]
        %v4599 = vld [vmem:[%s327 + $0x30] sm:$0x3]
        %v4600 = vld [vmem:[%s327 + $0x38] sm:$0x3]
        %v4601 = vld [vmem:[%s327 + $0x40] sm:$0xfc]
        %v4602 = vld [vmem:[%s327 + $0x48] sm:$0xfc]
        %v4603 = vld [vmem:[%s327 + $0x50] sm:$0x3]
        %v4604 = vld [vmem:[%s327 + $0x58] sm:$0x3]
        %v4605 = vld [vmem:[%s327 + $0x60] sm:$0xfc]
        %v4606 = vld [vmem:[%s327 + $0x68] sm:$0xfc]
        %v4607 = vld [vmem:[%s327 + $0x70] sm:$0x3]
        %v4608 = vld [vmem:[%s327 + $0x78] sm:$0x3]
        %v4609 = vld [vmem:[%s327 + $0x80] sm:$0xfc]
        %v4610 = vld [vmem:[%s327 + $0x88] sm:$0xfc]
        %v4611 = vld [vmem:[%s327 + $0x90] sm:$0x3]
        %v4612 = vld [vmem:[%s327 + $0x98] sm:$0x3]
        %v4613 = vld [vmem:[%s327 + $0xa0] sm:$0xfc]
        %v4614 = vld [vmem:[%s327 + $0xa8] sm:$0xfc]
        %v4615 = vld [vmem:[%s327 + $0xb0] sm:$0x3]
        %v4616 = vld [vmem:[%s327 + $0xb8] sm:$0x3]
        %v4617 = vld [vmem:[%s327 + $0xc0] sm:$0xfc]
        %v4618 = vld [vmem:[%s327 + $0xc8] sm:$0xfc]
        %v4619 = vld [vmem:[%s327 + $0xd0] sm:$0x3]
        %v4620 = vld [vmem:[%s327 + $0xd8] sm:$0x3]
        %v4621 = vld [vmem:[%s327 + $0xe0] sm:$0xfc]
        %v4622 = vld [vmem:[%s327 + $0xe8] sm:$0xfc]
        %v4623 = vld [vmem:[%s327 + $0xf0] sm:$0x3]
        %v4624 = vld [vmem:[%s327 + $0xf8] sm:$0x3]
        %s4625 = scalar_lea.vmem %s3936, 5
        %v4626 = vld [vmem:[%s4625] ss:$8 sm:$0x3]
        %v4628 = vlaneseq
        %v4629 = vshrl.u32 %v4628, 7
        %v4630 = vsub.s32 0, %v4629
        %v4631 = vrot.slane %v4626, %v4630
        %v4632 = vlaneseq
        %v4633 = vshrl.u32 %v4632, 7
        %v4634 = vsub.s32 1, %v4633
        %v4635 = vrot.slane %v4626, %v4634
        %v4638 = vmul.f32 %v4593, %v4631
        %v4639 = vmul.f32 %v4594, %v4635
        %v4640 = vmul.f32 %v4595, %v4631
        %v4641 = vmul.f32 %v4596, %v4635
        %v4642 = vmul.f32 %v4597, %v4631
        %v4643 = vmul.f32 %v4598, %v4635
        %v4644 = vmul.f32 %v4599, %v4631
        %v4645 = vmul.f32 %v4600, %v4635
        %v4646 = vmul.f32 %v4601, %v4631
        %v4647 = vmul.f32 %v4602, %v4635
        %v4648 = vmul.f32 %v4603, %v4631
        %v4649 = vmul.f32 %v4604, %v4635
        %v4650 = vmul.f32 %v4605, %v4631
        %v4651 = vmul.f32 %v4606, %v4635
        %v4652 = vmul.f32 %v4607, %v4631
        %v4653 = vmul.f32 %v4608, %v4635
        %v4654 = vmul.f32 %v4609, %v4631
        %v4655 = vmul.f32 %v4610, %v4635
        %v4656 = vmul.f32 %v4611, %v4631
        %v4657 = vmul.f32 %v4612, %v4635
        %v4658 = vmul.f32 %v4613, %v4631
        %v4659 = vmul.f32 %v4614, %v4635
        %v4660 = vmul.f32 %v4615, %v4631
        %v4661 = vmul.f32 %v4616, %v4635
        %v4662 = vmul.f32 %v4617, %v4631
        %v4663 = vmul.f32 %v4618, %v4635
        %v4664 = vmul.f32 %v4619, %v4631
        %v4665 = vmul.f32 %v4620, %v4635
        %v4666 = vmul.f32 %v4621, %v4631
        %v4667 = vmul.f32 %v4622, %v4635
        %v4668 = vmul.f32 %v4623, %v4631
        %v4669 = vmul.f32 %v4624, %v4635
        %v4702 = vrot.slane %v4638, 2
        %v4703 = vrot.slane %v4640, 2
        %v4704 = vsel %vm703, %v4702, %v4703
        %v4705 = vrot.slane %v4639, 2
        %v4706 = vrot.slane %v4641, 2
        %v4707 = vsel %vm703, %v4705, %v4706
        %v4708 = vrot.slane %v4642, 2
        %v4709 = vrot.slane %v4644, 2
        %v4710 = vsel %vm703, %v4708, %v4709
        %v4711 = vrot.slane %v4643, 2
        %v4712 = vrot.slane %v4645, 2
        %v4713 = vsel %vm703, %v4711, %v4712
        %v4714 = vrot.slane %v4646, 2
        %v4715 = vrot.slane %v4648, 2
        %v4716 = vsel %vm703, %v4714, %v4715
        %v4717 = vrot.slane %v4647, 2
        %v4718 = vrot.slane %v4649, 2
        %v4719 = vsel %vm703, %v4717, %v4718
        %v4720 = vrot.slane %v4650, 2
        %v4721 = vrot.slane %v4652, 2
        %v4722 = vsel %vm703, %v4720, %v4721
        %v4723 = vrot.slane %v4651, 2
        %v4724 = vrot.slane %v4653, 2
        %v4725 = vsel %vm703, %v4723, %v4724
        %v4726 = vrot.slane %v4654, 2
        %v4727 = vrot.slane %v4656, 2
        %v4728 = vsel %vm703, %v4726, %v4727
        %v4729 = vrot.slane %v4655, 2
        %v4730 = vrot.slane %v4657, 2
        %v4731 = vsel %vm703, %v4729, %v4730
        %v4732 = vrot.slane %v4658, 2
        %v4733 = vrot.slane %v4660, 2
        %v4734 = vsel %vm703, %v4732, %v4733
        %v4735 = vrot.slane %v4659, 2
        %v4736 = vrot.slane %v4661, 2
        %v4737 = vsel %vm703, %v4735, %v4736
        %v4738 = vrot.slane %v4662, 2
        %v4739 = vrot.slane %v4664, 2
        %v4740 = vsel %vm703, %v4738, %v4739
        %v4741 = vrot.slane %v4663, 2
        %v4742 = vrot.slane %v4665, 2
        %v4743 = vsel %vm703, %v4741, %v4742
        %v4744 = vrot.slane %v4666, 2
        %v4745 = vrot.slane %v4668, 2
        %v4746 = vsel %vm703, %v4744, %v4745
        %v4747 = vrot.slane %v4667, 2
        %v4748 = vrot.slane %v4669, 2
        %v4749 = vsel %vm703, %v4747, %v4748
        %v4766 = vadd.f32 %v4577, %v4704
        %v4767 = vadd.f32 %v4578, %v4707
        %v4768 = vadd.f32 %v4579, %v4710
        %v4769 = vadd.f32 %v4580, %v4713
        %v4770 = vadd.f32 %v4581, %v4716
        %v4771 = vadd.f32 %v4582, %v4719
        %v4772 = vadd.f32 %v4583, %v4722
        %v4773 = vadd.f32 %v4584, %v4725
        %v4774 = vadd.f32 %v4585, %v4728
        %v4775 = vadd.f32 %v4586, %v4731
        %v4776 = vadd.f32 %v4587, %v4734
        %v4777 = vadd.f32 %v4588, %v4737
        %v4778 = vadd.f32 %v4589, %v4740
        %v4779 = vadd.f32 %v4590, %v4743
        %v4780 = vadd.f32 %v4591, %v4746
        %v4781 = vadd.f32 %v4592, %v4749
        %v4782 = vld [vmem:[%s1223] sm:$0xff]
        %v4783 = vld [vmem:[%s1223 + $0x8] sm:$0xff]
        %v4784 = vld [vmem:[%s1223 + $0x20] sm:$0xff]
        %v4785 = vld [vmem:[%s1223 + $0x28] sm:$0xff]
        %v4786 = vld [vmem:[%s1223 + $0x40] sm:$0xff]
        %v4787 = vld [vmem:[%s1223 + $0x48] sm:$0xff]
        %v4788 = vld [vmem:[%s1223 + $0x60] sm:$0xff]
        %v4789 = vld [vmem:[%s1223 + $0x68] sm:$0xff]
        %v4790 = vld [vmem:[%s1223 + $0x80] sm:$0xff]
        %v4791 = vld [vmem:[%s1223 + $0x88] sm:$0xff]
        %v4792 = vld [vmem:[%s1223 + $0xa0] sm:$0xff]
        %v4793 = vld [vmem:[%s1223 + $0xa8] sm:$0xff]
        %v4794 = vld [vmem:[%s1223 + $0xc0] sm:$0xff]
        %v4795 = vld [vmem:[%s1223 + $0xc8] sm:$0xff]
        %v4796 = vld [vmem:[%s1223 + $0xe0] sm:$0xff]
        %v4797 = vld [vmem:[%s1223 + $0xe8] sm:$0xff]
        %s4798 = scalar_lea.vmem %s3936, 6
        %v4799 = vld [vmem:[%s4798] ss:$8 sm:$0x3]
        %v4801 = vlaneseq
        %v4802 = vshrl.u32 %v4801, 7
        %v4803 = vsub.s32 0, %v4802
        %v4804 = vrot.slane %v4799, %v4803
        %v4805 = vlaneseq
        %v4806 = vshrl.u32 %v4805, 7
        %v4807 = vsub.s32 1, %v4806
        %v4808 = vrot.slane %v4799, %v4807
        %v4811 = vmul.f32 %v4782, %v4804
        %v4812 = vmul.f32 %v4783, %v4808
        %v4813 = vmul.f32 %v4784, %v4804
        %v4814 = vmul.f32 %v4785, %v4808
        %v4815 = vmul.f32 %v4786, %v4804
        %v4816 = vmul.f32 %v4787, %v4808
        %v4817 = vmul.f32 %v4788, %v4804
        %v4818 = vmul.f32 %v4789, %v4808
        %v4819 = vmul.f32 %v4790, %v4804
        %v4820 = vmul.f32 %v4791, %v4808
        %v4821 = vmul.f32 %v4792, %v4804
        %v4822 = vmul.f32 %v4793, %v4808
        %v4823 = vmul.f32 %v4794, %v4804
        %v4824 = vmul.f32 %v4795, %v4808
        %v4825 = vmul.f32 %v4796, %v4804
        %v4826 = vmul.f32 %v4797, %v4808
        %v4827 = vadd.f32 %v4766, %v4811
        %v4828 = vadd.f32 %v4767, %v4812
        %v4829 = vadd.f32 %v4768, %v4813
        %v4830 = vadd.f32 %v4769, %v4814
        %v4831 = vadd.f32 %v4770, %v4815
        %v4832 = vadd.f32 %v4771, %v4816
        %v4833 = vadd.f32 %v4772, %v4817
        %v4834 = vadd.f32 %v4773, %v4818
        %v4835 = vadd.f32 %v4774, %v4819
        %v4836 = vadd.f32 %v4775, %v4820
        %v4837 = vadd.f32 %v4776, %v4821
        %v4838 = vadd.f32 %v4777, %v4822
        %v4839 = vadd.f32 %v4778, %v4823
        %v4840 = vadd.f32 %v4779, %v4824
        %v4841 = vadd.f32 %v4780, %v4825
        %v4842 = vadd.f32 %v4781, %v4826
        %v4843 = vld [vmem:[%s1223] sm:$0xfe]
        %v4844 = vld [vmem:[%s1223 + $0x8] sm:$0xfe]
        %v4845 = vld [vmem:[%s1223 + $0x10] sm:$0x1]
        %v4846 = vld [vmem:[%s1223 + $0x18] sm:$0x1]
        %v4847 = vld [vmem:[%s1223 + $0x20] sm:$0xfe]
        %v4848 = vld [vmem:[%s1223 + $0x28] sm:$0xfe]
        %v4849 = vld [vmem:[%s1223 + $0x30] sm:$0x1]
        %v4850 = vld [vmem:[%s1223 + $0x38] sm:$0x1]
        %v4851 = vld [vmem:[%s1223 + $0x40] sm:$0xfe]
        %v4852 = vld [vmem:[%s1223 + $0x48] sm:$0xfe]
        %v4853 = vld [vmem:[%s1223 + $0x50] sm:$0x1]
        %v4854 = vld [vmem:[%s1223 + $0x58] sm:$0x1]
        %v4855 = vld [vmem:[%s1223 + $0x60] sm:$0xfe]
        %v4856 = vld [vmem:[%s1223 + $0x68] sm:$0xfe]
        %v4857 = vld [vmem:[%s1223 + $0x70] sm:$0x1]
        %v4858 = vld [vmem:[%s1223 + $0x78] sm:$0x1]
        %v4859 = vld [vmem:[%s1223 + $0x80] sm:$0xfe]
        %v4860 = vld [vmem:[%s1223 + $0x88] sm:$0xfe]
        %v4861 = vld [vmem:[%s1223 + $0x90] sm:$0x1]
        %v4862 = vld [vmem:[%s1223 + $0x98] sm:$0x1]
        %v4863 = vld [vmem:[%s1223 + $0xa0] sm:$0xfe]
        %v4864 = vld [vmem:[%s1223 + $0xa8] sm:$0xfe]
        %v4865 = vld [vmem:[%s1223 + $0xb0] sm:$0x1]
        %v4866 = vld [vmem:[%s1223 + $0xb8] sm:$0x1]
        %v4867 = vld [vmem:[%s1223 + $0xc0] sm:$0xfe]
        %v4868 = vld [vmem:[%s1223 + $0xc8] sm:$0xfe]
        %v4869 = vld [vmem:[%s1223 + $0xd0] sm:$0x1]
        %v4870 = vld [vmem:[%s1223 + $0xd8] sm:$0x1]
        %v4871 = vld [vmem:[%s1223 + $0xe0] sm:$0xfe]
        %v4872 = vld [vmem:[%s1223 + $0xe8] sm:$0xfe]
        %v4873 = vld [vmem:[%s1223 + $0xf0] sm:$0x1]
        %v4874 = vld [vmem:[%s1223 + $0xf8] sm:$0x1]
        %s4875 = scalar_lea.vmem %s3936, 7
        %v4876 = vld [vmem:[%s4875] ss:$8 sm:$0x3]
        %v4878 = vlaneseq
        %v4879 = vshrl.u32 %v4878, 7
        %v4880 = vsub.s32 0, %v4879
        %v4881 = vrot.slane %v4876, %v4880
        %v4882 = vlaneseq
        %v4883 = vshrl.u32 %v4882, 7
        %v4884 = vsub.s32 1, %v4883
        %v4885 = vrot.slane %v4876, %v4884
        %v4888 = vmul.f32 %v4843, %v4881
        %v4889 = vmul.f32 %v4844, %v4885
        %v4890 = vmul.f32 %v4845, %v4881
        %v4891 = vmul.f32 %v4846, %v4885
        %v4892 = vmul.f32 %v4847, %v4881
        %v4893 = vmul.f32 %v4848, %v4885
        %v4894 = vmul.f32 %v4849, %v4881
        %v4895 = vmul.f32 %v4850, %v4885
        %v4896 = vmul.f32 %v4851, %v4881
        %v4897 = vmul.f32 %v4852, %v4885
        %v4898 = vmul.f32 %v4853, %v4881
        %v4899 = vmul.f32 %v4854, %v4885
        %v4900 = vmul.f32 %v4855, %v4881
        %v4901 = vmul.f32 %v4856, %v4885
        %v4902 = vmul.f32 %v4857, %v4881
        %v4903 = vmul.f32 %v4858, %v4885
        %v4904 = vmul.f32 %v4859, %v4881
        %v4905 = vmul.f32 %v4860, %v4885
        %v4906 = vmul.f32 %v4861, %v4881
        %v4907 = vmul.f32 %v4862, %v4885
        %v4908 = vmul.f32 %v4863, %v4881
        %v4909 = vmul.f32 %v4864, %v4885
        %v4910 = vmul.f32 %v4865, %v4881
        %v4911 = vmul.f32 %v4866, %v4885
        %v4912 = vmul.f32 %v4867, %v4881
        %v4913 = vmul.f32 %v4868, %v4885
        %v4914 = vmul.f32 %v4869, %v4881
        %v4915 = vmul.f32 %v4870, %v4885
        %v4916 = vmul.f32 %v4871, %v4881
        %v4917 = vmul.f32 %v4872, %v4885
        %v4918 = vmul.f32 %v4873, %v4881
        %v4919 = vmul.f32 %v4874, %v4885
        %v4952 = vrot.slane %v4888, 1
        %v4953 = vrot.slane %v4890, 1
        %v4954 = vsel %vm513, %v4952, %v4953
        %v4955 = vrot.slane %v4889, 1
        %v4956 = vrot.slane %v4891, 1
        %v4957 = vsel %vm513, %v4955, %v4956
        %v4958 = vrot.slane %v4892, 1
        %v4959 = vrot.slane %v4894, 1
        %v4960 = vsel %vm513, %v4958, %v4959
        %v4961 = vrot.slane %v4893, 1
        %v4962 = vrot.slane %v4895, 1
        %v4963 = vsel %vm513, %v4961, %v4962
        %v4964 = vrot.slane %v4896, 1
        %v4965 = vrot.slane %v4898, 1
        %v4966 = vsel %vm513, %v4964, %v4965
        %v4967 = vrot.slane %v4897, 1
        %v4968 = vrot.slane %v4899, 1
        %v4969 = vsel %vm513, %v4967, %v4968
        %v4970 = vrot.slane %v4900, 1
        %v4971 = vrot.slane %v4902, 1
        %v4972 = vsel %vm513, %v4970, %v4971
        %v4973 = vrot.slane %v4901, 1
        %v4974 = vrot.slane %v4903, 1
        %v4975 = vsel %vm513, %v4973, %v4974
        %v4976 = vrot.slane %v4904, 1
        %v4977 = vrot.slane %v4906, 1
        %v4978 = vsel %vm513, %v4976, %v4977
        %v4979 = vrot.slane %v4905, 1
        %v4980 = vrot.slane %v4907, 1
        %v4981 = vsel %vm513, %v4979, %v4980
        %v4982 = vrot.slane %v4908, 1
        %v4983 = vrot.slane %v4910, 1
        %v4984 = vsel %vm513, %v4982, %v4983
        %v4985 = vrot.slane %v4909, 1
        %v4986 = vrot.slane %v4911, 1
        %v4987 = vsel %vm513, %v4985, %v4986
        %v4988 = vrot.slane %v4912, 1
        %v4989 = vrot.slane %v4914, 1
        %v4990 = vsel %vm513, %v4988, %v4989
        %v4991 = vrot.slane %v4913, 1
        %v4992 = vrot.slane %v4915, 1
        %v4993 = vsel %vm513, %v4991, %v4992
        %v4994 = vrot.slane %v4916, 1
        %v4995 = vrot.slane %v4918, 1
        %v4996 = vsel %vm513, %v4994, %v4995
        %v4997 = vrot.slane %v4917, 1
        %v4998 = vrot.slane %v4919, 1
        %v4999 = vsel %vm513, %v4997, %v4998
        %v5016 = vadd.f32 %v4827, %v4954
        %v5017 = vadd.f32 %v4828, %v4957
        %v5018 = vadd.f32 %v4829, %v4960
        %v5019 = vadd.f32 %v4830, %v4963
        %v5020 = vadd.f32 %v4831, %v4966
        %v5021 = vadd.f32 %v4832, %v4969
        %v5022 = vadd.f32 %v4833, %v4972
        %v5023 = vadd.f32 %v4834, %v4975
        %v5024 = vadd.f32 %v4835, %v4978
        %v5025 = vadd.f32 %v4836, %v4981
        %v5026 = vadd.f32 %v4837, %v4984
        %v5027 = vadd.f32 %v4838, %v4987
        %v5028 = vadd.f32 %v4839, %v4990
        %v5029 = vadd.f32 %v4840, %v4993
        %v5030 = vadd.f32 %v4841, %v4996
        %v5031 = vadd.f32 %v4842, %v4999
        %v5032 = vld [vmem:[%s1223] sm:$0xfc]
        %v5033 = vld [vmem:[%s1223 + $0x8] sm:$0xfc]
        %v5034 = vld [vmem:[%s1223 + $0x10] sm:$0x3]
        %v5035 = vld [vmem:[%s1223 + $0x18] sm:$0x3]
        %v5036 = vld [vmem:[%s1223 + $0x20] sm:$0xfc]
        %v5037 = vld [vmem:[%s1223 + $0x28] sm:$0xfc]
        %v5038 = vld [vmem:[%s1223 + $0x30] sm:$0x3]
        %v5039 = vld [vmem:[%s1223 + $0x38] sm:$0x3]
        %v5040 = vld [vmem:[%s1223 + $0x40] sm:$0xfc]
        %v5041 = vld [vmem:[%s1223 + $0x48] sm:$0xfc]
        %v5042 = vld [vmem:[%s1223 + $0x50] sm:$0x3]
        %v5043 = vld [vmem:[%s1223 + $0x58] sm:$0x3]
        %v5044 = vld [vmem:[%s1223 + $0x60] sm:$0xfc]
        %v5045 = vld [vmem:[%s1223 + $0x68] sm:$0xfc]
        %v5046 = vld [vmem:[%s1223 + $0x70] sm:$0x3]
        %v5047 = vld [vmem:[%s1223 + $0x78] sm:$0x3]
        %v5048 = vld [vmem:[%s1223 + $0x80] sm:$0xfc]
        %v5049 = vld [vmem:[%s1223 + $0x88] sm:$0xfc]
        %v5050 = vld [vmem:[%s1223 + $0x90] sm:$0x3]
        %v5051 = vld [vmem:[%s1223 + $0x98] sm:$0x3]
        %v5052 = vld [vmem:[%s1223 + $0xa0] sm:$0xfc]
        %v5053 = vld [vmem:[%s1223 + $0xa8] sm:$0xfc]
        %v5054 = vld [vmem:[%s1223 + $0xb0] sm:$0x3]
        %v5055 = vld [vmem:[%s1223 + $0xb8] sm:$0x3]
        %v5056 = vld [vmem:[%s1223 + $0xc0] sm:$0xfc]
        %v5057 = vld [vmem:[%s1223 + $0xc8] sm:$0xfc]
        %v5058 = vld [vmem:[%s1223 + $0xd0] sm:$0x3]
        %v5059 = vld [vmem:[%s1223 + $0xd8] sm:$0x3]
        %v5060 = vld [vmem:[%s1223 + $0xe0] sm:$0xfc]
        %v5061 = vld [vmem:[%s1223 + $0xe8] sm:$0xfc]
        %v5062 = vld [vmem:[%s1223 + $0xf0] sm:$0x3]
        %v5063 = vld [vmem:[%s1223 + $0xf8] sm:$0x3]
        %s5064 = scalar_lea.vmem %s3936, 16
        %v5065 = vld [vmem:[%s5064] ss:$8 sm:$0x3]
        %v5067 = vlaneseq
        %v5068 = vshrl.u32 %v5067, 7
        %v5069 = vsub.s32 0, %v5068
        %v5070 = vrot.slane %v5065, %v5069
        %v5071 = vlaneseq
        %v5072 = vshrl.u32 %v5071, 7
        %v5073 = vsub.s32 1, %v5072
        %v5074 = vrot.slane %v5065, %v5073
        %v5077 = vmul.f32 %v5032, %v5070
        %v5078 = vmul.f32 %v5033, %v5074
        %v5079 = vmul.f32 %v5034, %v5070
        %v5080 = vmul.f32 %v5035, %v5074
        %v5081 = vmul.f32 %v5036, %v5070
        %v5082 = vmul.f32 %v5037, %v5074
        %v5083 = vmul.f32 %v5038, %v5070
        %v5084 = vmul.f32 %v5039, %v5074
        %v5085 = vmul.f32 %v5040, %v5070
        %v5086 = vmul.f32 %v5041, %v5074
        %v5087 = vmul.f32 %v5042, %v5070
        %v5088 = vmul.f32 %v5043, %v5074
        %v5089 = vmul.f32 %v5044, %v5070
        %v5090 = vmul.f32 %v5045, %v5074
        %v5091 = vmul.f32 %v5046, %v5070
        %v5092 = vmul.f32 %v5047, %v5074
        %v5093 = vmul.f32 %v5048, %v5070
        %v5094 = vmul.f32 %v5049, %v5074
        %v5095 = vmul.f32 %v5050, %v5070
        %v5096 = vmul.f32 %v5051, %v5074
        %v5097 = vmul.f32 %v5052, %v5070
        %v5098 = vmul.f32 %v5053, %v5074
        %v5099 = vmul.f32 %v5054, %v5070
        %v5100 = vmul.f32 %v5055, %v5074
        %v5101 = vmul.f32 %v5056, %v5070
        %v5102 = vmul.f32 %v5057, %v5074
        %v5103 = vmul.f32 %v5058, %v5070
        %v5104 = vmul.f32 %v5059, %v5074
        %v5105 = vmul.f32 %v5060, %v5070
        %v5106 = vmul.f32 %v5061, %v5074
        %v5107 = vmul.f32 %v5062, %v5070
        %v5108 = vmul.f32 %v5063, %v5074
        %v5141 = vrot.slane %v5077, 2
        %v5142 = vrot.slane %v5079, 2
        %v5143 = vsel %vm703, %v5141, %v5142
        %v5144 = vrot.slane %v5078, 2
        %v5145 = vrot.slane %v5080, 2
        %v5146 = vsel %vm703, %v5144, %v5145
        %v5147 = vrot.slane %v5081, 2
        %v5148 = vrot.slane %v5083, 2
        %v5149 = vsel %vm703, %v5147, %v5148
        %v5150 = vrot.slane %v5082, 2
        %v5151 = vrot.slane %v5084, 2
        %v5152 = vsel %vm703, %v5150, %v5151
        %v5153 = vrot.slane %v5085, 2
        %v5154 = vrot.slane %v5087, 2
        %v5155 = vsel %vm703, %v5153, %v5154
        %v5156 = vrot.slane %v5086, 2
        %v5157 = vrot.slane %v5088, 2
        %v5158 = vsel %vm703, %v5156, %v5157
        %v5159 = vrot.slane %v5089, 2
        %v5160 = vrot.slane %v5091, 2
        %v5161 = vsel %vm703, %v5159, %v5160
        %v5162 = vrot.slane %v5090, 2
        %v5163 = vrot.slane %v5092, 2
        %v5164 = vsel %vm703, %v5162, %v5163
        %v5165 = vrot.slane %v5093, 2
        %v5166 = vrot.slane %v5095, 2
        %v5167 = vsel %vm703, %v5165, %v5166
        %v5168 = vrot.slane %v5094, 2
        %v5169 = vrot.slane %v5096, 2
        %v5170 = vsel %vm703, %v5168, %v5169
        %v5171 = vrot.slane %v5097, 2
        %v5172 = vrot.slane %v5099, 2
        %v5173 = vsel %vm703, %v5171, %v5172
        %v5174 = vrot.slane %v5098, 2
        %v5175 = vrot.slane %v5100, 2
        %v5176 = vsel %vm703, %v5174, %v5175
        %v5177 = vrot.slane %v5101, 2
        %v5178 = vrot.slane %v5103, 2
        %v5179 = vsel %vm703, %v5177, %v5178
        %v5180 = vrot.slane %v5102, 2
        %v5181 = vrot.slane %v5104, 2
        %v5182 = vsel %vm703, %v5180, %v5181
        %v5183 = vrot.slane %v5105, 2
        %v5184 = vrot.slane %v5107, 2
        %v5185 = vsel %vm703, %v5183, %v5184
        %v5186 = vrot.slane %v5106, 2
        %v5187 = vrot.slane %v5108, 2
        %v5188 = vsel %vm703, %v5186, %v5187
        %v5205 = vadd.f32 %v5016, %v5143
        %v5206 = vadd.f32 %v5017, %v5146
        %v5207 = vadd.f32 %v5018, %v5149
        %v5208 = vadd.f32 %v5019, %v5152
        %v5209 = vadd.f32 %v5020, %v5155
        %v5210 = vadd.f32 %v5021, %v5158
        %v5211 = vadd.f32 %v5022, %v5161
        %v5212 = vadd.f32 %v5023, %v5164
        %v5213 = vadd.f32 %v5024, %v5167
        %v5214 = vadd.f32 %v5025, %v5170
        %v5215 = vadd.f32 %v5026, %v5173
        %v5216 = vadd.f32 %v5027, %v5176
        %v5217 = vadd.f32 %v5028, %v5179
        %v5218 = vadd.f32 %v5029, %v5182
        %v5219 = vadd.f32 %v5030, %v5185
        %v5220 = vadd.f32 %v5031, %v5188
        %v5221 = vpack.c.bf16 %v5207, %v5205
        %v5222 = vpack.c.bf16 %v5208, %v5206
        %v5223 = vpack.c.bf16 %v5211, %v5209
        %v5224 = vpack.c.bf16 %v5212, %v5210
        %v5225 = vpack.c.bf16 %v5215, %v5213
        %v5226 = vpack.c.bf16 %v5216, %v5214
        %v5227 = vpack.c.bf16 %v5219, %v5217
        %v5228 = vpack.c.bf16 %v5220, %v5218
        %s5229 = scalar_lea.vmem %s2, 512
        %v5230 = vld [vmem:[%s5229] sm:$0xff]
        %v5231 = vld [vmem:[%s5229 + $0x8] sm:$0xff]
        %v5232 = vld [vmem:[%s5229 + $0x10] sm:$0xff]
        %v5233 = vld [vmem:[%s5229 + $0x18] sm:$0xff]
        %v5234 = vld [vmem:[%s5229 + $0x20] sm:$0xff]
        %v5235 = vld [vmem:[%s5229 + $0x28] sm:$0xff]
        %v5236 = vld [vmem:[%s5229 + $0x30] sm:$0xff]
        %v5237 = vld [vmem:[%s5229 + $0x38] sm:$0xff]
        %v5238 = vld [vmem:[%s5229 + $0x40] sm:$0xff]
        %v5239 = vld [vmem:[%s5229 + $0x48] sm:$0xff]
        %v5240 = vld [vmem:[%s5229 + $0x50] sm:$0xff]
        %v5241 = vld [vmem:[%s5229 + $0x58] sm:$0xff]
        %v5242 = vld [vmem:[%s5229 + $0x60] sm:$0xff]
        %v5243 = vld [vmem:[%s5229 + $0x68] sm:$0xff]
        %v5244 = vld [vmem:[%s5229 + $0x70] sm:$0xff]
        %v5245 = vld [vmem:[%s5229 + $0x78] sm:$0xff]
        %v5246 = vld [vmem:[%s5229 + $0x80] sm:$0xff]
        %v5247 = vld [vmem:[%s5229 + $0x88] sm:$0xff]
        %v5248 = vld [vmem:[%s5229 + $0x90] sm:$0xff]
        %v5249 = vld [vmem:[%s5229 + $0x98] sm:$0xff]
        %v5250 = vld [vmem:[%s5229 + $0xa0] sm:$0xff]
        %v5251 = vld [vmem:[%s5229 + $0xa8] sm:$0xff]
        %v5252 = vld [vmem:[%s5229 + $0xb0] sm:$0xff]
        %v5253 = vld [vmem:[%s5229 + $0xb8] sm:$0xff]
        %v5254 = vld [vmem:[%s5229 + $0xc0] sm:$0xff]
        %v5255 = vld [vmem:[%s5229 + $0xc8] sm:$0xff]
        %v5256 = vld [vmem:[%s5229 + $0xd0] sm:$0xff]
        %v5257 = vld [vmem:[%s5229 + $0xd8] sm:$0xff]
        %v5258 = vld [vmem:[%s5229 + $0xe0] sm:$0xff]
        %v5259 = vld [vmem:[%s5229 + $0xe8] sm:$0xff]
        %v5260 = vld [vmem:[%s5229 + $0xf0] sm:$0xff]
        %v5261 = vld [vmem:[%s5229 + $0xf8] sm:$0xff]
        %s5262 = scalar_lea.vmem %s3, 4
        %v5263 = vld [vmem:[%s5262] sm:$0x3]
        %v5265 = vlaneseq
        %v5266 = vshrl.u32 %v5265, 7
        %v5267 = vsub.s32 0, %v5266
        %v5268 = vrot.slane %v5263, %v5267
        %v5269 = vlaneseq
        %v5270 = vshrl.u32 %v5269, 7
        %v5271 = vsub.s32 1, %v5270
        %v5272 = vrot.slane %v5263, %v5271
        %v5307 = vunpack.c.l.b16 %v5230
        %v5308 = vunpack.c.h.b16 %v5230
        %v5309 = vunpack.c.l.b16 %v5231
        %v5310 = vunpack.c.h.b16 %v5231
        %v5311 = vunpack.c.l.b16 %v5232
        %v5312 = vunpack.c.h.b16 %v5232
        %v5313 = vunpack.c.l.b16 %v5233
        %v5314 = vunpack.c.h.b16 %v5233
        %v5315 = vunpack.c.l.b16 %v5234
        %v5316 = vunpack.c.h.b16 %v5234
        %v5317 = vunpack.c.l.b16 %v5235
        %v5318 = vunpack.c.h.b16 %v5235
        %v5319 = vunpack.c.l.b16 %v5236
        %v5320 = vunpack.c.h.b16 %v5236
        %v5321 = vunpack.c.l.b16 %v5237
        %v5322 = vunpack.c.h.b16 %v5237
        %v5323 = vunpack.c.l.b16 %v5238
        %v5324 = vunpack.c.h.b16 %v5238
        %v5325 = vunpack.c.l.b16 %v5239
        %v5326 = vunpack.c.h.b16 %v5239
        %v5327 = vunpack.c.l.b16 %v5240
        %v5328 = vunpack.c.h.b16 %v5240
        %v5329 = vunpack.c.l.b16 %v5241
        %v5330 = vunpack.c.h.b16 %v5241
        %v5331 = vunpack.c.l.b16 %v5242
        %v5332 = vunpack.c.h.b16 %v5242
        %v5333 = vunpack.c.l.b16 %v5243
        %v5334 = vunpack.c.h.b16 %v5243
        %v5335 = vunpack.c.l.b16 %v5244
        %v5336 = vunpack.c.h.b16 %v5244
        %v5337 = vunpack.c.l.b16 %v5245
        %v5338 = vunpack.c.h.b16 %v5245
        %v5339 = vunpack.c.l.b16 %v5246
        %v5340 = vunpack.c.h.b16 %v5246
        %v5341 = vunpack.c.l.b16 %v5247
        %v5342 = vunpack.c.h.b16 %v5247
        %v5343 = vunpack.c.l.b16 %v5248
        %v5344 = vunpack.c.h.b16 %v5248
        %v5345 = vunpack.c.l.b16 %v5249
        %v5346 = vunpack.c.h.b16 %v5249
        %v5347 = vunpack.c.l.b16 %v5250
        %v5348 = vunpack.c.h.b16 %v5250
        %v5349 = vunpack.c.l.b16 %v5251
        %v5350 = vunpack.c.h.b16 %v5251
        %v5351 = vunpack.c.l.b16 %v5252
        %v5352 = vunpack.c.h.b16 %v5252
        %v5353 = vunpack.c.l.b16 %v5253
        %v5354 = vunpack.c.h.b16 %v5253
        %v5355 = vunpack.c.l.b16 %v5254
        %v5356 = vunpack.c.h.b16 %v5254
        %v5357 = vunpack.c.l.b16 %v5255
        %v5358 = vunpack.c.h.b16 %v5255
        %v5359 = vunpack.c.l.b16 %v5256
        %v5360 = vunpack.c.h.b16 %v5256
        %v5361 = vunpack.c.l.b16 %v5257
        %v5362 = vunpack.c.h.b16 %v5257
        %v5363 = vunpack.c.l.b16 %v5258
        %v5364 = vunpack.c.h.b16 %v5258
        %v5365 = vunpack.c.l.b16 %v5259
        %v5366 = vunpack.c.h.b16 %v5259
        %v5367 = vunpack.c.l.b16 %v5260
        %v5368 = vunpack.c.h.b16 %v5260
        %v5369 = vunpack.c.l.b16 %v5261
        %v5370 = vunpack.c.h.b16 %v5261
        %v5371 = vpack.c.b16 %v5309, %v5307
        %v5372 = vpack.c.b16 %v5310, %v5308
        %v5373 = vpack.c.b16 %v5313, %v5311
        %v5374 = vpack.c.b16 %v5314, %v5312
        %v5375 = vpack.c.b16 %v5317, %v5315
        %v5376 = vpack.c.b16 %v5318, %v5316
        %v5377 = vpack.c.b16 %v5321, %v5319
        %v5378 = vpack.c.b16 %v5322, %v5320
        %v5379 = vpack.c.b16 %v5325, %v5323
        %v5380 = vpack.c.b16 %v5326, %v5324
        %v5381 = vpack.c.b16 %v5329, %v5327
        %v5382 = vpack.c.b16 %v5330, %v5328
        %v5383 = vpack.c.b16 %v5333, %v5331
        %v5384 = vpack.c.b16 %v5334, %v5332
        %v5385 = vpack.c.b16 %v5337, %v5335
        %v5386 = vpack.c.b16 %v5338, %v5336
        %v5387 = vpack.c.b16 %v5341, %v5339
        %v5388 = vpack.c.b16 %v5342, %v5340
        %v5389 = vpack.c.b16 %v5345, %v5343
        %v5390 = vpack.c.b16 %v5346, %v5344
        %v5391 = vpack.c.b16 %v5349, %v5347
        %v5392 = vpack.c.b16 %v5350, %v5348
        %v5393 = vpack.c.b16 %v5353, %v5351
        %v5394 = vpack.c.b16 %v5354, %v5352
        %v5395 = vpack.c.b16 %v5357, %v5355
        %v5396 = vpack.c.b16 %v5358, %v5356
        %v5397 = vpack.c.b16 %v5361, %v5359
        %v5398 = vpack.c.b16 %v5362, %v5360
        %v5399 = vpack.c.b16 %v5365, %v5363
        %v5400 = vpack.c.b16 %v5366, %v5364
        %v5401 = vpack.c.b16 %v5369, %v5367
        %v5402 = vpack.c.b16 %v5370, %v5368
        %5435 = vmatprep.subr.bf16.mxu0 %v5372
        %5436 = vmatpush1.bf16.msra.mxu0 %v5371
        %5437 = vmatprep.subr.bf16.mxu0 %v5374
        %5438 = vmatpush1.bf16.msra.mxu0 %v5373
        %5439 = vmatprep.subr.bf16.mxu0 %v5376
        %5440 = vmatpush1.bf16.msra.mxu0 %v5375
        %5441 = vmatprep.subr.bf16.mxu0 %v5378
        %5442 = vmatpush1.bf16.msra.mxu0 %v5377
        %5443 = vmatprep.subr.bf16.mxu0 %v5380
        %5444 = vmatpush1.bf16.msra.mxu0 %v5379
        %5445 = vmatprep.subr.bf16.mxu0 %v5382
        %5446 = vmatpush1.bf16.msra.mxu0 %v5381
        %5447 = vmatprep.subr.bf16.mxu0 %v5384
        %5448 = vmatpush1.bf16.msra.mxu0 %v5383
        %5449 = vmatprep.subr.bf16.mxu0 %v5386
        %5450 = vmatpush1.bf16.msra.mxu0 %v5385
        %5451 = vmatprep.subr.bf16.mxu0 %v5388
        %5452 = vmatpush1.bf16.msra.mxu0 %v5387
        %5453 = vmatprep.subr.bf16.mxu0 %v5390
        %5454 = vmatpush1.bf16.msra.mxu0 %v5389
        %5455 = vmatprep.subr.bf16.mxu0 %v5392
        %5456 = vmatpush1.bf16.msra.mxu0 %v5391
        %5457 = vmatprep.subr.bf16.mxu0 %v5394
        %5458 = vmatpush1.bf16.msra.mxu0 %v5393
        %5459 = vmatprep.subr.bf16.mxu0 %v5396
        %5460 = vmatpush1.bf16.msra.mxu0 %v5395
        %5461 = vmatprep.subr.bf16.mxu0 %v5398
        %5462 = vmatpush1.bf16.msra.mxu0 %v5397
        %5463 = vmatprep.subr.bf16.mxu0 %v5400
        %5464 = vmatpush1.bf16.msra.mxu0 %v5399
        %5465 = vmatprep.subr.bf16.mxu0 %v5402
        %5466 = vmatpush1.bf16.msra.mxu0 %v5401
        %5467 = vmatprep.mubr.bf16.mxu0 %v5222
        %5468 = vmatmul.mubr.bf16.gmra.mrb[0].mxu0 %v5221
        %v5469 = vpop.f32.mrb[0].mxu0
        %v5470 = vadd.f32 %v5268, %v5469
        %v5471 = vpop.f32.mrb[0].mxu0
        %v5472 = vadd.f32 %v5272, %v5471
        %v5473 = vpop.f32.mrb[0].mxu0
        %v5474 = vadd.f32 %v5268, %v5473
        %v5475 = vpop.f32.mrb[0].mxu0
        %v5476 = vadd.f32 %v5272, %v5475
        %5477 = vmatprep.mubr.bf16.mxu0 %v5224
        %5478 = vmatmul.mubr.bf16.gmra.mrb[0].mxu0 %v5223
        %v5479 = vpop.f32.mrb[0].mxu0
        %v5480 = vadd.f32 %v5268, %v5479
        %v5481 = vpop.f32.mrb[0].mxu0
        %v5482 = vadd.f32 %v5272, %v5481
        %v5483 = vpop.f32.mrb[0].mxu0
        %v5484 = vadd.f32 %v5268, %v5483
        %v5485 = vpop.f32.mrb[0].mxu0
        %v5486 = vadd.f32 %v5272, %v5485
        %5487 = vmatprep.mubr.bf16.mxu0 %v5226
        %5488 = vmatmul.mubr.bf16.gmra.mrb[0].mxu0 %v5225
        %v5489 = vpop.f32.mrb[0].mxu0
        %v5490 = vadd.f32 %v5268, %v5489
        %v5491 = vpop.f32.mrb[0].mxu0
        %v5492 = vadd.f32 %v5272, %v5491
        %v5493 = vpop.f32.mrb[0].mxu0
        %v5494 = vadd.f32 %v5268, %v5493
        %v5495 = vpop.f32.mrb[0].mxu0
        %v5496 = vadd.f32 %v5272, %v5495
        %5497 = vmatprep.mubr.bf16.mxu0 %v5228
        %5498 = vmatmul.mubr.bf16.gmra.mrb[0].mxu0 %v5227
        %v5499 = vpop.f32.mrb[0].mxu0
        %v5500 = vadd.f32 %v5268, %v5499
        %v5501 = vpop.f32.mrb[0].mxu0
        %v5502 = vadd.f32 %v5272, %v5501
        %v5503 = vpop.f32.mrb[0].mxu0
        %v5504 = vadd.f32 %v5268, %v5503
        %v5505 = vpop.f32.mrb[0].mxu0
        %v5506 = vadd.f32 %v5272, %v5505
        %5507 = vdwg.mxu0
        %v5508 = vxor.u32 %v5470, 2147483648
        %v5509 = vxor.u32 %v5472, 2147483648
        %v5510 = vxor.u32 %v5474, 2147483648
        %v5511 = vxor.u32 %v5476, 2147483648
        %v5512 = vxor.u32 %v5480, 2147483648
        %v5513 = vxor.u32 %v5482, 2147483648
        %v5514 = vxor.u32 %v5484, 2147483648
        %v5515 = vxor.u32 %v5486, 2147483648
        %v5516 = vxor.u32 %v5490, 2147483648
        %v5517 = vxor.u32 %v5492, 2147483648
        %v5518 = vxor.u32 %v5494, 2147483648
        %v5519 = vxor.u32 %v5496, 2147483648
        %v5520 = vxor.u32 %v5500, 2147483648
        %v5521 = vxor.u32 %v5502, 2147483648
        %v5522 = vxor.u32 %v5504, 2147483648
        %v5523 = vxor.u32 %v5506, 2147483648
        %v5524 = vmul.f32 %v5508, 1.442695
        %v5525 = vpow.pop %v5524
        %v5526 = vmul.f32 %v5509, 1.442695
        %v5527 = vpow.pop %v5526
        %v5528 = vmul.f32 %v5510, 1.442695
        %v5529 = vpow.pop %v5528
        %v5530 = vmul.f32 %v5511, 1.442695
        %v5531 = vpow.pop %v5530
        %v5532 = vmul.f32 %v5512, 1.442695
        %v5533 = vpow.pop %v5532
        %v5534 = vmul.f32 %v5513, 1.442695
        %v5535 = vpow.pop %v5534
        %v5536 = vmul.f32 %v5514, 1.442695
        %v5537 = vpow.pop %v5536
        %v5538 = vmul.f32 %v5515, 1.442695
        %v5539 = vpow.pop %v5538
        %v5540 = vmul.f32 %v5516, 1.442695
        %v5541 = vpow.pop %v5540
        %v5542 = vmul.f32 %v5517, 1.442695
        %v5543 = vpow.pop %v5542
        %v5544 = vmul.f32 %v5518, 1.442695
        %v5545 = vpow.pop %v5544
        %v5546 = vmul.f32 %v5519, 1.442695
        %v5547 = vpow.pop %v5546
        %v5548 = vmul.f32 %v5520, 1.442695
        %v5549 = vpow.pop %v5548
        %v5550 = vmul.f32 %v5521, 1.442695
        %v5551 = vpow.pop %v5550
        %v5552 = vmul.f32 %v5522, 1.442695
        %v5553 = vpow.pop %v5552
        %v5554 = vmul.f32 %v5523, 1.442695
        %v5555 = vpow.pop %v5554
        %v5556 = vadd.f32 %v5525, 1.0
        %v5557 = vadd.f32 %v5527, 1.0
        %v5558 = vadd.f32 %v5529, 1.0
        %v5559 = vadd.f32 %v5531, 1.0
        %v5560 = vadd.f32 %v5533, 1.0
        %v5561 = vadd.f32 %v5535, 1.0
        %v5562 = vadd.f32 %v5537, 1.0
        %v5563 = vadd.f32 %v5539, 1.0
        %v5564 = vadd.f32 %v5541, 1.0
        %v5565 = vadd.f32 %v5543, 1.0
        %v5566 = vadd.f32 %v5545, 1.0
        %v5567 = vadd.f32 %v5547, 1.0
        %v5568 = vadd.f32 %v5549, 1.0
        %v5569 = vadd.f32 %v5551, 1.0
        %v5570 = vadd.f32 %v5553, 1.0
        %v5571 = vadd.f32 %v5555, 1.0
        %v5572 = vrcp.pop %v5556
        %v5573 = vmul.f32 1.0, %v5572
        %v5574 = vrcp.pop %v5557
        %v5575 = vmul.f32 1.0, %v5574
        %v5576 = vrcp.pop %v5558
        %v5577 = vmul.f32 1.0, %v5576
        %v5578 = vrcp.pop %v5559
        %v5579 = vmul.f32 1.0, %v5578
        %v5580 = vrcp.pop %v5560
        %v5581 = vmul.f32 1.0, %v5580
        %v5582 = vrcp.pop %v5561
        %v5583 = vmul.f32 1.0, %v5582
        %v5584 = vrcp.pop %v5562
        %v5585 = vmul.f32 1.0, %v5584
        %v5586 = vrcp.pop %v5563
        %v5587 = vmul.f32 1.0, %v5586
        %v5588 = vrcp.pop %v5564
        %v5589 = vmul.f32 1.0, %v5588
        %v5590 = vrcp.pop %v5565
        %v5591 = vmul.f32 1.0, %v5590
        %v5592 = vrcp.pop %v5566
        %v5593 = vmul.f32 1.0, %v5592
        %v5594 = vrcp.pop %v5567
        %v5595 = vmul.f32 1.0, %v5594
        %v5596 = vrcp.pop %v5568
        %v5597 = vmul.f32 1.0, %v5596
        %v5598 = vrcp.pop %v5569
        %v5599 = vmul.f32 1.0, %v5598
        %v5600 = vrcp.pop %v5570
        %v5601 = vmul.f32 1.0, %v5600
        %v5602 = vrcp.pop %v5571
        %v5603 = vmul.f32 1.0, %v5602
        %v5604 = vmul.f32 %v5470, %v5573
        %v5605 = vmul.f32 %v5472, %v5575
        %v5606 = vmul.f32 %v5474, %v5577
        %v5607 = vmul.f32 %v5476, %v5579
        %v5608 = vmul.f32 %v5480, %v5581
        %v5609 = vmul.f32 %v5482, %v5583
        %v5610 = vmul.f32 %v5484, %v5585
        %v5611 = vmul.f32 %v5486, %v5587
        %v5612 = vmul.f32 %v5490, %v5589
        %v5613 = vmul.f32 %v5492, %v5591
        %v5614 = vmul.f32 %v5494, %v5593
        %v5615 = vmul.f32 %v5496, %v5595
        %v5616 = vmul.f32 %v5500, %v5597
        %v5617 = vmul.f32 %v5502, %v5599
        %v5618 = vmul.f32 %v5504, %v5601
        %v5619 = vmul.f32 %v5506, %v5603
        %v5636 = vrot.slane %v5604, 7
        %v5637 = vrot.slane %v5605, 7
        %v5638 = vrot.slane %v5606, 7
        %v5639 = vrot.slane %v5607, 7
        %v5640 = vrot.slane %v5608, 7
        %v5641 = vrot.slane %v5609, 7
        %v5642 = vrot.slane %v5610, 7
        %v5643 = vrot.slane %v5611, 7
        %v5644 = vrot.slane %v5612, 7
        %v5645 = vrot.slane %v5613, 7
        %v5646 = vrot.slane %v5614, 7
        %v5647 = vrot.slane %v5615, 7
        %v5648 = vrot.slane %v5616, 7
        %v5649 = vrot.slane %v5617, 7
        %v5650 = vrot.slane %v5618, 7
        %v5651 = vrot.slane %v5619, 7
        %5668 = vst [vmem:[%s327] sm:$0xfe] %v5636
        %5669 = vst [vmem:[%s327 + $0x8] sm:$0xfe] %v5637
        %5670 = vst [vmem:[%s327 + $0x10] sm:$0x1] %v5636
        %5671 = vst [vmem:[%s327 + $0x18] sm:$0x1] %v5637
        %5672 = vst [vmem:[%s327 + $0x20] sm:$0xfe] %v5638
        %5673 = vst [vmem:[%s327 + $0x28] sm:$0xfe] %v5639
        %5674 = vst [vmem:[%s327 + $0x30] sm:$0x1] %v5638
        %5675 = vst [vmem:[%s327 + $0x38] sm:$0x1] %v5639
        %5676 = vst [vmem:[%s327 + $0x40] sm:$0xfe] %v5640
        %5677 = vst [vmem:[%s327 + $0x48] sm:$0xfe] %v5641
        %5678 = vst [vmem:[%s327 + $0x50] sm:$0x1] %v5640
        %5679 = vst [vmem:[%s327 + $0x58] sm:$0x1] %v5641
        %5680 = vst [vmem:[%s327 + $0x60] sm:$0xfe] %v5642
        %5681 = vst [vmem:[%s327 + $0x68] sm:$0xfe] %v5643
        %5682 = vst [vmem:[%s327 + $0x70] sm:$0x1] %v5642
        %5683 = vst [vmem:[%s327 + $0x78] sm:$0x1] %v5643
        %5684 = vst [vmem:[%s327 + $0x80] sm:$0xfe] %v5644
        %5685 = vst [vmem:[%s327 + $0x88] sm:$0xfe] %v5645
        %5686 = vst [vmem:[%s327 + $0x90] sm:$0x1] %v5644
        %5687 = vst [vmem:[%s327 + $0x98] sm:$0x1] %v5645
        %5688 = vst [vmem:[%s327 + $0xa0] sm:$0xfe] %v5646
        %5689 = vst [vmem:[%s327 + $0xa8] sm:$0xfe] %v5647
        %5690 = vst [vmem:[%s327 + $0xb0] sm:$0x1] %v5646
        %5691 = vst [vmem:[%s327 + $0xb8] sm:$0x1] %v5647
        %5692 = vst [vmem:[%s327 + $0xc0] sm:$0xfe] %v5648
        %5693 = vst [vmem:[%s327 + $0xc8] sm:$0xfe] %v5649
        %5694 = vst [vmem:[%s327 + $0xd0] sm:$0x1] %v5648
        %5695 = vst [vmem:[%s327 + $0xd8] sm:$0x1] %v5649
        %5696 = vst [vmem:[%s327 + $0xe0] sm:$0xfe] %v5650
        %5697 = vst [vmem:[%s327 + $0xe8] sm:$0xfe] %v5651
        %5698 = vst [vmem:[%s327 + $0xf0] sm:$0x1] %v5650
        %5699 = vst [vmem:[%s327 + $0xf8] sm:$0x1] %v5651
        %v5700 = vld [vmem:[#allocation2] sm:$0xff]
        %v5701 = vld [vmem:[#allocation2 + $0x8] sm:$0xff]
        %v5702 = vld [vmem:[#allocation2 + $0x20] sm:$0xff]
        %v5703 = vld [vmem:[#allocation2 + $0x28] sm:$0xff]
        %v5704 = vld [vmem:[#allocation2 + $0x40] sm:$0xff]
        %v5705 = vld [vmem:[#allocation2 + $0x48] sm:$0xff]
        %v5706 = vld [vmem:[#allocation2 + $0x60] sm:$0xff]
        %v5707 = vld [vmem:[#allocation2 + $0x68] sm:$0xff]
        %v5708 = vld [vmem:[#allocation2 + $0x80] sm:$0xff]
        %v5709 = vld [vmem:[#allocation2 + $0x88] sm:$0xff]
        %v5710 = vld [vmem:[#allocation2 + $0xa0] sm:$0xff]
        %v5711 = vld [vmem:[#allocation2 + $0xa8] sm:$0xff]
        %v5712 = vld [vmem:[#allocation2 + $0xc0] sm:$0xff]
        %v5713 = vld [vmem:[#allocation2 + $0xc8] sm:$0xff]
        %v5714 = vld [vmem:[#allocation2 + $0xe0] sm:$0xff]
        %v5715 = vld [vmem:[#allocation2 + $0xe8] sm:$0xff]
        %s5716 = scalar_lea.vmem %s1, 96
        %v5717 = vld [vmem:[%s5716] ss:$8 sm:$0x3]
        %v5719 = vlaneseq
        %v5720 = vshrl.u32 %v5719, 7
        %v5721 = vsub.s32 0, %v5720
        %v5722 = vrot.slane %v5717, %v5721
        %v5723 = vlaneseq
        %v5724 = vshrl.u32 %v5723, 7
        %v5725 = vsub.s32 1, %v5724
        %v5726 = vrot.slane %v5717, %v5725
        %v5729 = vmul.f32 %v5700, %v5722
        %v5730 = vmul.f32 %v5701, %v5726
        %v5731 = vmul.f32 %v5702, %v5722
        %v5732 = vmul.f32 %v5703, %v5726
        %v5733 = vmul.f32 %v5704, %v5722
        %v5734 = vmul.f32 %v5705, %v5726
        %v5735 = vmul.f32 %v5706, %v5722
        %v5736 = vmul.f32 %v5707, %v5726
        %v5737 = vmul.f32 %v5708, %v5722
        %v5738 = vmul.f32 %v5709, %v5726
        %v5739 = vmul.f32 %v5710, %v5722
        %v5740 = vmul.f32 %v5711, %v5726
        %v5741 = vmul.f32 %v5712, %v5722
        %v5742 = vmul.f32 %v5713, %v5726
        %v5743 = vmul.f32 %v5714, %v5722
        %v5744 = vmul.f32 %v5715, %v5726
        %v5745 = vld [vmem:[#allocation2] sm:$0xfe]
        %v5746 = vld [vmem:[#allocation2 + $0x8] sm:$0xfe]
        %v5747 = vld [vmem:[#allocation2 + $0x10] sm:$0x1]
        %v5748 = vld [vmem:[#allocation2 + $0x18] sm:$0x1]
        %v5749 = vld [vmem:[#allocation2 + $0x20] sm:$0xfe]
        %v5750 = vld [vmem:[#allocation2 + $0x28] sm:$0xfe]
        %v5751 = vld [vmem:[#allocation2 + $0x30] sm:$0x1]
        %v5752 = vld [vmem:[#allocation2 + $0x38] sm:$0x1]
        %v5753 = vld [vmem:[#allocation2 + $0x40] sm:$0xfe]
        %v5754 = vld [vmem:[#allocation2 + $0x48] sm:$0xfe]
        %v5755 = vld [vmem:[#allocation2 + $0x50] sm:$0x1]
        %v5756 = vld [vmem:[#allocation2 + $0x58] sm:$0x1]
        %v5757 = vld [vmem:[#allocation2 + $0x60] sm:$0xfe]
        %v5758 = vld [vmem:[#allocation2 + $0x68] sm:$0xfe]
        %v5759 = vld [vmem:[#allocation2 + $0x70] sm:$0x1]
        %v5760 = vld [vmem:[#allocation2 + $0x78] sm:$0x1]
        %v5761 = vld [vmem:[#allocation2 + $0x80] sm:$0xfe]
        %v5762 = vld [vmem:[#allocation2 + $0x88] sm:$0xfe]
        %v5763 = vld [vmem:[#allocation2 + $0x90] sm:$0x1]
        %v5764 = vld [vmem:[#allocation2 + $0x98] sm:$0x1]
        %v5765 = vld [vmem:[#allocation2 + $0xa0] sm:$0xfe]
        %v5766 = vld [vmem:[#allocation2 + $0xa8] sm:$0xfe]
        %v5767 = vld [vmem:[#allocation2 + $0xb0] sm:$0x1]
        %v5768 = vld [vmem:[#allocation2 + $0xb8] sm:$0x1]
        %v5769 = vld [vmem:[#allocation2 + $0xc0] sm:$0xfe]
        %v5770 = vld [vmem:[#allocation2 + $0xc8] sm:$0xfe]
        %v5771 = vld [vmem:[#allocation2 + $0xd0] sm:$0x1]
        %v5772 = vld [vmem:[#allocation2 + $0xd8] sm:$0x1]
        %v5773 = vld [vmem:[#allocation2 + $0xe0] sm:$0xfe]
        %v5774 = vld [vmem:[#allocation2 + $0xe8] sm:$0xfe]
        %v5775 = vld [vmem:[#allocation2 + $0xf0] sm:$0x1]
        %v5776 = vld [vmem:[#allocation2 + $0xf8] sm:$0x1]
        %s5777 = scalar_lea.vmem %s5716, 1
        %v5778 = vld [vmem:[%s5777] ss:$8 sm:$0x3]
        %v5780 = vlaneseq
        %v5781 = vshrl.u32 %v5780, 7
        %v5782 = vsub.s32 0, %v5781
        %v5783 = vrot.slane %v5778, %v5782
        %v5784 = vlaneseq
        %v5785 = vshrl.u32 %v5784, 7
        %v5786 = vsub.s32 1, %v5785
        %v5787 = vrot.slane %v5778, %v5786
        %v5790 = vmul.f32 %v5745, %v5783
        %v5791 = vmul.f32 %v5746, %v5787
        %v5792 = vmul.f32 %v5747, %v5783
        %v5793 = vmul.f32 %v5748, %v5787
        %v5794 = vmul.f32 %v5749, %v5783
        %v5795 = vmul.f32 %v5750, %v5787
        %v5796 = vmul.f32 %v5751, %v5783
        %v5797 = vmul.f32 %v5752, %v5787
        %v5798 = vmul.f32 %v5753, %v5783
        %v5799 = vmul.f32 %v5754, %v5787
        %v5800 = vmul.f32 %v5755, %v5783
        %v5801 = vmul.f32 %v5756, %v5787
        %v5802 = vmul.f32 %v5757, %v5783
        %v5803 = vmul.f32 %v5758, %v5787
        %v5804 = vmul.f32 %v5759, %v5783
        %v5805 = vmul.f32 %v5760, %v5787
        %v5806 = vmul.f32 %v5761, %v5783
        %v5807 = vmul.f32 %v5762, %v5787
        %v5808 = vmul.f32 %v5763, %v5783
        %v5809 = vmul.f32 %v5764, %v5787
        %v5810 = vmul.f32 %v5765, %v5783
        %v5811 = vmul.f32 %v5766, %v5787
        %v5812 = vmul.f32 %v5767, %v5783
        %v5813 = vmul.f32 %v5768, %v5787
        %v5814 = vmul.f32 %v5769, %v5783
        %v5815 = vmul.f32 %v5770, %v5787
        %v5816 = vmul.f32 %v5771, %v5783
        %v5817 = vmul.f32 %v5772, %v5787
        %v5818 = vmul.f32 %v5773, %v5783
        %v5819 = vmul.f32 %v5774, %v5787
        %v5820 = vmul.f32 %v5775, %v5783
        %v5821 = vmul.f32 %v5776, %v5787
        %v5854 = vrot.slane %v5790, 1
        %v5855 = vrot.slane %v5792, 1
        %v5856 = vsel %vm513, %v5854, %v5855
        %v5857 = vrot.slane %v5791, 1
        %v5858 = vrot.slane %v5793, 1
        %v5859 = vsel %vm513, %v5857, %v5858
        %v5860 = vrot.slane %v5794, 1
        %v5861 = vrot.slane %v5796, 1
        %v5862 = vsel %vm513, %v5860, %v5861
        %v5863 = vrot.slane %v5795, 1
        %v5864 = vrot.slane %v5797, 1
        %v5865 = vsel %vm513, %v5863, %v5864
        %v5866 = vrot.slane %v5798, 1
        %v5867 = vrot.slane %v5800, 1
        %v5868 = vsel %vm513, %v5866, %v5867
        %v5869 = vrot.slane %v5799, 1
        %v5870 = vrot.slane %v5801, 1
        %v5871 = vsel %vm513, %v5869, %v5870
        %v5872 = vrot.slane %v5802, 1
        %v5873 = vrot.slane %v5804, 1
        %v5874 = vsel %vm513, %v5872, %v5873
        %v5875 = vrot.slane %v5803, 1
        %v5876 = vrot.slane %v5805, 1
        %v5877 = vsel %vm513, %v5875, %v5876
        %v5878 = vrot.slane %v5806, 1
        %v5879 = vrot.slane %v5808, 1
        %v5880 = vsel %vm513, %v5878, %v5879
        %v5881 = vrot.slane %v5807, 1
        %v5882 = vrot.slane %v5809, 1
        %v5883 = vsel %vm513, %v5881, %v5882
        %v5884 = vrot.slane %v5810, 1
        %v5885 = vrot.slane %v5812, 1
        %v5886 = vsel %vm513, %v5884, %v5885
        %v5887 = vrot.slane %v5811, 1
        %v5888 = vrot.slane %v5813, 1
        %v5889 = vsel %vm513, %v5887, %v5888
        %v5890 = vrot.slane %v5814, 1
        %v5891 = vrot.slane %v5816, 1
        %v5892 = vsel %vm513, %v5890, %v5891
        %v5893 = vrot.slane %v5815, 1
        %v5894 = vrot.slane %v5817, 1
        %v5895 = vsel %vm513, %v5893, %v5894
        %v5896 = vrot.slane %v5818, 1
        %v5897 = vrot.slane %v5820, 1
        %v5898 = vsel %vm513, %v5896, %v5897
        %v5899 = vrot.slane %v5819, 1
        %v5900 = vrot.slane %v5821, 1
        %v5901 = vsel %vm513, %v5899, %v5900
        %v5918 = vadd.f32 %v5729, %v5856
        %v5919 = vadd.f32 %v5730, %v5859
        %v5920 = vadd.f32 %v5731, %v5862
        %v5921 = vadd.f32 %v5732, %v5865
        %v5922 = vadd.f32 %v5733, %v5868
        %v5923 = vadd.f32 %v5734, %v5871
        %v5924 = vadd.f32 %v5735, %v5874
        %v5925 = vadd.f32 %v5736, %v5877
        %v5926 = vadd.f32 %v5737, %v5880
        %v5927 = vadd.f32 %v5738, %v5883
        %v5928 = vadd.f32 %v5739, %v5886
        %v5929 = vadd.f32 %v5740, %v5889
        %v5930 = vadd.f32 %v5741, %v5892
        %v5931 = vadd.f32 %v5742, %v5895
        %v5932 = vadd.f32 %v5743, %v5898
        %v5933 = vadd.f32 %v5744, %v5901
        %v5934 = vld [vmem:[#allocation2] sm:$0xfc]
        %v5935 = vld [vmem:[#allocation2 + $0x8] sm:$0xfc]
        %v5936 = vld [vmem:[#allocation2 + $0x10] sm:$0x3]
        %v5937 = vld [vmem:[#allocation2 + $0x18] sm:$0x3]
        %v5938 = vld [vmem:[#allocation2 + $0x20] sm:$0xfc]
        %v5939 = vld [vmem:[#allocation2 + $0x28] sm:$0xfc]
        %v5940 = vld [vmem:[#allocation2 + $0x30] sm:$0x3]
        %v5941 = vld [vmem:[#allocation2 + $0x38] sm:$0x3]
        %v5942 = vld [vmem:[#allocation2 + $0x40] sm:$0xfc]
        %v5943 = vld [vmem:[#allocation2 + $0x48] sm:$0xfc]
        %v5944 = vld [vmem:[#allocation2 + $0x50] sm:$0x3]
        %v5945 = vld [vmem:[#allocation2 + $0x58] sm:$0x3]
        %v5946 = vld [vmem:[#allocation2 + $0x60] sm:$0xfc]
        %v5947 = vld [vmem:[#allocation2 + $0x68] sm:$0xfc]
        %v5948 = vld [vmem:[#allocation2 + $0x70] sm:$0x3]
        %v5949 = vld [vmem:[#allocation2 + $0x78] sm:$0x3]
        %v5950 = vld [vmem:[#allocation2 + $0x80] sm:$0xfc]
        %v5951 = vld [vmem:[#allocation2 + $0x88] sm:$0xfc]
        %v5952 = vld [vmem:[#allocation2 + $0x90] sm:$0x3]
        %v5953 = vld [vmem:[#allocation2 + $0x98] sm:$0x3]
        %v5954 = vld [vmem:[#allocation2 + $0xa0] sm:$0xfc]
        %v5955 = vld [vmem:[#allocation2 + $0xa8] sm:$0xfc]
        %v5956 = vld [vmem:[#allocation2 + $0xb0] sm:$0x3]
        %v5957 = vld [vmem:[#allocation2 + $0xb8] sm:$0x3]
        %v5958 = vld [vmem:[#allocation2 + $0xc0] sm:$0xfc]
        %v5959 = vld [vmem:[#allocation2 + $0xc8] sm:$0xfc]
        %v5960 = vld [vmem:[#allocation2 + $0xd0] sm:$0x3]
        %v5961 = vld [vmem:[#allocation2 + $0xd8] sm:$0x3]
        %v5962 = vld [vmem:[#allocation2 + $0xe0] sm:$0xfc]
        %v5963 = vld [vmem:[#allocation2 + $0xe8] sm:$0xfc]
        %v5964 = vld [vmem:[#allocation2 + $0xf0] sm:$0x3]
        %v5965 = vld [vmem:[#allocation2 + $0xf8] sm:$0x3]
        %s5966 = scalar_lea.vmem %s5716, 2
        %v5967 = vld [vmem:[%s5966] ss:$8 sm:$0x3]
        %v5969 = vlaneseq
        %v5970 = vshrl.u32 %v5969, 7
        %v5971 = vsub.s32 0, %v5970
        %v5972 = vrot.slane %v5967, %v5971
        %v5973 = vlaneseq
        %v5974 = vshrl.u32 %v5973, 7
        %v5975 = vsub.s32 1, %v5974
        %v5976 = vrot.slane %v5967, %v5975
        %v5979 = vmul.f32 %v5934, %v5972
        %v5980 = vmul.f32 %v5935, %v5976
        %v5981 = vmul.f32 %v5936, %v5972
        %v5982 = vmul.f32 %v5937, %v5976
        %v5983 = vmul.f32 %v5938, %v5972
        %v5984 = vmul.f32 %v5939, %v5976
        %v5985 = vmul.f32 %v5940, %v5972
        %v5986 = vmul.f32 %v5941, %v5976
        %v5987 = vmul.f32 %v5942, %v5972
        %v5988 = vmul.f32 %v5943, %v5976
        %v5989 = vmul.f32 %v5944, %v5972
        %v5990 = vmul.f32 %v5945, %v5976
        %v5991 = vmul.f32 %v5946, %v5972
        %v5992 = vmul.f32 %v5947, %v5976
        %v5993 = vmul.f32 %v5948, %v5972
        %v5994 = vmul.f32 %v5949, %v5976
        %v5995 = vmul.f32 %v5950, %v5972
        %v5996 = vmul.f32 %v5951, %v5976
        %v5997 = vmul.f32 %v5952, %v5972
        %v5998 = vmul.f32 %v5953, %v5976
        %v5999 = vmul.f32 %v5954, %v5972
        %v6000 = vmul.f32 %v5955, %v5976
        %v6001 = vmul.f32 %v5956, %v5972
        %v6002 = vmul.f32 %v5957, %v5976
        %v6003 = vmul.f32 %v5958, %v5972
        %v6004 = vmul.f32 %v5959, %v5976
        %v6005 = vmul.f32 %v5960, %v5972
        %v6006 = vmul.f32 %v5961, %v5976
        %v6007 = vmul.f32 %v5962, %v5972
        %v6008 = vmul.f32 %v5963, %v5976
        %v6009 = vmul.f32 %v5964, %v5972
        %v6010 = vmul.f32 %v5965, %v5976
        %v6043 = vrot.slane %v5979, 2
        %v6044 = vrot.slane %v5981, 2
        %v6045 = vsel %vm703, %v6043, %v6044
        %v6046 = vrot.slane %v5980, 2
        %v6047 = vrot.slane %v5982, 2
        %v6048 = vsel %vm703, %v6046, %v6047
        %v6049 = vrot.slane %v5983, 2
        %v6050 = vrot.slane %v5985, 2
        %v6051 = vsel %vm703, %v6049, %v6050
        %v6052 = vrot.slane %v5984, 2
        %v6053 = vrot.slane %v5986, 2
        %v6054 = vsel %vm703, %v6052, %v6053
        %v6055 = vrot.slane %v5987, 2
        %v6056 = vrot.slane %v5989, 2
        %v6057 = vsel %vm703, %v6055, %v6056
        %v6058 = vrot.slane %v5988, 2
        %v6059 = vrot.slane %v5990, 2
        %v6060 = vsel %vm703, %v6058, %v6059
        %v6061 = vrot.slane %v5991, 2
        %v6062 = vrot.slane %v5993, 2
        %v6063 = vsel %vm703, %v6061, %v6062
        %v6064 = vrot.slane %v5992, 2
        %v6065 = vrot.slane %v5994, 2
        %v6066 = vsel %vm703, %v6064, %v6065
        %v6067 = vrot.slane %v5995, 2
        %v6068 = vrot.slane %v5997, 2
        %v6069 = vsel %vm703, %v6067, %v6068
        %v6070 = vrot.slane %v5996, 2
        %v6071 = vrot.slane %v5998, 2
        %v6072 = vsel %vm703, %v6070, %v6071
        %v6073 = vrot.slane %v5999, 2
        %v6074 = vrot.slane %v6001, 2
        %v6075 = vsel %vm703, %v6073, %v6074
        %v6076 = vrot.slane %v6000, 2
        %v6077 = vrot.slane %v6002, 2
        %v6078 = vsel %vm703, %v6076, %v6077
        %v6079 = vrot.slane %v6003, 2
        %v6080 = vrot.slane %v6005, 2
        %v6081 = vsel %vm703, %v6079, %v6080
        %v6082 = vrot.slane %v6004, 2
        %v6083 = vrot.slane %v6006, 2
        %v6084 = vsel %vm703, %v6082, %v6083
        %v6085 = vrot.slane %v6007, 2
        %v6086 = vrot.slane %v6009, 2
        %v6087 = vsel %vm703, %v6085, %v6086
        %v6088 = vrot.slane %v6008, 2
        %v6089 = vrot.slane %v6010, 2
        %v6090 = vsel %vm703, %v6088, %v6089
        %v6107 = vadd.f32 %v5918, %v6045
        %v6108 = vadd.f32 %v5919, %v6048
        %v6109 = vadd.f32 %v5920, %v6051
        %v6110 = vadd.f32 %v5921, %v6054
        %v6111 = vadd.f32 %v5922, %v6057
        %v6112 = vadd.f32 %v5923, %v6060
        %v6113 = vadd.f32 %v5924, %v6063
        %v6114 = vadd.f32 %v5925, %v6066
        %v6115 = vadd.f32 %v5926, %v6069
        %v6116 = vadd.f32 %v5927, %v6072
        %v6117 = vadd.f32 %v5928, %v6075
        %v6118 = vadd.f32 %v5929, %v6078
        %v6119 = vadd.f32 %v5930, %v6081
        %v6120 = vadd.f32 %v5931, %v6084
        %v6121 = vadd.f32 %v5932, %v6087
        %v6122 = vadd.f32 %v5933, %v6090
        %v6123 = vld [vmem:[%s327] sm:$0xff]
        %v6124 = vld [vmem:[%s327 + $0x8] sm:$0xff]
        %v6125 = vld [vmem:[%s327 + $0x20] sm:$0xff]
        %v6126 = vld [vmem:[%s327 + $0x28] sm:$0xff]
        %v6127 = vld [vmem:[%s327 + $0x40] sm:$0xff]
        %v6128 = vld [vmem:[%s327 + $0x48] sm:$0xff]
        %v6129 = vld [vmem:[%s327 + $0x60] sm:$0xff]
        %v6130 = vld [vmem:[%s327 + $0x68] sm:$0xff]
        %v6131 = vld [vmem:[%s327 + $0x80] sm:$0xff]
        %v6132 = vld [vmem:[%s327 + $0x88] sm:$0xff]
        %v6133 = vld [vmem:[%s327 + $0xa0] sm:$0xff]
        %v6134 = vld [vmem:[%s327 + $0xa8] sm:$0xff]
        %v6135 = vld [vmem:[%s327 + $0xc0] sm:$0xff]
        %v6136 = vld [vmem:[%s327 + $0xc8] sm:$0xff]
        %v6137 = vld [vmem:[%s327 + $0xe0] sm:$0xff]
        %v6138 = vld [vmem:[%s327 + $0xe8] sm:$0xff]
        %s6139 = scalar_lea.vmem %s5716, 3
        %v6140 = vld [vmem:[%s6139] ss:$8 sm:$0x3]
        %v6142 = vlaneseq
        %v6143 = vshrl.u32 %v6142, 7
        %v6144 = vsub.s32 0, %v6143
        %v6145 = vrot.slane %v6140, %v6144
        %v6146 = vlaneseq
        %v6147 = vshrl.u32 %v6146, 7
        %v6148 = vsub.s32 1, %v6147
        %v6149 = vrot.slane %v6140, %v6148
        %v6152 = vmul.f32 %v6123, %v6145
        %v6153 = vmul.f32 %v6124, %v6149
        %v6154 = vmul.f32 %v6125, %v6145
        %v6155 = vmul.f32 %v6126, %v6149
        %v6156 = vmul.f32 %v6127, %v6145
        %v6157 = vmul.f32 %v6128, %v6149
        %v6158 = vmul.f32 %v6129, %v6145
        %v6159 = vmul.f32 %v6130, %v6149
        %v6160 = vmul.f32 %v6131, %v6145
        %v6161 = vmul.f32 %v6132, %v6149
        %v6162 = vmul.f32 %v6133, %v6145
        %v6163 = vmul.f32 %v6134, %v6149
        %v6164 = vmul.f32 %v6135, %v6145
        %v6165 = vmul.f32 %v6136, %v6149
        %v6166 = vmul.f32 %v6137, %v6145
        %v6167 = vmul.f32 %v6138, %v6149
        %v6168 = vadd.f32 %v6107, %v6152
        %v6169 = vadd.f32 %v6108, %v6153
        %v6170 = vadd.f32 %v6109, %v6154
        %v6171 = vadd.f32 %v6110, %v6155
        %v6172 = vadd.f32 %v6111, %v6156
        %v6173 = vadd.f32 %v6112, %v6157
        %v6174 = vadd.f32 %v6113, %v6158
        %v6175 = vadd.f32 %v6114, %v6159
        %v6176 = vadd.f32 %v6115, %v6160
        %v6177 = vadd.f32 %v6116, %v6161
        %v6178 = vadd.f32 %v6117, %v6162
        %v6179 = vadd.f32 %v6118, %v6163
        %v6180 = vadd.f32 %v6119, %v6164
        %v6181 = vadd.f32 %v6120, %v6165
        %v6182 = vadd.f32 %v6121, %v6166
        %v6183 = vadd.f32 %v6122, %v6167
        %v6184 = vld [vmem:[%s327] sm:$0xfe]
        %v6185 = vld [vmem:[%s327 + $0x8] sm:$0xfe]
        %v6186 = vld [vmem:[%s327 + $0x10] sm:$0x1]
        %v6187 = vld [vmem:[%s327 + $0x18] sm:$0x1]
        %v6188 = vld [vmem:[%s327 + $0x20] sm:$0xfe]
        %v6189 = vld [vmem:[%s327 + $0x28] sm:$0xfe]
        %v6190 = vld [vmem:[%s327 + $0x30] sm:$0x1]
        %v6191 = vld [vmem:[%s327 + $0x38] sm:$0x1]
        %v6192 = vld [vmem:[%s327 + $0x40] sm:$0xfe]
        %v6193 = vld [vmem:[%s327 + $0x48] sm:$0xfe]
        %v6194 = vld [vmem:[%s327 + $0x50] sm:$0x1]
        %v6195 = vld [vmem:[%s327 + $0x58] sm:$0x1]
        %v6196 = vld [vmem:[%s327 + $0x60] sm:$0xfe]
        %v6197 = vld [vmem:[%s327 + $0x68] sm:$0xfe]
        %v6198 = vld [vmem:[%s327 + $0x70] sm:$0x1]
        %v6199 = vld [vmem:[%s327 + $0x78] sm:$0x1]
        %v6200 = vld [vmem:[%s327 + $0x80] sm:$0xfe]
        %v6201 = vld [vmem:[%s327 + $0x88] sm:$0xfe]
        %v6202 = vld [vmem:[%s327 + $0x90] sm:$0x1]
        %v6203 = vld [vmem:[%s327 + $0x98] sm:$0x1]
        %v6204 = vld [vmem:[%s327 + $0xa0] sm:$0xfe]
        %v6205 = vld [vmem:[%s327 + $0xa8] sm:$0xfe]
        %v6206 = vld [vmem:[%s327 + $0xb0] sm:$0x1]
        %v6207 = vld [vmem:[%s327 + $0xb8] sm:$0x1]
        %v6208 = vld [vmem:[%s327 + $0xc0] sm:$0xfe]
        %v6209 = vld [vmem:[%s327 + $0xc8] sm:$0xfe]
        %v6210 = vld [vmem:[%s327 + $0xd0] sm:$0x1]
        %v6211 = vld [vmem:[%s327 + $0xd8] sm:$0x1]
        %v6212 = vld [vmem:[%s327 + $0xe0] sm:$0xfe]
        %v6213 = vld [vmem:[%s327 + $0xe8] sm:$0xfe]
        %v6214 = vld [vmem:[%s327 + $0xf0] sm:$0x1]
        %v6215 = vld [vmem:[%s327 + $0xf8] sm:$0x1]
        %s6216 = scalar_lea.vmem %s5716, 4
        %v6217 = vld [vmem:[%s6216] ss:$8 sm:$0x3]
        %v6219 = vlaneseq
        %v6220 = vshrl.u32 %v6219, 7
        %v6221 = vsub.s32 0, %v6220
        %v6222 = vrot.slane %v6217, %v6221
        %v6223 = vlaneseq
        %v6224 = vshrl.u32 %v6223, 7
        %v6225 = vsub.s32 1, %v6224
        %v6226 = vrot.slane %v6217, %v6225
        %v6229 = vmul.f32 %v6184, %v6222
        %v6230 = vmul.f32 %v6185, %v6226
        %v6231 = vmul.f32 %v6186, %v6222
        %v6232 = vmul.f32 %v6187, %v6226
        %v6233 = vmul.f32 %v6188, %v6222
        %v6234 = vmul.f32 %v6189, %v6226
        %v6235 = vmul.f32 %v6190, %v6222
        %v6236 = vmul.f32 %v6191, %v6226
        %v6237 = vmul.f32 %v6192, %v6222
        %v6238 = vmul.f32 %v6193, %v6226
        %v6239 = vmul.f32 %v6194, %v6222
        %v6240 = vmul.f32 %v6195, %v6226
        %v6241 = vmul.f32 %v6196, %v6222
        %v6242 = vmul.f32 %v6197, %v6226
        %v6243 = vmul.f32 %v6198, %v6222
        %v6244 = vmul.f32 %v6199, %v6226
        %v6245 = vmul.f32 %v6200, %v6222
        %v6246 = vmul.f32 %v6201, %v6226
        %v6247 = vmul.f32 %v6202, %v6222
        %v6248 = vmul.f32 %v6203, %v6226
        %v6249 = vmul.f32 %v6204, %v6222
        %v6250 = vmul.f32 %v6205, %v6226
        %v6251 = vmul.f32 %v6206, %v6222
        %v6252 = vmul.f32 %v6207, %v6226
        %v6253 = vmul.f32 %v6208, %v6222
        %v6254 = vmul.f32 %v6209, %v6226
        %v6255 = vmul.f32 %v6210, %v6222
        %v6256 = vmul.f32 %v6211, %v6226
        %v6257 = vmul.f32 %v6212, %v6222
        %v6258 = vmul.f32 %v6213, %v6226
        %v6259 = vmul.f32 %v6214, %v6222
        %v6260 = vmul.f32 %v6215, %v6226
        %v6293 = vrot.slane %v6229, 1
        %v6294 = vrot.slane %v6231, 1
        %v6295 = vsel %vm513, %v6293, %v6294
        %v6296 = vrot.slane %v6230, 1
        %v6297 = vrot.slane %v6232, 1
        %v6298 = vsel %vm513, %v6296, %v6297
        %v6299 = vrot.slane %v6233, 1
        %v6300 = vrot.slane %v6235, 1
        %v6301 = vsel %vm513, %v6299, %v6300
        %v6302 = vrot.slane %v6234, 1
        %v6303 = vrot.slane %v6236, 1
        %v6304 = vsel %vm513, %v6302, %v6303
        %v6305 = vrot.slane %v6237, 1
        %v6306 = vrot.slane %v6239, 1
        %v6307 = vsel %vm513, %v6305, %v6306
        %v6308 = vrot.slane %v6238, 1
        %v6309 = vrot.slane %v6240, 1
        %v6310 = vsel %vm513, %v6308, %v6309
        %v6311 = vrot.slane %v6241, 1
        %v6312 = vrot.slane %v6243, 1
        %v6313 = vsel %vm513, %v6311, %v6312
        %v6314 = vrot.slane %v6242, 1
        %v6315 = vrot.slane %v6244, 1
        %v6316 = vsel %vm513, %v6314, %v6315
        %v6317 = vrot.slane %v6245, 1
        %v6318 = vrot.slane %v6247, 1
        %v6319 = vsel %vm513, %v6317, %v6318
        %v6320 = vrot.slane %v6246, 1
        %v6321 = vrot.slane %v6248, 1
        %v6322 = vsel %vm513, %v6320, %v6321
        %v6323 = vrot.slane %v6249, 1
        %v6324 = vrot.slane %v6251, 1
        %v6325 = vsel %vm513, %v6323, %v6324
        %v6326 = vrot.slane %v6250, 1
        %v6327 = vrot.slane %v6252, 1
        %v6328 = vsel %vm513, %v6326, %v6327
        %v6329 = vrot.slane %v6253, 1
        %v6330 = vrot.slane %v6255, 1
        %v6331 = vsel %vm513, %v6329, %v6330
        %v6332 = vrot.slane %v6254, 1
        %v6333 = vrot.slane %v6256, 1
        %v6334 = vsel %vm513, %v6332, %v6333
        %v6335 = vrot.slane %v6257, 1
        %v6336 = vrot.slane %v6259, 1
        %v6337 = vsel %vm513, %v6335, %v6336
        %v6338 = vrot.slane %v6258, 1
        %v6339 = vrot.slane %v6260, 1
        %v6340 = vsel %vm513, %v6338, %v6339
        %v6357 = vadd.f32 %v6168, %v6295
        %v6358 = vadd.f32 %v6169, %v6298
        %v6359 = vadd.f32 %v6170, %v6301
        %v6360 = vadd.f32 %v6171, %v6304
        %v6361 = vadd.f32 %v6172, %v6307
        %v6362 = vadd.f32 %v6173, %v6310
        %v6363 = vadd.f32 %v6174, %v6313
        %v6364 = vadd.f32 %v6175, %v6316
        %v6365 = vadd.f32 %v6176, %v6319
        %v6366 = vadd.f32 %v6177, %v6322
        %v6367 = vadd.f32 %v6178, %v6325
        %v6368 = vadd.f32 %v6179, %v6328
        %v6369 = vadd.f32 %v6180, %v6331
        %v6370 = vadd.f32 %v6181, %v6334
        %v6371 = vadd.f32 %v6182, %v6337
        %v6372 = vadd.f32 %v6183, %v6340
        %v6373 = vld [vmem:[%s327] sm:$0xfc]
        %v6374 = vld [vmem:[%s327 + $0x8] sm:$0xfc]
        %v6375 = vld [vmem:[%s327 + $0x10] sm:$0x3]
        %v6376 = vld [vmem:[%s327 + $0x18] sm:$0x3]
        %v6377 = vld [vmem:[%s327 + $0x20] sm:$0xfc]
        %v6378 = vld [vmem:[%s327 + $0x28] sm:$0xfc]
        %v6379 = vld [vmem:[%s327 + $0x30] sm:$0x3]
        %v6380 = vld [vmem:[%s327 + $0x38] sm:$0x3]
        %v6381 = vld [vmem:[%s327 + $0x40] sm:$0xfc]
        %v6382 = vld [vmem:[%s327 + $0x48] sm:$0xfc]
        %v6383 = vld [vmem:[%s327 + $0x50] sm:$0x3]
        %v6384 = vld [vmem:[%s327 + $0x58] sm:$0x3]
        %v6385 = vld [vmem:[%s327 + $0x60] sm:$0xfc]
        %v6386 = vld [vmem:[%s327 + $0x68] sm:$0xfc]
        %v6387 = vld [vmem:[%s327 + $0x70] sm:$0x3]
        %v6388 = vld [vmem:[%s327 + $0x78] sm:$0x3]
        %v6389 = vld [vmem:[%s327 + $0x80] sm:$0xfc]
        %v6390 = vld [vmem:[%s327 + $0x88] sm:$0xfc]
        %v6391 = vld [vmem:[%s327 + $0x90] sm:$0x3]
        %v6392 = vld [vmem:[%s327 + $0x98] sm:$0x3]
        %v6393 = vld [vmem:[%s327 + $0xa0] sm:$0xfc]
        %v6394 = vld [vmem:[%s327 + $0xa8] sm:$0xfc]
        %v6395 = vld [vmem:[%s327 + $0xb0] sm:$0x3]
        %v6396 = vld [vmem:[%s327 + $0xb8] sm:$0x3]
        %v6397 = vld [vmem:[%s327 + $0xc0] sm:$0xfc]
        %v6398 = vld [vmem:[%s327 + $0xc8] sm:$0xfc]
        %v6399 = vld [vmem:[%s327 + $0xd0] sm:$0x3]
        %v6400 = vld [vmem:[%s327 + $0xd8] sm:$0x3]
        %v6401 = vld [vmem:[%s327 + $0xe0] sm:$0xfc]
        %v6402 = vld [vmem:[%s327 + $0xe8] sm:$0xfc]
        %v6403 = vld [vmem:[%s327 + $0xf0] sm:$0x3]
        %v6404 = vld [vmem:[%s327 + $0xf8] sm:$0x3]
        %s6405 = scalar_lea.vmem %s5716, 5
        %v6406 = vld [vmem:[%s6405] ss:$8 sm:$0x3]
        %v6408 = vlaneseq
        %v6409 = vshrl.u32 %v6408, 7
        %v6410 = vsub.s32 0, %v6409
        %v6411 = vrot.slane %v6406, %v6410
        %v6412 = vlaneseq
        %v6413 = vshrl.u32 %v6412, 7
        %v6414 = vsub.s32 1, %v6413
        %v6415 = vrot.slane %v6406, %v6414
        %v6418 = vmul.f32 %v6373, %v6411
        %v6419 = vmul.f32 %v6374, %v6415
        %v6420 = vmul.f32 %v6375, %v6411
        %v6421 = vmul.f32 %v6376, %v6415
        %v6422 = vmul.f32 %v6377, %v6411
        %v6423 = vmul.f32 %v6378, %v6415
        %v6424 = vmul.f32 %v6379, %v6411
        %v6425 = vmul.f32 %v6380, %v6415
        %v6426 = vmul.f32 %v6381, %v6411
        %v6427 = vmul.f32 %v6382, %v6415
        %v6428 = vmul.f32 %v6383, %v6411
        %v6429 = vmul.f32 %v6384, %v6415
        %v6430 = vmul.f32 %v6385, %v6411
        %v6431 = vmul.f32 %v6386, %v6415
        %v6432 = vmul.f32 %v6387, %v6411
        %v6433 = vmul.f32 %v6388, %v6415
        %v6434 = vmul.f32 %v6389, %v6411
        %v6435 = vmul.f32 %v6390, %v6415
        %v6436 = vmul.f32 %v6391, %v6411
        %v6437 = vmul.f32 %v6392, %v6415
        %v6438 = vmul.f32 %v6393, %v6411
        %v6439 = vmul.f32 %v6394, %v6415
        %v6440 = vmul.f32 %v6395, %v6411
        %v6441 = vmul.f32 %v6396, %v6415
        %v6442 = vmul.f32 %v6397, %v6411
        %v6443 = vmul.f32 %v6398, %v6415
        %v6444 = vmul.f32 %v6399, %v6411
        %v6445 = vmul.f32 %v6400, %v6415
        %v6446 = vmul.f32 %v6401, %v6411
        %v6447 = vmul.f32 %v6402, %v6415
        %v6448 = vmul.f32 %v6403, %v6411
        %v6449 = vmul.f32 %v6404, %v6415
        %v6482 = vrot.slane %v6418, 2
        %v6483 = vrot.slane %v6420, 2
        %v6484 = vsel %vm703, %v6482, %v6483
        %v6485 = vrot.slane %v6419, 2
        %v6486 = vrot.slane %v6421, 2
        %v6487 = vsel %vm703, %v6485, %v6486
        %v6488 = vrot.slane %v6422, 2
        %v6489 = vrot.slane %v6424, 2
        %v6490 = vsel %vm703, %v6488, %v6489
        %v6491 = vrot.slane %v6423, 2
        %v6492 = vrot.slane %v6425, 2
        %v6493 = vsel %vm703, %v6491, %v6492
        %v6494 = vrot.slane %v6426, 2
        %v6495 = vrot.slane %v6428, 2
        %v6496 = vsel %vm703, %v6494, %v6495
        %v6497 = vrot.slane %v6427, 2
        %v6498 = vrot.slane %v6429, 2
        %v6499 = vsel %vm703, %v6497, %v6498
        %v6500 = vrot.slane %v6430, 2
        %v6501 = vrot.slane %v6432, 2
        %v6502 = vsel %vm703, %v6500, %v6501
        %v6503 = vrot.slane %v6431, 2
        %v6504 = vrot.slane %v6433, 2
        %v6505 = vsel %vm703, %v6503, %v6504
        %v6506 = vrot.slane %v6434, 2
        %v6507 = vrot.slane %v6436, 2
        %v6508 = vsel %vm703, %v6506, %v6507
        %v6509 = vrot.slane %v6435, 2
        %v6510 = vrot.slane %v6437, 2
        %v6511 = vsel %vm703, %v6509, %v6510
        %v6512 = vrot.slane %v6438, 2
        %v6513 = vrot.slane %v6440, 2
        %v6514 = vsel %vm703, %v6512, %v6513
        %v6515 = vrot.slane %v6439, 2
        %v6516 = vrot.slane %v6441, 2
        %v6517 = vsel %vm703, %v6515, %v6516
        %v6518 = vrot.slane %v6442, 2
        %v6519 = vrot.slane %v6444, 2
        %v6520 = vsel %vm703, %v6518, %v6519
        %v6521 = vrot.slane %v6443, 2
        %v6522 = vrot.slane %v6445, 2
        %v6523 = vsel %vm703, %v6521, %v6522
        %v6524 = vrot.slane %v6446, 2
        %v6525 = vrot.slane %v6448, 2
        %v6526 = vsel %vm703, %v6524, %v6525
        %v6527 = vrot.slane %v6447, 2
        %v6528 = vrot.slane %v6449, 2
        %v6529 = vsel %vm703, %v6527, %v6528
        %v6546 = vadd.f32 %v6357, %v6484
        %v6547 = vadd.f32 %v6358, %v6487
        %v6548 = vadd.f32 %v6359, %v6490
        %v6549 = vadd.f32 %v6360, %v6493
        %v6550 = vadd.f32 %v6361, %v6496
        %v6551 = vadd.f32 %v6362, %v6499
        %v6552 = vadd.f32 %v6363, %v6502
        %v6553 = vadd.f32 %v6364, %v6505
        %v6554 = vadd.f32 %v6365, %v6508
        %v6555 = vadd.f32 %v6366, %v6511
        %v6556 = vadd.f32 %v6367, %v6514
        %v6557 = vadd.f32 %v6368, %v6517
        %v6558 = vadd.f32 %v6369, %v6520
        %v6559 = vadd.f32 %v6370, %v6523
        %v6560 = vadd.f32 %v6371, %v6526
        %v6561 = vadd.f32 %v6372, %v6529
        %v6562 = vld [vmem:[%s1223] sm:$0xff]
        %v6563 = vld [vmem:[%s1223 + $0x8] sm:$0xff]
        %v6564 = vld [vmem:[%s1223 + $0x20] sm:$0xff]
        %v6565 = vld [vmem:[%s1223 + $0x28] sm:$0xff]
        %v6566 = vld [vmem:[%s1223 + $0x40] sm:$0xff]
        %v6567 = vld [vmem:[%s1223 + $0x48] sm:$0xff]
        %v6568 = vld [vmem:[%s1223 + $0x60] sm:$0xff]
        %v6569 = vld [vmem:[%s1223 + $0x68] sm:$0xff]
        %v6570 = vld [vmem:[%s1223 + $0x80] sm:$0xff]
        %v6571 = vld [vmem:[%s1223 + $0x88] sm:$0xff]
        %v6572 = vld [vmem:[%s1223 + $0xa0] sm:$0xff]
        %v6573 = vld [vmem:[%s1223 + $0xa8] sm:$0xff]
        %v6574 = vld [vmem:[%s1223 + $0xc0] sm:$0xff]
        %v6575 = vld [vmem:[%s1223 + $0xc8] sm:$0xff]
        %v6576 = vld [vmem:[%s1223 + $0xe0] sm:$0xff]
        %v6577 = vld [vmem:[%s1223 + $0xe8] sm:$0xff]
        %s6578 = scalar_lea.vmem %s5716, 6
        %v6579 = vld [vmem:[%s6578] ss:$8 sm:$0x3]
        %v6581 = vlaneseq
        %v6582 = vshrl.u32 %v6581, 7
        %v6583 = vsub.s32 0, %v6582
        %v6584 = vrot.slane %v6579, %v6583
        %v6585 = vlaneseq
        %v6586 = vshrl.u32 %v6585, 7
        %v6587 = vsub.s32 1, %v6586
        %v6588 = vrot.slane %v6579, %v6587
        %v6591 = vmul.f32 %v6562, %v6584
        %v6592 = vmul.f32 %v6563, %v6588
        %v6593 = vmul.f32 %v6564, %v6584
        %v6594 = vmul.f32 %v6565, %v6588
        %v6595 = vmul.f32 %v6566, %v6584
        %v6596 = vmul.f32 %v6567, %v6588
        %v6597 = vmul.f32 %v6568, %v6584
        %v6598 = vmul.f32 %v6569, %v6588
        %v6599 = vmul.f32 %v6570, %v6584
        %v6600 = vmul.f32 %v6571, %v6588
        %v6601 = vmul.f32 %v6572, %v6584
        %v6602 = vmul.f32 %v6573, %v6588
        %v6603 = vmul.f32 %v6574, %v6584
        %v6604 = vmul.f32 %v6575, %v6588
        %v6605 = vmul.f32 %v6576, %v6584
        %v6606 = vmul.f32 %v6577, %v6588
        %v6607 = vadd.f32 %v6546, %v6591
        %v6608 = vadd.f32 %v6547, %v6592
        %v6609 = vadd.f32 %v6548, %v6593
        %v6610 = vadd.f32 %v6549, %v6594
        %v6611 = vadd.f32 %v6550, %v6595
        %v6612 = vadd.f32 %v6551, %v6596
        %v6613 = vadd.f32 %v6552, %v6597
        %v6614 = vadd.f32 %v6553, %v6598
        %v6615 = vadd.f32 %v6554, %v6599
        %v6616 = vadd.f32 %v6555, %v6600
        %v6617 = vadd.f32 %v6556, %v6601
        %v6618 = vadd.f32 %v6557, %v6602
        %v6619 = vadd.f32 %v6558, %v6603
        %v6620 = vadd.f32 %v6559, %v6604
        %v6621 = vadd.f32 %v6560, %v6605
        %v6622 = vadd.f32 %v6561, %v6606
        %v6623 = vld [vmem:[%s1223] sm:$0xfe]
        %v6624 = vld [vmem:[%s1223 + $0x8] sm:$0xfe]
        %v6625 = vld [vmem:[%s1223 + $0x10] sm:$0x1]
        %v6626 = vld [vmem:[%s1223 + $0x18] sm:$0x1]
        %v6627 = vld [vmem:[%s1223 + $0x20] sm:$0xfe]
        %v6628 = vld [vmem:[%s1223 + $0x28] sm:$0xfe]
        %v6629 = vld [vmem:[%s1223 + $0x30] sm:$0x1]
        %v6630 = vld [vmem:[%s1223 + $0x38] sm:$0x1]
        %v6631 = vld [vmem:[%s1223 + $0x40] sm:$0xfe]
        %v6632 = vld [vmem:[%s1223 + $0x48] sm:$0xfe]
        %v6633 = vld [vmem:[%s1223 + $0x50] sm:$0x1]
        %v6634 = vld [vmem:[%s1223 + $0x58] sm:$0x1]
        %v6635 = vld [vmem:[%s1223 + $0x60] sm:$0xfe]
        %v6636 = vld [vmem:[%s1223 + $0x68] sm:$0xfe]
        %v6637 = vld [vmem:[%s1223 + $0x70] sm:$0x1]
        %v6638 = vld [vmem:[%s1223 + $0x78] sm:$0x1]
        %v6639 = vld [vmem:[%s1223 + $0x80] sm:$0xfe]
        %v6640 = vld [vmem:[%s1223 + $0x88] sm:$0xfe]
        %v6641 = vld [vmem:[%s1223 + $0x90] sm:$0x1]
        %v6642 = vld [vmem:[%s1223 + $0x98] sm:$0x1]
        %v6643 = vld [vmem:[%s1223 + $0xa0] sm:$0xfe]
        %v6644 = vld [vmem:[%s1223 + $0xa8] sm:$0xfe]
        %v6645 = vld [vmem:[%s1223 + $0xb0] sm:$0x1]
        %v6646 = vld [vmem:[%s1223 + $0xb8] sm:$0x1]
        %v6647 = vld [vmem:[%s1223 + $0xc0] sm:$0xfe]
        %v6648 = vld [vmem:[%s1223 + $0xc8] sm:$0xfe]
        %v6649 = vld [vmem:[%s1223 + $0xd0] sm:$0x1]
        %v6650 = vld [vmem:[%s1223 + $0xd8] sm:$0x1]
        %v6651 = vld [vmem:[%s1223 + $0xe0] sm:$0xfe]
        %v6652 = vld [vmem:[%s1223 + $0xe8] sm:$0xfe]
        %v6653 = vld [vmem:[%s1223 + $0xf0] sm:$0x1]
        %v6654 = vld [vmem:[%s1223 + $0xf8] sm:$0x1]
        %s6655 = scalar_lea.vmem %s5716, 7
        %v6656 = vld [vmem:[%s6655] ss:$8 sm:$0x3]
        %v6658 = vlaneseq
        %v6659 = vshrl.u32 %v6658, 7
        %v6660 = vsub.s32 0, %v6659
        %v6661 = vrot.slane %v6656, %v6660
        %v6662 = vlaneseq
        %v6663 = vshrl.u32 %v6662, 7
        %v6664 = vsub.s32 1, %v6663
        %v6665 = vrot.slane %v6656, %v6664
        %v6668 = vmul.f32 %v6623, %v6661
        %v6669 = vmul.f32 %v6624, %v6665
        %v6670 = vmul.f32 %v6625, %v6661
        %v6671 = vmul.f32 %v6626, %v6665
        %v6672 = vmul.f32 %v6627, %v6661
        %v6673 = vmul.f32 %v6628, %v6665
        %v6674 = vmul.f32 %v6629, %v6661
        %v6675 = vmul.f32 %v6630, %v6665
        %v6676 = vmul.f32 %v6631, %v6661
        %v6677 = vmul.f32 %v6632, %v6665
        %v6678 = vmul.f32 %v6633, %v6661
        %v6679 = vmul.f32 %v6634, %v6665
        %v6680 = vmul.f32 %v6635, %v6661
        %v6681 = vmul.f32 %v6636, %v6665
        %v6682 = vmul.f32 %v6637, %v6661
        %v6683 = vmul.f32 %v6638, %v6665
        %v6684 = vmul.f32 %v6639, %v6661
        %v6685 = vmul.f32 %v6640, %v6665
        %v6686 = vmul.f32 %v6641, %v6661
        %v6687 = vmul.f32 %v6642, %v6665
        %v6688 = vmul.f32 %v6643, %v6661
        %v6689 = vmul.f32 %v6644, %v6665
        %v6690 = vmul.f32 %v6645, %v6661
        %v6691 = vmul.f32 %v6646, %v6665
        %v6692 = vmul.f32 %v6647, %v6661
        %v6693 = vmul.f32 %v6648, %v6665
        %v6694 = vmul.f32 %v6649, %v6661
        %v6695 = vmul.f32 %v6650, %v6665
        %v6696 = vmul.f32 %v6651, %v6661
        %v6697 = vmul.f32 %v6652, %v6665
        %v6698 = vmul.f32 %v6653, %v6661
        %v6699 = vmul.f32 %v6654, %v6665
        %v6732 = vrot.slane %v6668, 1
        %v6733 = vrot.slane %v6670, 1
        %v6734 = vsel %vm513, %v6732, %v6733
        %v6735 = vrot.slane %v6669, 1
        %v6736 = vrot.slane %v6671, 1
        %v6737 = vsel %vm513, %v6735, %v6736
        %v6738 = vrot.slane %v6672, 1
        %v6739 = vrot.slane %v6674, 1
        %v6740 = vsel %vm513, %v6738, %v6739
        %v6741 = vrot.slane %v6673, 1
        %v6742 = vrot.slane %v6675, 1
        %v6743 = vsel %vm513, %v6741, %v6742
        %v6744 = vrot.slane %v6676, 1
        %v6745 = vrot.slane %v6678, 1
        %v6746 = vsel %vm513, %v6744, %v6745
        %v6747 = vrot.slane %v6677, 1
        %v6748 = vrot.slane %v6679, 1
        %v6749 = vsel %vm513, %v6747, %v6748
        %v6750 = vrot.slane %v6680, 1
        %v6751 = vrot.slane %v6682, 1
        %v6752 = vsel %vm513, %v6750, %v6751
        %v6753 = vrot.slane %v6681, 1
        %v6754 = vrot.slane %v6683, 1
        %v6755 = vsel %vm513, %v6753, %v6754
        %v6756 = vrot.slane %v6684, 1
        %v6757 = vrot.slane %v6686, 1
        %v6758 = vsel %vm513, %v6756, %v6757
        %v6759 = vrot.slane %v6685, 1
        %v6760 = vrot.slane %v6687, 1
        %v6761 = vsel %vm513, %v6759, %v6760
        %v6762 = vrot.slane %v6688, 1
        %v6763 = vrot.slane %v6690, 1
        %v6764 = vsel %vm513, %v6762, %v6763
        %v6765 = vrot.slane %v6689, 1
        %v6766 = vrot.slane %v6691, 1
        %v6767 = vsel %vm513, %v6765, %v6766
        %v6768 = vrot.slane %v6692, 1
        %v6769 = vrot.slane %v6694, 1
        %v6770 = vsel %vm513, %v6768, %v6769
        %v6771 = vrot.slane %v6693, 1
        %v6772 = vrot.slane %v6695, 1
        %v6773 = vsel %vm513, %v6771, %v6772
        %v6774 = vrot.slane %v6696, 1
        %v6775 = vrot.slane %v6698, 1
        %v6776 = vsel %vm513, %v6774, %v6775
        %v6777 = vrot.slane %v6697, 1
        %v6778 = vrot.slane %v6699, 1
        %v6779 = vsel %vm513, %v6777, %v6778
        %v6796 = vadd.f32 %v6607, %v6734
        %v6797 = vadd.f32 %v6608, %v6737
        %v6798 = vadd.f32 %v6609, %v6740
        %v6799 = vadd.f32 %v6610, %v6743
        %v6800 = vadd.f32 %v6611, %v6746
        %v6801 = vadd.f32 %v6612, %v6749
        %v6802 = vadd.f32 %v6613, %v6752
        %v6803 = vadd.f32 %v6614, %v6755
        %v6804 = vadd.f32 %v6615, %v6758
        %v6805 = vadd.f32 %v6616, %v6761
        %v6806 = vadd.f32 %v6617, %v6764
        %v6807 = vadd.f32 %v6618, %v6767
        %v6808 = vadd.f32 %v6619, %v6770
        %v6809 = vadd.f32 %v6620, %v6773
        %v6810 = vadd.f32 %v6621, %v6776
        %v6811 = vadd.f32 %v6622, %v6779
        %v6812 = vld [vmem:[%s1223] sm:$0xfc]
        %v6813 = vld [vmem:[%s1223 + $0x8] sm:$0xfc]
        %v6814 = vld [vmem:[%s1223 + $0x10] sm:$0x3]
        %v6815 = vld [vmem:[%s1223 + $0x18] sm:$0x3]
        %v6816 = vld [vmem:[%s1223 + $0x20] sm:$0xfc]
        %v6817 = vld [vmem:[%s1223 + $0x28] sm:$0xfc]
        %v6818 = vld [vmem:[%s1223 + $0x30] sm:$0x3]
        %v6819 = vld [vmem:[%s1223 + $0x38] sm:$0x3]
        %v6820 = vld [vmem:[%s1223 + $0x40] sm:$0xfc]
        %v6821 = vld [vmem:[%s1223 + $0x48] sm:$0xfc]
        %v6822 = vld [vmem:[%s1223 + $0x50] sm:$0x3]
        %v6823 = vld [vmem:[%s1223 + $0x58] sm:$0x3]
        %v6824 = vld [vmem:[%s1223 + $0x60] sm:$0xfc]
        %v6825 = vld [vmem:[%s1223 + $0x68] sm:$0xfc]
        %v6826 = vld [vmem:[%s1223 + $0x70] sm:$0x3]
        %v6827 = vld [vmem:[%s1223 + $0x78] sm:$0x3]
        %v6828 = vld [vmem:[%s1223 + $0x80] sm:$0xfc]
        %v6829 = vld [vmem:[%s1223 + $0x88] sm:$0xfc]
        %v6830 = vld [vmem:[%s1223 + $0x90] sm:$0x3]
        %v6831 = vld [vmem:[%s1223 + $0x98] sm:$0x3]
        %v6832 = vld [vmem:[%s1223 + $0xa0] sm:$0xfc]
        %v6833 = vld [vmem:[%s1223 + $0xa8] sm:$0xfc]
        %v6834 = vld [vmem:[%s1223 + $0xb0] sm:$0x3]
        %v6835 = vld [vmem:[%s1223 + $0xb8] sm:$0x3]
        %v6836 = vld [vmem:[%s1223 + $0xc0] sm:$0xfc]
        %v6837 = vld [vmem:[%s1223 + $0xc8] sm:$0xfc]
        %v6838 = vld [vmem:[%s1223 + $0xd0] sm:$0x3]
        %v6839 = vld [vmem:[%s1223 + $0xd8] sm:$0x3]
        %v6840 = vld [vmem:[%s1223 + $0xe0] sm:$0xfc]
        %v6841 = vld [vmem:[%s1223 + $0xe8] sm:$0xfc]
        %v6842 = vld [vmem:[%s1223 + $0xf0] sm:$0x3]
        %v6843 = vld [vmem:[%s1223 + $0xf8] sm:$0x3]
        %s6844 = scalar_lea.vmem %s5716, 16
        %v6845 = vld [vmem:[%s6844] ss:$8 sm:$0x3]
        %v6847 = vlaneseq
        %v6848 = vshrl.u32 %v6847, 7
        %v6849 = vsub.s32 0, %v6848
        %v6850 = vrot.slane %v6845, %v6849
        %v6851 = vlaneseq
        %v6852 = vshrl.u32 %v6851, 7
        %v6853 = vsub.s32 1, %v6852
        %v6854 = vrot.slane %v6845, %v6853
        %v6857 = vmul.f32 %v6812, %v6850
        %v6858 = vmul.f32 %v6813, %v6854
        %v6859 = vmul.f32 %v6814, %v6850
        %v6860 = vmul.f32 %v6815, %v6854
        %v6861 = vmul.f32 %v6816, %v6850
        %v6862 = vmul.f32 %v6817, %v6854
        %v6863 = vmul.f32 %v6818, %v6850
        %v6864 = vmul.f32 %v6819, %v6854
        %v6865 = vmul.f32 %v6820, %v6850
        %v6866 = vmul.f32 %v6821, %v6854
        %v6867 = vmul.f32 %v6822, %v6850
        %v6868 = vmul.f32 %v6823, %v6854
        %v6869 = vmul.f32 %v6824, %v6850
        %v6870 = vmul.f32 %v6825, %v6854
        %v6871 = vmul.f32 %v6826, %v6850
        %v6872 = vmul.f32 %v6827, %v6854
        %v6873 = vmul.f32 %v6828, %v6850
        %v6874 = vmul.f32 %v6829, %v6854
        %v6875 = vmul.f32 %v6830, %v6850
        %v6876 = vmul.f32 %v6831, %v6854
        %v6877 = vmul.f32 %v6832, %v6850
        %v6878 = vmul.f32 %v6833, %v6854
        %v6879 = vmul.f32 %v6834, %v6850
        %v6880 = vmul.f32 %v6835, %v6854
        %v6881 = vmul.f32 %v6836, %v6850
        %v6882 = vmul.f32 %v6837, %v6854
        %v6883 = vmul.f32 %v6838, %v6850
        %v6884 = vmul.f32 %v6839, %v6854
        %v6885 = vmul.f32 %v6840, %v6850
        %v6886 = vmul.f32 %v6841, %v6854
        %v6887 = vmul.f32 %v6842, %v6850
        %v6888 = vmul.f32 %v6843, %v6854
        %v6921 = vrot.slane %v6857, 2
        %v6922 = vrot.slane %v6859, 2
        %v6923 = vsel %vm703, %v6921, %v6922
        %v6924 = vrot.slane %v6858, 2
        %v6925 = vrot.slane %v6860, 2
        %v6926 = vsel %vm703, %v6924, %v6925
        %v6927 = vrot.slane %v6861, 2
        %v6928 = vrot.slane %v6863, 2
        %v6929 = vsel %vm703, %v6927, %v6928
        %v6930 = vrot.slane %v6862, 2
        %v6931 = vrot.slane %v6864, 2
        %v6932 = vsel %vm703, %v6930, %v6931
        %v6933 = vrot.slane %v6865, 2
        %v6934 = vrot.slane %v6867, 2
        %v6935 = vsel %vm703, %v6933, %v6934
        %v6936 = vrot.slane %v6866, 2
        %v6937 = vrot.slane %v6868, 2
        %v6938 = vsel %vm703, %v6936, %v6937
        %v6939 = vrot.slane %v6869, 2
        %v6940 = vrot.slane %v6871, 2
        %v6941 = vsel %vm703, %v6939, %v6940
        %v6942 = vrot.slane %v6870, 2
        %v6943 = vrot.slane %v6872, 2
        %v6944 = vsel %vm703, %v6942, %v6943
        %v6945 = vrot.slane %v6873, 2
        %v6946 = vrot.slane %v6875, 2
        %v6947 = vsel %vm703, %v6945, %v6946
        %v6948 = vrot.slane %v6874, 2
        %v6949 = vrot.slane %v6876, 2
        %v6950 = vsel %vm703, %v6948, %v6949
        %v6951 = vrot.slane %v6877, 2
        %v6952 = vrot.slane %v6879, 2
        %v6953 = vsel %vm703, %v6951, %v6952
        %v6954 = vrot.slane %v6878, 2
        %v6955 = vrot.slane %v6880, 2
        %v6956 = vsel %vm703, %v6954, %v6955
        %v6957 = vrot.slane %v6881, 2
        %v6958 = vrot.slane %v6883, 2
        %v6959 = vsel %vm703, %v6957, %v6958
        %v6960 = vrot.slane %v6882, 2
        %v6961 = vrot.slane %v6884, 2
        %v6962 = vsel %vm703, %v6960, %v6961
        %v6963 = vrot.slane %v6885, 2
        %v6964 = vrot.slane %v6887, 2
        %v6965 = vsel %vm703, %v6963, %v6964
        %v6966 = vrot.slane %v6886, 2
        %v6967 = vrot.slane %v6888, 2
        %v6968 = vsel %vm703, %v6966, %v6967
        %v6985 = vadd.f32 %v6796, %v6923
        %v6986 = vadd.f32 %v6797, %v6926
        %v6987 = vadd.f32 %v6798, %v6929
        %v6988 = vadd.f32 %v6799, %v6932
        %v6989 = vadd.f32 %v6800, %v6935
        %v6990 = vadd.f32 %v6801, %v6938
        %v6991 = vadd.f32 %v6802, %v6941
        %v6992 = vadd.f32 %v6803, %v6944
        %v6993 = vadd.f32 %v6804, %v6947
        %v6994 = vadd.f32 %v6805, %v6950
        %v6995 = vadd.f32 %v6806, %v6953
        %v6996 = vadd.f32 %v6807, %v6956
        %v6997 = vadd.f32 %v6808, %v6959
        %v6998 = vadd.f32 %v6809, %v6962
        %v6999 = vadd.f32 %v6810, %v6965
        %v7000 = vadd.f32 %v6811, %v6968
        %v7001 = vpack.c.bf16 %v6987, %v6985
        %v7002 = vpack.c.bf16 %v6988, %v6986
        %v7003 = vpack.c.bf16 %v6991, %v6989
        %v7004 = vpack.c.bf16 %v6992, %v6990
        %v7005 = vpack.c.bf16 %v6995, %v6993
        %v7006 = vpack.c.bf16 %v6996, %v6994
        %v7007 = vpack.c.bf16 %v6999, %v6997
        %v7008 = vpack.c.bf16 %v7000, %v6998
        %s7009 = scalar_lea.vmem %s2, 768
        %v7010 = vld [vmem:[%s7009] sm:$0xff]
        %v7011 = vld [vmem:[%s7009 + $0x8] sm:$0xff]
        %v7012 = vld [vmem:[%s7009 + $0x10] sm:$0xff]
        %v7013 = vld [vmem:[%s7009 + $0x18] sm:$0xff]
        %v7014 = vld [vmem:[%s7009 + $0x20] sm:$0xff]
        %v7015 = vld [vmem:[%s7009 + $0x28] sm:$0xff]
        %v7016 = vld [vmem:[%s7009 + $0x30] sm:$0xff]
        %v7017 = vld [vmem:[%s7009 + $0x38] sm:$0xff]
        %v7018 = vld [vmem:[%s7009 + $0x40] sm:$0xff]
        %v7019 = vld [vmem:[%s7009 + $0x48] sm:$0xff]
        %v7020 = vld [vmem:[%s7009 + $0x50] sm:$0xff]
        %v7021 = vld [vmem:[%s7009 + $0x58] sm:$0xff]
        %v7022 = vld [vmem:[%s7009 + $0x60] sm:$0xff]
        %v7023 = vld [vmem:[%s7009 + $0x68] sm:$0xff]
        %v7024 = vld [vmem:[%s7009 + $0x70] sm:$0xff]
        %v7025 = vld [vmem:[%s7009 + $0x78] sm:$0xff]
        %v7026 = vld [vmem:[%s7009 + $0x80] sm:$0xff]
        %v7027 = vld [vmem:[%s7009 + $0x88] sm:$0xff]
        %v7028 = vld [vmem:[%s7009 + $0x90] sm:$0xff]
        %v7029 = vld [vmem:[%s7009 + $0x98] sm:$0xff]
        %v7030 = vld [vmem:[%s7009 + $0xa0] sm:$0xff]
        %v7031 = vld [vmem:[%s7009 + $0xa8] sm:$0xff]
        %v7032 = vld [vmem:[%s7009 + $0xb0] sm:$0xff]
        %v7033 = vld [vmem:[%s7009 + $0xb8] sm:$0xff]
        %v7034 = vld [vmem:[%s7009 + $0xc0] sm:$0xff]
        %v7035 = vld [vmem:[%s7009 + $0xc8] sm:$0xff]
        %v7036 = vld [vmem:[%s7009 + $0xd0] sm:$0xff]
        %v7037 = vld [vmem:[%s7009 + $0xd8] sm:$0xff]
        %v7038 = vld [vmem:[%s7009 + $0xe0] sm:$0xff]
        %v7039 = vld [vmem:[%s7009 + $0xe8] sm:$0xff]
        %v7040 = vld [vmem:[%s7009 + $0xf0] sm:$0xff]
        %v7041 = vld [vmem:[%s7009 + $0xf8] sm:$0xff]
        %s7042 = scalar_lea.vmem %s3, 6
        %v7043 = vld [vmem:[%s7042] sm:$0x3]
        %v7045 = vlaneseq
        %v7046 = vshrl.u32 %v7045, 7
        %v7047 = vsub.s32 0, %v7046
        %v7048 = vrot.slane %v7043, %v7047
        %v7049 = vlaneseq
        %v7050 = vshrl.u32 %v7049, 7
        %v7051 = vsub.s32 1, %v7050
        %v7052 = vrot.slane %v7043, %v7051
        %v7087 = vunpack.c.l.b16 %v7010
        %v7088 = vunpack.c.h.b16 %v7010
        %v7089 = vunpack.c.l.b16 %v7011
        %v7090 = vunpack.c.h.b16 %v7011
        %v7091 = vunpack.c.l.b16 %v7012
        %v7092 = vunpack.c.h.b16 %v7012
        %v7093 = vunpack.c.l.b16 %v7013
        %v7094 = vunpack.c.h.b16 %v7013
        %v7095 = vunpack.c.l.b16 %v7014
        %v7096 = vunpack.c.h.b16 %v7014
        %v7097 = vunpack.c.l.b16 %v7015
        %v7098 = vunpack.c.h.b16 %v7015
        %v7099 = vunpack.c.l.b16 %v7016
        %v7100 = vunpack.c.h.b16 %v7016
        %v7101 = vunpack.c.l.b16 %v7017
        %v7102 = vunpack.c.h.b16 %v7017
        %v7103 = vunpack.c.l.b16 %v7018
        %v7104 = vunpack.c.h.b16 %v7018
        %v7105 = vunpack.c.l.b16 %v7019
        %v7106 = vunpack.c.h.b16 %v7019
        %v7107 = vunpack.c.l.b16 %v7020
        %v7108 = vunpack.c.h.b16 %v7020
        %v7109 = vunpack.c.l.b16 %v7021
        %v7110 = vunpack.c.h.b16 %v7021
        %v7111 = vunpack.c.l.b16 %v7022
        %v7112 = vunpack.c.h.b16 %v7022
        %v7113 = vunpack.c.l.b16 %v7023
        %v7114 = vunpack.c.h.b16 %v7023
        %v7115 = vunpack.c.l.b16 %v7024
        %v7116 = vunpack.c.h.b16 %v7024
        %v7117 = vunpack.c.l.b16 %v7025
        %v7118 = vunpack.c.h.b16 %v7025
        %v7119 = vunpack.c.l.b16 %v7026
        %v7120 = vunpack.c.h.b16 %v7026
        %v7121 = vunpack.c.l.b16 %v7027
        %v7122 = vunpack.c.h.b16 %v7027
        %v7123 = vunpack.c.l.b16 %v7028
        %v7124 = vunpack.c.h.b16 %v7028
        %v7125 = vunpack.c.l.b16 %v7029
        %v7126 = vunpack.c.h.b16 %v7029
        %v7127 = vunpack.c.l.b16 %v7030
        %v7128 = vunpack.c.h.b16 %v7030
        %v7129 = vunpack.c.l.b16 %v7031
        %v7130 = vunpack.c.h.b16 %v7031
        %v7131 = vunpack.c.l.b16 %v7032
        %v7132 = vunpack.c.h.b16 %v7032
        %v7133 = vunpack.c.l.b16 %v7033
        %v7134 = vunpack.c.h.b16 %v7033
        %v7135 = vunpack.c.l.b16 %v7034
        %v7136 = vunpack.c.h.b16 %v7034
        %v7137 = vunpack.c.l.b16 %v7035
        %v7138 = vunpack.c.h.b16 %v7035
        %v7139 = vunpack.c.l.b16 %v7036
        %v7140 = vunpack.c.h.b16 %v7036
        %v7141 = vunpack.c.l.b16 %v7037
        %v7142 = vunpack.c.h.b16 %v7037
        %v7143 = vunpack.c.l.b16 %v7038
        %v7144 = vunpack.c.h.b16 %v7038
        %v7145 = vunpack.c.l.b16 %v7039
        %v7146 = vunpack.c.h.b16 %v7039
        %v7147 = vunpack.c.l.b16 %v7040
        %v7148 = vunpack.c.h.b16 %v7040
        %v7149 = vunpack.c.l.b16 %v7041
        %v7150 = vunpack.c.h.b16 %v7041
        %v7151 = vpack.c.b16 %v7089, %v7087
        %v7152 = vpack.c.b16 %v7090, %v7088
        %v7153 = vpack.c.b16 %v7093, %v7091
        %v7154 = vpack.c.b16 %v7094, %v7092
        %v7155 = vpack.c.b16 %v7097, %v7095
        %v7156 = vpack.c.b16 %v7098, %v7096
        %v7157 = vpack.c.b16 %v7101, %v7099
        %v7158 = vpack.c.b16 %v7102, %v7100
        %v7159 = vpack.c.b16 %v7105, %v7103
        %v7160 = vpack.c.b16 %v7106, %v7104
        %v7161 = vpack.c.b16 %v7109, %v7107
        %v7162 = vpack.c.b16 %v7110, %v7108
        %v7163 = vpack.c.b16 %v7113, %v7111
        %v7164 = vpack.c.b16 %v7114, %v7112
        %v7165 = vpack.c.b16 %v7117, %v7115
        %v7166 = vpack.c.b16 %v7118, %v7116
        %v7167 = vpack.c.b16 %v7121, %v7119
        %v7168 = vpack.c.b16 %v7122, %v7120
        %v7169 = vpack.c.b16 %v7125, %v7123
        %v7170 = vpack.c.b16 %v7126, %v7124
        %v7171 = vpack.c.b16 %v7129, %v7127
        %v7172 = vpack.c.b16 %v7130, %v7128
        %v7173 = vpack.c.b16 %v7133, %v7131
        %v7174 = vpack.c.b16 %v7134, %v7132
        %v7175 = vpack.c.b16 %v7137, %v7135
        %v7176 = vpack.c.b16 %v7138, %v7136
        %v7177 = vpack.c.b16 %v7141, %v7139
        %v7178 = vpack.c.b16 %v7142, %v7140
        %v7179 = vpack.c.b16 %v7145, %v7143
        %v7180 = vpack.c.b16 %v7146, %v7144
        %v7181 = vpack.c.b16 %v7149, %v7147
        %v7182 = vpack.c.b16 %v7150, %v7148
        %7215 = vmatprep.subr.bf16.mxu0 %v7152
        %7216 = vmatpush1.bf16.msra.mxu0 %v7151
        %7217 = vmatprep.subr.bf16.mxu0 %v7154
        %7218 = vmatpush1.bf16.msra.mxu0 %v7153
        %7219 = vmatprep.subr.bf16.mxu0 %v7156
        %7220 = vmatpush1.bf16.msra.mxu0 %v7155
        %7221 = vmatprep.subr.bf16.mxu0 %v7158
        %7222 = vmatpush1.bf16.msra.mxu0 %v7157
        %7223 = vmatprep.subr.bf16.mxu0 %v7160
        %7224 = vmatpush1.bf16.msra.mxu0 %v7159
        %7225 = vmatprep.subr.bf16.mxu0 %v7162
        %7226 = vmatpush1.bf16.msra.mxu0 %v7161
        %7227 = vmatprep.subr.bf16.mxu0 %v7164
        %7228 = vmatpush1.bf16.msra.mxu0 %v7163
        %7229 = vmatprep.subr.bf16.mxu0 %v7166
        %7230 = vmatpush1.bf16.msra.mxu0 %v7165
        %7231 = vmatprep.subr.bf16.mxu0 %v7168
        %7232 = vmatpush1.bf16.msra.mxu0 %v7167
        %7233 = vmatprep.subr.bf16.mxu0 %v7170
        %7234 = vmatpush1.bf16.msra.mxu0 %v7169
        %7235 = vmatprep.subr.bf16.mxu0 %v7172
        %7236 = vmatpush1.bf16.msra.mxu0 %v7171
        %7237 = vmatprep.subr.bf16.mxu0 %v7174
        %7238 = vmatpush1.bf16.msra.mxu0 %v7173
        %7239 = vmatprep.subr.bf16.mxu0 %v7176
        %7240 = vmatpush1.bf16.msra.mxu0 %v7175
        %7241 = vmatprep.subr.bf16.mxu0 %v7178
        %7242 = vmatpush1.bf16.msra.mxu0 %v7177
        %7243 = vmatprep.subr.bf16.mxu0 %v7180
        %7244 = vmatpush1.bf16.msra.mxu0 %v7179
        %7245 = vmatprep.subr.bf16.mxu0 %v7182
        %7246 = vmatpush1.bf16.msra.mxu0 %v7181
        %7247 = vmatprep.mubr.bf16.mxu0 %v7002
        %7248 = vmatmul.mubr.bf16.gmra.mrb[0].mxu0 %v7001
        %v7249 = vpop.f32.mrb[0].mxu0
        %v7250 = vadd.f32 %v7048, %v7249
        %v7251 = vpop.f32.mrb[0].mxu0
        %v7252 = vadd.f32 %v7052, %v7251
        %v7253 = vpop.f32.mrb[0].mxu0
        %v7254 = vadd.f32 %v7048, %v7253
        %v7255 = vpop.f32.mrb[0].mxu0
        %v7256 = vadd.f32 %v7052, %v7255
        %7257 = vmatprep.mubr.bf16.mxu0 %v7004
        %7258 = vmatmul.mubr.bf16.gmra.mrb[0].mxu0 %v7003
        %v7259 = vpop.f32.mrb[0].mxu0
        %v7260 = vadd.f32 %v7048, %v7259
        %v7261 = vpop.f32.mrb[0].mxu0
        %v7262 = vadd.f32 %v7052, %v7261
        %v7263 = vpop.f32.mrb[0].mxu0
        %v7264 = vadd.f32 %v7048, %v7263
        %v7265 = vpop.f32.mrb[0].mxu0
        %v7266 = vadd.f32 %v7052, %v7265
        %7267 = vmatprep.mubr.bf16.mxu0 %v7006
        %7268 = vmatmul.mubr.bf16.gmra.mrb[0].mxu0 %v7005
        %v7269 = vpop.f32.mrb[0].mxu0
        %v7270 = vadd.f32 %v7048, %v7269
        %v7271 = vpop.f32.mrb[0].mxu0
        %v7272 = vadd.f32 %v7052, %v7271
        %v7273 = vpop.f32.mrb[0].mxu0
        %v7274 = vadd.f32 %v7048, %v7273
        %v7275 = vpop.f32.mrb[0].mxu0
        %v7276 = vadd.f32 %v7052, %v7275
        %7277 = vmatprep.mubr.bf16.mxu0 %v7008
        %7278 = vmatmul.mubr.bf16.gmra.mrb[0].mxu0 %v7007
        %v7279 = vpop.f32.mrb[0].mxu0
        %v7280 = vadd.f32 %v7048, %v7279
        %v7281 = vpop.f32.mrb[0].mxu0
        %v7282 = vadd.f32 %v7052, %v7281
        %v7283 = vpop.f32.mrb[0].mxu0
        %v7284 = vadd.f32 %v7048, %v7283
        %v7285 = vpop.f32.mrb[0].mxu0
        %v7286 = vadd.f32 %v7052, %v7285
        %7287 = vdwg.mxu0
        %v7288 = vxor.u32 %v7250, 2147483648
        %v7289 = vxor.u32 %v7252, 2147483648
        %v7290 = vxor.u32 %v7254, 2147483648
        %v7291 = vxor.u32 %v7256, 2147483648
        %v7292 = vxor.u32 %v7260, 2147483648
        %v7293 = vxor.u32 %v7262, 2147483648
        %v7294 = vxor.u32 %v7264, 2147483648
        %v7295 = vxor.u32 %v7266, 2147483648
        %v7296 = vxor.u32 %v7270, 2147483648
        %v7297 = vxor.u32 %v7272, 2147483648
        %v7298 = vxor.u32 %v7274, 2147483648
        %v7299 = vxor.u32 %v7276, 2147483648
        %v7300 = vxor.u32 %v7280, 2147483648
        %v7301 = vxor.u32 %v7282, 2147483648
        %v7302 = vxor.u32 %v7284, 2147483648
        %v7303 = vxor.u32 %v7286, 2147483648
        %v7304 = vmul.f32 %v7288, 1.442695
        %v7305 = vpow.pop %v7304
        %v7306 = vmul.f32 %v7289, 1.442695
        %v7307 = vpow.pop %v7306
        %v7308 = vmul.f32 %v7290, 1.442695
        %v7309 = vpow.pop %v7308
        %v7310 = vmul.f32 %v7291, 1.442695
        %v7311 = vpow.pop %v7310
        %v7312 = vmul.f32 %v7292, 1.442695
        %v7313 = vpow.pop %v7312
        %v7314 = vmul.f32 %v7293, 1.442695
        %v7315 = vpow.pop %v7314
        %v7316 = vmul.f32 %v7294, 1.442695
        %v7317 = vpow.pop %v7316
        %v7318 = vmul.f32 %v7295, 1.442695
        %v7319 = vpow.pop %v7318
        %v7320 = vmul.f32 %v7296, 1.442695
        %v7321 = vpow.pop %v7320
        %v7322 = vmul.f32 %v7297, 1.442695
        %v7323 = vpow.pop %v7322
        %v7324 = vmul.f32 %v7298, 1.442695
        %v7325 = vpow.pop %v7324
        %v7326 = vmul.f32 %v7299, 1.442695
        %v7327 = vpow.pop %v7326
        %v7328 = vmul.f32 %v7300, 1.442695
        %v7329 = vpow.pop %v7328
        %v7330 = vmul.f32 %v7301, 1.442695
        %v7331 = vpow.pop %v7330
        %v7332 = vmul.f32 %v7302, 1.442695
        %v7333 = vpow.pop %v7332
        %v7334 = vmul.f32 %v7303, 1.442695
        %v7335 = vpow.pop %v7334
        %v7336 = vadd.f32 %v7305, 1.0
        %v7337 = vadd.f32 %v7307, 1.0
        %v7338 = vadd.f32 %v7309, 1.0
        %v7339 = vadd.f32 %v7311, 1.0
        %v7340 = vadd.f32 %v7313, 1.0
        %v7341 = vadd.f32 %v7315, 1.0
        %v7342 = vadd.f32 %v7317, 1.0
        %v7343 = vadd.f32 %v7319, 1.0
        %v7344 = vadd.f32 %v7321, 1.0
        %v7345 = vadd.f32 %v7323, 1.0
        %v7346 = vadd.f32 %v7325, 1.0
        %v7347 = vadd.f32 %v7327, 1.0
        %v7348 = vadd.f32 %v7329, 1.0
        %v7349 = vadd.f32 %v7331, 1.0
        %v7350 = vadd.f32 %v7333, 1.0
        %v7351 = vadd.f32 %v7335, 1.0
        %v7352 = vrcp.pop %v7336
        %v7353 = vmul.f32 1.0, %v7352
        %v7354 = vrcp.pop %v7337
        %v7355 = vmul.f32 1.0, %v7354
        %v7356 = vrcp.pop %v7338
        %v7357 = vmul.f32 1.0, %v7356
        %v7358 = vrcp.pop %v7339
        %v7359 = vmul.f32 1.0, %v7358
        %v7360 = vrcp.pop %v7340
        %v7361 = vmul.f32 1.0, %v7360
        %v7362 = vrcp.pop %v7341
        %v7363 = vmul.f32 1.0, %v7362
        %v7364 = vrcp.pop %v7342
        %v7365 = vmul.f32 1.0, %v7364
        %v7366 = vrcp.pop %v7343
        %v7367 = vmul.f32 1.0, %v7366
        %v7368 = vrcp.pop %v7344
        %v7369 = vmul.f32 1.0, %v7368
        %v7370 = vrcp.pop %v7345
        %v7371 = vmul.f32 1.0, %v7370
        %v7372 = vrcp.pop %v7346
        %v7373 = vmul.f32 1.0, %v7372
        %v7374 = vrcp.pop %v7347
        %v7375 = vmul.f32 1.0, %v7374
        %v7376 = vrcp.pop %v7348
        %v7377 = vmul.f32 1.0, %v7376
        %v7378 = vrcp.pop %v7349
        %v7379 = vmul.f32 1.0, %v7378
        %v7380 = vrcp.pop %v7350
        %v7381 = vmul.f32 1.0, %v7380
        %v7382 = vrcp.pop %v7351
        %v7383 = vmul.f32 1.0, %v7382
        %v7384 = vmul.f32 %v7250, %v7353
        %v7385 = vmul.f32 %v7252, %v7355
        %v7386 = vmul.f32 %v7254, %v7357
        %v7387 = vmul.f32 %v7256, %v7359
        %v7388 = vmul.f32 %v7260, %v7361
        %v7389 = vmul.f32 %v7262, %v7363
        %v7390 = vmul.f32 %v7264, %v7365
        %v7391 = vmul.f32 %v7266, %v7367
        %v7392 = vmul.f32 %v7270, %v7369
        %v7393 = vmul.f32 %v7272, %v7371
        %v7394 = vmul.f32 %v7274, %v7373
        %v7395 = vmul.f32 %v7276, %v7375
        %v7396 = vmul.f32 %v7280, %v7377
        %v7397 = vmul.f32 %v7282, %v7379
        %v7398 = vmul.f32 %v7284, %v7381
        %v7399 = vmul.f32 %v7286, %v7383
        %v7416 = vrot.slane %v7384, 7
        %v7417 = vrot.slane %v7385, 7
        %v7418 = vrot.slane %v7386, 7
        %v7419 = vrot.slane %v7387, 7
        %v7420 = vrot.slane %v7388, 7
        %v7421 = vrot.slane %v7389, 7
        %v7422 = vrot.slane %v7390, 7
        %v7423 = vrot.slane %v7391, 7
        %v7424 = vrot.slane %v7392, 7
        %v7425 = vrot.slane %v7393, 7
        %v7426 = vrot.slane %v7394, 7
        %v7427 = vrot.slane %v7395, 7
        %v7428 = vrot.slane %v7396, 7
        %v7429 = vrot.slane %v7397, 7
        %v7430 = vrot.slane %v7398, 7
        %v7431 = vrot.slane %v7399, 7
        %7448 = vst [vmem:[%s327] sm:$0xfe] %v7416
        %7449 = vst [vmem:[%s327 + $0x8] sm:$0xfe] %v7417
        %7450 = vst [vmem:[%s327 + $0x10] sm:$0x1] %v7416
        %7451 = vst [vmem:[%s327 + $0x18] sm:$0x1] %v7417
        %7452 = vst [vmem:[%s327 + $0x20] sm:$0xfe] %v7418
        %7453 = vst [vmem:[%s327 + $0x28] sm:$0xfe] %v7419
        %7454 = vst [vmem:[%s327 + $0x30] sm:$0x1] %v7418
        %7455 = vst [vmem:[%s327 + $0x38] sm:$0x1] %v7419
        %7456 = vst [vmem:[%s327 + $0x40] sm:$0xfe] %v7420
        %7457 = vst [vmem:[%s327 + $0x48] sm:$0xfe] %v7421
        %7458 = vst [vmem:[%s327 + $0x50] sm:$0x1] %v7420
        %7459 = vst [vmem:[%s327 + $0x58] sm:$0x1] %v7421
        %7460 = vst [vmem:[%s327 + $0x60] sm:$0xfe] %v7422
        %7461 = vst [vmem:[%s327 + $0x68] sm:$0xfe] %v7423
        %7462 = vst [vmem:[%s327 + $0x70] sm:$0x1] %v7422
        %7463 = vst [vmem:[%s327 + $0x78] sm:$0x1] %v7423
        %7464 = vst [vmem:[%s327 + $0x80] sm:$0xfe] %v7424
        %7465 = vst [vmem:[%s327 + $0x88] sm:$0xfe] %v7425
        %7466 = vst [vmem:[%s327 + $0x90] sm:$0x1] %v7424
        %7467 = vst [vmem:[%s327 + $0x98] sm:$0x1] %v7425
        %7468 = vst [vmem:[%s327 + $0xa0] sm:$0xfe] %v7426
        %7469 = vst [vmem:[%s327 + $0xa8] sm:$0xfe] %v7427
        %7470 = vst [vmem:[%s327 + $0xb0] sm:$0x1] %v7426
        %7471 = vst [vmem:[%s327 + $0xb8] sm:$0x1] %v7427
        %7472 = vst [vmem:[%s327 + $0xc0] sm:$0xfe] %v7428
        %7473 = vst [vmem:[%s327 + $0xc8] sm:$0xfe] %v7429
        %7474 = vst [vmem:[%s327 + $0xd0] sm:$0x1] %v7428
        %7475 = vst [vmem:[%s327 + $0xd8] sm:$0x1] %v7429
        %7476 = vst [vmem:[%s327 + $0xe0] sm:$0xfe] %v7430
        %7477 = vst [vmem:[%s327 + $0xe8] sm:$0xfe] %v7431
        %7478 = vst [vmem:[%s327 + $0xf0] sm:$0x1] %v7430
        %7479 = vst [vmem:[%s327 + $0xf8] sm:$0x1] %v7431
        %v7480 = vld [vmem:[#allocation2] sm:$0xff]
        %v7481 = vld [vmem:[#allocation2 + $0x8] sm:$0xff]
        %v7482 = vld [vmem:[#allocation2 + $0x20] sm:$0xff]
        %v7483 = vld [vmem:[#allocation2 + $0x28] sm:$0xff]
        %v7484 = vld [vmem:[#allocation2 + $0x40] sm:$0xff]
        %v7485 = vld [vmem:[#allocation2 + $0x48] sm:$0xff]
        %v7486 = vld [vmem:[#allocation2 + $0x60] sm:$0xff]
        %v7487 = vld [vmem:[#allocation2 + $0x68] sm:$0xff]
        %v7488 = vld [vmem:[#allocation2 + $0x80] sm:$0xff]
        %v7489 = vld [vmem:[#allocation2 + $0x88] sm:$0xff]
        %v7490 = vld [vmem:[#allocation2 + $0xa0] sm:$0xff]
        %v7491 = vld [vmem:[#allocation2 + $0xa8] sm:$0xff]
        %v7492 = vld [vmem:[#allocation2 + $0xc0] sm:$0xff]
        %v7493 = vld [vmem:[#allocation2 + $0xc8] sm:$0xff]
        %v7494 = vld [vmem:[#allocation2 + $0xe0] sm:$0xff]
        %v7495 = vld [vmem:[#allocation2 + $0xe8] sm:$0xff]
        %s7496 = scalar_lea.vmem %s1, 128
        %v7497 = vld [vmem:[%s7496] ss:$8 sm:$0x3]
        %v7499 = vlaneseq
        %v7500 = vshrl.u32 %v7499, 7
        %v7501 = vsub.s32 0, %v7500
        %v7502 = vrot.slane %v7497, %v7501
        %v7503 = vlaneseq
        %v7504 = vshrl.u32 %v7503, 7
        %v7505 = vsub.s32 1, %v7504
        %v7506 = vrot.slane %v7497, %v7505
        %v7509 = vmul.f32 %v7480, %v7502
        %v7510 = vmul.f32 %v7481, %v7506
        %v7511 = vmul.f32 %v7482, %v7502
        %v7512 = vmul.f32 %v7483, %v7506
        %v7513 = vmul.f32 %v7484, %v7502
        %v7514 = vmul.f32 %v7485, %v7506
        %v7515 = vmul.f32 %v7486, %v7502
        %v7516 = vmul.f32 %v7487, %v7506
        %v7517 = vmul.f32 %v7488, %v7502
        %v7518 = vmul.f32 %v7489, %v7506
        %v7519 = vmul.f32 %v7490, %v7502
        %v7520 = vmul.f32 %v7491, %v7506
        %v7521 = vmul.f32 %v7492, %v7502
        %v7522 = vmul.f32 %v7493, %v7506
        %v7523 = vmul.f32 %v7494, %v7502
        %v7524 = vmul.f32 %v7495, %v7506
        %v7525 = vld [vmem:[#allocation2] sm:$0xfe]
        %v7526 = vld [vmem:[#allocation2 + $0x8] sm:$0xfe]
        %v7527 = vld [vmem:[#allocation2 + $0x10] sm:$0x1]
        %v7528 = vld [vmem:[#allocation2 + $0x18] sm:$0x1]
        %v7529 = vld [vmem:[#allocation2 + $0x20] sm:$0xfe]
        %v7530 = vld [vmem:[#allocation2 + $0x28] sm:$0xfe]
        %v7531 = vld [vmem:[#allocation2 + $0x30] sm:$0x1]
        %v7532 = vld [vmem:[#allocation2 + $0x38] sm:$0x1]
        %v7533 = vld [vmem:[#allocation2 + $0x40] sm:$0xfe]
        %v7534 = vld [vmem:[#allocation2 + $0x48] sm:$0xfe]
        %v7535 = vld [vmem:[#allocation2 + $0x50] sm:$0x1]
        %v7536 = vld [vmem:[#allocation2 + $0x58] sm:$0x1]
        %v7537 = vld [vmem:[#allocation2 + $0x60] sm:$0xfe]
        %v7538 = vld [vmem:[#allocation2 + $0x68] sm:$0xfe]
        %v7539 = vld [vmem:[#allocation2 + $0x70] sm:$0x1]
        %v7540 = vld [vmem:[#allocation2 + $0x78] sm:$0x1]
        %v7541 = vld [vmem:[#allocation2 + $0x80] sm:$0xfe]
        %v7542 = vld [vmem:[#allocation2 + $0x88] sm:$0xfe]
        %v7543 = vld [vmem:[#allocation2 + $0x90] sm:$0x1]
        %v7544 = vld [vmem:[#allocation2 + $0x98] sm:$0x1]
        %v7545 = vld [vmem:[#allocation2 + $0xa0] sm:$0xfe]
        %v7546 = vld [vmem:[#allocation2 + $0xa8] sm:$0xfe]
        %v7547 = vld [vmem:[#allocation2 + $0xb0] sm:$0x1]
        %v7548 = vld [vmem:[#allocation2 + $0xb8] sm:$0x1]
        %v7549 = vld [vmem:[#allocation2 + $0xc0] sm:$0xfe]
        %v7550 = vld [vmem:[#allocation2 + $0xc8] sm:$0xfe]
        %v7551 = vld [vmem:[#allocation2 + $0xd0] sm:$0x1]
        %v7552 = vld [vmem:[#allocation2 + $0xd8] sm:$0x1]
        %v7553 = vld [vmem:[#allocation2 + $0xe0] sm:$0xfe]
        %v7554 = vld [vmem:[#allocation2 + $0xe8] sm:$0xfe]
        %v7555 = vld [vmem:[#allocation2 + $0xf0] sm:$0x1]
        %v7556 = vld [vmem:[#allocation2 + $0xf8] sm:$0x1]
        %s7557 = scalar_lea.vmem %s7496, 1
        %v7558 = vld [vmem:[%s7557] ss:$8 sm:$0x3]
        %v7560 = vlaneseq
        %v7561 = vshrl.u32 %v7560, 7
        %v7562 = vsub.s32 0, %v7561
        %v7563 = vrot.slane %v7558, %v7562
        %v7564 = vlaneseq
        %v7565 = vshrl.u32 %v7564, 7
        %v7566 = vsub.s32 1, %v7565
        %v7567 = vrot.slane %v7558, %v7566
        %v7570 = vmul.f32 %v7525, %v7563
        %v7571 = vmul.f32 %v7526, %v7567
        %v7572 = vmul.f32 %v7527, %v7563
        %v7573 = vmul.f32 %v7528, %v7567
        %v7574 = vmul.f32 %v7529, %v7563
        %v7575 = vmul.f32 %v7530, %v7567
        %v7576 = vmul.f32 %v7531, %v7563
        %v7577 = vmul.f32 %v7532, %v7567
        %v7578 = vmul.f32 %v7533, %v7563
        %v7579 = vmul.f32 %v7534, %v7567
        %v7580 = vmul.f32 %v7535, %v7563
        %v7581 = vmul.f32 %v7536, %v7567
        %v7582 = vmul.f32 %v7537, %v7563
        %v7583 = vmul.f32 %v7538, %v7567
        %v7584 = vmul.f32 %v7539, %v7563
        %v7585 = vmul.f32 %v7540, %v7567
        %v7586 = vmul.f32 %v7541, %v7563
        %v7587 = vmul.f32 %v7542, %v7567
        %v7588 = vmul.f32 %v7543, %v7563
        %v7589 = vmul.f32 %v7544, %v7567
        %v7590 = vmul.f32 %v7545, %v7563
        %v7591 = vmul.f32 %v7546, %v7567
        %v7592 = vmul.f32 %v7547, %v7563
        %v7593 = vmul.f32 %v7548, %v7567
        %v7594 = vmul.f32 %v7549, %v7563
        %v7595 = vmul.f32 %v7550, %v7567
        %v7596 = vmul.f32 %v7551, %v7563
        %v7597 = vmul.f32 %v7552, %v7567
        %v7598 = vmul.f32 %v7553, %v7563
        %v7599 = vmul.f32 %v7554, %v7567
        %v7600 = vmul.f32 %v7555, %v7563
        %v7601 = vmul.f32 %v7556, %v7567
        %v7634 = vrot.slane %v7570, 1
        %v7635 = vrot.slane %v7572, 1
        %v7636 = vsel %vm513, %v7634, %v7635
        %v7637 = vrot.slane %v7571, 1
        %v7638 = vrot.slane %v7573, 1
        %v7639 = vsel %vm513, %v7637, %v7638
        %v7640 = vrot.slane %v7574, 1
        %v7641 = vrot.slane %v7576, 1
        %v7642 = vsel %vm513, %v7640, %v7641
        %v7643 = vrot.slane %v7575, 1
        %v7644 = vrot.slane %v7577, 1
        %v7645 = vsel %vm513, %v7643, %v7644
        %v7646 = vrot.slane %v7578, 1
        %v7647 = vrot.slane %v7580, 1
        %v7648 = vsel %vm513, %v7646, %v7647
        %v7649 = vrot.slane %v7579, 1
        %v7650 = vrot.slane %v7581, 1
        %v7651 = vsel %vm513, %v7649, %v7650
        %v7652 = vrot.slane %v7582, 1
        %v7653 = vrot.slane %v7584, 1
        %v7654 = vsel %vm513, %v7652, %v7653
        %v7655 = vrot.slane %v7583, 1
        %v7656 = vrot.slane %v7585, 1
        %v7657 = vsel %vm513, %v7655, %v7656
        %v7658 = vrot.slane %v7586, 1
        %v7659 = vrot.slane %v7588, 1
        %v7660 = vsel %vm513, %v7658, %v7659
        %v7661 = vrot.slane %v7587, 1
        %v7662 = vrot.slane %v7589, 1
        %v7663 = vsel %vm513, %v7661, %v7662
        %v7664 = vrot.slane %v7590, 1
        %v7665 = vrot.slane %v7592, 1
        %v7666 = vsel %vm513, %v7664, %v7665
        %v7667 = vrot.slane %v7591, 1
        %v7668 = vrot.slane %v7593, 1
        %v7669 = vsel %vm513, %v7667, %v7668
        %v7670 = vrot.slane %v7594, 1
        %v7671 = vrot.slane %v7596, 1
        %v7672 = vsel %vm513, %v7670, %v7671
        %v7673 = vrot.slane %v7595, 1
        %v7674 = vrot.slane %v7597, 1
        %v7675 = vsel %vm513, %v7673, %v7674
        %v7676 = vrot.slane %v7598, 1
        %v7677 = vrot.slane %v7600, 1
        %v7678 = vsel %vm513, %v7676, %v7677
        %v7679 = vrot.slane %v7599, 1
        %v7680 = vrot.slane %v7601, 1
        %v7681 = vsel %vm513, %v7679, %v7680
        %v7698 = vadd.f32 %v7509, %v7636
        %v7699 = vadd.f32 %v7510, %v7639
        %v7700 = vadd.f32 %v7511, %v7642
        %v7701 = vadd.f32 %v7512, %v7645
        %v7702 = vadd.f32 %v7513, %v7648
        %v7703 = vadd.f32 %v7514, %v7651
        %v7704 = vadd.f32 %v7515, %v7654
        %v7705 = vadd.f32 %v7516, %v7657
        %v7706 = vadd.f32 %v7517, %v7660
        %v7707 = vadd.f32 %v7518, %v7663
        %v7708 = vadd.f32 %v7519, %v7666
        %v7709 = vadd.f32 %v7520, %v7669
        %v7710 = vadd.f32 %v7521, %v7672
        %v7711 = vadd.f32 %v7522, %v7675
        %v7712 = vadd.f32 %v7523, %v7678
        %v7713 = vadd.f32 %v7524, %v7681
        %v7714 = vld [vmem:[#allocation2] sm:$0xfc]
        %v7715 = vld [vmem:[#allocation2 + $0x8] sm:$0xfc]
        %v7716 = vld [vmem:[#allocation2 + $0x10] sm:$0x3]
        %v7717 = vld [vmem:[#allocation2 + $0x18] sm:$0x3]
        %v7718 = vld [vmem:[#allocation2 + $0x20] sm:$0xfc]
        %v7719 = vld [vmem:[#allocation2 + $0x28] sm:$0xfc]
        %v7720 = vld [vmem:[#allocation2 + $0x30] sm:$0x3]
        %v7721 = vld [vmem:[#allocation2 + $0x38] sm:$0x3]
        %v7722 = vld [vmem:[#allocation2 + $0x40] sm:$0xfc]
        %v7723 = vld [vmem:[#allocation2 + $0x48] sm:$0xfc]
        %v7724 = vld [vmem:[#allocation2 + $0x50] sm:$0x3]
        %v7725 = vld [vmem:[#allocation2 + $0x58] sm:$0x3]
        %v7726 = vld [vmem:[#allocation2 + $0x60] sm:$0xfc]
        %v7727 = vld [vmem:[#allocation2 + $0x68] sm:$0xfc]
        %v7728 = vld [vmem:[#allocation2 + $0x70] sm:$0x3]
        %v7729 = vld [vmem:[#allocation2 + $0x78] sm:$0x3]
        %v7730 = vld [vmem:[#allocation2 + $0x80] sm:$0xfc]
        %v7731 = vld [vmem:[#allocation2 + $0x88] sm:$0xfc]
        %v7732 = vld [vmem:[#allocation2 + $0x90] sm:$0x3]
        %v7733 = vld [vmem:[#allocation2 + $0x98] sm:$0x3]
        %v7734 = vld [vmem:[#allocation2 + $0xa0] sm:$0xfc]
        %v7735 = vld [vmem:[#allocation2 + $0xa8] sm:$0xfc]
        %v7736 = vld [vmem:[#allocation2 + $0xb0] sm:$0x3]
        %v7737 = vld [vmem:[#allocation2 + $0xb8] sm:$0x3]
        %v7738 = vld [vmem:[#allocation2 + $0xc0] sm:$0xfc]
        %v7739 = vld [vmem:[#allocation2 + $0xc8] sm:$0xfc]
        %v7740 = vld [vmem:[#allocation2 + $0xd0] sm:$0x3]
        %v7741 = vld [vmem:[#allocation2 + $0xd8] sm:$0x3]
        %v7742 = vld [vmem:[#allocation2 + $0xe0] sm:$0xfc]
        %v7743 = vld [vmem:[#allocation2 + $0xe8] sm:$0xfc]
        %v7744 = vld [vmem:[#allocation2 + $0xf0] sm:$0x3]
        %v7745 = vld [vmem:[#allocation2 + $0xf8] sm:$0x3]
        %s7746 = scalar_lea.vmem %s7496, 2
        %v7747 = vld [vmem:[%s7746] ss:$8 sm:$0x3]
        %v7749 = vlaneseq
        %v7750 = vshrl.u32 %v7749, 7
        %v7751 = vsub.s32 0, %v7750
        %v7752 = vrot.slane %v7747, %v7751
        %v7753 = vlaneseq
        %v7754 = vshrl.u32 %v7753, 7
        %v7755 = vsub.s32 1, %v7754
        %v7756 = vrot.slane %v7747, %v7755
        %v7759 = vmul.f32 %v7714, %v7752
        %v7760 = vmul.f32 %v7715, %v7756
        %v7761 = vmul.f32 %v7716, %v7752
        %v7762 = vmul.f32 %v7717, %v7756
        %v7763 = vmul.f32 %v7718, %v7752
        %v7764 = vmul.f32 %v7719, %v7756
        %v7765 = vmul.f32 %v7720, %v7752
        %v7766 = vmul.f32 %v7721, %v7756
        %v7767 = vmul.f32 %v7722, %v7752
        %v7768 = vmul.f32 %v7723, %v7756
        %v7769 = vmul.f32 %v7724, %v7752
        %v7770 = vmul.f32 %v7725, %v7756
        %v7771 = vmul.f32 %v7726, %v7752
        %v7772 = vmul.f32 %v7727, %v7756
        %v7773 = vmul.f32 %v7728, %v7752
        %v7774 = vmul.f32 %v7729, %v7756
        %v7775 = vmul.f32 %v7730, %v7752
        %v7776 = vmul.f32 %v7731, %v7756
        %v7777 = vmul.f32 %v7732, %v7752
        %v7778 = vmul.f32 %v7733, %v7756
        %v7779 = vmul.f32 %v7734, %v7752
        %v7780 = vmul.f32 %v7735, %v7756
        %v7781 = vmul.f32 %v7736, %v7752
        %v7782 = vmul.f32 %v7737, %v7756
        %v7783 = vmul.f32 %v7738, %v7752
        %v7784 = vmul.f32 %v7739, %v7756
        %v7785 = vmul.f32 %v7740, %v7752
        %v7786 = vmul.f32 %v7741, %v7756
        %v7787 = vmul.f32 %v7742, %v7752
        %v7788 = vmul.f32 %v7743, %v7756
        %v7789 = vmul.f32 %v7744, %v7752
        %v7790 = vmul.f32 %v7745, %v7756
        %v7823 = vrot.slane %v7759, 2
        %v7824 = vrot.slane %v7761, 2
        %v7825 = vsel %vm703, %v7823, %v7824
        %v7826 = vrot.slane %v7760, 2
        %v7827 = vrot.slane %v7762, 2
        %v7828 = vsel %vm703, %v7826, %v7827
        %v7829 = vrot.slane %v7763, 2
        %v7830 = vrot.slane %v7765, 2
        %v7831 = vsel %vm703, %v7829, %v7830
        %v7832 = vrot.slane %v7764, 2
        %v7833 = vrot.slane %v7766, 2
        %v7834 = vsel %vm703, %v7832, %v7833
        %v7835 = vrot.slane %v7767, 2
        %v7836 = vrot.slane %v7769, 2
        %v7837 = vsel %vm703, %v7835, %v7836
        %v7838 = vrot.slane %v7768, 2
        %v7839 = vrot.slane %v7770, 2
        %v7840 = vsel %vm703, %v7838, %v7839
        %v7841 = vrot.slane %v7771, 2
        %v7842 = vrot.slane %v7773, 2
        %v7843 = vsel %vm703, %v7841, %v7842
        %v7844 = vrot.slane %v7772, 2
        %v7845 = vrot.slane %v7774, 2
        %v7846 = vsel %vm703, %v7844, %v7845
        %v7847 = vrot.slane %v7775, 2
        %v7848 = vrot.slane %v7777, 2
        %v7849 = vsel %vm703, %v7847, %v7848
        %v7850 = vrot.slane %v7776, 2
        %v7851 = vrot.slane %v7778, 2
        %v7852 = vsel %vm703, %v7850, %v7851
        %v7853 = vrot.slane %v7779, 2
        %v7854 = vrot.slane %v7781, 2
        %v7855 = vsel %vm703, %v7853, %v7854
        %v7856 = vrot.slane %v7780, 2
        %v7857 = vrot.slane %v7782, 2
        %v7858 = vsel %vm703, %v7856, %v7857
        %v7859 = vrot.slane %v7783, 2
        %v7860 = vrot.slane %v7785, 2
        %v7861 = vsel %vm703, %v7859, %v7860
        %v7862 = vrot.slane %v7784, 2
        %v7863 = vrot.slane %v7786, 2
        %v7864 = vsel %vm703, %v7862, %v7863
        %v7865 = vrot.slane %v7787, 2
        %v7866 = vrot.slane %v7789, 2
        %v7867 = vsel %vm703, %v7865, %v7866
        %v7868 = vrot.slane %v7788, 2
        %v7869 = vrot.slane %v7790, 2
        %v7870 = vsel %vm703, %v7868, %v7869
        %v7887 = vadd.f32 %v7698, %v7825
        %v7888 = vadd.f32 %v7699, %v7828
        %v7889 = vadd.f32 %v7700, %v7831
        %v7890 = vadd.f32 %v7701, %v7834
        %v7891 = vadd.f32 %v7702, %v7837
        %v7892 = vadd.f32 %v7703, %v7840
        %v7893 = vadd.f32 %v7704, %v7843
        %v7894 = vadd.f32 %v7705, %v7846
        %v7895 = vadd.f32 %v7706, %v7849
        %v7896 = vadd.f32 %v7707, %v7852
        %v7897 = vadd.f32 %v7708, %v7855
        %v7898 = vadd.f32 %v7709, %v7858
        %v7899 = vadd.f32 %v7710, %v7861
        %v7900 = vadd.f32 %v7711, %v7864
        %v7901 = vadd.f32 %v7712, %v7867
        %v7902 = vadd.f32 %v7713, %v7870
        %v7903 = vld [vmem:[%s327] sm:$0xff]
        %v7904 = vld [vmem:[%s327 + $0x8] sm:$0xff]
        %v7905 = vld [vmem:[%s327 + $0x20] sm:$0xff]
        %v7906 = vld [vmem:[%s327 + $0x28] sm:$0xff]
        %v7907 = vld [vmem:[%s327 + $0x40] sm:$0xff]
        %v7908 = vld [vmem:[%s327 + $0x48] sm:$0xff]
        %v7909 = vld [vmem:[%s327 + $0x60] sm:$0xff]
        %v7910 = vld [vmem:[%s327 + $0x68] sm:$0xff]
        %v7911 = vld [vmem:[%s327 + $0x80] sm:$0xff]
        %v7912 = vld [vmem:[%s327 + $0x88] sm:$0xff]
        %v7913 = vld [vmem:[%s327 + $0xa0] sm:$0xff]
        %v7914 = vld [vmem:[%s327 + $0xa8] sm:$0xff]
        %v7915 = vld [vmem:[%s327 + $0xc0] sm:$0xff]
        %v7916 = vld [vmem:[%s327 + $0xc8] sm:$0xff]
        %v7917 = vld [vmem:[%s327 + $0xe0] sm:$0xff]
        %v7918 = vld [vmem:[%s327 + $0xe8] sm:$0xff]
        %s7919 = scalar_lea.vmem %s7496, 3
        %v7920 = vld [vmem:[%s7919] ss:$8 sm:$0x3]
        %v7922 = vlaneseq
        %v7923 = vshrl.u32 %v7922, 7
        %v7924 = vsub.s32 0, %v7923
        %v7925 = vrot.slane %v7920, %v7924
        %v7926 = vlaneseq
        %v7927 = vshrl.u32 %v7926, 7
        %v7928 = vsub.s32 1, %v7927
        %v7929 = vrot.slane %v7920, %v7928
        %v7932 = vmul.f32 %v7903, %v7925
        %v7933 = vmul.f32 %v7904, %v7929
        %v7934 = vmul.f32 %v7905, %v7925
        %v7935 = vmul.f32 %v7906, %v7929
        %v7936 = vmul.f32 %v7907, %v7925
        %v7937 = vmul.f32 %v7908, %v7929
        %v7938 = vmul.f32 %v7909, %v7925
        %v7939 = vmul.f32 %v7910, %v7929
        %v7940 = vmul.f32 %v7911, %v7925
        %v7941 = vmul.f32 %v7912, %v7929
        %v7942 = vmul.f32 %v7913, %v7925
        %v7943 = vmul.f32 %v7914, %v7929
        %v7944 = vmul.f32 %v7915, %v7925
        %v7945 = vmul.f32 %v7916, %v7929
        %v7946 = vmul.f32 %v7917, %v7925
        %v7947 = vmul.f32 %v7918, %v7929
        %v7948 = vadd.f32 %v7887, %v7932
        %v7949 = vadd.f32 %v7888, %v7933
        %v7950 = vadd.f32 %v7889, %v7934
        %v7951 = vadd.f32 %v7890, %v7935
        %v7952 = vadd.f32 %v7891, %v7936
        %v7953 = vadd.f32 %v7892, %v7937
        %v7954 = vadd.f32 %v7893, %v7938
        %v7955 = vadd.f32 %v7894, %v7939
        %v7956 = vadd.f32 %v7895, %v7940
        %v7957 = vadd.f32 %v7896, %v7941
        %v7958 = vadd.f32 %v7897, %v7942
        %v7959 = vadd.f32 %v7898, %v7943
        %v7960 = vadd.f32 %v7899, %v7944
        %v7961 = vadd.f32 %v7900, %v7945
        %v7962 = vadd.f32 %v7901, %v7946
        %v7963 = vadd.f32 %v7902, %v7947
        %v7964 = vld [vmem:[%s327] sm:$0xfe]
        %v7965 = vld [vmem:[%s327 + $0x8] sm:$0xfe]
        %v7966 = vld [vmem:[%s327 + $0x10] sm:$0x1]
        %v7967 = vld [vmem:[%s327 + $0x18] sm:$0x1]
        %v7968 = vld [vmem:[%s327 + $0x20] sm:$0xfe]
        %v7969 = vld [vmem:[%s327 + $0x28] sm:$0xfe]
        %v7970 = vld [vmem:[%s327 + $0x30] sm:$0x1]
        %v7971 = vld [vmem:[%s327 + $0x38] sm:$0x1]
        %v7972 = vld [vmem:[%s327 + $0x40] sm:$0xfe]
        %v7973 = vld [vmem:[%s327 + $0x48] sm:$0xfe]
        %v7974 = vld [vmem:[%s327 + $0x50] sm:$0x1]
        %v7975 = vld [vmem:[%s327 + $0x58] sm:$0x1]
        %v7976 = vld [vmem:[%s327 + $0x60] sm:$0xfe]
        %v7977 = vld [vmem:[%s327 + $0x68] sm:$0xfe]
        %v7978 = vld [vmem:[%s327 + $0x70] sm:$0x1]
        %v7979 = vld [vmem:[%s327 + $0x78] sm:$0x1]
        %v7980 = vld [vmem:[%s327 + $0x80] sm:$0xfe]
        %v7981 = vld [vmem:[%s327 + $0x88] sm:$0xfe]
        %v7982 = vld [vmem:[%s327 + $0x90] sm:$0x1]
        %v7983 = vld [vmem:[%s327 + $0x98] sm:$0x1]
        %v7984 = vld [vmem:[%s327 + $0xa0] sm:$0xfe]
        %v7985 = vld [vmem:[%s327 + $0xa8] sm:$0xfe]
        %v7986 = vld [vmem:[%s327 + $0xb0] sm:$0x1]
        %v7987 = vld [vmem:[%s327 + $0xb8] sm:$0x1]
        %v7988 = vld [vmem:[%s327 + $0xc0] sm:$0xfe]
        %v7989 = vld [vmem:[%s327 + $0xc8] sm:$0xfe]
        %v7990 = vld [vmem:[%s327 + $0xd0] sm:$0x1]
        %v7991 = vld [vmem:[%s327 + $0xd8] sm:$0x1]
        %v7992 = vld [vmem:[%s327 + $0xe0] sm:$0xfe]
        %v7993 = vld [vmem:[%s327 + $0xe8] sm:$0xfe]
        %v7994 = vld [vmem:[%s327 + $0xf0] sm:$0x1]
        %v7995 = vld [vmem:[%s327 + $0xf8] sm:$0x1]
        %s7996 = scalar_lea.vmem %s7496, 4
        %v7997 = vld [vmem:[%s7996] ss:$8 sm:$0x3]
        %v7999 = vlaneseq
        %v8000 = vshrl.u32 %v7999, 7
        %v8001 = vsub.s32 0, %v8000
        %v8002 = vrot.slane %v7997, %v8001
        %v8003 = vlaneseq
        %v8004 = vshrl.u32 %v8003, 7
        %v8005 = vsub.s32 1, %v8004
        %v8006 = vrot.slane %v7997, %v8005
        %v8009 = vmul.f32 %v7964, %v8002
        %v8010 = vmul.f32 %v7965, %v8006
        %v8011 = vmul.f32 %v7966, %v8002
        %v8012 = vmul.f32 %v7967, %v8006
        %v8013 = vmul.f32 %v7968, %v8002
        %v8014 = vmul.f32 %v7969, %v8006
        %v8015 = vmul.f32 %v7970, %v8002
        %v8016 = vmul.f32 %v7971, %v8006
        %v8017 = vmul.f32 %v7972, %v8002
        %v8018 = vmul.f32 %v7973, %v8006
        %v8019 = vmul.f32 %v7974, %v8002
        %v8020 = vmul.f32 %v7975, %v8006
        %v8021 = vmul.f32 %v7976, %v8002
        %v8022 = vmul.f32 %v7977, %v8006
        %v8023 = vmul.f32 %v7978, %v8002
        %v8024 = vmul.f32 %v7979, %v8006
        %v8025 = vmul.f32 %v7980, %v8002
        %v8026 = vmul.f32 %v7981, %v8006
        %v8027 = vmul.f32 %v7982, %v8002
        %v8028 = vmul.f32 %v7983, %v8006
        %v8029 = vmul.f32 %v7984, %v8002
        %v8030 = vmul.f32 %v7985, %v8006
        %v8031 = vmul.f32 %v7986, %v8002
        %v8032 = vmul.f32 %v7987, %v8006
        %v8033 = vmul.f32 %v7988, %v8002
        %v8034 = vmul.f32 %v7989, %v8006
        %v8035 = vmul.f32 %v7990, %v8002
        %v8036 = vmul.f32 %v7991, %v8006
        %v8037 = vmul.f32 %v7992, %v8002
        %v8038 = vmul.f32 %v7993, %v8006
        %v8039 = vmul.f32 %v7994, %v8002
        %v8040 = vmul.f32 %v7995, %v8006
        %v8073 = vrot.slane %v8009, 1
        %v8074 = vrot.slane %v8011, 1
        %v8075 = vsel %vm513, %v8073, %v8074
        %v8076 = vrot.slane %v8010, 1
        %v8077 = vrot.slane %v8012, 1
        %v8078 = vsel %vm513, %v8076, %v8077
        %v8079 = vrot.slane %v8013, 1
        %v8080 = vrot.slane %v8015, 1
        %v8081 = vsel %vm513, %v8079, %v8080
        %v8082 = vrot.slane %v8014, 1
        %v8083 = vrot.slane %v8016, 1
        %v8084 = vsel %vm513, %v8082, %v8083
        %v8085 = vrot.slane %v8017, 1
        %v8086 = vrot.slane %v8019, 1
        %v8087 = vsel %vm513, %v8085, %v8086
        %v8088 = vrot.slane %v8018, 1
        %v8089 = vrot.slane %v8020, 1
        %v8090 = vsel %vm513, %v8088, %v8089
        %v8091 = vrot.slane %v8021, 1
        %v8092 = vrot.slane %v8023, 1
        %v8093 = vsel %vm513, %v8091, %v8092
        %v8094 = vrot.slane %v8022, 1
        %v8095 = vrot.slane %v8024, 1
        %v8096 = vsel %vm513, %v8094, %v8095
        %v8097 = vrot.slane %v8025, 1
        %v8098 = vrot.slane %v8027, 1
        %v8099 = vsel %vm513, %v8097, %v8098
        %v8100 = vrot.slane %v8026, 1
        %v8101 = vrot.slane %v8028, 1
        %v8102 = vsel %vm513, %v8100, %v8101
        %v8103 = vrot.slane %v8029, 1
        %v8104 = vrot.slane %v8031, 1
        %v8105 = vsel %vm513, %v8103, %v8104
        %v8106 = vrot.slane %v8030, 1
        %v8107 = vrot.slane %v8032, 1
        %v8108 = vsel %vm513, %v8106, %v8107
        %v8109 = vrot.slane %v8033, 1
        %v8110 = vrot.slane %v8035, 1
        %v8111 = vsel %vm513, %v8109, %v8110
        %v8112 = vrot.slane %v8034, 1
        %v8113 = vrot.slane %v8036, 1
        %v8114 = vsel %vm513, %v8112, %v8113
        %v8115 = vrot.slane %v8037, 1
        %v8116 = vrot.slane %v8039, 1
        %v8117 = vsel %vm513, %v8115, %v8116
        %v8118 = vrot.slane %v8038, 1
        %v8119 = vrot.slane %v8040, 1
        %v8120 = vsel %vm513, %v8118, %v8119
        %v8137 = vadd.f32 %v7948, %v8075
        %v8138 = vadd.f32 %v7949, %v8078
        %v8139 = vadd.f32 %v7950, %v8081
        %v8140 = vadd.f32 %v7951, %v8084
        %v8141 = vadd.f32 %v7952, %v8087
        %v8142 = vadd.f32 %v7953, %v8090
        %v8143 = vadd.f32 %v7954, %v8093
        %v8144 = vadd.f32 %v7955, %v8096
        %v8145 = vadd.f32 %v7956, %v8099
        %v8146 = vadd.f32 %v7957, %v8102
        %v8147 = vadd.f32 %v7958, %v8105
        %v8148 = vadd.f32 %v7959, %v8108
        %v8149 = vadd.f32 %v7960, %v8111
        %v8150 = vadd.f32 %v7961, %v8114
        %v8151 = vadd.f32 %v7962, %v8117
        %v8152 = vadd.f32 %v7963, %v8120
        %v8153 = vld [vmem:[%s327] sm:$0xfc]
        %v8154 = vld [vmem:[%s327 + $0x8] sm:$0xfc]
        %v8155 = vld [vmem:[%s327 + $0x10] sm:$0x3]
        %v8156 = vld [vmem:[%s327 + $0x18] sm:$0x3]
        %v8157 = vld [vmem:[%s327 + $0x20] sm:$0xfc]
        %v8158 = vld [vmem:[%s327 + $0x28] sm:$0xfc]
        %v8159 = vld [vmem:[%s327 + $0x30] sm:$0x3]
        %v8160 = vld [vmem:[%s327 + $0x38] sm:$0x3]
        %v8161 = vld [vmem:[%s327 + $0x40] sm:$0xfc]
        %v8162 = vld [vmem:[%s327 + $0x48] sm:$0xfc]
        %v8163 = vld [vmem:[%s327 + $0x50] sm:$0x3]
        %v8164 = vld [vmem:[%s327 + $0x58] sm:$0x3]
        %v8165 = vld [vmem:[%s327 + $0x60] sm:$0xfc]
        %v8166 = vld [vmem:[%s327 + $0x68] sm:$0xfc]
        %v8167 = vld [vmem:[%s327 + $0x70] sm:$0x3]
        %v8168 = vld [vmem:[%s327 + $0x78] sm:$0x3]
        %v8169 = vld [vmem:[%s327 + $0x80] sm:$0xfc]
        %v8170 = vld [vmem:[%s327 + $0x88] sm:$0xfc]
        %v8171 = vld [vmem:[%s327 + $0x90] sm:$0x3]
        %v8172 = vld [vmem:[%s327 + $0x98] sm:$0x3]
        %v8173 = vld [vmem:[%s327 + $0xa0] sm:$0xfc]
        %v8174 = vld [vmem:[%s327 + $0xa8] sm:$0xfc]
        %v8175 = vld [vmem:[%s327 + $0xb0] sm:$0x3]
        %v8176 = vld [vmem:[%s327 + $0xb8] sm:$0x3]
        %v8177 = vld [vmem:[%s327 + $0xc0] sm:$0xfc]
        %v8178 = vld [vmem:[%s327 + $0xc8] sm:$0xfc]
        %v8179 = vld [vmem:[%s327 + $0xd0] sm:$0x3]
        %v8180 = vld [vmem:[%s327 + $0xd8] sm:$0x3]
        %v8181 = vld [vmem:[%s327 + $0xe0] sm:$0xfc]
        %v8182 = vld [vmem:[%s327 + $0xe8] sm:$0xfc]
        %v8183 = vld [vmem:[%s327 + $0xf0] sm:$0x3]
        %v8184 = vld [vmem:[%s327 + $0xf8] sm:$0x3]
        %s8185 = scalar_lea.vmem %s7496, 5
        %v8186 = vld [vmem:[%s8185] ss:$8 sm:$0x3]
        %v8188 = vlaneseq
        %v8189 = vshrl.u32 %v8188, 7
        %v8190 = vsub.s32 0, %v8189
        %v8191 = vrot.slane %v8186, %v8190
        %v8192 = vlaneseq
        %v8193 = vshrl.u32 %v8192, 7
        %v8194 = vsub.s32 1, %v8193
        %v8195 = vrot.slane %v8186, %v8194
        %v8198 = vmul.f32 %v8153, %v8191
        %v8199 = vmul.f32 %v8154, %v8195
        %v8200 = vmul.f32 %v8155, %v8191
        %v8201 = vmul.f32 %v8156, %v8195
        %v8202 = vmul.f32 %v8157, %v8191
        %v8203 = vmul.f32 %v8158, %v8195
        %v8204 = vmul.f32 %v8159, %v8191
        %v8205 = vmul.f32 %v8160, %v8195
        %v8206 = vmul.f32 %v8161, %v8191
        %v8207 = vmul.f32 %v8162, %v8195
        %v8208 = vmul.f32 %v8163, %v8191
        %v8209 = vmul.f32 %v8164, %v8195
        %v8210 = vmul.f32 %v8165, %v8191
        %v8211 = vmul.f32 %v8166, %v8195
        %v8212 = vmul.f32 %v8167, %v8191
        %v8213 = vmul.f32 %v8168, %v8195
        %v8214 = vmul.f32 %v8169, %v8191
        %v8215 = vmul.f32 %v8170, %v8195
        %v8216 = vmul.f32 %v8171, %v8191
        %v8217 = vmul.f32 %v8172, %v8195
        %v8218 = vmul.f32 %v8173, %v8191
        %v8219 = vmul.f32 %v8174, %v8195
        %v8220 = vmul.f32 %v8175, %v8191
        %v8221 = vmul.f32 %v8176, %v8195
        %v8222 = vmul.f32 %v8177, %v8191
        %v8223 = vmul.f32 %v8178, %v8195
        %v8224 = vmul.f32 %v8179, %v8191
        %v8225 = vmul.f32 %v8180, %v8195
        %v8226 = vmul.f32 %v8181, %v8191
        %v8227 = vmul.f32 %v8182, %v8195
        %v8228 = vmul.f32 %v8183, %v8191
        %v8229 = vmul.f32 %v8184, %v8195
        %v8262 = vrot.slane %v8198, 2
        %v8263 = vrot.slane %v8200, 2
        %v8264 = vsel %vm703, %v8262, %v8263
        %v8265 = vrot.slane %v8199, 2
        %v8266 = vrot.slane %v8201, 2
        %v8267 = vsel %vm703, %v8265, %v8266
        %v8268 = vrot.slane %v8202, 2
        %v8269 = vrot.slane %v8204, 2
        %v8270 = vsel %vm703, %v8268, %v8269
        %v8271 = vrot.slane %v8203, 2
        %v8272 = vrot.slane %v8205, 2
        %v8273 = vsel %vm703, %v8271, %v8272
        %v8274 = vrot.slane %v8206, 2
        %v8275 = vrot.slane %v8208, 2
        %v8276 = vsel %vm703, %v8274, %v8275
        %v8277 = vrot.slane %v8207, 2
        %v8278 = vrot.slane %v8209, 2
        %v8279 = vsel %vm703, %v8277, %v8278
        %v8280 = vrot.slane %v8210, 2
        %v8281 = vrot.slane %v8212, 2
        %v8282 = vsel %vm703, %v8280, %v8281
        %v8283 = vrot.slane %v8211, 2
        %v8284 = vrot.slane %v8213, 2
        %v8285 = vsel %vm703, %v8283, %v8284
        %v8286 = vrot.slane %v8214, 2
        %v8287 = vrot.slane %v8216, 2
        %v8288 = vsel %vm703, %v8286, %v8287
        %v8289 = vrot.slane %v8215, 2
        %v8290 = vrot.slane %v8217, 2
        %v8291 = vsel %vm703, %v8289, %v8290
        %v8292 = vrot.slane %v8218, 2
        %v8293 = vrot.slane %v8220, 2
        %v8294 = vsel %vm703, %v8292, %v8293
        %v8295 = vrot.slane %v8219, 2
        %v8296 = vrot.slane %v8221, 2
        %v8297 = vsel %vm703, %v8295, %v8296
        %v8298 = vrot.slane %v8222, 2
        %v8299 = vrot.slane %v8224, 2
        %v8300 = vsel %vm703, %v8298, %v8299
        %v8301 = vrot.slane %v8223, 2
        %v8302 = vrot.slane %v8225, 2
        %v8303 = vsel %vm703, %v8301, %v8302
        %v8304 = vrot.slane %v8226, 2
        %v8305 = vrot.slane %v8228, 2
        %v8306 = vsel %vm703, %v8304, %v8305
        %v8307 = vrot.slane %v8227, 2
        %v8308 = vrot.slane %v8229, 2
        %v8309 = vsel %vm703, %v8307, %v8308
        %v8326 = vadd.f32 %v8137, %v8264
        %v8327 = vadd.f32 %v8138, %v8267
        %v8328 = vadd.f32 %v8139, %v8270
        %v8329 = vadd.f32 %v8140, %v8273
        %v8330 = vadd.f32 %v8141, %v8276
        %v8331 = vadd.f32 %v8142, %v8279
        %v8332 = vadd.f32 %v8143, %v8282
        %v8333 = vadd.f32 %v8144, %v8285
        %v8334 = vadd.f32 %v8145, %v8288
        %v8335 = vadd.f32 %v8146, %v8291
        %v8336 = vadd.f32 %v8147, %v8294
        %v8337 = vadd.f32 %v8148, %v8297
        %v8338 = vadd.f32 %v8149, %v8300
        %v8339 = vadd.f32 %v8150, %v8303
        %v8340 = vadd.f32 %v8151, %v8306
        %v8341 = vadd.f32 %v8152, %v8309
        %v8342 = vld [vmem:[%s1223] sm:$0xff]
        %v8343 = vld [vmem:[%s1223 + $0x8] sm:$0xff]
        %v8344 = vld [vmem:[%s1223 + $0x20] sm:$0xff]
        %v8345 = vld [vmem:[%s1223 + $0x28] sm:$0xff]
        %v8346 = vld [vmem:[%s1223 + $0x40] sm:$0xff]
        %v8347 = vld [vmem:[%s1223 + $0x48] sm:$0xff]
        %v8348 = vld [vmem:[%s1223 + $0x60] sm:$0xff]
        %v8349 = vld [vmem:[%s1223 + $0x68] sm:$0xff]
        %v8350 = vld [vmem:[%s1223 + $0x80] sm:$0xff]
        %v8351 = vld [vmem:[%s1223 + $0x88] sm:$0xff]
        %v8352 = vld [vmem:[%s1223 + $0xa0] sm:$0xff]
        %v8353 = vld [vmem:[%s1223 + $0xa8] sm:$0xff]
        %v8354 = vld [vmem:[%s1223 + $0xc0] sm:$0xff]
        %v8355 = vld [vmem:[%s1223 + $0xc8] sm:$0xff]
        %v8356 = vld [vmem:[%s1223 + $0xe0] sm:$0xff]
        %v8357 = vld [vmem:[%s1223 + $0xe8] sm:$0xff]
        %s8358 = scalar_lea.vmem %s7496, 6
        %v8359 = vld [vmem:[%s8358] ss:$8 sm:$0x3]
        %v8361 = vlaneseq
        %v8362 = vshrl.u32 %v8361, 7
        %v8363 = vsub.s32 0, %v8362
        %v8364 = vrot.slane %v8359, %v8363
        %v8365 = vlaneseq
        %v8366 = vshrl.u32 %v8365, 7
        %v8367 = vsub.s32 1, %v8366
        %v8368 = vrot.slane %v8359, %v8367
        %v8371 = vmul.f32 %v8342, %v8364
        %v8372 = vmul.f32 %v8343, %v8368
        %v8373 = vmul.f32 %v8344, %v8364
        %v8374 = vmul.f32 %v8345, %v8368
        %v8375 = vmul.f32 %v8346, %v8364
        %v8376 = vmul.f32 %v8347, %v8368
        %v8377 = vmul.f32 %v8348, %v8364
        %v8378 = vmul.f32 %v8349, %v8368
        %v8379 = vmul.f32 %v8350, %v8364
        %v8380 = vmul.f32 %v8351, %v8368
        %v8381 = vmul.f32 %v8352, %v8364
        %v8382 = vmul.f32 %v8353, %v8368
        %v8383 = vmul.f32 %v8354, %v8364
        %v8384 = vmul.f32 %v8355, %v8368
        %v8385 = vmul.f32 %v8356, %v8364
        %v8386 = vmul.f32 %v8357, %v8368
        %v8387 = vadd.f32 %v8326, %v8371
        %v8388 = vadd.f32 %v8327, %v8372
        %v8389 = vadd.f32 %v8328, %v8373
        %v8390 = vadd.f32 %v8329, %v8374
        %v8391 = vadd.f32 %v8330, %v8375
        %v8392 = vadd.f32 %v8331, %v8376
        %v8393 = vadd.f32 %v8332, %v8377
        %v8394 = vadd.f32 %v8333, %v8378
        %v8395 = vadd.f32 %v8334, %v8379
        %v8396 = vadd.f32 %v8335, %v8380
        %v8397 = vadd.f32 %v8336, %v8381
        %v8398 = vadd.f32 %v8337, %v8382
        %v8399 = vadd.f32 %v8338, %v8383
        %v8400 = vadd.f32 %v8339, %v8384
        %v8401 = vadd.f32 %v8340, %v8385
        %v8402 = vadd.f32 %v8341, %v8386
        %v8403 = vld [vmem:[%s1223] sm:$0xfe]
        %v8404 = vld [vmem:[%s1223 + $0x8] sm:$0xfe]
        %v8405 = vld [vmem:[%s1223 + $0x10] sm:$0x1]
        %v8406 = vld [vmem:[%s1223 + $0x18] sm:$0x1]
        %v8407 = vld [vmem:[%s1223 + $0x20] sm:$0xfe]
        %v8408 = vld [vmem:[%s1223 + $0x28] sm:$0xfe]
        %v8409 = vld [vmem:[%s1223 + $0x30] sm:$0x1]
        %v8410 = vld [vmem:[%s1223 + $0x38] sm:$0x1]
        %v8411 = vld [vmem:[%s1223 + $0x40] sm:$0xfe]
        %v8412 = vld [vmem:[%s1223 + $0x48] sm:$0xfe]
        %v8413 = vld [vmem:[%s1223 + $0x50] sm:$0x1]
        %v8414 = vld [vmem:[%s1223 + $0x58] sm:$0x1]
        %v8415 = vld [vmem:[%s1223 + $0x60] sm:$0xfe]
        %v8416 = vld [vmem:[%s1223 + $0x68] sm:$0xfe]
        %v8417 = vld [vmem:[%s1223 + $0x70] sm:$0x1]
        %v8418 = vld [vmem:[%s1223 + $0x78] sm:$0x1]
        %v8419 = vld [vmem:[%s1223 + $0x80] sm:$0xfe]
        %v8420 = vld [vmem:[%s1223 + $0x88] sm:$0xfe]
        %v8421 = vld [vmem:[%s1223 + $0x90] sm:$0x1]
        %v8422 = vld [vmem:[%s1223 + $0x98] sm:$0x1]
        %v8423 = vld [vmem:[%s1223 + $0xa0] sm:$0xfe]
        %v8424 = vld [vmem:[%s1223 + $0xa8] sm:$0xfe]
        %v8425 = vld [vmem:[%s1223 + $0xb0] sm:$0x1]
        %v8426 = vld [vmem:[%s1223 + $0xb8] sm:$0x1]
        %v8427 = vld [vmem:[%s1223 + $0xc0] sm:$0xfe]
        %v8428 = vld [vmem:[%s1223 + $0xc8] sm:$0xfe]
        %v8429 = vld [vmem:[%s1223 + $0xd0] sm:$0x1]
        %v8430 = vld [vmem:[%s1223 + $0xd8] sm:$0x1]
        %v8431 = vld [vmem:[%s1223 + $0xe0] sm:$0xfe]
        %v8432 = vld [vmem:[%s1223 + $0xe8] sm:$0xfe]
        %v8433 = vld [vmem:[%s1223 + $0xf0] sm:$0x1]
        %v8434 = vld [vmem:[%s1223 + $0xf8] sm:$0x1]
        %s8435 = scalar_lea.vmem %s7496, 7
        %v8436 = vld [vmem:[%s8435] ss:$8 sm:$0x3]
        %v8438 = vlaneseq
        %v8439 = vshrl.u32 %v8438, 7
        %v8440 = vsub.s32 0, %v8439
        %v8441 = vrot.slane %v8436, %v8440
        %v8442 = vlaneseq
        %v8443 = vshrl.u32 %v8442, 7
        %v8444 = vsub.s32 1, %v8443
        %v8445 = vrot.slane %v8436, %v8444
        %v8448 = vmul.f32 %v8403, %v8441
        %v8449 = vmul.f32 %v8404, %v8445
        %v8450 = vmul.f32 %v8405, %v8441
        %v8451 = vmul.f32 %v8406, %v8445
        %v8452 = vmul.f32 %v8407, %v8441
        %v8453 = vmul.f32 %v8408, %v8445
        %v8454 = vmul.f32 %v8409, %v8441
        %v8455 = vmul.f32 %v8410, %v8445
        %v8456 = vmul.f32 %v8411, %v8441
        %v8457 = vmul.f32 %v8412, %v8445
        %v8458 = vmul.f32 %v8413, %v8441
        %v8459 = vmul.f32 %v8414, %v8445
        %v8460 = vmul.f32 %v8415, %v8441
        %v8461 = vmul.f32 %v8416, %v8445
        %v8462 = vmul.f32 %v8417, %v8441
        %v8463 = vmul.f32 %v8418, %v8445
        %v8464 = vmul.f32 %v8419, %v8441
        %v8465 = vmul.f32 %v8420, %v8445
        %v8466 = vmul.f32 %v8421, %v8441
        %v8467 = vmul.f32 %v8422, %v8445
        %v8468 = vmul.f32 %v8423, %v8441
        %v8469 = vmul.f32 %v8424, %v8445
        %v8470 = vmul.f32 %v8425, %v8441
        %v8471 = vmul.f32 %v8426, %v8445
        %v8472 = vmul.f32 %v8427, %v8441
        %v8473 = vmul.f32 %v8428, %v8445
        %v8474 = vmul.f32 %v8429, %v8441
        %v8475 = vmul.f32 %v8430, %v8445
        %v8476 = vmul.f32 %v8431, %v8441
        %v8477 = vmul.f32 %v8432, %v8445
        %v8478 = vmul.f32 %v8433, %v8441
        %v8479 = vmul.f32 %v8434, %v8445
        %v8512 = vrot.slane %v8448, 1
        %v8513 = vrot.slane %v8450, 1
        %v8514 = vsel %vm513, %v8512, %v8513
        %v8515 = vrot.slane %v8449, 1
        %v8516 = vrot.slane %v8451, 1
        %v8517 = vsel %vm513, %v8515, %v8516
        %v8518 = vrot.slane %v8452, 1
        %v8519 = vrot.slane %v8454, 1
        %v8520 = vsel %vm513, %v8518, %v8519
        %v8521 = vrot.slane %v8453, 1
        %v8522 = vrot.slane %v8455, 1
        %v8523 = vsel %vm513, %v8521, %v8522
        %v8524 = vrot.slane %v8456, 1
        %v8525 = vrot.slane %v8458, 1
        %v8526 = vsel %vm513, %v8524, %v8525
        %v8527 = vrot.slane %v8457, 1
        %v8528 = vrot.slane %v8459, 1
        %v8529 = vsel %vm513, %v8527, %v8528
        %v8530 = vrot.slane %v8460, 1
        %v8531 = vrot.slane %v8462, 1
        %v8532 = vsel %vm513, %v8530, %v8531
        %v8533 = vrot.slane %v8461, 1
        %v8534 = vrot.slane %v8463, 1
        %v8535 = vsel %vm513, %v8533, %v8534
        %v8536 = vrot.slane %v8464, 1
        %v8537 = vrot.slane %v8466, 1
        %v8538 = vsel %vm513, %v8536, %v8537
        %v8539 = vrot.slane %v8465, 1
        %v8540 = vrot.slane %v8467, 1
        %v8541 = vsel %vm513, %v8539, %v8540
        %v8542 = vrot.slane %v8468, 1
        %v8543 = vrot.slane %v8470, 1
        %v8544 = vsel %vm513, %v8542, %v8543
        %v8545 = vrot.slane %v8469, 1
        %v8546 = vrot.slane %v8471, 1
        %v8547 = vsel %vm513, %v8545, %v8546
        %v8548 = vrot.slane %v8472, 1
        %v8549 = vrot.slane %v8474, 1
        %v8550 = vsel %vm513, %v8548, %v8549
        %v8551 = vrot.slane %v8473, 1
        %v8552 = vrot.slane %v8475, 1
        %v8553 = vsel %vm513, %v8551, %v8552
        %v8554 = vrot.slane %v8476, 1
        %v8555 = vrot.slane %v8478, 1
        %v8556 = vsel %vm513, %v8554, %v8555
        %v8557 = vrot.slane %v8477, 1
        %v8558 = vrot.slane %v8479, 1
        %v8559 = vsel %vm513, %v8557, %v8558
        %v8576 = vadd.f32 %v8387, %v8514
        %v8577 = vadd.f32 %v8388, %v8517
        %v8578 = vadd.f32 %v8389, %v8520
        %v8579 = vadd.f32 %v8390, %v8523
        %v8580 = vadd.f32 %v8391, %v8526
        %v8581 = vadd.f32 %v8392, %v8529
        %v8582 = vadd.f32 %v8393, %v8532
        %v8583 = vadd.f32 %v8394, %v8535
        %v8584 = vadd.f32 %v8395, %v8538
        %v8585 = vadd.f32 %v8396, %v8541
        %v8586 = vadd.f32 %v8397, %v8544
        %v8587 = vadd.f32 %v8398, %v8547
        %v8588 = vadd.f32 %v8399, %v8550
        %v8589 = vadd.f32 %v8400, %v8553
        %v8590 = vadd.f32 %v8401, %v8556
        %v8591 = vadd.f32 %v8402, %v8559
        %v8592 = vld [vmem:[%s1223] sm:$0xfc]
        %v8593 = vld [vmem:[%s1223 + $0x8] sm:$0xfc]
        %v8594 = vld [vmem:[%s1223 + $0x10] sm:$0x3]
        %v8595 = vld [vmem:[%s1223 + $0x18] sm:$0x3]
        %v8596 = vld [vmem:[%s1223 + $0x20] sm:$0xfc]
        %v8597 = vld [vmem:[%s1223 + $0x28] sm:$0xfc]
        %v8598 = vld [vmem:[%s1223 + $0x30] sm:$0x3]
        %v8599 = vld [vmem:[%s1223 + $0x38] sm:$0x3]
        %v8600 = vld [vmem:[%s1223 + $0x40] sm:$0xfc]
        %v8601 = vld [vmem:[%s1223 + $0x48] sm:$0xfc]
        %v8602 = vld [vmem:[%s1223 + $0x50] sm:$0x3]
        %v8603 = vld [vmem:[%s1223 + $0x58] sm:$0x3]
        %v8604 = vld [vmem:[%s1223 + $0x60] sm:$0xfc]
        %v8605 = vld [vmem:[%s1223 + $0x68] sm:$0xfc]
        %v8606 = vld [vmem:[%s1223 + $0x70] sm:$0x3]
        %v8607 = vld [vmem:[%s1223 + $0x78] sm:$0x3]
        %v8608 = vld [vmem:[%s1223 + $0x80] sm:$0xfc]
        %v8609 = vld [vmem:[%s1223 + $0x88] sm:$0xfc]
        %v8610 = vld [vmem:[%s1223 + $0x90] sm:$0x3]
        %v8611 = vld [vmem:[%s1223 + $0x98] sm:$0x3]
        %v8612 = vld [vmem:[%s1223 + $0xa0] sm:$0xfc]
        %v8613 = vld [vmem:[%s1223 + $0xa8] sm:$0xfc]
        %v8614 = vld [vmem:[%s1223 + $0xb0] sm:$0x3]
        %v8615 = vld [vmem:[%s1223 + $0xb8] sm:$0x3]
        %v8616 = vld [vmem:[%s1223 + $0xc0] sm:$0xfc]
        %v8617 = vld [vmem:[%s1223 + $0xc8] sm:$0xfc]
        %v8618 = vld [vmem:[%s1223 + $0xd0] sm:$0x3]
        %v8619 = vld [vmem:[%s1223 + $0xd8] sm:$0x3]
        %v8620 = vld [vmem:[%s1223 + $0xe0] sm:$0xfc]
        %v8621 = vld [vmem:[%s1223 + $0xe8] sm:$0xfc]
        %v8622 = vld [vmem:[%s1223 + $0xf0] sm:$0x3]
        %v8623 = vld [vmem:[%s1223 + $0xf8] sm:$0x3]
        %s8624 = scalar_lea.vmem %s7496, 16
        %v8625 = vld [vmem:[%s8624] ss:$8 sm:$0x3]
        %v8627 = vlaneseq
        %v8628 = vshrl.u32 %v8627, 7
        %v8629 = vsub.s32 0, %v8628
        %v8630 = vrot.slane %v8625, %v8629
        %v8631 = vlaneseq
        %v8632 = vshrl.u32 %v8631, 7
        %v8633 = vsub.s32 1, %v8632
        %v8634 = vrot.slane %v8625, %v8633
        %v8637 = vmul.f32 %v8592, %v8630
        %v8638 = vmul.f32 %v8593, %v8634
        %v8639 = vmul.f32 %v8594, %v8630
        %v8640 = vmul.f32 %v8595, %v8634
        %v8641 = vmul.f32 %v8596, %v8630
        %v8642 = vmul.f32 %v8597, %v8634
        %v8643 = vmul.f32 %v8598, %v8630
        %v8644 = vmul.f32 %v8599, %v8634
        %v8645 = vmul.f32 %v8600, %v8630
        %v8646 = vmul.f32 %v8601, %v8634
        %v8647 = vmul.f32 %v8602, %v8630
        %v8648 = vmul.f32 %v8603, %v8634
        %v8649 = vmul.f32 %v8604, %v8630
        %v8650 = vmul.f32 %v8605, %v8634
        %v8651 = vmul.f32 %v8606, %v8630
        %v8652 = vmul.f32 %v8607, %v8634
        %v8653 = vmul.f32 %v8608, %v8630
        %v8654 = vmul.f32 %v8609, %v8634
        %v8655 = vmul.f32 %v8610, %v8630
        %v8656 = vmul.f32 %v8611, %v8634
        %v8657 = vmul.f32 %v8612, %v8630
        %v8658 = vmul.f32 %v8613, %v8634
        %v8659 = vmul.f32 %v8614, %v8630
        %v8660 = vmul.f32 %v8615, %v8634
        %v8661 = vmul.f32 %v8616, %v8630
        %v8662 = vmul.f32 %v8617, %v8634
        %v8663 = vmul.f32 %v8618, %v8630
        %v8664 = vmul.f32 %v8619, %v8634
        %v8665 = vmul.f32 %v8620, %v8630
        %v8666 = vmul.f32 %v8621, %v8634
        %v8667 = vmul.f32 %v8622, %v8630
        %v8668 = vmul.f32 %v8623, %v8634
        %v8701 = vrot.slane %v8637, 2
        %v8702 = vrot.slane %v8639, 2
        %v8703 = vsel %vm703, %v8701, %v8702
        %v8704 = vrot.slane %v8638, 2
        %v8705 = vrot.slane %v8640, 2
        %v8706 = vsel %vm703, %v8704, %v8705
        %v8707 = vrot.slane %v8641, 2
        %v8708 = vrot.slane %v8643, 2
        %v8709 = vsel %vm703, %v8707, %v8708
        %v8710 = vrot.slane %v8642, 2
        %v8711 = vrot.slane %v8644, 2
        %v8712 = vsel %vm703, %v8710, %v8711
        %v8713 = vrot.slane %v8645, 2
        %v8714 = vrot.slane %v8647, 2
        %v8715 = vsel %vm703, %v8713, %v8714
        %v8716 = vrot.slane %v8646, 2
        %v8717 = vrot.slane %v8648, 2
        %v8718 = vsel %vm703, %v8716, %v8717
        %v8719 = vrot.slane %v8649, 2
        %v8720 = vrot.slane %v8651, 2
        %v8721 = vsel %vm703, %v8719, %v8720
        %v8722 = vrot.slane %v8650, 2
        %v8723 = vrot.slane %v8652, 2
        %v8724 = vsel %vm703, %v8722, %v8723
        %v8725 = vrot.slane %v8653, 2
        %v8726 = vrot.slane %v8655, 2
        %v8727 = vsel %vm703, %v8725, %v8726
        %v8728 = vrot.slane %v8654, 2
        %v8729 = vrot.slane %v8656, 2
        %v8730 = vsel %vm703, %v8728, %v8729
        %v8731 = vrot.slane %v8657, 2
        %v8732 = vrot.slane %v8659, 2
        %v8733 = vsel %vm703, %v8731, %v8732
        %v8734 = vrot.slane %v8658, 2
        %v8735 = vrot.slane %v8660, 2
        %v8736 = vsel %vm703, %v8734, %v8735
        %v8737 = vrot.slane %v8661, 2
        %v8738 = vrot.slane %v8663, 2
        %v8739 = vsel %vm703, %v8737, %v8738
        %v8740 = vrot.slane %v8662, 2
        %v8741 = vrot.slane %v8664, 2
        %v8742 = vsel %vm703, %v8740, %v8741
        %v8743 = vrot.slane %v8665, 2
        %v8744 = vrot.slane %v8667, 2
        %v8745 = vsel %vm703, %v8743, %v8744
        %v8746 = vrot.slane %v8666, 2
        %v8747 = vrot.slane %v8668, 2
        %v8748 = vsel %vm703, %v8746, %v8747
        %v8765 = vadd.f32 %v8576, %v8703
        %v8766 = vadd.f32 %v8577, %v8706
        %v8767 = vadd.f32 %v8578, %v8709
        %v8768 = vadd.f32 %v8579, %v8712
        %v8769 = vadd.f32 %v8580, %v8715
        %v8770 = vadd.f32 %v8581, %v8718
        %v8771 = vadd.f32 %v8582, %v8721
        %v8772 = vadd.f32 %v8583, %v8724
        %v8773 = vadd.f32 %v8584, %v8727
        %v8774 = vadd.f32 %v8585, %v8730
        %v8775 = vadd.f32 %v8586, %v8733
        %v8776 = vadd.f32 %v8587, %v8736
        %v8777 = vadd.f32 %v8588, %v8739
        %v8778 = vadd.f32 %v8589, %v8742
        %v8779 = vadd.f32 %v8590, %v8745
        %v8780 = vadd.f32 %v8591, %v8748
        %v8781 = vpack.c.bf16 %v8767, %v8765
        %v8782 = vpack.c.bf16 %v8768, %v8766
        %v8783 = vpack.c.bf16 %v8771, %v8769
        %v8784 = vpack.c.bf16 %v8772, %v8770
        %v8785 = vpack.c.bf16 %v8775, %v8773
        %v8786 = vpack.c.bf16 %v8776, %v8774
        %v8787 = vpack.c.bf16 %v8779, %v8777
        %v8788 = vpack.c.bf16 %v8780, %v8778
        %s8789 = scalar_lea.vmem %s2, 1024
        %v8790 = vld [vmem:[%s8789] sm:$0xff]
        %v8791 = vld [vmem:[%s8789 + $0x8] sm:$0xff]
        %v8792 = vld [vmem:[%s8789 + $0x10] sm:$0xff]
        %v8793 = vld [vmem:[%s8789 + $0x18] sm:$0xff]
        %v8794 = vld [vmem:[%s8789 + $0x20] sm:$0xff]
        %v8795 = vld [vmem:[%s8789 + $0x28] sm:$0xff]
        %v8796 = vld [vmem:[%s8789 + $0x30] sm:$0xff]
        %v8797 = vld [vmem:[%s8789 + $0x38] sm:$0xff]
        %v8798 = vld [vmem:[%s8789 + $0x40] sm:$0xff]
        %v8799 = vld [vmem:[%s8789 + $0x48] sm:$0xff]
        %v8800 = vld [vmem:[%s8789 + $0x50] sm:$0xff]
        %v8801 = vld [vmem:[%s8789 + $0x58] sm:$0xff]
        %v8802 = vld [vmem:[%s8789 + $0x60] sm:$0xff]
        %v8803 = vld [vmem:[%s8789 + $0x68] sm:$0xff]
        %v8804 = vld [vmem:[%s8789 + $0x70] sm:$0xff]
        %v8805 = vld [vmem:[%s8789 + $0x78] sm:$0xff]
        %v8806 = vld [vmem:[%s8789 + $0x80] sm:$0xff]
        %v8807 = vld [vmem:[%s8789 + $0x88] sm:$0xff]
        %v8808 = vld [vmem:[%s8789 + $0x90] sm:$0xff]
        %v8809 = vld [vmem:[%s8789 + $0x98] sm:$0xff]
        %v8810 = vld [vmem:[%s8789 + $0xa0] sm:$0xff]
        %v8811 = vld [vmem:[%s8789 + $0xa8] sm:$0xff]
        %v8812 = vld [vmem:[%s8789 + $0xb0] sm:$0xff]
        %v8813 = vld [vmem:[%s8789 + $0xb8] sm:$0xff]
        %v8814 = vld [vmem:[%s8789 + $0xc0] sm:$0xff]
        %v8815 = vld [vmem:[%s8789 + $0xc8] sm:$0xff]
        %v8816 = vld [vmem:[%s8789 + $0xd0] sm:$0xff]
        %v8817 = vld [vmem:[%s8789 + $0xd8] sm:$0xff]
        %v8818 = vld [vmem:[%s8789 + $0xe0] sm:$0xff]
        %v8819 = vld [vmem:[%s8789 + $0xe8] sm:$0xff]
        %v8820 = vld [vmem:[%s8789 + $0xf0] sm:$0xff]
        %v8821 = vld [vmem:[%s8789 + $0xf8] sm:$0xff]
        %s8822 = scalar_lea.vmem %s3, 8
        %v8823 = vld [vmem:[%s8822] sm:$0x3]
        %v8825 = vlaneseq
        %v8826 = vshrl.u32 %v8825, 7
        %v8827 = vsub.s32 0, %v8826
        %v8828 = vrot.slane %v8823, %v8827
        %v8829 = vlaneseq
        %v8830 = vshrl.u32 %v8829, 7
        %v8831 = vsub.s32 1, %v8830
        %v8832 = vrot.slane %v8823, %v8831
        %v8867 = vunpack.c.l.b16 %v8790
        %v8868 = vunpack.c.h.b16 %v8790
        %v8869 = vunpack.c.l.b16 %v8791
        %v8870 = vunpack.c.h.b16 %v8791
        %v8871 = vunpack.c.l.b16 %v8792
        %v8872 = vunpack.c.h.b16 %v8792
        %v8873 = vunpack.c.l.b16 %v8793
        %v8874 = vunpack.c.h.b16 %v8793
        %v8875 = vunpack.c.l.b16 %v8794
        %v8876 = vunpack.c.h.b16 %v8794
        %v8877 = vunpack.c.l.b16 %v8795
        %v8878 = vunpack.c.h.b16 %v8795
        %v8879 = vunpack.c.l.b16 %v8796
        %v8880 = vunpack.c.h.b16 %v8796
        %v8881 = vunpack.c.l.b16 %v8797
        %v8882 = vunpack.c.h.b16 %v8797
        %v8883 = vunpack.c.l.b16 %v8798
        %v8884 = vunpack.c.h.b16 %v8798
        %v8885 = vunpack.c.l.b16 %v8799
        %v8886 = vunpack.c.h.b16 %v8799
        %v8887 = vunpack.c.l.b16 %v8800
        %v8888 = vunpack.c.h.b16 %v8800
        %v8889 = vunpack.c.l.b16 %v8801
        %v8890 = vunpack.c.h.b16 %v8801
        %v8891 = vunpack.c.l.b16 %v8802
        %v8892 = vunpack.c.h.b16 %v8802
        %v8893 = vunpack.c.l.b16 %v8803
        %v8894 = vunpack.c.h.b16 %v8803
        %v8895 = vunpack.c.l.b16 %v8804
        %v8896 = vunpack.c.h.b16 %v8804
        %v8897 = vunpack.c.l.b16 %v8805
        %v8898 = vunpack.c.h.b16 %v8805
        %v8899 = vunpack.c.l.b16 %v8806
        %v8900 = vunpack.c.h.b16 %v8806
        %v8901 = vunpack.c.l.b16 %v8807
        %v8902 = vunpack.c.h.b16 %v8807
        %v8903 = vunpack.c.l.b16 %v8808
        %v8904 = vunpack.c.h.b16 %v8808
        %v8905 = vunpack.c.l.b16 %v8809
        %v8906 = vunpack.c.h.b16 %v8809
        %v8907 = vunpack.c.l.b16 %v8810
        %v8908 = vunpack.c.h.b16 %v8810
        %v8909 = vunpack.c.l.b16 %v8811
        %v8910 = vunpack.c.h.b16 %v8811
        %v8911 = vunpack.c.l.b16 %v8812
        %v8912 = vunpack.c.h.b16 %v8812
        %v8913 = vunpack.c.l.b16 %v8813
        %v8914 = vunpack.c.h.b16 %v8813
        %v8915 = vunpack.c.l.b16 %v8814
        %v8916 = vunpack.c.h.b16 %v8814
        %v8917 = vunpack.c.l.b16 %v8815
        %v8918 = vunpack.c.h.b16 %v8815
        %v8919 = vunpack.c.l.b16 %v8816
        %v8920 = vunpack.c.h.b16 %v8816
        %v8921 = vunpack.c.l.b16 %v8817
        %v8922 = vunpack.c.h.b16 %v8817
        %v8923 = vunpack.c.l.b16 %v8818
        %v8924 = vunpack.c.h.b16 %v8818
        %v8925 = vunpack.c.l.b16 %v8819
        %v8926 = vunpack.c.h.b16 %v8819
        %v8927 = vunpack.c.l.b16 %v8820
        %v8928 = vunpack.c.h.b16 %v8820
        %v8929 = vunpack.c.l.b16 %v8821
        %v8930 = vunpack.c.h.b16 %v8821
        %v8931 = vpack.c.b16 %v8869, %v8867
        %v8932 = vpack.c.b16 %v8870, %v8868
        %v8933 = vpack.c.b16 %v8873, %v8871
        %v8934 = vpack.c.b16 %v8874, %v8872
        %v8935 = vpack.c.b16 %v8877, %v8875
        %v8936 = vpack.c.b16 %v8878, %v8876
        %v8937 = vpack.c.b16 %v8881, %v8879
        %v8938 = vpack.c.b16 %v8882, %v8880
        %v8939 = vpack.c.b16 %v8885, %v8883
        %v8940 = vpack.c.b16 %v8886, %v8884
        %v8941 = vpack.c.b16 %v8889, %v8887
        %v8942 = vpack.c.b16 %v8890, %v8888
        %v8943 = vpack.c.b16 %v8893, %v8891
        %v8944 = vpack.c.b16 %v8894, %v8892
        %v8945 = vpack.c.b16 %v8897, %v8895
        %v8946 = vpack.c.b16 %v8898, %v8896
        %v8947 = vpack.c.b16 %v8901, %v8899
        %v8948 = vpack.c.b16 %v8902, %v8900
        %v8949 = vpack.c.b16 %v8905, %v8903
        %v8950 = vpack.c.b16 %v8906, %v8904
        %v8951 = vpack.c.b16 %v8909, %v8907
        %v8952 = vpack.c.b16 %v8910, %v8908
        %v8953 = vpack.c.b16 %v8913, %v8911
        %v8954 = vpack.c.b16 %v8914, %v8912
        %v8955 = vpack.c.b16 %v8917, %v8915
        %v8956 = vpack.c.b16 %v8918, %v8916
        %v8957 = vpack.c.b16 %v8921, %v8919
        %v8958 = vpack.c.b16 %v8922, %v8920
        %v8959 = vpack.c.b16 %v8925, %v8923
        %v8960 = vpack.c.b16 %v8926, %v8924
        %v8961 = vpack.c.b16 %v8929, %v8927
        %v8962 = vpack.c.b16 %v8930, %v8928
        %8995 = vmatprep.subr.bf16.mxu0 %v8932
        %8996 = vmatpush1.bf16.msra.mxu0 %v8931
        %8997 = vmatprep.subr.bf16.mxu0 %v8934
        %8998 = vmatpush1.bf16.msra.mxu0 %v8933
        %8999 = vmatprep.subr.bf16.mxu0 %v8936
        %9000 = vmatpush1.bf16.msra.mxu0 %v8935
        %9001 = vmatprep.subr.bf16.mxu0 %v8938
        %9002 = vmatpush1.bf16.msra.mxu0 %v8937
        %9003 = vmatprep.subr.bf16.mxu0 %v8940
        %9004 = vmatpush1.bf16.msra.mxu0 %v8939
        %9005 = vmatprep.subr.bf16.mxu0 %v8942
        %9006 = vmatpush1.bf16.msra.mxu0 %v8941
        %9007 = vmatprep.subr.bf16.mxu0 %v8944
        %9008 = vmatpush1.bf16.msra.mxu0 %v8943
        %9009 = vmatprep.subr.bf16.mxu0 %v8946
        %9010 = vmatpush1.bf16.msra.mxu0 %v8945
        %9011 = vmatprep.subr.bf16.mxu0 %v8948
        %9012 = vmatpush1.bf16.msra.mxu0 %v8947
        %9013 = vmatprep.subr.bf16.mxu0 %v8950
        %9014 = vmatpush1.bf16.msra.mxu0 %v8949
        %9015 = vmatprep.subr.bf16.mxu0 %v8952
        %9016 = vmatpush1.bf16.msra.mxu0 %v8951
        %9017 = vmatprep.subr.bf16.mxu0 %v8954
        %9018 = vmatpush1.bf16.msra.mxu0 %v8953
        %9019 = vmatprep.subr.bf16.mxu0 %v8956
        %9020 = vmatpush1.bf16.msra.mxu0 %v8955
        %9021 = vmatprep.subr.bf16.mxu0 %v8958
        %9022 = vmatpush1.bf16.msra.mxu0 %v8957
        %9023 = vmatprep.subr.bf16.mxu0 %v8960
        %9024 = vmatpush1.bf16.msra.mxu0 %v8959
        %9025 = vmatprep.subr.bf16.mxu0 %v8962
        %9026 = vmatpush1.bf16.msra.mxu0 %v8961
        %9027 = vmatprep.mubr.bf16.mxu0 %v8782
        %9028 = vmatmul.mubr.bf16.gmra.mrb[0].mxu0 %v8781
        %v9029 = vpop.f32.mrb[0].mxu0
        %v9030 = vadd.f32 %v8828, %v9029
        %v9031 = vpop.f32.mrb[0].mxu0
        %v9032 = vadd.f32 %v8832, %v9031
        %v9033 = vpop.f32.mrb[0].mxu0
        %v9034 = vadd.f32 %v8828, %v9033
        %v9035 = vpop.f32.mrb[0].mxu0
        %v9036 = vadd.f32 %v8832, %v9035
        %9037 = vmatprep.mubr.bf16.mxu0 %v8784
        %9038 = vmatmul.mubr.bf16.gmra.mrb[0].mxu0 %v8783
        %v9039 = vpop.f32.mrb[0].mxu0
        %v9040 = vadd.f32 %v8828, %v9039
        %v9041 = vpop.f32.mrb[0].mxu0
        %v9042 = vadd.f32 %v8832, %v9041
        %v9043 = vpop.f32.mrb[0].mxu0
        %v9044 = vadd.f32 %v8828, %v9043
        %v9045 = vpop.f32.mrb[0].mxu0
        %v9046 = vadd.f32 %v8832, %v9045
        %9047 = vmatprep.mubr.bf16.mxu0 %v8786
        %9048 = vmatmul.mubr.bf16.gmra.mrb[0].mxu0 %v8785
        %v9049 = vpop.f32.mrb[0].mxu0
        %v9050 = vadd.f32 %v8828, %v9049
        %v9051 = vpop.f32.mrb[0].mxu0
        %v9052 = vadd.f32 %v8832, %v9051
        %v9053 = vpop.f32.mrb[0].mxu0
        %v9054 = vadd.f32 %v8828, %v9053
        %v9055 = vpop.f32.mrb[0].mxu0
        %v9056 = vadd.f32 %v8832, %v9055
        %9057 = vmatprep.mubr.bf16.mxu0 %v8788
        %9058 = vmatmul.mubr.bf16.gmra.mrb[0].mxu0 %v8787
        %v9059 = vpop.f32.mrb[0].mxu0
        %v9060 = vadd.f32 %v8828, %v9059
        %v9061 = vpop.f32.mrb[0].mxu0
        %v9062 = vadd.f32 %v8832, %v9061
        %v9063 = vpop.f32.mrb[0].mxu0
        %v9064 = vadd.f32 %v8828, %v9063
        %v9065 = vpop.f32.mrb[0].mxu0
        %v9066 = vadd.f32 %v8832, %v9065
        %9067 = vdwg.mxu0
        %v9068 = vxor.u32 %v9030, 2147483648
        %v9069 = vxor.u32 %v9032, 2147483648
        %v9070 = vxor.u32 %v9034, 2147483648
        %v9071 = vxor.u32 %v9036, 2147483648
        %v9072 = vxor.u32 %v9040, 2147483648
        %v9073 = vxor.u32 %v9042, 2147483648
        %v9074 = vxor.u32 %v9044, 2147483648
        %v9075 = vxor.u32 %v9046, 2147483648
        %v9076 = vxor.u32 %v9050, 2147483648
        %v9077 = vxor.u32 %v9052, 2147483648
        %v9078 = vxor.u32 %v9054, 2147483648
        %v9079 = vxor.u32 %v9056, 2147483648
        %v9080 = vxor.u32 %v9060, 2147483648
        %v9081 = vxor.u32 %v9062, 2147483648
        %v9082 = vxor.u32 %v9064, 2147483648
        %v9083 = vxor.u32 %v9066, 2147483648
        %v9084 = vmul.f32 %v9068, 1.442695
        %v9085 = vpow.pop %v9084
        %v9086 = vmul.f32 %v9069, 1.442695
        %v9087 = vpow.pop %v9086
        %v9088 = vmul.f32 %v9070, 1.442695
        %v9089 = vpow.pop %v9088
        %v9090 = vmul.f32 %v9071, 1.442695
        %v9091 = vpow.pop %v9090
        %v9092 = vmul.f32 %v9072, 1.442695
        %v9093 = vpow.pop %v9092
        %v9094 = vmul.f32 %v9073, 1.442695
        %v9095 = vpow.pop %v9094
        %v9096 = vmul.f32 %v9074, 1.442695
        %v9097 = vpow.pop %v9096
        %v9098 = vmul.f32 %v9075, 1.442695
        %v9099 = vpow.pop %v9098
        %v9100 = vmul.f32 %v9076, 1.442695
        %v9101 = vpow.pop %v9100
        %v9102 = vmul.f32 %v9077, 1.442695
        %v9103 = vpow.pop %v9102
        %v9104 = vmul.f32 %v9078, 1.442695
        %v9105 = vpow.pop %v9104
        %v9106 = vmul.f32 %v9079, 1.442695
        %v9107 = vpow.pop %v9106
        %v9108 = vmul.f32 %v9080, 1.442695
        %v9109 = vpow.pop %v9108
        %v9110 = vmul.f32 %v9081, 1.442695
        %v9111 = vpow.pop %v9110
        %v9112 = vmul.f32 %v9082, 1.442695
        %v9113 = vpow.pop %v9112
        %v9114 = vmul.f32 %v9083, 1.442695
        %v9115 = vpow.pop %v9114
        %v9116 = vadd.f32 %v9085, 1.0
        %v9117 = vadd.f32 %v9087, 1.0
        %v9118 = vadd.f32 %v9089, 1.0
        %v9119 = vadd.f32 %v9091, 1.0
        %v9120 = vadd.f32 %v9093, 1.0
        %v9121 = vadd.f32 %v9095, 1.0
        %v9122 = vadd.f32 %v9097, 1.0
        %v9123 = vadd.f32 %v9099, 1.0
        %v9124 = vadd.f32 %v9101, 1.0
        %v9125 = vadd.f32 %v9103, 1.0
        %v9126 = vadd.f32 %v9105, 1.0
        %v9127 = vadd.f32 %v9107, 1.0
        %v9128 = vadd.f32 %v9109, 1.0
        %v9129 = vadd.f32 %v9111, 1.0
        %v9130 = vadd.f32 %v9113, 1.0
        %v9131 = vadd.f32 %v9115, 1.0
        %v9132 = vrcp.pop %v9116
        %v9133 = vmul.f32 1.0, %v9132
        %v9134 = vrcp.pop %v9117
        %v9135 = vmul.f32 1.0, %v9134
        %v9136 = vrcp.pop %v9118
        %v9137 = vmul.f32 1.0, %v9136
        %v9138 = vrcp.pop %v9119
        %v9139 = vmul.f32 1.0, %v9138
        %v9140 = vrcp.pop %v9120
        %v9141 = vmul.f32 1.0, %v9140
        %v9142 = vrcp.pop %v9121
        %v9143 = vmul.f32 1.0, %v9142
        %v9144 = vrcp.pop %v9122
        %v9145 = vmul.f32 1.0, %v9144
        %v9146 = vrcp.pop %v9123
        %v9147 = vmul.f32 1.0, %v9146
        %v9148 = vrcp.pop %v9124
        %v9149 = vmul.f32 1.0, %v9148
        %v9150 = vrcp.pop %v9125
        %v9151 = vmul.f32 1.0, %v9150
        %v9152 = vrcp.pop %v9126
        %v9153 = vmul.f32 1.0, %v9152
        %v9154 = vrcp.pop %v9127
        %v9155 = vmul.f32 1.0, %v9154
        %v9156 = vrcp.pop %v9128
        %v9157 = vmul.f32 1.0, %v9156
        %v9158 = vrcp.pop %v9129
        %v9159 = vmul.f32 1.0, %v9158
        %v9160 = vrcp.pop %v9130
        %v9161 = vmul.f32 1.0, %v9160
        %v9162 = vrcp.pop %v9131
        %v9163 = vmul.f32 1.0, %v9162
        %v9164 = vmul.f32 %v9030, %v9133
        %v9165 = vmul.f32 %v9032, %v9135
        %v9166 = vmul.f32 %v9034, %v9137
        %v9167 = vmul.f32 %v9036, %v9139
        %v9168 = vmul.f32 %v9040, %v9141
        %v9169 = vmul.f32 %v9042, %v9143
        %v9170 = vmul.f32 %v9044, %v9145
        %v9171 = vmul.f32 %v9046, %v9147
        %v9172 = vmul.f32 %v9050, %v9149
        %v9173 = vmul.f32 %v9052, %v9151
        %v9174 = vmul.f32 %v9054, %v9153
        %v9175 = vmul.f32 %v9056, %v9155
        %v9176 = vmul.f32 %v9060, %v9157
        %v9177 = vmul.f32 %v9062, %v9159
        %v9178 = vmul.f32 %v9064, %v9161
        %v9179 = vmul.f32 %v9066, %v9163
        %v9180 = vld [vmem:[%s4] sm:$0xff]
        %v9181 = vld [vmem:[%s4 + $0x8] sm:$0xff]
        %v9182 = vld [vmem:[%s4 + $0x10] sm:$0xff]
        %v9183 = vld [vmem:[%s4 + $0x18] sm:$0xff]
        %v9184 = vld [vmem:[%s4 + $0x20] sm:$0xff]
        %v9185 = vld [vmem:[%s4 + $0x28] sm:$0xff]
        %v9186 = vld [vmem:[%s4 + $0x30] sm:$0xff]
        %v9187 = vld [vmem:[%s4 + $0x38] sm:$0xff]
        %v9188 = vld [vmem:[%s4 + $0x40] sm:$0xff]
        %v9189 = vld [vmem:[%s4 + $0x48] sm:$0xff]
        %v9190 = vld [vmem:[%s4 + $0x50] sm:$0xff]
        %v9191 = vld [vmem:[%s4 + $0x58] sm:$0xff]
        %v9192 = vld [vmem:[%s4 + $0x60] sm:$0xff]
        %v9193 = vld [vmem:[%s4 + $0x68] sm:$0xff]
        %v9194 = vld [vmem:[%s4 + $0x70] sm:$0xff]
        %v9195 = vld [vmem:[%s4 + $0x78] sm:$0xff]
        %v9196 = vld [vmem:[%s4 + $0x80] sm:$0xff]
        %v9197 = vld [vmem:[%s4 + $0x88] sm:$0xff]
        %v9198 = vld [vmem:[%s4 + $0x90] sm:$0xff]
        %v9199 = vld [vmem:[%s4 + $0x98] sm:$0xff]
        %v9200 = vld [vmem:[%s4 + $0xa0] sm:$0xff]
        %v9201 = vld [vmem:[%s4 + $0xa8] sm:$0xff]
        %v9202 = vld [vmem:[%s4 + $0xb0] sm:$0xff]
        %v9203 = vld [vmem:[%s4 + $0xb8] sm:$0xff]
        %v9204 = vld [vmem:[%s4 + $0xc0] sm:$0xff]
        %v9205 = vld [vmem:[%s4 + $0xc8] sm:$0xff]
        %v9206 = vld [vmem:[%s4 + $0xd0] sm:$0xff]
        %v9207 = vld [vmem:[%s4 + $0xd8] sm:$0xff]
        %v9208 = vld [vmem:[%s4 + $0xe0] sm:$0xff]
        %v9209 = vld [vmem:[%s4 + $0xe8] sm:$0xff]
        %v9210 = vld [vmem:[%s4 + $0xf0] sm:$0xff]
        %v9211 = vld [vmem:[%s4 + $0xf8] sm:$0xff]
        %vm9212 = vcmask 523264
        %v9214 = vsel %vm9212, %v9180, 0
        %v9217 = vsel %vm9212, %v9181, 0
        %v9220 = vsel %vm9212, %v9182, 0
        %v9223 = vsel %vm9212, %v9183, 0
        %v9226 = vsel %vm9212, %v9184, 0
        %v9229 = vsel %vm9212, %v9185, 0
        %v9232 = vsel %vm9212, %v9186, 0
        %v9235 = vsel %vm9212, %v9187, 0
        %v9238 = vsel %vm9212, %v9188, 0
        %v9241 = vsel %vm9212, %v9189, 0
        %v9244 = vsel %vm9212, %v9190, 0
        %v9247 = vsel %vm9212, %v9191, 0
        %v9250 = vsel %vm9212, %v9192, 0
        %v9253 = vsel %vm9212, %v9193, 0
        %v9256 = vsel %vm9212, %v9194, 0
        %v9259 = vsel %vm9212, %v9195, 0
        %v9262 = vsel %vm9212, %v9196, 0
        %v9265 = vsel %vm9212, %v9197, 0
        %v9268 = vsel %vm9212, %v9198, 0
        %v9271 = vsel %vm9212, %v9199, 0
        %v9274 = vsel %vm9212, %v9200, 0
        %v9277 = vsel %vm9212, %v9201, 0
        %v9280 = vsel %vm9212, %v9202, 0
        %v9283 = vsel %vm9212, %v9203, 0
        %v9286 = vsel %vm9212, %v9204, 0
        %v9289 = vsel %vm9212, %v9205, 0
        %v9292 = vsel %vm9212, %v9206, 0
        %v9295 = vsel %vm9212, %v9207, 0
        %v9298 = vsel %vm9212, %v9208, 0
        %v9301 = vsel %vm9212, %v9209, 0
        %v9304 = vsel %vm9212, %v9210, 0
        %v9307 = vsel %vm9212, %v9211, 0
        %9309 = vmatprep.subr.mxu0 %v9165
        %9310 = vmatpush1.msra.mxu0 %v9164
        %9311 = vmatprep.subr.mxu0 %v9167
        %9312 = vmatpush1.msra.mxu0 %v9166
        %9313 = vmatprep.subr.mxu0 %v9169
        %9314 = vmatpush1.msra.mxu0 %v9168
        %9315 = vmatprep.subr.mxu0 %v9171
        %9316 = vmatpush1.msra.mxu0 %v9170
        %9317 = vmatprep.subr.mxu0 %v9173
        %9318 = vmatpush1.msra.mxu0 %v9172
        %9319 = vmatprep.subr.mxu0 %v9175
        %9320 = vmatpush1.msra.mxu0 %v9174
        %9321 = vmatprep.subr.mxu0 %v9177
        %9322 = vmatpush1.msra.mxu0 %v9176
        %9323 = vmatprep.subr.mxu0 %v9179
        %9324 = vmatpush1.msra.mxu0 %v9178
        %9325 = vmatprep.subr.mxu0 0.0
        %9326 = vmatpush1.msra.mxu0 0.0
        %9327 = vmatprep.subr.mxu0 0.0
        %9328 = vmatpush1.msra.mxu0 0.0
        %9329 = vmatprep.subr.mxu0 0.0
        %9330 = vmatpush1.msra.mxu0 0.0
        %9331 = vmatprep.subr.mxu0 0.0
        %9332 = vmatpush1.msra.mxu0 0.0
        %9333 = vmatprep.subr.mxu0 0.0
        %9334 = vmatpush1.msra.mxu0 0.0
        %9335 = vmatprep.subr.mxu0 0.0
        %9336 = vmatpush1.msra.mxu0 0.0
        %9337 = vmatprep.subr.mxu0 0.0
        %9338 = vmatpush1.msra.mxu0 0.0
        %9339 = vmatprep.subr.mxu0 0.0
        %9340 = vmatpush1.msra.mxu0 0.0
        %9341 = vmatprep.subr.mxu0 0.0
        %9342 = vmatpush1.msra.mxu0 0.0
        %9343 = vmatprep.subr.mxu0 0.0
        %9344 = vmatpush1.msra.mxu0 0.0
        %9345 = vmatprep.subr.mxu0 0.0
        %9346 = vmatpush1.msra.mxu0 0.0
        %9347 = vmatprep.subr.mxu0 0.0
        %9348 = vmatpush1.msra.mxu0 0.0
        %9349 = vmatprep.subr.mxu0 0.0
        %9350 = vmatpush1.msra.mxu0 0.0
        %9351 = vmatprep.subr.mxu0 0.0
        %9352 = vmatpush1.msra.mxu0 0.0
        %9353 = vmatprep.subr.mxu0 0.0
        %9354 = vmatpush1.msra.mxu0 0.0
        %9355 = vmatprep.subr.mxu0 0.0
        %9356 = vmatpush1.msra.mxu0 0.0
        %9357 = vmatprep.subr.mxu0 0.0
        %9358 = vmatpush1.msra.mxu0 0.0
        %9359 = vmatprep.subr.mxu0 0.0
        %9360 = vmatpush1.msra.mxu0 0.0
        %9361 = vmatprep.subr.mxu0 0.0
        %9362 = vmatpush1.msra.mxu0 0.0
        %9363 = vmatprep.subr.mxu0 0.0
        %9364 = vmatpush1.msra.mxu0 0.0
        %9365 = vmatprep.subr.mxu0 0.0
        %9366 = vmatpush1.msra.mxu0 0.0
        %9367 = vmatprep.subr.mxu0 0.0
        %9368 = vmatpush1.msra.mxu0 0.0
        %9369 = vmatprep.subr.mxu0 0.0
        %9370 = vmatpush1.msra.mxu0 0.0
        %9371 = vmatprep.subr.mxu0 0.0
        %9372 = vmatpush1.msra.mxu0 0.0
        %9373 = vmatprep.mubr.f32.mxu0 0.0
        %9374 = vmatmul.mubr.f32.gmra.mrb[0].mxu0 %v9214
        %v9375 = vpop.f32.mrb[0].mxu0
        %v9376 = vadd.f32 0.0, %v9375
        %v9377 = vpop.f32.mrb[0].mxu0
        %v9378 = vadd.f32 0.0, %v9377
        %9379 = vmatprep.mubr.f32.mxu0 0.0
        %9380 = vmatmul.mubr.f32.gmra.mrb[0].mxu0 %v9217
        %v9381 = vpop.f32.mrb[0].mxu0
        %v9382 = vadd.f32 0.0, %v9381
        %v9383 = vpop.f32.mrb[0].mxu0
        %v9384 = vadd.f32 0.0, %v9383
        %9385 = vmatprep.mubr.f32.mxu0 0.0
        %9386 = vmatmul.mubr.f32.gmra.mrb[0].mxu0 %v9220
        %v9387 = vpop.f32.mrb[0].mxu0
        %v9388 = vadd.f32 0.0, %v9387
        %v9389 = vpop.f32.mrb[0].mxu0
        %v9390 = vadd.f32 0.0, %v9389
        %9391 = vmatprep.mubr.f32.mxu0 0.0
        %9392 = vmatmul.mubr.f32.gmra.mrb[0].mxu0 %v9223
        %v9393 = vpop.f32.mrb[0].mxu0
        %v9394 = vadd.f32 0.0, %v9393
        %v9395 = vpop.f32.mrb[0].mxu0
        %v9396 = vadd.f32 0.0, %v9395
        %9397 = vmatprep.mubr.f32.mxu0 0.0
        %9398 = vmatmul.mubr.f32.gmra.mrb[0].mxu0 %v9226
        %v9399 = vpop.f32.mrb[0].mxu0
        %v9400 = vadd.f32 0.0, %v9399
        %v9401 = vpop.f32.mrb[0].mxu0
        %v9402 = vadd.f32 0.0, %v9401
        %9403 = vmatprep.mubr.f32.mxu0 0.0
        %9404 = vmatmul.mubr.f32.gmra.mrb[0].mxu0 %v9229
        %v9405 = vpop.f32.mrb[0].mxu0
        %v9406 = vadd.f32 0.0, %v9405
        %v9407 = vpop.f32.mrb[0].mxu0
        %v9408 = vadd.f32 0.0, %v9407
        %9409 = vmatprep.mubr.f32.mxu0 0.0
        %9410 = vmatmul.mubr.f32.gmra.mrb[0].mxu0 %v9232
        %v9411 = vpop.f32.mrb[0].mxu0
        %v9412 = vadd.f32 0.0, %v9411
        %v9413 = vpop.f32.mrb[0].mxu0
        %v9414 = vadd.f32 0.0, %v9413
        %9415 = vmatprep.mubr.f32.mxu0 0.0
        %9416 = vmatmul.mubr.f32.gmra.mrb[0].mxu0 %v9235
        %v9417 = vpop.f32.mrb[0].mxu0
        %v9418 = vadd.f32 0.0, %v9417
        %v9419 = vpop.f32.mrb[0].mxu0
        %v9420 = vadd.f32 0.0, %v9419
        %9421 = vmatprep.mubr.f32.mxu0 0.0
        %9422 = vmatmul.mubr.f32.gmra.mrb[0].mxu0 %v9238
        %v9423 = vpop.f32.mrb[0].mxu0
        %v9424 = vadd.f32 0.0, %v9423
        %v9425 = vpop.f32.mrb[0].mxu0
        %v9426 = vadd.f32 0.0, %v9425
        %9427 = vmatprep.mubr.f32.mxu0 0.0
        %9428 = vmatmul.mubr.f32.gmra.mrb[0].mxu0 %v9241
        %v9429 = vpop.f32.mrb[0].mxu0
        %v9430 = vadd.f32 0.0, %v9429
        %v9431 = vpop.f32.mrb[0].mxu0
        %v9432 = vadd.f32 0.0, %v9431
        %9433 = vmatprep.mubr.f32.mxu0 0.0
        %9434 = vmatmul.mubr.f32.gmra.mrb[0].mxu0 %v9244
        %v9435 = vpop.f32.mrb[0].mxu0
        %v9436 = vadd.f32 0.0, %v9435
        %v9437 = vpop.f32.mrb[0].mxu0
        %v9438 = vadd.f32 0.0, %v9437
        %9439 = vmatprep.mubr.f32.mxu0 0.0
        %9440 = vmatmul.mubr.f32.gmra.mrb[0].mxu0 %v9247
        %v9441 = vpop.f32.mrb[0].mxu0
        %v9442 = vadd.f32 0.0, %v9441
        %v9443 = vpop.f32.mrb[0].mxu0
        %v9444 = vadd.f32 0.0, %v9443
        %9445 = vmatprep.mubr.f32.mxu0 0.0
        %9446 = vmatmul.mubr.f32.gmra.mrb[0].mxu0 %v9250
        %v9447 = vpop.f32.mrb[0].mxu0
        %v9448 = vadd.f32 0.0, %v9447
        %v9449 = vpop.f32.mrb[0].mxu0
        %v9450 = vadd.f32 0.0, %v9449
        %9451 = vmatprep.mubr.f32.mxu0 0.0
        %9452 = vmatmul.mubr.f32.gmra.mrb[0].mxu0 %v9253
        %v9453 = vpop.f32.mrb[0].mxu0
        %v9454 = vadd.f32 0.0, %v9453
        %v9455 = vpop.f32.mrb[0].mxu0
        %v9456 = vadd.f32 0.0, %v9455
        %9457 = vmatprep.mubr.f32.mxu0 0.0
        %9458 = vmatmul.mubr.f32.gmra.mrb[0].mxu0 %v9256
        %v9459 = vpop.f32.mrb[0].mxu0
        %v9460 = vadd.f32 0.0, %v9459
        %v9461 = vpop.f32.mrb[0].mxu0
        %v9462 = vadd.f32 0.0, %v9461
        %9463 = vmatprep.mubr.f32.mxu0 0.0
        %9464 = vmatmul.mubr.f32.gmra.mrb[0].mxu0 %v9259
        %v9465 = vpop.f32.mrb[0].mxu0
        %v9466 = vadd.f32 0.0, %v9465
        %v9467 = vpop.f32.mrb[0].mxu0
        %v9468 = vadd.f32 0.0, %v9467
        %9469 = vmatprep.mubr.f32.mxu0 0.0
        %9470 = vmatmul.mubr.f32.gmra.mrb[0].mxu0 %v9262
        %v9471 = vpop.f32.mrb[0].mxu0
        %v9472 = vadd.f32 0.0, %v9471
        %v9473 = vpop.f32.mrb[0].mxu0
        %v9474 = vadd.f32 0.0, %v9473
        %9475 = vmatprep.mubr.f32.mxu0 0.0
        %9476 = vmatmul.mubr.f32.gmra.mrb[0].mxu0 %v9265
        %v9477 = vpop.f32.mrb[0].mxu0
        %v9478 = vadd.f32 0.0, %v9477
        %v9479 = vpop.f32.mrb[0].mxu0
        %v9480 = vadd.f32 0.0, %v9479
        %9481 = vmatprep.mubr.f32.mxu0 0.0
        %9482 = vmatmul.mubr.f32.gmra.mrb[0].mxu0 %v9268
        %v9483 = vpop.f32.mrb[0].mxu0
        %v9484 = vadd.f32 0.0, %v9483
        %v9485 = vpop.f32.mrb[0].mxu0
        %v9486 = vadd.f32 0.0, %v9485
        %9487 = vmatprep.mubr.f32.mxu0 0.0
        %9488 = vmatmul.mubr.f32.gmra.mrb[0].mxu0 %v9271
        %v9489 = vpop.f32.mrb[0].mxu0
        %v9490 = vadd.f32 0.0, %v9489
        %v9491 = vpop.f32.mrb[0].mxu0
        %v9492 = vadd.f32 0.0, %v9491
        %9493 = vmatprep.mubr.f32.mxu0 0.0
        %9494 = vmatmul.mubr.f32.gmra.mrb[0].mxu0 %v9274
        %v9495 = vpop.f32.mrb[0].mxu0
        %v9496 = vadd.f32 0.0, %v9495
        %v9497 = vpop.f32.mrb[0].mxu0
        %v9498 = vadd.f32 0.0, %v9497
        %9499 = vmatprep.mubr.f32.mxu0 0.0
        %9500 = vmatmul.mubr.f32.gmra.mrb[0].mxu0 %v9277
        %v9501 = vpop.f32.mrb[0].mxu0
        %v9502 = vadd.f32 0.0, %v9501
        %v9503 = vpop.f32.mrb[0].mxu0
        %v9504 = vadd.f32 0.0, %v9503
        %9505 = vmatprep.mubr.f32.mxu0 0.0
        %9506 = vmatmul.mubr.f32.gmra.mrb[0].mxu0 %v9280
        %v9507 = vpop.f32.mrb[0].mxu0
        %v9508 = vadd.f32 0.0, %v9507
        %v9509 = vpop.f32.mrb[0].mxu0
        %v9510 = vadd.f32 0.0, %v9509
        %9511 = vmatprep.mubr.f32.mxu0 0.0
        %9512 = vmatmul.mubr.f32.gmra.mrb[0].mxu0 %v9283
        %v9513 = vpop.f32.mrb[0].mxu0
        %v9514 = vadd.f32 0.0, %v9513
        %v9515 = vpop.f32.mrb[0].mxu0
        %v9516 = vadd.f32 0.0, %v9515
        %9517 = vmatprep.mubr.f32.mxu0 0.0
        %9518 = vmatmul.mubr.f32.gmra.mrb[0].mxu0 %v9286
        %v9519 = vpop.f32.mrb[0].mxu0
        %v9520 = vadd.f32 0.0, %v9519
        %v9521 = vpop.f32.mrb[0].mxu0
        %v9522 = vadd.f32 0.0, %v9521
        %9523 = vmatprep.mubr.f32.mxu0 0.0
        %9524 = vmatmul.mubr.f32.gmra.mrb[0].mxu0 %v9289
        %v9525 = vpop.f32.mrb[0].mxu0
        %v9526 = vadd.f32 0.0, %v9525
        %v9527 = vpop.f32.mrb[0].mxu0
        %v9528 = vadd.f32 0.0, %v9527
        %9529 = vmatprep.mubr.f32.mxu0 0.0
        %9530 = vmatmul.mubr.f32.gmra.mrb[0].mxu0 %v9292
        %v9531 = vpop.f32.mrb[0].mxu0
        %v9532 = vadd.f32 0.0, %v9531
        %v9533 = vpop.f32.mrb[0].mxu0
        %v9534 = vadd.f32 0.0, %v9533
        %9535 = vmatprep.mubr.f32.mxu0 0.0
        %9536 = vmatmul.mubr.f32.gmra.mrb[0].mxu0 %v9295
        %v9537 = vpop.f32.mrb[0].mxu0
        %v9538 = vadd.f32 0.0, %v9537
        %v9539 = vpop.f32.mrb[0].mxu0
        %v9540 = vadd.f32 0.0, %v9539
        %9541 = vmatprep.mubr.f32.mxu0 0.0
        %9542 = vmatmul.mubr.f32.gmra.mrb[0].mxu0 %v9298
        %v9543 = vpop.f32.mrb[0].mxu0
        %v9544 = vadd.f32 0.0, %v9543
        %v9545 = vpop.f32.mrb[0].mxu0
        %v9546 = vadd.f32 0.0, %v9545
        %9547 = vmatprep.mubr.f32.mxu0 0.0
        %9548 = vmatmul.mubr.f32.gmra.mrb[0].mxu0 %v9301
        %v9549 = vpop.f32.mrb[0].mxu0
        %v9550 = vadd.f32 0.0, %v9549
        %v9551 = vpop.f32.mrb[0].mxu0
        %v9552 = vadd.f32 0.0, %v9551
        %9553 = vmatprep.mubr.f32.mxu0 0.0
        %9554 = vmatmul.mubr.f32.gmra.mrb[0].mxu0 %v9304
        %v9555 = vpop.f32.mrb[0].mxu0
        %v9556 = vadd.f32 0.0, %v9555
        %v9557 = vpop.f32.mrb[0].mxu0
        %v9558 = vadd.f32 0.0, %v9557
        %9559 = vmatprep.mubr.f32.mxu0 0.0
        %9560 = vmatmul.mubr.f32.gmra.mrb[0].mxu0 %v9307
        %v9561 = vpop.f32.mrb[0].mxu0
        %v9562 = vadd.f32 0.0, %v9561
        %v9563 = vpop.f32.mrb[0].mxu0
        %v9564 = vadd.f32 0.0, %v9563
        %9565 = vdwg.mxu0
        %9566 = vst [vmem:[%s217] sm:$0xff] %v9376
        %9567 = vst [vmem:[%s217 + $0x8] sm:$0xff] %v9378
        %9568 = vst [vmem:[%s217 + $0x10] sm:$0xff] %v9382
        %9569 = vst [vmem:[%s217 + $0x18] sm:$0xff] %v9384
        %9570 = vst [vmem:[%s217 + $0x20] sm:$0xff] %v9388
        %9571 = vst [vmem:[%s217 + $0x28] sm:$0xff] %v9390
        %9572 = vst [vmem:[%s217 + $0x30] sm:$0xff] %v9394
        %9573 = vst [vmem:[%s217 + $0x38] sm:$0xff] %v9396
        %9574 = vst [vmem:[%s217 + $0x40] sm:$0xff] %v9400
        %9575 = vst [vmem:[%s217 + $0x48] sm:$0xff] %v9402
        %9576 = vst [vmem:[%s217 + $0x50] sm:$0xff] %v9406
        %9577 = vst [vmem:[%s217 + $0x58] sm:$0xff] %v9408
        %9578 = vst [vmem:[%s217 + $0x60] sm:$0xff] %v9412
        %9579 = vst [vmem:[%s217 + $0x68] sm:$0xff] %v9414
        %9580 = vst [vmem:[%s217 + $0x70] sm:$0xff] %v9418
        %9581 = vst [vmem:[%s217 + $0x78] sm:$0xff] %v9420
        %9582 = vst [vmem:[%s217 + $0x80] sm:$0xff] %v9424
        %9583 = vst [vmem:[%s217 + $0x88] sm:$0xff] %v9426
        %9584 = vst [vmem:[%s217 + $0x90] sm:$0xff] %v9430
        %9585 = vst [vmem:[%s217 + $0x98] sm:$0xff] %v9432
        %9586 = vst [vmem:[%s217 + $0xa0] sm:$0xff] %v9436
        %9587 = vst [vmem:[%s217 + $0xa8] sm:$0xff] %v9438
        %9588 = vst [vmem:[%s217 + $0xb0] sm:$0xff] %v9442
        %9589 = vst [vmem:[%s217 + $0xb8] sm:$0xff] %v9444
        %9590 = vst [vmem:[%s217 + $0xc0] sm:$0xff] %v9448
        %9591 = vst [vmem:[%s217 + $0xc8] sm:$0xff] %v9450
        %9592 = vst [vmem:[%s217 + $0xd0] sm:$0xff] %v9454
        %9593 = vst [vmem:[%s217 + $0xd8] sm:$0xff] %v9456
        %9594 = vst [vmem:[%s217 + $0xe0] sm:$0xff] %v9460
        %9595 = vst [vmem:[%s217 + $0xe8] sm:$0xff] %v9462
        %9596 = vst [vmem:[%s217 + $0xf0] sm:$0xff] %v9466
        %9597 = vst [vmem:[%s217 + $0xf8] sm:$0xff] %v9468
        %9598 = vst [vmem:[%s217 + $0x100] sm:$0xff] %v9472
        %9599 = vst [vmem:[%s217 + $0x108] sm:$0xff] %v9474
        %9600 = vst [vmem:[%s217 + $0x110] sm:$0xff] %v9478
        %9601 = vst [vmem:[%s217 + $0x118] sm:$0xff] %v9480
        %9602 = vst [vmem:[%s217 + $0x120] sm:$0xff] %v9484
        %9603 = vst [vmem:[%s217 + $0x128] sm:$0xff] %v9486
        %9604 = vst [vmem:[%s217 + $0x130] sm:$0xff] %v9490
        %9605 = vst [vmem:[%s217 + $0x138] sm:$0xff] %v9492
        %9606 = vst [vmem:[%s217 + $0x140] sm:$0xff] %v9496
        %9607 = vst [vmem:[%s217 + $0x148] sm:$0xff] %v9498
        %9608 = vst [vmem:[%s217 + $0x150] sm:$0xff] %v9502
        %9609 = vst [vmem:[%s217 + $0x158] sm:$0xff] %v9504
        %9610 = vst [vmem:[%s217 + $0x160] sm:$0xff] %v9508
        %9611 = vst [vmem:[%s217 + $0x168] sm:$0xff] %v9510
        %9612 = vst [vmem:[%s217 + $0x170] sm:$0xff] %v9514
        %9613 = vst [vmem:[%s217 + $0x178] sm:$0xff] %v9516
        %9614 = vst [vmem:[%s217 + $0x180] sm:$0xff] %v9520
        %9615 = vst [vmem:[%s217 + $0x188] sm:$0xff] %v9522
        %9616 = vst [vmem:[%s217 + $0x190] sm:$0xff] %v9526
        %9617 = vst [vmem:[%s217 + $0x198] sm:$0xff] %v9528
        %9618 = vst [vmem:[%s217 + $0x1a0] sm:$0xff] %v9532
        %9619 = vst [vmem:[%s217 + $0x1a8] sm:$0xff] %v9534
        %9620 = vst [vmem:[%s217 + $0x1b0] sm:$0xff] %v9538
        %9621 = vst [vmem:[%s217 + $0x1b8] sm:$0xff] %v9540
        %9622 = vst [vmem:[%s217 + $0x1c0] sm:$0xff] %v9544
        %9623 = vst [vmem:[%s217 + $0x1c8] sm:$0xff] %v9546
        %9624 = vst [vmem:[%s217 + $0x1d0] sm:$0xff] %v9550
        %9625 = vst [vmem:[%s217 + $0x1d8] sm:$0xff] %v9552
        %9626 = vst [vmem:[%s217 + $0x1e0] sm:$0xff] %v9556
        %9627 = vst [vmem:[%s217 + $0x1e8] sm:$0xff] %v9558
        %9628 = vst [vmem:[%s217 + $0x1f0] sm:$0xff] %v9562
        %9629 = vst [vmem:[%s217 + $0x1f8] sm:$0xff] %v9564
        %s9630 = sand.u32 %s137, 1
        %s9631 = scalar_lea.sflag [#allocation4], %s9630
        %s9632 = sand.u32 %s137, 1
        %s9633 = smul.addr %s9632, 512
        %s9634 = scalar_lea.vmem [#allocation3], %s9633
        // Predicated region
        $region41: #{correction_module.1} parent=39 // pred_check
          %p9635 = pneg %p147
        $region42: #{correction_module.1} parent=39 // pred_check_branch
          %9637 = sbr.rel (%p9635) target = $region44
        $region43: #{correction_module.1} parent=39 // pred_region
          %s9639 = ssub.s32 8192, 8192
          %9640 = vsyncadd %s9631, %s9639
          %s9641 = smul.addr %s19, 64
          %s9642 = smul.addr %s9641, 128
          %s9643 = scalar_lea.hbm %s5, %s9642
          %s9644 = sshll.u32 %s9634, 4
          %s9645 = int_to_ptr.vmem [resolvable:$true] %s9644
          %9650 = dma.vmem_to_hbm [thread:$0]  %s9645, 8192, %s9643, %s9631, 256, 256, 16
        $region44: #{correction_module.1} parent=39 // pred_fallthru
          _
      $region40: #{correction_module.1} parent=5 // pred_fallthru
        _
      %p9651 = scmp.le.s32.totalorder 2, %s14
      // Predicated region
      $region45: #{correction_module.1} parent=5 // pred_check
        %p9652 = pneg %p9651
      $region46: #{correction_module.1} parent=5 // pred_check_branch
        %9654 = sbr.rel (%p9652) target = $region48
      $region47: #{correction_module.1} parent=5 // pred_region
        %s9655 = ssub.s32 %s14, 2
        // Predicated region
        $region49: #{correction_module.1} parent=47 // pred_check
          %p9656 = pneg %p153
        $region50: #{correction_module.1} parent=47 // pred_check_branch
          %9658 = sbr.rel (%p9656) target = $region52
        $region51: #{correction_module.1} parent=47 // pred_region
          %s9659 = sand.u32 %s138, 1
          %s9660 = scalar_lea.sflag [#allocation4], %s9659
          %s9661 = sand.u32 %s138, 1
          %s9662 = smul.addr %s9661, 512
          %s9663 = scalar_lea.vmem [#allocation3], %s9662
          %9664 = dma.done %s9660, 8192
        $region52: #{correction_module.1} parent=47 // pred_fallthru
          _
      $region48: #{correction_module.1} parent=5 // pred_fallthru
        _
    $region6: #{correction_module.1} parent=1 // loop_footer
      %s18 = sadd.s32 1, %s14
    $region7: #{correction_module.1} parent=1 // loop_footer_branch
      %13 = sbr.rel target = $region3
    $region8: #{correction_module.1} parent=1 // loop_exit
      _
    %9665 = vsyncpa [#allocation4], 1
    %s9666 = scalar_lea.sflag [#allocation4], 1
    %9667 = vsyncpa %s9666, 1

</llo_original>
